<compile_context>
chip_gen: v7x
topology: tpu7x:2x2x1
jax: 0.10.0
libtpu: 0.0.40
codegen_flags: <defaults>
</compile_context>

<pallas_src>
import jax
import jax.numpy as jnp
from jax.experimental import pallas as pl

NEG_SLOPE = 0.01            # F.leaky_relu default
BN_EPS = 1e-5               # nn.BatchNorm2d default
MXU_DTYPE = jnp.bfloat16    # MXU input dtype; set to jnp.float32 for exact-f32 path


# ----------------------------- Pallas kernels ------------------------------

def _conv_lrelu_stats_kernel(cols_ref, w_ref, b_ref, y_ref, mean_ref, var_ref):
    """Fused im2col-matmul + bias + LeakyReLU + per-channel BN batch stats.

    Runs as one full-M tile, so the activation is resident in VMEM and the BN
    mean / biased variance come for free instead of a second pallas_call that
    re-reads the activation from HBM.
    """
    y = jnp.dot(cols_ref[...], w_ref[...], preferred_element_type=jnp.float32)
    y = y + b_ref[...]                               # bias in f32
    y = jnp.where(y > 0, y, NEG_SLOPE * y)           # LeakyReLU in f32
    y_ref[...] = y
    m = jnp.mean(y, axis=0, keepdims=True)           # per-channel mean
    mean_ref[...] = m
    var_ref[...] = jnp.mean((y - m) ** 2, axis=0, keepdims=True)   # biased var


def conv_lrelu_stats(cols, w_mat, bias):
    """cols: (M, K), w_mat: (K, N), bias: (N,) -> (y (M,N) f32, mean (1,N), var (1,N)).

    Single un-gridded call (block == full array): total operands are < 2 MiB,
    comfortably inside VMEM on v5e/v6e/v7x, and one launch beats a
    per-step-overhead-bound row grid at this size.
    """
    # TODO(synk): if batch/spatial size ever grows, switch to a row grid with
    # per-tile partial sum / sum-of-squares outputs (mark the row axis
    # "parallel" so v7x's 2 TensorCores share it) and set vmem_limit_bytes,
    # instead of relying on whole-array VMEM residency.
    M, K = cols.shape
    N = w_mat.shape[1]
    return pl.pallas_call(
        _conv_lrelu_stats_kernel,
        out_shape=(jax.ShapeDtypeStruct((M, N), jnp.float32),
                   jax.ShapeDtypeStruct((1, N), jnp.float32),
                   jax.ShapeDtypeStruct((1, N), jnp.float32)),
    )(cols, w_mat, bias.astype(jnp.float32)[None, :])


def _bn_maxpool_kernel(y_ref, mean_ref, var_ref, gamma_ref, beta_ref, o_ref):
    """BatchNorm apply + in-kernel k x k max-pool.

    y_ref: (B*Hp, k, Wp, k, C) -- a contiguous (free) reshape of the conv
    output; the pooling reduction happens in-kernel, so no XLA transpose and
    no window-expanded tensor ever goes through HBM.
    """
    inv = jax.lax.rsqrt(var_ref[...] + BN_EPS)
    scale = gamma_ref[...] * inv                     # (1, C)
    shift = beta_ref[...] - mean_ref[...] * scale    # (1, C)
    xn = y_ref[...] * scale + shift                  # (N, k, Wp, k, C), f32
    red = jnp.max(xn, axis=3)                        # pool over width -> (N, k, Wp, C)
    out = red[:, 0]
    for i in range(1, red.shape[1]):                 # pool over height (leading dim)
        out = jnp.maximum(out, red[:, i])
    o_ref[...] = out                                 # (N, Wp, C)


def bn_maxpool(y, mean, var, gamma, beta, B, Ho, Wo, k):
    """y: (B*Ho*Wo, C) conv output -> (B, Ho//k, Wo//k, C) after BN + MaxPool2d(k)."""
    C = y.shape[-1]
    Hp, Wp = Ho // k, Wo // k                        # floor mode (PyTorch default)
    ywin = y.reshape(B, Ho, Wo, C)[:, :Hp * k, :Wp * k, :]
    ywin = ywin.reshape(B * Hp, k, Wp, k, C)         # contiguous split: free reshape
    out = pl.pallas_call(
        _bn_maxpool_kernel,
        out_shape=jax.ShapeDtypeStruct((B * Hp, Wp, C), jnp.float32),
    )(ywin, mean, var, gamma[None, :], beta[None, :])
    return out.reshape(B, Hp, Wp, C)


def _bn_globalpool_heads_kernel(y_ref, mean_ref, var_ref, gamma_ref, beta_ref,
                                wh_ref, bh_ref, o_ref):
    """BN apply + max-pool over the whole (k x k) map + actor/critic heads."""
    inv = jax.lax.rsqrt(var_ref[...] + BN_EPS)
    scale = gamma_ref[...] * inv
    shift = beta_ref[...] - mean_ref[...] * scale
    xn = y_ref[...] * scale + shift                  # (B, k*k, C)
    feats = jnp.max(xn, axis=1)                      # (B, C)  -> flattened features
    o_ref[...] = (jnp.dot(feats, wh_ref[...], preferred_element_type=jnp.float32)
                  + bh_ref[...])                     # (B, n_actor + n_critic)


def bn_globalpool_heads(y, mean, var, gamma, beta, w_heads, b_heads, B, Ho, Wo, k):
    """Final stage: BN2 + MaxPool2d(k) (-> 1x1 map) + both linear heads, fused."""
    C = y.shape[-1]
    assert Ho // k == 1 and Wo // k == 1, "heads require a 1x1 pooled feature map"
    ywin = y.reshape(B, Ho, Wo, C)[:, :k, :k, :].reshape(B, k * k, C)
    return pl.pallas_call(
        _bn_globalpool_heads_kernel,
        out_shape=jax.ShapeDtypeStruct((B, w_heads.shape[1]), jnp.float32),
    )(ywin, mean, var, gamma[None, :], beta[None, :], w_heads, b_heads)


# ------------------------------- glue (JAX) --------------------------------
# TODO(synk): the im2col patch extraction (and the NCHW->NHWC transpose) stays
# in XLA; an in-kernel strided-window gather (or allow_input_fusion) could
# remove the remaining duplicated-patch HBM round trip, but everything
# downstream of it is now fused into the four Pallas calls above.

def im2col(x_nhwc, kh, kw, stride):
    """x: (B, H, W, C) -> (B*Ho*Wo, kh*kw*C) patches, feature idx (i*kw+j)*C+c."""
    B, H, W, C = x_nhwc.shape
    Ho = (H - kh) // stride + 1
    Wo = (W - kw) // stride + 1
    cols = []
    for i in range(kh):
        for j in range(kw):
            cols.append(x_nhwc[:, i:i + stride * Ho:stride,
                               j:j + stride * Wo:stride, :])
    p = jnp.stack(cols, axis=3)                      # (B, Ho, Wo, kh*kw, C)
    return p.reshape(B * Ho * Wo, kh * kw * C), Ho, Wo


def conv_weight_to_matrix(w_oihw):
    """(O, I, kh, kw) -> (kh*kw*I, O), matching im2col feature ordering."""
    O, I, kh, kw = w_oihw.shape
    return jnp.transpose(w_oihw, (2, 3, 1, 0)).reshape(kh * kw * I, O)


def init_params(key):
    def uinit(k, shape, fan_in):
        bound = 1.0 / float(fan_in) ** 0.5
        return jax.random.uniform(k, shape, jnp.float32, -bound, bound)

    ks = jax.random.split(key, 8)
    return {
        "conv1_w": uinit(ks[0], (32, 4, 8, 8), 4 * 8 * 8),
        "conv1_b": uinit(ks[1], (32,), 4 * 8 * 8),
        "bn1_gamma": jnp.ones((32,), jnp.float32),
        "bn1_beta": jnp.zeros((32,), jnp.float32),
        "conv2_w": uinit(ks[2], (64, 32, 5, 5), 32 * 5 * 5),
        "conv2_b": uinit(ks[3], (64,), 32 * 5 * 5),
        "bn2_gamma": jnp.ones((64,), jnp.float32),
        "bn2_beta": jnp.zeros((64,), jnp.float32),
        "actor_w": uinit(ks[4], (4, 64), 64),
        "actor_b": uinit(ks[5], (4,), 64),
        "critic_w": uinit(ks[6], (1, 64), 64),
        "critic_b": uinit(ks[7], (1,), 64),
    }


def actor_critic_forward(x_nchw, p):
    B = x_nchw.shape[0]
    x = jnp.transpose(x_nchw, (0, 2, 3, 1)).astype(MXU_DTYPE)    # NHWC, MXU dtype

    # conv1 (4->32, 8x8, stride 2) + LeakyReLU + BN1 stats       (pallas_call #1)
    cols1, Ho1, Wo1 = im2col(x, 8, 8, 2)
    y1, m1, v1 = conv_lrelu_stats(
        cols1, conv_weight_to_matrix(p["conv1_w"]).astype(MXU_DTYPE), p["conv1_b"])
    # BN1 apply + MaxPool2d(3), pooled in-kernel                 (pallas_call #2)
    z1 = bn_maxpool(y1, m1, v1, p["bn1_gamma"], p["bn1_beta"], B, Ho1, Wo1, 3)

    # conv2 (32->64, 5x5, stride 2) + LeakyReLU + BN2 stats      (pallas_call #3)
    cols2, Ho2, Wo2 = im2col(z1.astype(MXU_DTYPE), 5, 5, 2)
    y2, m2, v2 = conv_lrelu_stats(
        cols2, conv_weight_to_matrix(p["conv2_w"]).astype(MXU_DTYPE), p["conv2_b"])

    # BN2 apply + MaxPool2d(3) (3x3 -> 1x1) + actor/critic heads (pallas_call #4)
    w_heads = jnp.concatenate([p["actor_w"].T, p["critic_w"].T], axis=1)   # (64, 5)
    b_heads = jnp.concatenate([p["actor_b"], p["critic_b"]])[None, :]      # (1, 5)
    heads = bn_globalpool_heads(y2, m2, v2, p["bn2_gamma"], p["bn2_beta"],
                                w_heads, b_heads, B, Ho2, Wo2, 3)
    return heads[:, :4], heads[:, 4:5]


# --------------------------- pure-JAX reference ----------------------------

def _maxpool_nchw(x, k):
    B, C, H, W = x.shape
    Hp, Wp = H // k, W // k
    return x[:, :, :Hp * k, :Wp * k].reshape(B, C, Hp, k, Wp, k).max(axis=(3, 5))


def reference_forward(x_nchw, p):
    def bn(y, gamma, beta):
        m = y.mean(axis=(0, 2, 3), keepdims=True)
        v = ((y - m) ** 2).mean(axis=(0, 2, 3), keepdims=True)
        return ((y - m) / jnp.sqrt(v + BN_EPS) * gamma[None, :, None, None]
                + beta[None, :, None, None])

    def lrelu(y):
        return jnp.where(y > 0, y, NEG_SLOPE * y)

    y = jax.lax.conv_general_dilated(
        x_nchw, p["conv1_w"], (2, 2), "VALID",
        dimension_numbers=("NCHW", "OIHW", "NCHW")) + p["conv1_b"][None, :, None, None]
    y = _maxpool_nchw(bn(lrelu(y), p["bn1_gamma"], p["bn1_beta"]), 3)
    y = jax.lax.conv_general_dilated(
        y, p["conv2_w"], (2, 2), "VALID",
        dimension_numbers=("NCHW", "OIHW", "NCHW")) + p["conv2_b"][None, :, None, None]
    y = _maxpool_nchw(bn(lrelu(y), p["bn2_gamma"], p["bn2_beta"]), 3)
    f = y.reshape(y.shape[0], -1)
    return f @ p["actor_w"].T + p["actor_b"], f @ p["critic_w"].T + p["critic_b"]


# ---------------------------------- main ------------------------------------

if __name__ == "__main__":
    key = jax.random.PRNGKey(0)
    k_param, k_x = jax.random.split(key)
    params = init_params(k_param)

    # batch=2, channels=4, spatial=60x60 (implied by Linear(64, .) after flatten)
    x = jax.random.normal(k_x, (2, 4, 60, 60), jnp.float32)

    policy, value = jax.jit(actor_critic_forward)(x, params)
    jax.block_until_ready((policy, value))
    assert policy.shape == (2, 4) and value.shape == (2, 1)

    ref_policy, ref_value = reference_forward(x, params)
    # bf16 MXU inputs (f32 accumulation / epilogue) vs. an all-f32 reference
    # need a looser tolerance; the exact-f32 path keeps the tight one.
    tol = 2e-3 if MXU_DTYPE == jnp.float32 else 5e-2
    assert jnp.allclose(policy, ref_policy, atol=tol, rtol=tol)
    assert jnp.allclose(value, ref_value, atol=tol, rtol=tol)

    print("KERNEL_OK")
</pallas_src>

<mosaic_0001>
module attributes {stable_mosaic.version = 11 : i64} {
  func.func @_conv_lrelu_stats_kernel(%arg0: memref<1458x256xbf16, #tpu.memory_space<vmem>>, %arg1: memref<256x32xbf16, #tpu.memory_space<vmem>>, %arg2: memref<1x32xf32, #tpu.memory_space<vmem>>, %arg3: memref<1458x32xf32, #tpu.memory_space<vmem>>, %arg4: memref<1x32xf32, #tpu.memory_space<vmem>>, %arg5: memref<1x32xf32, #tpu.memory_space<vmem>>) attributes {dimension_semantics = [], scalar_prefetch = 0 : i64, scratch_operands = 0 : i64, tpu.core_type = #tpu.core_type<tc>} {
    %c0 = arith.constant 0 : index
    %c0_0 = arith.constant 0 : index
    %0 = vector.load %arg0[%c0, %c0_0] : memref<1458x256xbf16, #tpu.memory_space<vmem>>, vector<1458x256xbf16>
    %c0_1 = arith.constant 0 : index
    %c0_2 = arith.constant 0 : index
    %1 = vector.load %arg1[%c0_1, %c0_2] : memref<256x32xbf16, #tpu.memory_space<vmem>>, vector<256x32xbf16>
    %cst = arith.constant dense<0.000000e+00> : vector<1458x32xf32>
    %2 = tpu.matmul %0, %1, %cst {dimension_numbers = #tpu.dot_dimension_numbers<[1], [0], [0], [1], [0, 0, 1, 1], [], []>} : vector<1458x256xbf16>, vector<256x32xbf16>, vector<1458x32xf32> -> vector<1458x32xf32>
    %c0_3 = arith.constant 0 : index
    %c0_4 = arith.constant 0 : index
    %3 = vector.load %arg2[%c0_3, %c0_4] : memref<1x32xf32, #tpu.memory_space<vmem>>, vector<1x32xf32>
    %4 = vector.broadcast %3 : vector<1x32xf32> to vector<1458x32xf32>
    %5 = arith.addf %2, %4 : vector<1458x32xf32>
    %cst_5 = arith.constant 0.000000e+00 : f32
    %6 = vector.broadcast %cst_5 : f32 to vector<1458x32xf32>
    %7 = arith.cmpf ogt, %5, %6 : vector<1458x32xf32>
    %cst_6 = arith.constant 0.00999999977 : f32
    %8 = vector.broadcast %cst_6 : f32 to vector<1458x32xf32>
    %9 = arith.mulf %8, %5 : vector<1458x32xf32>
    %10 = arith.select %7, %5, %9 : vector<1458x32xi1>, vector<1458x32xf32>
    %c0_7 = arith.constant 0 : index
    %c0_8 = arith.constant 0 : index
    %11 = vector.load %arg3[%c0_7, %c0_8] : memref<1458x32xf32, #tpu.memory_space<vmem>>, vector<1458x32xf32>
    tpu.vector_store %arg3[%c0_7, %c0_8], %10 {strides = array<i32>} : memref<1458x32xf32, #tpu.memory_space<vmem>>, vector<1458x32xf32>,
    %cst_9 = arith.constant dense<0.000000e+00> : vector<32xf32>
    %12 = vector.multi_reduction <add>, %10, %cst_9 [0] : vector<1458x32xf32> to vector<32xf32>
    %13 = vector.shape_cast %12 : vector<32xf32> to vector<1x32xf32>
    %cst_10 = arith.constant 1.458000e+03 : f32
    %14 = vector.broadcast %cst_10 : f32 to vector<1x32xf32>
    %15 = arith.divf %13, %14 : vector<1x32xf32>
    %c0_11 = arith.constant 0 : index
    %c0_12 = arith.constant 0 : index
    %16 = vector.load %arg4[%c0_11, %c0_12] : memref<1x32xf32, #tpu.memory_space<vmem>>, vector<1x32xf32>
    tpu.vector_store %arg4[%c0_11, %c0_12], %15 {strides = array<i32>} : memref<1x32xf32, #tpu.memory_space<vmem>>, vector<1x32xf32>,
    %17 = vector.broadcast %15 : vector<1x32xf32> to vector<1458x32xf32>
    %18 = arith.subf %10, %17 : vector<1458x32xf32>
    %19 = arith.mulf %18, %18 : vector<1458x32xf32>
    %cst_13 = arith.constant dense<0.000000e+00> : vector<32xf32>
    %20 = vector.multi_reduction <add>, %19, %cst_13 [0] : vector<1458x32xf32> to vector<32xf32>
    %21 = vector.shape_cast %20 : vector<32xf32> to vector<1x32xf32>
    %cst_14 = arith.constant 1.458000e+03 : f32
    %22 = vector.broadcast %cst_14 : f32 to vector<1x32xf32>
    %23 = arith.divf %21, %22 : vector<1x32xf32>
    %c0_15 = arith.constant 0 : index
    %c0_16 = arith.constant 0 : index
    %24 = vector.load %arg5[%c0_15, %c0_16] : memref<1x32xf32, #tpu.memory_space<vmem>>, vector<1x32xf32>
    tpu.vector_store %arg5[%c0_15, %c0_16], %23 {strides = array<i32>} : memref<1x32xf32, #tpu.memory_space<vmem>>, vector<1x32xf32>,
    return
  }
}

module attributes {stable_mosaic.version = 11 : i64} {
  func.func @_bn_maxpool_kernel(%arg0: memref<18x3x9x3x32xf32, #tpu.memory_space<vmem>>, %arg1: memref<1x32xf32, #tpu.memory_space<vmem>>, %arg2: memref<1x32xf32, #tpu.memory_space<vmem>>, %arg3: memref<1x32xf32, #tpu.memory_space<vmem>>, %arg4: memref<1x32xf32, #tpu.memory_space<vmem>>, %arg5: memref<18x9x32xf32, #tpu.memory_space<vmem>>) attributes {dimension_semantics = [], scalar_prefetch = 0 : i64, scratch_operands = 0 : i64, tpu.core_type = #tpu.core_type<tc>} {
    %c0 = arith.constant 0 : index
    %c0_0 = arith.constant 0 : index
    %0 = vector.load %arg2[%c0, %c0_0] : memref<1x32xf32, #tpu.memory_space<vmem>>, vector<1x32xf32>
    %cst = arith.constant 9.99999974E-6 : f32
    %1 = vector.broadcast %cst : f32 to vector<1x32xf32>
    %2 = arith.addf %0, %1 : vector<1x32xf32>
    %3 = math.rsqrt %2 : vector<1x32xf32>
    %c0_1 = arith.constant 0 : index
    %c0_2 = arith.constant 0 : index
    %4 = vector.load %arg3[%c0_1, %c0_2] : memref<1x32xf32, #tpu.memory_space<vmem>>, vector<1x32xf32>
    %5 = arith.mulf %4, %3 : vector<1x32xf32>
    %c0_3 = arith.constant 0 : index
    %c0_4 = arith.constant 0 : index
    %6 = vector.load %arg4[%c0_3, %c0_4] : memref<1x32xf32, #tpu.memory_space<vmem>>, vector<1x32xf32>
    %c0_5 = arith.constant 0 : index
    %c0_6 = arith.constant 0 : index
    %7 = vector.load %arg1[%c0_5, %c0_6] : memref<1x32xf32, #tpu.memory_space<vmem>>, vector<1x32xf32>
    %8 = arith.mulf %7, %5 : vector<1x32xf32>
    %9 = arith.subf %6, %8 : vector<1x32xf32>
    %c0_7 = arith.constant 0 : index
    %c0_8 = arith.constant 0 : index
    %c0_9 = arith.constant 0 : index
    %c0_10 = arith.constant 0 : index
    %c0_11 = arith.constant 0 : index
    %10 = vector.load %arg0[%c0_7, %c0_8, %c0_9, %c0_10, %c0_11] : memref<18x3x9x3x32xf32, #tpu.memory_space<vmem>>, vector<18x3x9x3x32xf32>
    %11 = vector.shape_cast %5 : vector<1x32xf32> to vector<1x1x1x1x32xf32>
    %12 = vector.broadcast %11 : vector<1x1x1x1x32xf32> to vector<18x3x9x3x32xf32>
    %13 = arith.mulf %10, %12 : vector<18x3x9x3x32xf32>
    %14 = vector.shape_cast %9 : vector<1x32xf32> to vector<1x1x1x1x32xf32>
    %15 = vector.broadcast %14 : vector<1x1x1x1x32xf32> to vector<18x3x9x3x32xf32>
    %16 = arith.addf %13, %15 : vector<18x3x9x3x32xf32>
    %cst_12 = arith.constant dense<0xFF800000> : vector<18x3x9x32xf32>
    %17 = vector.multi_reduction <maximumf>, %16, %cst_12 [3] : vector<18x3x9x3x32xf32> to vector<18x3x9x32xf32>
    %18 = vector.extract_strided_slice %17 {offsets = [0, 0, 0, 0], sizes = [18, 1, 9, 32], strides = [1, 1, 1, 1]} : vector<18x3x9x32xf32> to vector<18x1x9x32xf32>
    %19 = vector.shape_cast %18 : vector<18x1x9x32xf32> to vector<18x9x32xf32>
    %20 = vector.extract_strided_slice %17 {offsets = [0, 1, 0, 0], sizes = [18, 1, 9, 32], strides = [1, 1, 1, 1]} : vector<18x3x9x32xf32> to vector<18x1x9x32xf32>
    %21 = vector.shape_cast %20 : vector<18x1x9x32xf32> to vector<18x9x32xf32>
    %22 = arith.maximumf %19, %21 : vector<18x9x32xf32>
    %23 = vector.extract_strided_slice %17 {offsets = [0, 2, 0, 0], sizes = [18, 1, 9, 32], strides = [1, 1, 1, 1]} : vector<18x3x9x32xf32> to vector<18x1x9x32xf32>
    %24 = vector.shape_cast %23 : vector<18x1x9x32xf32> to vector<18x9x32xf32>
    %25 = arith.maximumf %22, %24 : vector<18x9x32xf32>
    %c0_13 = arith.constant 0 : index
    %c0_14 = arith.constant 0 : index
    %c0_15 = arith.constant 0 : index
    %26 = vector.load %arg5[%c0_13, %c0_14, %c0_15] : memref<18x9x32xf32, #tpu.memory_space<vmem>>, vector<18x9x32xf32>
    tpu.vector_store %arg5[%c0_13, %c0_14, %c0_15], %25 {strides = array<i32>} : memref<18x9x32xf32, #tpu.memory_space<vmem>>, vector<18x9x32xf32>,
    return
  }
}

module attributes {stable_mosaic.version = 11 : i64} {
  func.func @_conv_lrelu_stats_kernel(%arg0: memref<18x800xbf16, #tpu.memory_space<vmem>>, %arg1: memref<800x64xbf16, #tpu.memory_space<vmem>>, %arg2: memref<1x64xf32, #tpu.memory_space<vmem>>, %arg3: memref<18x64xf32, #tpu.memory_space<vmem>>, %arg4: memref<1x64xf32, #tpu.memory_space<vmem>>, %arg5: memref<1x64xf32, #tpu.memory_space<vmem>>) attributes {dimension_semantics = [], scalar_prefetch = 0 : i64, scratch_operands = 0 : i64, tpu.core_type = #tpu.core_type<tc>} {
    %c0 = arith.constant 0 : index
    %c0_0 = arith.constant 0 : index
    %0 = vector.load %arg0[%c0, %c0_0] : memref<18x800xbf16, #tpu.memory_space<vmem>>, vector<18x800xbf16>
    %c0_1 = arith.constant 0 : index
    %c0_2 = arith.constant 0 : index
    %1 = vector.load %arg1[%c0_1, %c0_2] : memref<800x64xbf16, #tpu.memory_space<vmem>>, vector<800x64xbf16>
    %cst = arith.constant dense<0.000000e+00> : vector<18x64xf32>
    %2 = tpu.matmul %0, %1, %cst {dimension_numbers = #tpu.dot_dimension_numbers<[1], [0], [0], [1], [0, 0, 1, 1], [], []>} : vector<18x800xbf16>, vector<800x64xbf16>, vector<18x64xf32> -> vector<18x64xf32>
    %c0_3 = arith.constant 0 : index
    %c0_4 = arith.constant 0 : index
    %3 = vector.load %arg2[%c0_3, %c0_4] : memref<1x64xf32, #tpu.memory_space<vmem>>, vector<1x64xf32>
    %4 = vector.broadcast %3 : vector<1x64xf32> to vector<18x64xf32>
    %5 = arith.addf %2, %4 : vector<18x64xf32>
    %cst_5 = arith.constant 0.000000e+00 : f32
    %6 = vector.broadcast %cst_5 : f32 to vector<18x64xf32>
    %7 = arith.cmpf ogt, %5, %6 : vector<18x64xf32>
    %cst_6 = arith.constant 0.00999999977 : f32
    %8 = vector.broadcast %cst_6 : f32 to vector<18x64xf32>
    %9 = arith.mulf %8, %5 : vector<18x64xf32>
    %10 = arith.select %7, %5, %9 : vector<18x64xi1>, vector<18x64xf32>
    %c0_7 = arith.constant 0 : index
    %c0_8 = arith.constant 0 : index
    %11 = vector.load %arg3[%c0_7, %c0_8] : memref<18x64xf32, #tpu.memory_space<vmem>>, vector<18x64xf32>
    tpu.vector_store %arg3[%c0_7, %c0_8], %10 {strides = array<i32>} : memref<18x64xf32, #tpu.memory_space<vmem>>, vector<18x64xf32>,
    %cst_9 = arith.constant dense<0.000000e+00> : vector<64xf32>
    %12 = vector.multi_reduction <add>, %10, %cst_9 [0] : vector<18x64xf32> to vector<64xf32>
    %13 = vector.shape_cast %12 : vector<64xf32> to vector<1x64xf32>
    %cst_10 = arith.constant 1.800000e+01 : f32
    %14 = vector.broadcast %cst_10 : f32 to vector<1x64xf32>
    %15 = arith.divf %13, %14 : vector<1x64xf32>
    %c0_11 = arith.constant 0 : index
    %c0_12 = arith.constant 0 : index
    %16 = vector.load %arg4[%c0_11, %c0_12] : memref<1x64xf32, #tpu.memory_space<vmem>>, vector<1x64xf32>
    tpu.vector_store %arg4[%c0_11, %c0_12], %15 {strides = array<i32>} : memref<1x64xf32, #tpu.memory_space<vmem>>, vector<1x64xf32>,
    %17 = vector.broadcast %15 : vector<1x64xf32> to vector<18x64xf32>
    %18 = arith.subf %10, %17 : vector<18x64xf32>
    %19 = arith.mulf %18, %18 : vector<18x64xf32>
    %cst_13 = arith.constant dense<0.000000e+00> : vector<64xf32>
    %20 = vector.multi_reduction <add>, %19, %cst_13 [0] : vector<18x64xf32> to vector<64xf32>
    %21 = vector.shape_cast %20 : vector<64xf32> to vector<1x64xf32>
    %cst_14 = arith.constant 1.800000e+01 : f32
    %22 = vector.broadcast %cst_14 : f32 to vector<1x64xf32>
    %23 = arith.divf %21, %22 : vector<1x64xf32>
    %c0_15 = arith.constant 0 : index
    %c0_16 = arith.constant 0 : index
    %24 = vector.load %arg5[%c0_15, %c0_16] : memref<1x64xf32, #tpu.memory_space<vmem>>, vector<1x64xf32>
    tpu.vector_store %arg5[%c0_15, %c0_16], %23 {strides = array<i32>} : memref<1x64xf32, #tpu.memory_space<vmem>>, vector<1x64xf32>,
    return
  }
}

module attributes {stable_mosaic.version = 11 : i64} {
  func.func @_bn_globalpool_heads_kernel(%arg0: memref<2x9x64xf32, #tpu.memory_space<vmem>>, %arg1: memref<1x64xf32, #tpu.memory_space<vmem>>, %arg2: memref<1x64xf32, #tpu.memory_space<vmem>>, %arg3: memref<1x64xf32, #tpu.memory_space<vmem>>, %arg4: memref<1x64xf32, #tpu.memory_space<vmem>>, %arg5: memref<64x5xf32, #tpu.memory_space<vmem>>, %arg6: memref<1x5xf32, #tpu.memory_space<vmem>>, %arg7: memref<2x5xf32, #tpu.memory_space<vmem>>) attributes {dimension_semantics = [], scalar_prefetch = 0 : i64, scratch_operands = 0 : i64, tpu.core_type = #tpu.core_type<tc>} {
    %c0 = arith.constant 0 : index
    %c0_0 = arith.constant 0 : index
    %0 = vector.load %arg2[%c0, %c0_0] : memref<1x64xf32, #tpu.memory_space<vmem>>, vector<1x64xf32>
    %cst = arith.constant 9.99999974E-6 : f32
    %1 = vector.broadcast %cst : f32 to vector<1x64xf32>
    %2 = arith.addf %0, %1 : vector<1x64xf32>
    %3 = math.rsqrt %2 : vector<1x64xf32>
    %c0_1 = arith.constant 0 : index
    %c0_2 = arith.constant 0 : index
    %4 = vector.load %arg3[%c0_1, %c0_2] : memref<1x64xf32, #tpu.memory_space<vmem>>, vector<1x64xf32>
    %5 = arith.mulf %4, %3 : vector<1x64xf32>
    %c0_3 = arith.constant 0 : index
    %c0_4 = arith.constant 0 : index
    %6 = vector.load %arg4[%c0_3, %c0_4] : memref<1x64xf32, #tpu.memory_space<vmem>>, vector<1x64xf32>
    %c0_5 = arith.constant 0 : index
    %c0_6 = arith.constant 0 : index
    %7 = vector.load %arg1[%c0_5, %c0_6] : memref<1x64xf32, #tpu.memory_space<vmem>>, vector<1x64xf32>
    %8 = arith.mulf %7, %5 : vector<1x64xf32>
    %9 = arith.subf %6, %8 : vector<1x64xf32>
    %c0_7 = arith.constant 0 : index
    %c0_8 = arith.constant 0 : index
    %c0_9 = arith.constant 0 : index
    %10 = vector.load %arg0[%c0_7, %c0_8, %c0_9] : memref<2x9x64xf32, #tpu.memory_space<vmem>>, vector<2x9x64xf32>
    %11 = vector.shape_cast %5 : vector<1x64xf32> to vector<1x1x64xf32>
    %12 = vector.broadcast %11 : vector<1x1x64xf32> to vector<2x9x64xf32>
    %13 = arith.mulf %10, %12 : vector<2x9x64xf32>
    %14 = vector.shape_cast %9 : vector<1x64xf32> to vector<1x1x64xf32>
    %15 = vector.broadcast %14 : vector<1x1x64xf32> to vector<2x9x64xf32>
    %16 = arith.addf %13, %15 : vector<2x9x64xf32>
    %cst_10 = arith.constant dense<0xFF800000> : vector<2x64xf32>
    %17 = vector.multi_reduction <maximumf>, %16, %cst_10 [1] : vector<2x9x64xf32> to vector<2x64xf32>
    %c0_11 = arith.constant 0 : index
    %c0_12 = arith.constant 0 : index
    %18 = vector.load %arg5[%c0_11, %c0_12] : memref<64x5xf32, #tpu.memory_space<vmem>>, vector<64x5xf32>
    %cst_13 = arith.constant dense<0.000000e+00> : vector<2x5xf32>
    %19 = tpu.matmul %17, %18, %cst_13 {dimension_numbers = #tpu.dot_dimension_numbers<[1], [0], [0], [1], [0, 0, 1, 1], [], []>} : vector<2x64xf32>, vector<64x5xf32>, vector<2x5xf32> -> vector<2x5xf32>
    %c0_14 = arith.constant 0 : index
    %c0_15 = arith.constant 0 : index
    %20 = vector.load %arg6[%c0_14, %c0_15] : memref<1x5xf32, #tpu.memory_space<vmem>>, vector<1x5xf32>
    %21 = vector.broadcast %20 : vector<1x5xf32> to vector<2x5xf32>
    %22 = arith.addf %19, %21 : vector<2x5xf32>
    %c0_16 = arith.constant 0 : index
    %c0_17 = arith.constant 0 : index
    %23 = vector.load %arg7[%c0_16, %c0_17] : memref<2x5xf32, #tpu.memory_space<vmem>>, vector<2x5xf32>
    tpu.vector_store %arg7[%c0_16, %c0_17], %22 {strides = array<i32>} : memref<2x5xf32, #tpu.memory_space<vmem>>, vector<2x5xf32>,
    return
  }
}

</mosaic_0001>

<llo_original>
// kernel: actor_critic_forward.4
$region0: #{actor_critic_forward.4}
  #allocation0 [shape = 'u32[]', space=smem, size = 0x4, offset = 0x4, fixed_abs, tag = 'smem constant byte address 0x4 - core index']
  #allocation1 [shape = 'u32[144,128]{1,0:T(1,128)}', space=vmem, size = 0x12000, scoped, tag = 'internal scratch']
  %s0 = inlined_call_operand.vmem [shape: bf16[1458,256], index: 0, kind: input, shape index: {}]
  %s1 = inlined_call_operand.vmem [shape: bf16[256,32], index: 1, kind: input, shape index: {}]
  %s2 = inlined_call_operand.vmem [shape: f32[1,32], index: 2, kind: input, shape index: {}]
  %s3 = inlined_call_operand.vmem [shape: f32[1458,32], index: 3, kind: output, shape index: {0}]
  %s4 = inlined_call_operand.vmem [shape: f32[1,32], index: 4, kind: output, shape index: {1}]
  %s5 = inlined_call_operand.vmem [shape: f32[1,32], index: 5, kind: output, shape index: {2}]
  %6 = xla_tuple %s3, %s4, %s5
  %s7 = sld [smem:[#allocation0]]
  $region38: #{actor_critic_forward.4} parent=0
    _
  %s9 = ssub.s32 1, %s7
  %s10 = scalar_select 0, %s9, %s7
  // Predicated region
  $region2: #{actor_critic_forward.4} parent=0 // pred_check
    _
  $region3: #{actor_critic_forward.4} parent=0 // pred_check_branch
    %12 = sbr.rel (0) target = $region5
  $region4: #{actor_critic_forward.4} parent=0 // pred_region
    _
  $region5: #{actor_critic_forward.4} parent=0 // pred_fallthru
    _
  // Predicated region
  $region6: #{actor_critic_forward.4} parent=0 // pred_check
    _
  $region7: #{actor_critic_forward.4} parent=0 // pred_check_branch
    %14 = sbr.rel (0) target = $region9
  $region8: #{actor_critic_forward.4} parent=0 // pred_region
    _
  $region9: #{actor_critic_forward.4} parent=0 // pred_fallthru
    _
  // Predicated region
  $region10: #{actor_critic_forward.4} parent=0 // pred_check
    _
  $region11: #{actor_critic_forward.4} parent=0 // pred_check_branch
    %16 = sbr.rel (0) target = $region13
  $region12: #{actor_critic_forward.4} parent=0 // pred_region
    _
  $region13: #{actor_critic_forward.4} parent=0 // pred_fallthru
    _
  %v18 = vld [vmem:[%s0] sm:$0xff]
  %v19 = vld [vmem:[%s0 + $0x8] sm:$0xff]
  %v20 = vld [vmem:[%s0 + $0x10] sm:$0xff]
  %v21 = vld [vmem:[%s0 + $0x18] sm:$0xff]
  %v22 = vld [vmem:[%s0 + $0x20] sm:$0xff]
  %v23 = vld [vmem:[%s0 + $0x28] sm:$0xff]
  %v24 = vld [vmem:[%s0 + $0x30] sm:$0xff]
  %v25 = vld [vmem:[%s0 + $0x38] sm:$0xff]
  %v26 = vld [vmem:[%s0 + $0x40] sm:$0xff]
  %v27 = vld [vmem:[%s0 + $0x48] sm:$0xff]
  %v28 = vld [vmem:[%s0 + $0x50] sm:$0xff]
  %v29 = vld [vmem:[%s0 + $0x58] sm:$0xff]
  %v30 = vld [vmem:[%s0 + $0x60] sm:$0xff]
  %v31 = vld [vmem:[%s0 + $0x68] sm:$0xff]
  %v32 = vld [vmem:[%s0 + $0x70] sm:$0xff]
  %v33 = vld [vmem:[%s0 + $0x78] sm:$0xff]
  %v34 = vld [vmem:[%s0 + $0x80] sm:$0xff]
  %v35 = vld [vmem:[%s0 + $0x88] sm:$0xff]
  %v36 = vld [vmem:[%s0 + $0x90] sm:$0xff]
  %v37 = vld [vmem:[%s0 + $0x98] sm:$0xff]
  %v38 = vld [vmem:[%s0 + $0xa0] sm:$0xff]
  %v39 = vld [vmem:[%s0 + $0xa8] sm:$0xff]
  %v40 = vld [vmem:[%s0 + $0xb0] sm:$0xff]
  %v41 = vld [vmem:[%s0 + $0xb8] sm:$0xff]
  %v42 = vld [vmem:[%s0 + $0xc0] sm:$0xff]
  %v43 = vld [vmem:[%s0 + $0xc8] sm:$0xff]
  %v44 = vld [vmem:[%s0 + $0xd0] sm:$0xff]
  %v45 = vld [vmem:[%s0 + $0xd8] sm:$0xff]
  %v46 = vld [vmem:[%s0 + $0xe0] sm:$0xff]
  %v47 = vld [vmem:[%s0 + $0xe8] sm:$0xff]
  %v48 = vld [vmem:[%s0 + $0xf0] sm:$0xff]
  %v49 = vld [vmem:[%s0 + $0xf8] sm:$0xff]
  %v50 = vld [vmem:[%s0 + $0x100] sm:$0xff]
  %v51 = vld [vmem:[%s0 + $0x108] sm:$0xff]
  %v52 = vld [vmem:[%s0 + $0x110] sm:$0xff]
  %v53 = vld [vmem:[%s0 + $0x118] sm:$0xff]
  %v54 = vld [vmem:[%s0 + $0x120] sm:$0xff]
  %v55 = vld [vmem:[%s0 + $0x128] sm:$0xff]
  %v56 = vld [vmem:[%s0 + $0x130] sm:$0xff]
  %v57 = vld [vmem:[%s0 + $0x138] sm:$0xff]
  %v58 = vld [vmem:[%s0 + $0x140] sm:$0xff]
  %v59 = vld [vmem:[%s0 + $0x148] sm:$0xff]
  %v60 = vld [vmem:[%s0 + $0x150] sm:$0xff]
  %v61 = vld [vmem:[%s0 + $0x158] sm:$0xff]
  %v62 = vld [vmem:[%s0 + $0x160] sm:$0xff]
  %v63 = vld [vmem:[%s0 + $0x168] sm:$0xff]
  %v64 = vld [vmem:[%s0 + $0x170] sm:$0xff]
  %v65 = vld [vmem:[%s0 + $0x178] sm:$0xff]
  %v66 = vld [vmem:[%s0 + $0x180] sm:$0xff]
  %v67 = vld [vmem:[%s0 + $0x188] sm:$0xff]
  %v68 = vld [vmem:[%s0 + $0x190] sm:$0xff]
  %v69 = vld [vmem:[%s0 + $0x198] sm:$0xff]
  %v70 = vld [vmem:[%s0 + $0x1a0] sm:$0xff]
  %v71 = vld [vmem:[%s0 + $0x1a8] sm:$0xff]
  %v72 = vld [vmem:[%s0 + $0x1b0] sm:$0xff]
  %v73 = vld [vmem:[%s0 + $0x1b8] sm:$0xff]
  %v74 = vld [vmem:[%s0 + $0x1c0] sm:$0xff]
  %v75 = vld [vmem:[%s0 + $0x1c8] sm:$0xff]
  %v76 = vld [vmem:[%s0 + $0x1d0] sm:$0xff]
  %v77 = vld [vmem:[%s0 + $0x1d8] sm:$0xff]
  %v78 = vld [vmem:[%s0 + $0x1e0] sm:$0xff]
  %v79 = vld [vmem:[%s0 + $0x1e8] sm:$0xff]
  %v80 = vld [vmem:[%s0 + $0x1f0] sm:$0xff]
  %v81 = vld [vmem:[%s0 + $0x1f8] sm:$0xff]
  %v82 = vld [vmem:[%s0 + $0x200] sm:$0xff]
  %v83 = vld [vmem:[%s0 + $0x208] sm:$0xff]
  %v84 = vld [vmem:[%s0 + $0x210] sm:$0xff]
  %v85 = vld [vmem:[%s0 + $0x218] sm:$0xff]
  %v86 = vld [vmem:[%s0 + $0x220] sm:$0xff]
  %v87 = vld [vmem:[%s0 + $0x228] sm:$0xff]
  %v88 = vld [vmem:[%s0 + $0x230] sm:$0xff]
  %v89 = vld [vmem:[%s0 + $0x238] sm:$0xff]
  %v90 = vld [vmem:[%s0 + $0x240] sm:$0xff]
  %v91 = vld [vmem:[%s0 + $0x248] sm:$0xff]
  %v92 = vld [vmem:[%s0 + $0x250] sm:$0xff]
  %v93 = vld [vmem:[%s0 + $0x258] sm:$0xff]
  %v94 = vld [vmem:[%s0 + $0x260] sm:$0xff]
  %v95 = vld [vmem:[%s0 + $0x268] sm:$0xff]
  %v96 = vld [vmem:[%s0 + $0x270] sm:$0xff]
  %v97 = vld [vmem:[%s0 + $0x278] sm:$0xff]
  %v98 = vld [vmem:[%s0 + $0x280] sm:$0xff]
  %v99 = vld [vmem:[%s0 + $0x288] sm:$0xff]
  %v100 = vld [vmem:[%s0 + $0x290] sm:$0xff]
  %v101 = vld [vmem:[%s0 + $0x298] sm:$0xff]
  %v102 = vld [vmem:[%s0 + $0x2a0] sm:$0xff]
  %v103 = vld [vmem:[%s0 + $0x2a8] sm:$0xff]
  %v104 = vld [vmem:[%s0 + $0x2b0] sm:$0xff]
  %v105 = vld [vmem:[%s0 + $0x2b8] sm:$0xff]
  %v106 = vld [vmem:[%s0 + $0x2c0] sm:$0xff]
  %v107 = vld [vmem:[%s0 + $0x2c8] sm:$0xff]
  %v108 = vld [vmem:[%s0 + $0x2d0] sm:$0xff]
  %v109 = vld [vmem:[%s0 + $0x2d8] sm:$0xff]
  %v110 = vld [vmem:[%s0 + $0x2e0] sm:$0xff]
  %v111 = vld [vmem:[%s0 + $0x2e8] sm:$0xff]
  %v112 = vld [vmem:[%s0 + $0x2f0] sm:$0xff]
  %v113 = vld [vmem:[%s0 + $0x2f8] sm:$0xff]
  %v114 = vld [vmem:[%s0 + $0x300] sm:$0xff]
  %v115 = vld [vmem:[%s0 + $0x308] sm:$0xff]
  %v116 = vld [vmem:[%s0 + $0x310] sm:$0xff]
  %v117 = vld [vmem:[%s0 + $0x318] sm:$0xff]
  %v118 = vld [vmem:[%s0 + $0x320] sm:$0xff]
  %v119 = vld [vmem:[%s0 + $0x328] sm:$0xff]
  %v120 = vld [vmem:[%s0 + $0x330] sm:$0xff]
  %v121 = vld [vmem:[%s0 + $0x338] sm:$0xff]
  %v122 = vld [vmem:[%s0 + $0x340] sm:$0xff]
  %v123 = vld [vmem:[%s0 + $0x348] sm:$0xff]
  %v124 = vld [vmem:[%s0 + $0x350] sm:$0xff]
  %v125 = vld [vmem:[%s0 + $0x358] sm:$0xff]
  %v126 = vld [vmem:[%s0 + $0x360] sm:$0xff]
  %v127 = vld [vmem:[%s0 + $0x368] sm:$0xff]
  %v128 = vld [vmem:[%s0 + $0x370] sm:$0xff]
  %v129 = vld [vmem:[%s0 + $0x378] sm:$0xff]
  %v130 = vld [vmem:[%s0 + $0x380] sm:$0xff]
  %v131 = vld [vmem:[%s0 + $0x388] sm:$0xff]
  %v132 = vld [vmem:[%s0 + $0x390] sm:$0xff]
  %v133 = vld [vmem:[%s0 + $0x398] sm:$0xff]
  %v134 = vld [vmem:[%s0 + $0x3a0] sm:$0xff]
  %v135 = vld [vmem:[%s0 + $0x3a8] sm:$0xff]
  %v136 = vld [vmem:[%s0 + $0x3b0] sm:$0xff]
  %v137 = vld [vmem:[%s0 + $0x3b8] sm:$0xff]
  %v138 = vld [vmem:[%s0 + $0x3c0] sm:$0xff]
  %v139 = vld [vmem:[%s0 + $0x3c8] sm:$0xff]
  %v140 = vld [vmem:[%s0 + $0x3d0] sm:$0xff]
  %v141 = vld [vmem:[%s0 + $0x3d8] sm:$0xff]
  %v142 = vld [vmem:[%s0 + $0x3e0] sm:$0xff]
  %v143 = vld [vmem:[%s0 + $0x3e8] sm:$0xff]
  %v144 = vld [vmem:[%s0 + $0x3f0] sm:$0xff]
  %v145 = vld [vmem:[%s0 + $0x3f8] sm:$0xff]
  %v146 = vld [vmem:[%s0 + $0x400] sm:$0xff]
  %v147 = vld [vmem:[%s0 + $0x408] sm:$0xff]
  %v148 = vld [vmem:[%s0 + $0x410] sm:$0xff]
  %v149 = vld [vmem:[%s0 + $0x418] sm:$0xff]
  %v150 = vld [vmem:[%s0 + $0x420] sm:$0xff]
  %v151 = vld [vmem:[%s0 + $0x428] sm:$0xff]
  %v152 = vld [vmem:[%s0 + $0x430] sm:$0xff]
  %v153 = vld [vmem:[%s0 + $0x438] sm:$0xff]
  %v154 = vld [vmem:[%s0 + $0x440] sm:$0xff]
  %v155 = vld [vmem:[%s0 + $0x448] sm:$0xff]
  %v156 = vld [vmem:[%s0 + $0x450] sm:$0xff]
  %v157 = vld [vmem:[%s0 + $0x458] sm:$0xff]
  %v158 = vld [vmem:[%s0 + $0x460] sm:$0xff]
  %v159 = vld [vmem:[%s0 + $0x468] sm:$0xff]
  %v160 = vld [vmem:[%s0 + $0x470] sm:$0xff]
  %v161 = vld [vmem:[%s0 + $0x478] sm:$0xff]
  %v162 = vld [vmem:[%s0 + $0x480] sm:$0xff]
  %v163 = vld [vmem:[%s0 + $0x488] sm:$0xff]
  %v164 = vld [vmem:[%s0 + $0x490] sm:$0xff]
  %v165 = vld [vmem:[%s0 + $0x498] sm:$0xff]
  %v166 = vld [vmem:[%s0 + $0x4a0] sm:$0xff]
  %v167 = vld [vmem:[%s0 + $0x4a8] sm:$0xff]
  %v168 = vld [vmem:[%s0 + $0x4b0] sm:$0xff]
  %v169 = vld [vmem:[%s0 + $0x4b8] sm:$0xff]
  %v170 = vld [vmem:[%s0 + $0x4c0] sm:$0xff]
  %v171 = vld [vmem:[%s0 + $0x4c8] sm:$0xff]
  %v172 = vld [vmem:[%s0 + $0x4d0] sm:$0xff]
  %v173 = vld [vmem:[%s0 + $0x4d8] sm:$0xff]
  %v174 = vld [vmem:[%s0 + $0x4e0] sm:$0xff]
  %v175 = vld [vmem:[%s0 + $0x4e8] sm:$0xff]
  %v176 = vld [vmem:[%s0 + $0x4f0] sm:$0xff]
  %v177 = vld [vmem:[%s0 + $0x4f8] sm:$0xff]
  %v178 = vld [vmem:[%s0 + $0x500] sm:$0xff]
  %v179 = vld [vmem:[%s0 + $0x508] sm:$0xff]
  %v180 = vld [vmem:[%s0 + $0x510] sm:$0xff]
  %v181 = vld [vmem:[%s0 + $0x518] sm:$0xff]
  %v182 = vld [vmem:[%s0 + $0x520] sm:$0xff]
  %v183 = vld [vmem:[%s0 + $0x528] sm:$0xff]
  %v184 = vld [vmem:[%s0 + $0x530] sm:$0xff]
  %v185 = vld [vmem:[%s0 + $0x538] sm:$0xff]
  %v186 = vld [vmem:[%s0 + $0x540] sm:$0xff]
  %v187 = vld [vmem:[%s0 + $0x548] sm:$0xff]
  %v188 = vld [vmem:[%s0 + $0x550] sm:$0xff]
  %v189 = vld [vmem:[%s0 + $0x558] sm:$0xff]
  %v190 = vld [vmem:[%s0 + $0x560] sm:$0xff]
  %v191 = vld [vmem:[%s0 + $0x568] sm:$0xff]
  %v192 = vld [vmem:[%s0 + $0x570] sm:$0xff]
  %v193 = vld [vmem:[%s0 + $0x578] sm:$0xff]
  %v194 = vld [vmem:[%s0 + $0x580] sm:$0xff]
  %v195 = vld [vmem:[%s0 + $0x588] sm:$0xff]
  %v196 = vld [vmem:[%s0 + $0x590] sm:$0xff]
  %v197 = vld [vmem:[%s0 + $0x598] sm:$0xff]
  %v198 = vld [vmem:[%s0 + $0x5a0] sm:$0xff]
  %v199 = vld [vmem:[%s0 + $0x5a8] sm:$0xff]
  %v200 = vld [vmem:[%s0 + $0x5b0] sm:$0x11]
  %v201 = vld [vmem:[%s1] sm:$0xf]
  %v202 = vld [vmem:[%s1 + $0x4] sm:$0xf]
  %v203 = vld [vmem:[%s1 + $0x8] sm:$0xf]
  %v204 = vld [vmem:[%s1 + $0xc] sm:$0xf]
  %v205 = vld [vmem:[%s1 + $0x10] sm:$0xf]
  %v206 = vld [vmem:[%s1 + $0x14] sm:$0xf]
  %v207 = vld [vmem:[%s1 + $0x18] sm:$0xf]
  %v208 = vld [vmem:[%s1 + $0x1c] sm:$0xf]
  %v209 = vld [vmem:[%s1 + $0x20] sm:$0xf]
  %v210 = vld [vmem:[%s1 + $0x24] sm:$0xf]
  %v211 = vld [vmem:[%s1 + $0x28] sm:$0xf]
  %v212 = vld [vmem:[%s1 + $0x2c] sm:$0xf]
  %v213 = vld [vmem:[%s1 + $0x30] sm:$0xf]
  %v214 = vld [vmem:[%s1 + $0x34] sm:$0xf]
  %v215 = vld [vmem:[%s1 + $0x38] sm:$0xf]
  %v216 = vld [vmem:[%s1 + $0x3c] sm:$0xf]
  %v217 = vld [vmem:[%s1 + $0x40] sm:$0xf]
  %v218 = vld [vmem:[%s1 + $0x44] sm:$0xf]
  %v219 = vld [vmem:[%s1 + $0x48] sm:$0xf]
  %v220 = vld [vmem:[%s1 + $0x4c] sm:$0xf]
  %v221 = vld [vmem:[%s1 + $0x50] sm:$0xf]
  %v222 = vld [vmem:[%s1 + $0x54] sm:$0xf]
  %v223 = vld [vmem:[%s1 + $0x58] sm:$0xf]
  %v224 = vld [vmem:[%s1 + $0x5c] sm:$0xf]
  %v225 = vld [vmem:[%s1 + $0x60] sm:$0xf]
  %v226 = vld [vmem:[%s1 + $0x64] sm:$0xf]
  %v227 = vld [vmem:[%s1 + $0x68] sm:$0xf]
  %v228 = vld [vmem:[%s1 + $0x6c] sm:$0xf]
  %v229 = vld [vmem:[%s1 + $0x70] sm:$0xf]
  %v230 = vld [vmem:[%s1 + $0x74] sm:$0xf]
  %v231 = vld [vmem:[%s1 + $0x78] sm:$0xf]
  %v232 = vld [vmem:[%s1 + $0x7c] sm:$0xf]
  %v233 = vld [vmem:[%s2] sm:$0x1]
  %v235 = vlaneseq
  %v236 = vshrl.u32 %v235, 7
  %v237 = vsub.s32 0, %v236
  %v238 = vrot.slane %v233, %v237
  %v423 = vunpack.c.l.b16 %v18
  %v424 = vunpack.c.h.b16 %v18
  %v425 = vunpack.c.l.b16 %v19
  %v426 = vunpack.c.h.b16 %v19
  %v427 = vunpack.c.l.b16 %v20
  %v428 = vunpack.c.h.b16 %v20
  %v429 = vunpack.c.l.b16 %v21
  %v430 = vunpack.c.h.b16 %v21
  %v431 = vunpack.c.l.b16 %v22
  %v432 = vunpack.c.h.b16 %v22
  %v433 = vunpack.c.l.b16 %v23
  %v434 = vunpack.c.h.b16 %v23
  %v435 = vunpack.c.l.b16 %v24
  %v436 = vunpack.c.h.b16 %v24
  %v437 = vunpack.c.l.b16 %v25
  %v438 = vunpack.c.h.b16 %v25
  %v439 = vunpack.c.l.b16 %v26
  %v440 = vunpack.c.h.b16 %v26
  %v441 = vunpack.c.l.b16 %v27
  %v442 = vunpack.c.h.b16 %v27
  %v443 = vunpack.c.l.b16 %v28
  %v444 = vunpack.c.h.b16 %v28
  %v445 = vunpack.c.l.b16 %v29
  %v446 = vunpack.c.h.b16 %v29
  %v447 = vunpack.c.l.b16 %v30
  %v448 = vunpack.c.h.b16 %v30
  %v449 = vunpack.c.l.b16 %v31
  %v450 = vunpack.c.h.b16 %v31
  %v451 = vunpack.c.l.b16 %v32
  %v452 = vunpack.c.h.b16 %v32
  %v453 = vunpack.c.l.b16 %v33
  %v454 = vunpack.c.h.b16 %v33
  %v455 = vunpack.c.l.b16 %v34
  %v456 = vunpack.c.h.b16 %v34
  %v457 = vunpack.c.l.b16 %v35
  %v458 = vunpack.c.h.b16 %v35
  %v459 = vunpack.c.l.b16 %v36
  %v460 = vunpack.c.h.b16 %v36
  %v461 = vunpack.c.l.b16 %v37
  %v462 = vunpack.c.h.b16 %v37
  %v463 = vunpack.c.l.b16 %v38
  %v464 = vunpack.c.h.b16 %v38
  %v465 = vunpack.c.l.b16 %v39
  %v466 = vunpack.c.h.b16 %v39
  %v467 = vunpack.c.l.b16 %v40
  %v468 = vunpack.c.h.b16 %v40
  %v469 = vunpack.c.l.b16 %v41
  %v470 = vunpack.c.h.b16 %v41
  %v471 = vunpack.c.l.b16 %v42
  %v472 = vunpack.c.h.b16 %v42
  %v473 = vunpack.c.l.b16 %v43
  %v474 = vunpack.c.h.b16 %v43
  %v475 = vunpack.c.l.b16 %v44
  %v476 = vunpack.c.h.b16 %v44
  %v477 = vunpack.c.l.b16 %v45
  %v478 = vunpack.c.h.b16 %v45
  %v479 = vunpack.c.l.b16 %v46
  %v480 = vunpack.c.h.b16 %v46
  %v481 = vunpack.c.l.b16 %v47
  %v482 = vunpack.c.h.b16 %v47
  %v483 = vunpack.c.l.b16 %v48
  %v484 = vunpack.c.h.b16 %v48
  %v485 = vunpack.c.l.b16 %v49
  %v486 = vunpack.c.h.b16 %v49
  %v487 = vunpack.c.l.b16 %v50
  %v488 = vunpack.c.h.b16 %v50
  %v489 = vunpack.c.l.b16 %v51
  %v490 = vunpack.c.h.b16 %v51
  %v491 = vunpack.c.l.b16 %v52
  %v492 = vunpack.c.h.b16 %v52
  %v493 = vunpack.c.l.b16 %v53
  %v494 = vunpack.c.h.b16 %v53
  %v495 = vunpack.c.l.b16 %v54
  %v496 = vunpack.c.h.b16 %v54
  %v497 = vunpack.c.l.b16 %v55
  %v498 = vunpack.c.h.b16 %v55
  %v499 = vunpack.c.l.b16 %v56
  %v500 = vunpack.c.h.b16 %v56
  %v501 = vunpack.c.l.b16 %v57
  %v502 = vunpack.c.h.b16 %v57
  %v503 = vunpack.c.l.b16 %v58
  %v504 = vunpack.c.h.b16 %v58
  %v505 = vunpack.c.l.b16 %v59
  %v506 = vunpack.c.h.b16 %v59
  %v507 = vunpack.c.l.b16 %v60
  %v508 = vunpack.c.h.b16 %v60
  %v509 = vunpack.c.l.b16 %v61
  %v510 = vunpack.c.h.b16 %v61
  %v511 = vunpack.c.l.b16 %v62
  %v512 = vunpack.c.h.b16 %v62
  %v513 = vunpack.c.l.b16 %v63
  %v514 = vunpack.c.h.b16 %v63
  %v515 = vunpack.c.l.b16 %v64
  %v516 = vunpack.c.h.b16 %v64
  %v517 = vunpack.c.l.b16 %v65
  %v518 = vunpack.c.h.b16 %v65
  %v519 = vunpack.c.l.b16 %v66
  %v520 = vunpack.c.h.b16 %v66
  %v521 = vunpack.c.l.b16 %v67
  %v522 = vunpack.c.h.b16 %v67
  %v523 = vunpack.c.l.b16 %v68
  %v524 = vunpack.c.h.b16 %v68
  %v525 = vunpack.c.l.b16 %v69
  %v526 = vunpack.c.h.b16 %v69
  %v527 = vunpack.c.l.b16 %v70
  %v528 = vunpack.c.h.b16 %v70
  %v529 = vunpack.c.l.b16 %v71
  %v530 = vunpack.c.h.b16 %v71
  %v531 = vunpack.c.l.b16 %v72
  %v532 = vunpack.c.h.b16 %v72
  %v533 = vunpack.c.l.b16 %v73
  %v534 = vunpack.c.h.b16 %v73
  %v535 = vunpack.c.l.b16 %v74
  %v536 = vunpack.c.h.b16 %v74
  %v537 = vunpack.c.l.b16 %v75
  %v538 = vunpack.c.h.b16 %v75
  %v539 = vunpack.c.l.b16 %v76
  %v540 = vunpack.c.h.b16 %v76
  %v541 = vunpack.c.l.b16 %v77
  %v542 = vunpack.c.h.b16 %v77
  %v543 = vunpack.c.l.b16 %v78
  %v544 = vunpack.c.h.b16 %v78
  %v545 = vunpack.c.l.b16 %v79
  %v546 = vunpack.c.h.b16 %v79
  %v547 = vunpack.c.l.b16 %v80
  %v548 = vunpack.c.h.b16 %v80
  %v549 = vunpack.c.l.b16 %v81
  %v550 = vunpack.c.h.b16 %v81
  %v551 = vunpack.c.l.b16 %v82
  %v552 = vunpack.c.h.b16 %v82
  %v553 = vunpack.c.l.b16 %v83
  %v554 = vunpack.c.h.b16 %v83
  %v555 = vunpack.c.l.b16 %v84
  %v556 = vunpack.c.h.b16 %v84
  %v557 = vunpack.c.l.b16 %v85
  %v558 = vunpack.c.h.b16 %v85
  %v559 = vunpack.c.l.b16 %v86
  %v560 = vunpack.c.h.b16 %v86
  %v561 = vunpack.c.l.b16 %v87
  %v562 = vunpack.c.h.b16 %v87
  %v563 = vunpack.c.l.b16 %v88
  %v564 = vunpack.c.h.b16 %v88
  %v565 = vunpack.c.l.b16 %v89
  %v566 = vunpack.c.h.b16 %v89
  %v567 = vunpack.c.l.b16 %v90
  %v568 = vunpack.c.h.b16 %v90
  %v569 = vunpack.c.l.b16 %v91
  %v570 = vunpack.c.h.b16 %v91
  %v571 = vunpack.c.l.b16 %v92
  %v572 = vunpack.c.h.b16 %v92
  %v573 = vunpack.c.l.b16 %v93
  %v574 = vunpack.c.h.b16 %v93
  %v575 = vunpack.c.l.b16 %v94
  %v576 = vunpack.c.h.b16 %v94
  %v577 = vunpack.c.l.b16 %v95
  %v578 = vunpack.c.h.b16 %v95
  %v579 = vunpack.c.l.b16 %v96
  %v580 = vunpack.c.h.b16 %v96
  %v581 = vunpack.c.l.b16 %v97
  %v582 = vunpack.c.h.b16 %v97
  %v583 = vunpack.c.l.b16 %v98
  %v584 = vunpack.c.h.b16 %v98
  %v585 = vunpack.c.l.b16 %v99
  %v586 = vunpack.c.h.b16 %v99
  %v587 = vunpack.c.l.b16 %v100
  %v588 = vunpack.c.h.b16 %v100
  %v589 = vunpack.c.l.b16 %v101
  %v590 = vunpack.c.h.b16 %v101
  %v591 = vunpack.c.l.b16 %v102
  %v592 = vunpack.c.h.b16 %v102
  %v593 = vunpack.c.l.b16 %v103
  %v594 = vunpack.c.h.b16 %v103
  %v595 = vunpack.c.l.b16 %v104
  %v596 = vunpack.c.h.b16 %v104
  %v597 = vunpack.c.l.b16 %v105
  %v598 = vunpack.c.h.b16 %v105
  %v599 = vunpack.c.l.b16 %v106
  %v600 = vunpack.c.h.b16 %v106
  %v601 = vunpack.c.l.b16 %v107
  %v602 = vunpack.c.h.b16 %v107
  %v603 = vunpack.c.l.b16 %v108
  %v604 = vunpack.c.h.b16 %v108
  %v605 = vunpack.c.l.b16 %v109
  %v606 = vunpack.c.h.b16 %v109
  %v607 = vunpack.c.l.b16 %v110
  %v608 = vunpack.c.h.b16 %v110
  %v609 = vunpack.c.l.b16 %v111
  %v610 = vunpack.c.h.b16 %v111
  %v611 = vunpack.c.l.b16 %v112
  %v612 = vunpack.c.h.b16 %v112
  %v613 = vunpack.c.l.b16 %v113
  %v614 = vunpack.c.h.b16 %v113
  %v615 = vunpack.c.l.b16 %v114
  %v616 = vunpack.c.h.b16 %v114
  %v617 = vunpack.c.l.b16 %v115
  %v618 = vunpack.c.h.b16 %v115
  %v619 = vunpack.c.l.b16 %v116
  %v620 = vunpack.c.h.b16 %v116
  %v621 = vunpack.c.l.b16 %v117
  %v622 = vunpack.c.h.b16 %v117
  %v623 = vunpack.c.l.b16 %v118
  %v624 = vunpack.c.h.b16 %v118
  %v625 = vunpack.c.l.b16 %v119
  %v626 = vunpack.c.h.b16 %v119
  %v627 = vunpack.c.l.b16 %v120
  %v628 = vunpack.c.h.b16 %v120
  %v629 = vunpack.c.l.b16 %v121
  %v630 = vunpack.c.h.b16 %v121
  %v631 = vunpack.c.l.b16 %v122
  %v632 = vunpack.c.h.b16 %v122
  %v633 = vunpack.c.l.b16 %v123
  %v634 = vunpack.c.h.b16 %v123
  %v635 = vunpack.c.l.b16 %v124
  %v636 = vunpack.c.h.b16 %v124
  %v637 = vunpack.c.l.b16 %v125
  %v638 = vunpack.c.h.b16 %v125
  %v639 = vunpack.c.l.b16 %v126
  %v640 = vunpack.c.h.b16 %v126
  %v641 = vunpack.c.l.b16 %v127
  %v642 = vunpack.c.h.b16 %v127
  %v643 = vunpack.c.l.b16 %v128
  %v644 = vunpack.c.h.b16 %v128
  %v645 = vunpack.c.l.b16 %v129
  %v646 = vunpack.c.h.b16 %v129
  %v647 = vunpack.c.l.b16 %v130
  %v648 = vunpack.c.h.b16 %v130
  %v649 = vunpack.c.l.b16 %v131
  %v650 = vunpack.c.h.b16 %v131
  %v651 = vunpack.c.l.b16 %v132
  %v652 = vunpack.c.h.b16 %v132
  %v653 = vunpack.c.l.b16 %v133
  %v654 = vunpack.c.h.b16 %v133
  %v655 = vunpack.c.l.b16 %v134
  %v656 = vunpack.c.h.b16 %v134
  %v657 = vunpack.c.l.b16 %v135
  %v658 = vunpack.c.h.b16 %v135
  %v659 = vunpack.c.l.b16 %v136
  %v660 = vunpack.c.h.b16 %v136
  %v661 = vunpack.c.l.b16 %v137
  %v662 = vunpack.c.h.b16 %v137
  %v663 = vunpack.c.l.b16 %v138
  %v664 = vunpack.c.h.b16 %v138
  %v665 = vunpack.c.l.b16 %v139
  %v666 = vunpack.c.h.b16 %v139
  %v667 = vunpack.c.l.b16 %v140
  %v668 = vunpack.c.h.b16 %v140
  %v669 = vunpack.c.l.b16 %v141
  %v670 = vunpack.c.h.b16 %v141
  %v671 = vunpack.c.l.b16 %v142
  %v672 = vunpack.c.h.b16 %v142
  %v673 = vunpack.c.l.b16 %v143
  %v674 = vunpack.c.h.b16 %v143
  %v675 = vunpack.c.l.b16 %v144
  %v676 = vunpack.c.h.b16 %v144
  %v677 = vunpack.c.l.b16 %v145
  %v678 = vunpack.c.h.b16 %v145
  %v679 = vunpack.c.l.b16 %v146
  %v680 = vunpack.c.h.b16 %v146
  %v681 = vunpack.c.l.b16 %v147
  %v682 = vunpack.c.h.b16 %v147
  %v683 = vunpack.c.l.b16 %v148
  %v684 = vunpack.c.h.b16 %v148
  %v685 = vunpack.c.l.b16 %v149
  %v686 = vunpack.c.h.b16 %v149
  %v687 = vunpack.c.l.b16 %v150
  %v688 = vunpack.c.h.b16 %v150
  %v689 = vunpack.c.l.b16 %v151
  %v690 = vunpack.c.h.b16 %v151
  %v691 = vunpack.c.l.b16 %v152
  %v692 = vunpack.c.h.b16 %v152
  %v693 = vunpack.c.l.b16 %v153
  %v694 = vunpack.c.h.b16 %v153
  %v695 = vunpack.c.l.b16 %v154
  %v696 = vunpack.c.h.b16 %v154
  %v697 = vunpack.c.l.b16 %v155
  %v698 = vunpack.c.h.b16 %v155
  %v699 = vunpack.c.l.b16 %v156
  %v700 = vunpack.c.h.b16 %v156
  %v701 = vunpack.c.l.b16 %v157
  %v702 = vunpack.c.h.b16 %v157
  %v703 = vunpack.c.l.b16 %v158
  %v704 = vunpack.c.h.b16 %v158
  %v705 = vunpack.c.l.b16 %v159
  %v706 = vunpack.c.h.b16 %v159
  %v707 = vunpack.c.l.b16 %v160
  %v708 = vunpack.c.h.b16 %v160
  %v709 = vunpack.c.l.b16 %v161
  %v710 = vunpack.c.h.b16 %v161
  %v711 = vunpack.c.l.b16 %v162
  %v712 = vunpack.c.h.b16 %v162
  %v713 = vunpack.c.l.b16 %v163
  %v714 = vunpack.c.h.b16 %v163
  %v715 = vunpack.c.l.b16 %v164
  %v716 = vunpack.c.h.b16 %v164
  %v717 = vunpack.c.l.b16 %v165
  %v718 = vunpack.c.h.b16 %v165
  %v719 = vunpack.c.l.b16 %v166
  %v720 = vunpack.c.h.b16 %v166
  %v721 = vunpack.c.l.b16 %v167
  %v722 = vunpack.c.h.b16 %v167
  %v723 = vunpack.c.l.b16 %v168
  %v724 = vunpack.c.h.b16 %v168
  %v725 = vunpack.c.l.b16 %v169
  %v726 = vunpack.c.h.b16 %v169
  %v727 = vunpack.c.l.b16 %v170
  %v728 = vunpack.c.h.b16 %v170
  %v729 = vunpack.c.l.b16 %v171
  %v730 = vunpack.c.h.b16 %v171
  %v731 = vunpack.c.l.b16 %v172
  %v732 = vunpack.c.h.b16 %v172
  %v733 = vunpack.c.l.b16 %v173
  %v734 = vunpack.c.h.b16 %v173
  %v735 = vunpack.c.l.b16 %v174
  %v736 = vunpack.c.h.b16 %v174
  %v737 = vunpack.c.l.b16 %v175
  %v738 = vunpack.c.h.b16 %v175
  %v739 = vunpack.c.l.b16 %v176
  %v740 = vunpack.c.h.b16 %v176
  %v741 = vunpack.c.l.b16 %v177
  %v742 = vunpack.c.h.b16 %v177
  %v743 = vunpack.c.l.b16 %v178
  %v744 = vunpack.c.h.b16 %v178
  %v745 = vunpack.c.l.b16 %v179
  %v746 = vunpack.c.h.b16 %v179
  %v747 = vunpack.c.l.b16 %v180
  %v748 = vunpack.c.h.b16 %v180
  %v749 = vunpack.c.l.b16 %v181
  %v750 = vunpack.c.h.b16 %v181
  %v751 = vunpack.c.l.b16 %v182
  %v752 = vunpack.c.h.b16 %v182
  %v753 = vunpack.c.l.b16 %v183
  %v754 = vunpack.c.h.b16 %v183
  %v755 = vunpack.c.l.b16 %v184
  %v756 = vunpack.c.h.b16 %v184
  %v757 = vunpack.c.l.b16 %v185
  %v758 = vunpack.c.h.b16 %v185
  %v759 = vunpack.c.l.b16 %v186
  %v760 = vunpack.c.h.b16 %v186
  %v761 = vunpack.c.l.b16 %v187
  %v762 = vunpack.c.h.b16 %v187
  %v763 = vunpack.c.l.b16 %v188
  %v764 = vunpack.c.h.b16 %v188
  %v765 = vunpack.c.l.b16 %v189
  %v766 = vunpack.c.h.b16 %v189
  %v767 = vunpack.c.l.b16 %v190
  %v768 = vunpack.c.h.b16 %v190
  %v769 = vunpack.c.l.b16 %v191
  %v770 = vunpack.c.h.b16 %v191
  %v771 = vunpack.c.l.b16 %v192
  %v772 = vunpack.c.h.b16 %v192
  %v773 = vunpack.c.l.b16 %v193
  %v774 = vunpack.c.h.b16 %v193
  %v775 = vunpack.c.l.b16 %v194
  %v776 = vunpack.c.h.b16 %v194
  %v777 = vunpack.c.l.b16 %v195
  %v778 = vunpack.c.h.b16 %v195
  %v779 = vunpack.c.l.b16 %v196
  %v780 = vunpack.c.h.b16 %v196
  %v781 = vunpack.c.l.b16 %v197
  %v782 = vunpack.c.h.b16 %v197
  %v783 = vunpack.c.l.b16 %v198
  %v784 = vunpack.c.h.b16 %v198
  %v785 = vunpack.c.l.b16 %v199
  %v786 = vunpack.c.h.b16 %v199
  %v787 = vunpack.c.l.b16 %v200
  %v788 = vunpack.c.h.b16 %v200
  %v789 = vpack.c.b16 %v425, %v423
  %v790 = vpack.c.b16 %v426, %v424
  %v791 = vpack.c.b16 %v429, %v427
  %v792 = vpack.c.b16 %v430, %v428
  %v793 = vpack.c.b16 %v433, %v431
  %v794 = vpack.c.b16 %v434, %v432
  %v795 = vpack.c.b16 %v437, %v435
  %v796 = vpack.c.b16 %v438, %v436
  %v797 = vpack.c.b16 %v441, %v439
  %v798 = vpack.c.b16 %v442, %v440
  %v799 = vpack.c.b16 %v445, %v443
  %v800 = vpack.c.b16 %v446, %v444
  %v801 = vpack.c.b16 %v449, %v447
  %v802 = vpack.c.b16 %v450, %v448
  %v803 = vpack.c.b16 %v453, %v451
  %v804 = vpack.c.b16 %v454, %v452
  %v805 = vpack.c.b16 %v457, %v455
  %v806 = vpack.c.b16 %v458, %v456
  %v807 = vpack.c.b16 %v461, %v459
  %v808 = vpack.c.b16 %v462, %v460
  %v809 = vpack.c.b16 %v465, %v463
  %v810 = vpack.c.b16 %v466, %v464
  %v811 = vpack.c.b16 %v469, %v467
  %v812 = vpack.c.b16 %v470, %v468
  %v813 = vpack.c.b16 %v473, %v471
  %v814 = vpack.c.b16 %v474, %v472
  %v815 = vpack.c.b16 %v477, %v475
  %v816 = vpack.c.b16 %v478, %v476
  %v817 = vpack.c.b16 %v481, %v479
  %v818 = vpack.c.b16 %v482, %v480
  %v819 = vpack.c.b16 %v485, %v483
  %v820 = vpack.c.b16 %v486, %v484
  %v821 = vpack.c.b16 %v489, %v487
  %v822 = vpack.c.b16 %v490, %v488
  %v823 = vpack.c.b16 %v493, %v491
  %v824 = vpack.c.b16 %v494, %v492
  %v825 = vpack.c.b16 %v497, %v495
  %v826 = vpack.c.b16 %v498, %v496
  %v827 = vpack.c.b16 %v501, %v499
  %v828 = vpack.c.b16 %v502, %v500
  %v829 = vpack.c.b16 %v505, %v503
  %v830 = vpack.c.b16 %v506, %v504
  %v831 = vpack.c.b16 %v509, %v507
  %v832 = vpack.c.b16 %v510, %v508
  %v833 = vpack.c.b16 %v513, %v511
  %v834 = vpack.c.b16 %v514, %v512
  %v835 = vpack.c.b16 %v517, %v515
  %v836 = vpack.c.b16 %v518, %v516
  %v837 = vpack.c.b16 %v521, %v519
  %v838 = vpack.c.b16 %v522, %v520
  %v839 = vpack.c.b16 %v525, %v523
  %v840 = vpack.c.b16 %v526, %v524
  %v841 = vpack.c.b16 %v529, %v527
  %v842 = vpack.c.b16 %v530, %v528
  %v843 = vpack.c.b16 %v533, %v531
  %v844 = vpack.c.b16 %v534, %v532
  %v845 = vpack.c.b16 %v537, %v535
  %v846 = vpack.c.b16 %v538, %v536
  %v847 = vpack.c.b16 %v541, %v539
  %v848 = vpack.c.b16 %v542, %v540
  %v849 = vpack.c.b16 %v545, %v543
  %v850 = vpack.c.b16 %v546, %v544
  %v851 = vpack.c.b16 %v549, %v547
  %v852 = vpack.c.b16 %v550, %v548
  %v853 = vpack.c.b16 %v553, %v551
  %v854 = vpack.c.b16 %v554, %v552
  %v855 = vpack.c.b16 %v557, %v555
  %v856 = vpack.c.b16 %v558, %v556
  %v857 = vpack.c.b16 %v561, %v559
  %v858 = vpack.c.b16 %v562, %v560
  %v859 = vpack.c.b16 %v565, %v563
  %v860 = vpack.c.b16 %v566, %v564
  %v861 = vpack.c.b16 %v569, %v567
  %v862 = vpack.c.b16 %v570, %v568
  %v863 = vpack.c.b16 %v573, %v571
  %v864 = vpack.c.b16 %v574, %v572
  %v865 = vpack.c.b16 %v577, %v575
  %v866 = vpack.c.b16 %v578, %v576
  %v867 = vpack.c.b16 %v581, %v579
  %v868 = vpack.c.b16 %v582, %v580
  %v869 = vpack.c.b16 %v585, %v583
  %v870 = vpack.c.b16 %v586, %v584
  %v871 = vpack.c.b16 %v589, %v587
  %v872 = vpack.c.b16 %v590, %v588
  %v873 = vpack.c.b16 %v593, %v591
  %v874 = vpack.c.b16 %v594, %v592
  %v875 = vpack.c.b16 %v597, %v595
  %v876 = vpack.c.b16 %v598, %v596
  %v877 = vpack.c.b16 %v601, %v599
  %v878 = vpack.c.b16 %v602, %v600
  %v879 = vpack.c.b16 %v605, %v603
  %v880 = vpack.c.b16 %v606, %v604
  %v881 = vpack.c.b16 %v609, %v607
  %v882 = vpack.c.b16 %v610, %v608
  %v883 = vpack.c.b16 %v613, %v611
  %v884 = vpack.c.b16 %v614, %v612
  %v885 = vpack.c.b16 %v617, %v615
  %v886 = vpack.c.b16 %v618, %v616
  %v887 = vpack.c.b16 %v621, %v619
  %v888 = vpack.c.b16 %v622, %v620
  %v889 = vpack.c.b16 %v625, %v623
  %v890 = vpack.c.b16 %v626, %v624
  %v891 = vpack.c.b16 %v629, %v627
  %v892 = vpack.c.b16 %v630, %v628
  %v893 = vpack.c.b16 %v633, %v631
  %v894 = vpack.c.b16 %v634, %v632
  %v895 = vpack.c.b16 %v637, %v635
  %v896 = vpack.c.b16 %v638, %v636
  %v897 = vpack.c.b16 %v641, %v639
  %v898 = vpack.c.b16 %v642, %v640
  %v899 = vpack.c.b16 %v645, %v643
  %v900 = vpack.c.b16 %v646, %v644
  %v901 = vpack.c.b16 %v649, %v647
  %v902 = vpack.c.b16 %v650, %v648
  %v903 = vpack.c.b16 %v653, %v651
  %v904 = vpack.c.b16 %v654, %v652
  %v905 = vpack.c.b16 %v657, %v655
  %v906 = vpack.c.b16 %v658, %v656
  %v907 = vpack.c.b16 %v661, %v659
  %v908 = vpack.c.b16 %v662, %v660
  %v909 = vpack.c.b16 %v665, %v663
  %v910 = vpack.c.b16 %v666, %v664
  %v911 = vpack.c.b16 %v669, %v667
  %v912 = vpack.c.b16 %v670, %v668
  %v913 = vpack.c.b16 %v673, %v671
  %v914 = vpack.c.b16 %v674, %v672
  %v915 = vpack.c.b16 %v677, %v675
  %v916 = vpack.c.b16 %v678, %v676
  %v917 = vpack.c.b16 %v681, %v679
  %v918 = vpack.c.b16 %v682, %v680
  %v919 = vpack.c.b16 %v685, %v683
  %v920 = vpack.c.b16 %v686, %v684
  %v921 = vpack.c.b16 %v689, %v687
  %v922 = vpack.c.b16 %v690, %v688
  %v923 = vpack.c.b16 %v693, %v691
  %v924 = vpack.c.b16 %v694, %v692
  %v925 = vpack.c.b16 %v697, %v695
  %v926 = vpack.c.b16 %v698, %v696
  %v927 = vpack.c.b16 %v701, %v699
  %v928 = vpack.c.b16 %v702, %v700
  %v929 = vpack.c.b16 %v705, %v703
  %v930 = vpack.c.b16 %v706, %v704
  %v931 = vpack.c.b16 %v709, %v707
  %v932 = vpack.c.b16 %v710, %v708
  %v933 = vpack.c.b16 %v713, %v711
  %v934 = vpack.c.b16 %v714, %v712
  %v935 = vpack.c.b16 %v717, %v715
  %v936 = vpack.c.b16 %v718, %v716
  %v937 = vpack.c.b16 %v721, %v719
  %v938 = vpack.c.b16 %v722, %v720
  %v939 = vpack.c.b16 %v725, %v723
  %v940 = vpack.c.b16 %v726, %v724
  %v941 = vpack.c.b16 %v729, %v727
  %v942 = vpack.c.b16 %v730, %v728
  %v943 = vpack.c.b16 %v733, %v731
  %v944 = vpack.c.b16 %v734, %v732
  %v945 = vpack.c.b16 %v737, %v735
  %v946 = vpack.c.b16 %v738, %v736
  %v947 = vpack.c.b16 %v741, %v739
  %v948 = vpack.c.b16 %v742, %v740
  %v949 = vpack.c.b16 %v745, %v743
  %v950 = vpack.c.b16 %v746, %v744
  %v951 = vpack.c.b16 %v749, %v747
  %v952 = vpack.c.b16 %v750, %v748
  %v953 = vpack.c.b16 %v753, %v751
  %v954 = vpack.c.b16 %v754, %v752
  %v955 = vpack.c.b16 %v757, %v755
  %v956 = vpack.c.b16 %v758, %v756
  %v957 = vpack.c.b16 %v761, %v759
  %v958 = vpack.c.b16 %v762, %v760
  %v959 = vpack.c.b16 %v765, %v763
  %v960 = vpack.c.b16 %v766, %v764
  %v961 = vpack.c.b16 %v769, %v767
  %v962 = vpack.c.b16 %v770, %v768
  %v963 = vpack.c.b16 %v773, %v771
  %v964 = vpack.c.b16 %v774, %v772
  %v965 = vpack.c.b16 %v777, %v775
  %v966 = vpack.c.b16 %v778, %v776
  %v967 = vpack.c.b16 %v781, %v779
  %v968 = vpack.c.b16 %v782, %v780
  %v969 = vpack.c.b16 %v785, %v783
  %v970 = vpack.c.b16 %v786, %v784
  %v971 = vpack.c.b16 %v787, %v787
  %v972 = vpack.c.b16 %v788, %v788
  %v1189 = vunpack.c.l.b16 %v201
  %v1190 = vunpack.c.l.b16 %v202
  %v1191 = vunpack.c.l.b16 %v203
  %v1192 = vunpack.c.l.b16 %v204
  %v1193 = vunpack.c.l.b16 %v205
  %v1194 = vunpack.c.l.b16 %v206
  %v1195 = vunpack.c.l.b16 %v207
  %v1196 = vunpack.c.l.b16 %v208
  %v1197 = vunpack.c.l.b16 %v209
  %v1198 = vunpack.c.l.b16 %v210
  %v1199 = vunpack.c.l.b16 %v211
  %v1200 = vunpack.c.l.b16 %v212
  %v1201 = vunpack.c.l.b16 %v213
  %v1202 = vunpack.c.l.b16 %v214
  %v1203 = vunpack.c.l.b16 %v215
  %v1204 = vunpack.c.l.b16 %v216
  %v1205 = vunpack.c.l.b16 %v217
  %v1206 = vunpack.c.l.b16 %v218
  %v1207 = vunpack.c.l.b16 %v219
  %v1208 = vunpack.c.l.b16 %v220
  %v1209 = vunpack.c.l.b16 %v221
  %v1210 = vunpack.c.l.b16 %v222
  %v1211 = vunpack.c.l.b16 %v223
  %v1212 = vunpack.c.l.b16 %v224
  %v1213 = vunpack.c.l.b16 %v225
  %v1214 = vunpack.c.l.b16 %v226
  %v1215 = vunpack.c.l.b16 %v227
  %v1216 = vunpack.c.l.b16 %v228
  %v1217 = vunpack.c.l.b16 %v229
  %v1218 = vunpack.c.l.b16 %v230
  %v1219 = vunpack.c.l.b16 %v231
  %v1220 = vunpack.c.l.b16 %v232
  %v1221 = vpack.c.b16 %v1190, %v1189
  %v1222 = vpack.c.b16 %v1192, %v1191
  %v1223 = vpack.c.b16 %v1194, %v1193
  %v1224 = vpack.c.b16 %v1196, %v1195
  %v1225 = vpack.c.b16 %v1198, %v1197
  %v1226 = vpack.c.b16 %v1200, %v1199
  %v1227 = vpack.c.b16 %v1202, %v1201
  %v1228 = vpack.c.b16 %v1204, %v1203
  %v1229 = vpack.c.b16 %v1206, %v1205
  %v1230 = vpack.c.b16 %v1208, %v1207
  %v1231 = vpack.c.b16 %v1210, %v1209
  %v1232 = vpack.c.b16 %v1212, %v1211
  %v1233 = vpack.c.b16 %v1214, %v1213
  %v1234 = vpack.c.b16 %v1216, %v1215
  %v1235 = vpack.c.b16 %v1218, %v1217
  %v1236 = vpack.c.b16 %v1220, %v1219
  %1253 = vmatprep.subr.bf16.mxu0 0
  %1254 = vmatpush1.bf16.msra.mxu0 %v1221
  %1255 = vmatprep.subr.bf16.mxu0 0
  %1256 = vmatpush1.bf16.msra.mxu0 %v1222
  %1257 = vmatprep.subr.bf16.mxu0 0
  %1258 = vmatpush1.bf16.msra.mxu0 %v1223
  %1259 = vmatprep.subr.bf16.mxu0 0
  %1260 = vmatpush1.bf16.msra.mxu0 %v1224
  %1261 = vmatprep.subr.bf16.mxu0 0
  %1262 = vmatpush1.bf16.msra.mxu0 %v1225
  %1263 = vmatprep.subr.bf16.mxu0 0
  %1264 = vmatpush1.bf16.msra.mxu0 %v1226
  %1265 = vmatprep.subr.bf16.mxu0 0
  %1266 = vmatpush1.bf16.msra.mxu0 %v1227
  %1267 = vmatprep.subr.bf16.mxu0 0
  %1268 = vmatpush1.bf16.msra.mxu0 %v1228
  %1269 = vmatprep.subr.bf16.mxu0 0
  %1270 = vmatpush1.bf16.msra.mxu0 %v1229
  %1271 = vmatprep.subr.bf16.mxu0 0
  %1272 = vmatpush1.bf16.msra.mxu0 %v1230
  %1273 = vmatprep.subr.bf16.mxu0 0
  %1274 = vmatpush1.bf16.msra.mxu0 %v1231
  %1275 = vmatprep.subr.bf16.mxu0 0
  %1276 = vmatpush1.bf16.msra.mxu0 %v1232
  %1277 = vmatprep.subr.bf16.mxu0 0
  %1278 = vmatpush1.bf16.msra.mxu0 %v1233
  %1279 = vmatprep.subr.bf16.mxu0 0
  %1280 = vmatpush1.bf16.msra.mxu0 %v1234
  %1281 = vmatprep.subr.bf16.mxu0 0
  %1282 = vmatpush1.bf16.msra.mxu0 %v1235
  %1283 = vmatprep.subr.bf16.mxu0 0
  %1284 = vmatpush1.bf16.msra.mxu0 %v1236
  %1285 = vmatprep.mubr.bf16.mxu0 %v790
  %1286 = vmatmul.mubr.bf16.gmra.mrb[0].mxu0 %v789
  %v1287 = vpop.f32.mrb[0].mxu0
  %v1288 = vadd.f32 %v238, %v1287
  %v1289 = vpop.f32.mrb[0].mxu0
  %v1290 = vpop.f32.mrb[0].mxu0
  %v1291 = vadd.f32 %v238, %v1290
  %v1292 = vpop.f32.mrb[0].mxu0
  %1293 = vmatprep.mubr.bf16.mxu0 %v792
  %1294 = vmatmul.mubr.bf16.gmra.mrb[0].mxu0 %v791
  %v1295 = vpop.f32.mrb[0].mxu0
  %v1296 = vadd.f32 %v238, %v1295
  %v1297 = vpop.f32.mrb[0].mxu0
  %v1298 = vpop.f32.mrb[0].mxu0
  %v1299 = vadd.f32 %v238, %v1298
  %v1300 = vpop.f32.mrb[0].mxu0
  %1301 = vmatprep.mubr.bf16.mxu0 %v794
  %1302 = vmatmul.mubr.bf16.gmra.mrb[0].mxu0 %v793
  %v1303 = vpop.f32.mrb[0].mxu0
  %v1304 = vadd.f32 %v238, %v1303
  %v1305 = vpop.f32.mrb[0].mxu0
  %v1306 = vpop.f32.mrb[0].mxu0
  %v1307 = vadd.f32 %v238, %v1306
  %v1308 = vpop.f32.mrb[0].mxu0
  %1309 = vmatprep.mubr.bf16.mxu0 %v796
  %1310 = vmatmul.mubr.bf16.gmra.mrb[0].mxu0 %v795
  %v1311 = vpop.f32.mrb[0].mxu0
  %v1312 = vadd.f32 %v238, %v1311
  %v1313 = vpop.f32.mrb[0].mxu0
  %v1314 = vpop.f32.mrb[0].mxu0
  %v1315 = vadd.f32 %v238, %v1314
  %v1316 = vpop.f32.mrb[0].mxu0
  %1317 = vmatprep.mubr.bf16.mxu0 %v798
  %1318 = vmatmul.mubr.bf16.gmra.mrb[0].mxu0 %v797
  %v1319 = vpop.f32.mrb[0].mxu0
  %v1320 = vadd.f32 %v238, %v1319
  %v1321 = vpop.f32.mrb[0].mxu0
  %v1322 = vpop.f32.mrb[0].mxu0
  %v1323 = vadd.f32 %v238, %v1322
  %v1324 = vpop.f32.mrb[0].mxu0
  %1325 = vmatprep.mubr.bf16.mxu0 %v800
  %1326 = vmatmul.mubr.bf16.gmra.mrb[0].mxu0 %v799
  %v1327 = vpop.f32.mrb[0].mxu0
  %v1328 = vadd.f32 %v238, %v1327
  %v1329 = vpop.f32.mrb[0].mxu0
  %v1330 = vpop.f32.mrb[0].mxu0
  %v1331 = vadd.f32 %v238, %v1330
  %v1332 = vpop.f32.mrb[0].mxu0
  %1333 = vmatprep.mubr.bf16.mxu0 %v802
  %1334 = vmatmul.mubr.bf16.gmra.mrb[0].mxu0 %v801
  %v1335 = vpop.f32.mrb[0].mxu0
  %v1336 = vadd.f32 %v238, %v1335
  %v1337 = vpop.f32.mrb[0].mxu0
  %v1338 = vpop.f32.mrb[0].mxu0
  %v1339 = vadd.f32 %v238, %v1338
  %v1340 = vpop.f32.mrb[0].mxu0
  %1341 = vmatprep.mubr.bf16.mxu0 %v804
  %1342 = vmatmul.mubr.bf16.gmra.mrb[0].mxu0 %v803
  %v1343 = vpop.f32.mrb[0].mxu0
  %v1344 = vadd.f32 %v238, %v1343
  %v1345 = vpop.f32.mrb[0].mxu0
  %v1346 = vpop.f32.mrb[0].mxu0
  %v1347 = vadd.f32 %v238, %v1346
  %v1348 = vpop.f32.mrb[0].mxu0
  %1349 = vmatprep.mubr.bf16.mxu0 %v806
  %1350 = vmatmul.mubr.bf16.gmra.mrb[0].mxu0 %v805
  %v1351 = vpop.f32.mrb[0].mxu0
  %v1352 = vadd.f32 %v238, %v1351
  %v1353 = vpop.f32.mrb[0].mxu0
  %v1354 = vpop.f32.mrb[0].mxu0
  %v1355 = vadd.f32 %v238, %v1354
  %v1356 = vpop.f32.mrb[0].mxu0
  %1357 = vmatprep.mubr.bf16.mxu0 %v808
  %1358 = vmatmul.mubr.bf16.gmra.mrb[0].mxu0 %v807
  %v1359 = vpop.f32.mrb[0].mxu0
  %v1360 = vadd.f32 %v238, %v1359
  %v1361 = vpop.f32.mrb[0].mxu0
  %v1362 = vpop.f32.mrb[0].mxu0
  %v1363 = vadd.f32 %v238, %v1362
  %v1364 = vpop.f32.mrb[0].mxu0
  %1365 = vmatprep.mubr.bf16.mxu0 %v810
  %1366 = vmatmul.mubr.bf16.gmra.mrb[0].mxu0 %v809
  %v1367 = vpop.f32.mrb[0].mxu0
  %v1368 = vadd.f32 %v238, %v1367
  %v1369 = vpop.f32.mrb[0].mxu0
  %v1370 = vpop.f32.mrb[0].mxu0
  %v1371 = vadd.f32 %v238, %v1370
  %v1372 = vpop.f32.mrb[0].mxu0
  %1373 = vmatprep.mubr.bf16.mxu0 %v812
  %1374 = vmatmul.mubr.bf16.gmra.mrb[0].mxu0 %v811
  %v1375 = vpop.f32.mrb[0].mxu0
  %v1376 = vadd.f32 %v238, %v1375
  %v1377 = vpop.f32.mrb[0].mxu0
  %v1378 = vpop.f32.mrb[0].mxu0
  %v1379 = vadd.f32 %v238, %v1378
  %v1380 = vpop.f32.mrb[0].mxu0
  %1381 = vmatprep.mubr.bf16.mxu0 %v814
  %1382 = vmatmul.mubr.bf16.gmra.mrb[0].mxu0 %v813
  %v1383 = vpop.f32.mrb[0].mxu0
  %v1384 = vadd.f32 %v238, %v1383
  %v1385 = vpop.f32.mrb[0].mxu0
  %v1386 = vpop.f32.mrb[0].mxu0
  %v1387 = vadd.f32 %v238, %v1386
  %v1388 = vpop.f32.mrb[0].mxu0
  %1389 = vmatprep.mubr.bf16.mxu0 %v816
  %1390 = vmatmul.mubr.bf16.gmra.mrb[0].mxu0 %v815
  %v1391 = vpop.f32.mrb[0].mxu0
  %v1392 = vadd.f32 %v238, %v1391
  %v1393 = vpop.f32.mrb[0].mxu0
  %v1394 = vpop.f32.mrb[0].mxu0
  %v1395 = vadd.f32 %v238, %v1394
  %v1396 = vpop.f32.mrb[0].mxu0
  %1397 = vmatprep.mubr.bf16.mxu0 %v818
  %1398 = vmatmul.mubr.bf16.gmra.mrb[0].mxu0 %v817
  %v1399 = vpop.f32.mrb[0].mxu0
  %v1400 = vadd.f32 %v238, %v1399
  %v1401 = vpop.f32.mrb[0].mxu0
  %v1402 = vpop.f32.mrb[0].mxu0
  %v1403 = vadd.f32 %v238, %v1402
  %v1404 = vpop.f32.mrb[0].mxu0
  %1405 = vmatprep.mubr.bf16.mxu0 %v820
  %1406 = vmatmul.mubr.bf16.gmra.mrb[0].mxu0 %v819
  %v1407 = vpop.f32.mrb[0].mxu0
  %v1408 = vadd.f32 %v238, %v1407
  %v1409 = vpop.f32.mrb[0].mxu0
  %v1410 = vpop.f32.mrb[0].mxu0
  %v1411 = vadd.f32 %v238, %v1410
  %v1412 = vpop.f32.mrb[0].mxu0
  %1413 = vmatprep.mubr.bf16.mxu0 %v822
  %1414 = vmatmul.mubr.bf16.gmra.mrb[0].mxu0 %v821
  %v1415 = vpop.f32.mrb[0].mxu0
  %v1416 = vadd.f32 %v238, %v1415
  %v1417 = vpop.f32.mrb[0].mxu0
  %v1418 = vpop.f32.mrb[0].mxu0
  %v1419 = vadd.f32 %v238, %v1418
  %v1420 = vpop.f32.mrb[0].mxu0
  %1421 = vmatprep.mubr.bf16.mxu0 %v824
  %1422 = vmatmul.mubr.bf16.gmra.mrb[0].mxu0 %v823
  %v1423 = vpop.f32.mrb[0].mxu0
  %v1424 = vadd.f32 %v238, %v1423
  %v1425 = vpop.f32.mrb[0].mxu0
  %v1426 = vpop.f32.mrb[0].mxu0
  %v1427 = vadd.f32 %v238, %v1426
  %v1428 = vpop.f32.mrb[0].mxu0
  %1429 = vmatprep.mubr.bf16.mxu0 %v826
  %1430 = vmatmul.mubr.bf16.gmra.mrb[0].mxu0 %v825
  %v1431 = vpop.f32.mrb[0].mxu0
  %v1432 = vadd.f32 %v238, %v1431
  %v1433 = vpop.f32.mrb[0].mxu0
  %v1434 = vpop.f32.mrb[0].mxu0
  %v1435 = vadd.f32 %v238, %v1434
  %v1436 = vpop.f32.mrb[0].mxu0
  %1437 = vmatprep.mubr.bf16.mxu0 %v828
  %1438 = vmatmul.mubr.bf16.gmra.mrb[0].mxu0 %v827
  %v1439 = vpop.f32.mrb[0].mxu0
  %v1440 = vadd.f32 %v238, %v1439
  %v1441 = vpop.f32.mrb[0].mxu0
  %v1442 = vpop.f32.mrb[0].mxu0
  %v1443 = vadd.f32 %v238, %v1442
  %v1444 = vpop.f32.mrb[0].mxu0
  %1445 = vmatprep.mubr.bf16.mxu0 %v830
  %1446 = vmatmul.mubr.bf16.gmra.mrb[0].mxu0 %v829
  %v1447 = vpop.f32.mrb[0].mxu0
  %v1448 = vadd.f32 %v238, %v1447
  %v1449 = vpop.f32.mrb[0].mxu0
  %v1450 = vpop.f32.mrb[0].mxu0
  %v1451 = vadd.f32 %v238, %v1450
  %v1452 = vpop.f32.mrb[0].mxu0
  %1453 = vmatprep.mubr.bf16.mxu0 %v832
  %1454 = vmatmul.mubr.bf16.gmra.mrb[0].mxu0 %v831
  %v1455 = vpop.f32.mrb[0].mxu0
  %v1456 = vadd.f32 %v238, %v1455
  %v1457 = vpop.f32.mrb[0].mxu0
  %v1458 = vpop.f32.mrb[0].mxu0
  %v1459 = vadd.f32 %v238, %v1458
  %v1460 = vpop.f32.mrb[0].mxu0
  %1461 = vmatprep.mubr.bf16.mxu0 %v834
  %1462 = vmatmul.mubr.bf16.gmra.mrb[0].mxu0 %v833
  %v1463 = vpop.f32.mrb[0].mxu0
  %v1464 = vadd.f32 %v238, %v1463
  %v1465 = vpop.f32.mrb[0].mxu0
  %v1466 = vpop.f32.mrb[0].mxu0
  %v1467 = vadd.f32 %v238, %v1466
  %v1468 = vpop.f32.mrb[0].mxu0
  %1469 = vmatprep.mubr.bf16.mxu0 %v836
  %1470 = vmatmul.mubr.bf16.gmra.mrb[0].mxu0 %v835
  %v1471 = vpop.f32.mrb[0].mxu0
  %v1472 = vadd.f32 %v238, %v1471
  %v1473 = vpop.f32.mrb[0].mxu0
  %v1474 = vpop.f32.mrb[0].mxu0
  %v1475 = vadd.f32 %v238, %v1474
  %v1476 = vpop.f32.mrb[0].mxu0
  %1477 = vmatprep.mubr.bf16.mxu0 %v838
  %1478 = vmatmul.mubr.bf16.gmra.mrb[0].mxu0 %v837
  %v1479 = vpop.f32.mrb[0].mxu0
  %v1480 = vadd.f32 %v238, %v1479
  %v1481 = vpop.f32.mrb[0].mxu0
  %v1482 = vpop.f32.mrb[0].mxu0
  %v1483 = vadd.f32 %v238, %v1482
  %v1484 = vpop.f32.mrb[0].mxu0
  %1485 = vmatprep.mubr.bf16.mxu0 %v840
  %1486 = vmatmul.mubr.bf16.gmra.mrb[0].mxu0 %v839
  %v1487 = vpop.f32.mrb[0].mxu0
  %v1488 = vadd.f32 %v238, %v1487
  %v1489 = vpop.f32.mrb[0].mxu0
  %v1490 = vpop.f32.mrb[0].mxu0
  %v1491 = vadd.f32 %v238, %v1490
  %v1492 = vpop.f32.mrb[0].mxu0
  %1493 = vmatprep.mubr.bf16.mxu0 %v842
  %1494 = vmatmul.mubr.bf16.gmra.mrb[0].mxu0 %v841
  %v1495 = vpop.f32.mrb[0].mxu0
  %v1496 = vadd.f32 %v238, %v1495
  %v1497 = vpop.f32.mrb[0].mxu0
  %v1498 = vpop.f32.mrb[0].mxu0
  %v1499 = vadd.f32 %v238, %v1498
  %v1500 = vpop.f32.mrb[0].mxu0
  %1501 = vmatprep.mubr.bf16.mxu0 %v844
  %1502 = vmatmul.mubr.bf16.gmra.mrb[0].mxu0 %v843
  %v1503 = vpop.f32.mrb[0].mxu0
  %v1504 = vadd.f32 %v238, %v1503
  %v1505 = vpop.f32.mrb[0].mxu0
  %v1506 = vpop.f32.mrb[0].mxu0
  %v1507 = vadd.f32 %v238, %v1506
  %v1508 = vpop.f32.mrb[0].mxu0
  %1509 = vmatprep.mubr.bf16.mxu0 %v846
  %1510 = vmatmul.mubr.bf16.gmra.mrb[0].mxu0 %v845
  %v1511 = vpop.f32.mrb[0].mxu0
  %v1512 = vadd.f32 %v238, %v1511
  %v1513 = vpop.f32.mrb[0].mxu0
  %v1514 = vpop.f32.mrb[0].mxu0
  %v1515 = vadd.f32 %v238, %v1514
  %v1516 = vpop.f32.mrb[0].mxu0
  %1517 = vmatprep.mubr.bf16.mxu0 %v848
  %1518 = vmatmul.mubr.bf16.gmra.mrb[0].mxu0 %v847
  %v1519 = vpop.f32.mrb[0].mxu0
  %v1520 = vadd.f32 %v238, %v1519
  %v1521 = vpop.f32.mrb[0].mxu0
  %v1522 = vpop.f32.mrb[0].mxu0
  %v1523 = vadd.f32 %v238, %v1522
  %v1524 = vpop.f32.mrb[0].mxu0
  %1525 = vmatprep.mubr.bf16.mxu0 %v850
  %1526 = vmatmul.mubr.bf16.gmra.mrb[0].mxu0 %v849
  %v1527 = vpop.f32.mrb[0].mxu0
  %v1528 = vadd.f32 %v238, %v1527
  %v1529 = vpop.f32.mrb[0].mxu0
  %v1530 = vpop.f32.mrb[0].mxu0
  %v1531 = vadd.f32 %v238, %v1530
  %v1532 = vpop.f32.mrb[0].mxu0
  %1533 = vmatprep.mubr.bf16.mxu0 %v852
  %1534 = vmatmul.mubr.bf16.gmra.mrb[0].mxu0 %v851
  %v1535 = vpop.f32.mrb[0].mxu0
  %v1536 = vadd.f32 %v238, %v1535
  %v1537 = vpop.f32.mrb[0].mxu0
  %v1538 = vpop.f32.mrb[0].mxu0
  %v1539 = vadd.f32 %v238, %v1538
  %v1540 = vpop.f32.mrb[0].mxu0
  %1541 = vmatprep.mubr.bf16.mxu0 %v854
  %1542 = vmatmul.mubr.bf16.gmra.mrb[0].mxu0 %v853
  %v1543 = vpop.f32.mrb[0].mxu0
  %v1544 = vadd.f32 %v238, %v1543
  %v1545 = vpop.f32.mrb[0].mxu0
  %v1546 = vpop.f32.mrb[0].mxu0
  %v1547 = vadd.f32 %v238, %v1546
  %v1548 = vpop.f32.mrb[0].mxu0
  %1549 = vmatprep.mubr.bf16.mxu0 %v856
  %1550 = vmatmul.mubr.bf16.gmra.mrb[0].mxu0 %v855
  %v1551 = vpop.f32.mrb[0].mxu0
  %v1552 = vadd.f32 %v238, %v1551
  %v1553 = vpop.f32.mrb[0].mxu0
  %v1554 = vpop.f32.mrb[0].mxu0
  %v1555 = vadd.f32 %v238, %v1554
  %v1556 = vpop.f32.mrb[0].mxu0
  %1557 = vmatprep.mubr.bf16.mxu0 %v858
  %1558 = vmatmul.mubr.bf16.gmra.mrb[0].mxu0 %v857
  %v1559 = vpop.f32.mrb[0].mxu0
  %v1560 = vadd.f32 %v238, %v1559
  %v1561 = vpop.f32.mrb[0].mxu0
  %v1562 = vpop.f32.mrb[0].mxu0
  %v1563 = vadd.f32 %v238, %v1562
  %v1564 = vpop.f32.mrb[0].mxu0
  %1565 = vmatprep.mubr.bf16.mxu0 %v860
  %1566 = vmatmul.mubr.bf16.gmra.mrb[0].mxu0 %v859
  %v1567 = vpop.f32.mrb[0].mxu0
  %v1568 = vadd.f32 %v238, %v1567
  %v1569 = vpop.f32.mrb[0].mxu0
  %v1570 = vpop.f32.mrb[0].mxu0
  %v1571 = vadd.f32 %v238, %v1570
  %v1572 = vpop.f32.mrb[0].mxu0
  %1573 = vmatprep.mubr.bf16.mxu0 %v862
  %1574 = vmatmul.mubr.bf16.gmra.mrb[0].mxu0 %v861
  %v1575 = vpop.f32.mrb[0].mxu0
  %v1576 = vadd.f32 %v238, %v1575
  %v1577 = vpop.f32.mrb[0].mxu0
  %v1578 = vpop.f32.mrb[0].mxu0
  %v1579 = vadd.f32 %v238, %v1578
  %v1580 = vpop.f32.mrb[0].mxu0
  %1581 = vmatprep.mubr.bf16.mxu0 %v864
  %1582 = vmatmul.mubr.bf16.gmra.mrb[0].mxu0 %v863
  %v1583 = vpop.f32.mrb[0].mxu0
  %v1584 = vadd.f32 %v238, %v1583
  %v1585 = vpop.f32.mrb[0].mxu0
  %v1586 = vpop.f32.mrb[0].mxu0
  %v1587 = vadd.f32 %v238, %v1586
  %v1588 = vpop.f32.mrb[0].mxu0
  %1589 = vmatprep.mubr.bf16.mxu0 %v866
  %1590 = vmatmul.mubr.bf16.gmra.mrb[0].mxu0 %v865
  %v1591 = vpop.f32.mrb[0].mxu0
  %v1592 = vadd.f32 %v238, %v1591
  %v1593 = vpop.f32.mrb[0].mxu0
  %v1594 = vpop.f32.mrb[0].mxu0
  %v1595 = vadd.f32 %v238, %v1594
  %v1596 = vpop.f32.mrb[0].mxu0
  %1597 = vmatprep.mubr.bf16.mxu0 %v868
  %1598 = vmatmul.mubr.bf16.gmra.mrb[0].mxu0 %v867
  %v1599 = vpop.f32.mrb[0].mxu0
  %v1600 = vadd.f32 %v238, %v1599
  %v1601 = vpop.f32.mrb[0].mxu0
  %v1602 = vpop.f32.mrb[0].mxu0
  %v1603 = vadd.f32 %v238, %v1602
  %v1604 = vpop.f32.mrb[0].mxu0
  %1605 = vmatprep.mubr.bf16.mxu0 %v870
  %1606 = vmatmul.mubr.bf16.gmra.mrb[0].mxu0 %v869
  %v1607 = vpop.f32.mrb[0].mxu0
  %v1608 = vadd.f32 %v238, %v1607
  %v1609 = vpop.f32.mrb[0].mxu0
  %v1610 = vpop.f32.mrb[0].mxu0
  %v1611 = vadd.f32 %v238, %v1610
  %v1612 = vpop.f32.mrb[0].mxu0
  %1613 = vmatprep.mubr.bf16.mxu0 %v872
  %1614 = vmatmul.mubr.bf16.gmra.mrb[0].mxu0 %v871
  %v1615 = vpop.f32.mrb[0].mxu0
  %v1616 = vadd.f32 %v238, %v1615
  %v1617 = vpop.f32.mrb[0].mxu0
  %v1618 = vpop.f32.mrb[0].mxu0
  %v1619 = vadd.f32 %v238, %v1618
  %v1620 = vpop.f32.mrb[0].mxu0
  %1621 = vmatprep.mubr.bf16.mxu0 %v874
  %1622 = vmatmul.mubr.bf16.gmra.mrb[0].mxu0 %v873
  %v1623 = vpop.f32.mrb[0].mxu0
  %v1624 = vadd.f32 %v238, %v1623
  %v1625 = vpop.f32.mrb[0].mxu0
  %v1626 = vpop.f32.mrb[0].mxu0
  %v1627 = vadd.f32 %v238, %v1626
  %v1628 = vpop.f32.mrb[0].mxu0
  %1629 = vmatprep.mubr.bf16.mxu0 %v876
  %1630 = vmatmul.mubr.bf16.gmra.mrb[0].mxu0 %v875
  %v1631 = vpop.f32.mrb[0].mxu0
  %v1632 = vadd.f32 %v238, %v1631
  %v1633 = vpop.f32.mrb[0].mxu0
  %v1634 = vpop.f32.mrb[0].mxu0
  %v1635 = vadd.f32 %v238, %v1634
  %v1636 = vpop.f32.mrb[0].mxu0
  %1637 = vmatprep.mubr.bf16.mxu0 %v878
  %1638 = vmatmul.mubr.bf16.gmra.mrb[0].mxu0 %v877
  %v1639 = vpop.f32.mrb[0].mxu0
  %v1640 = vadd.f32 %v238, %v1639
  %v1641 = vpop.f32.mrb[0].mxu0
  %v1642 = vpop.f32.mrb[0].mxu0
  %v1643 = vadd.f32 %v238, %v1642
  %v1644 = vpop.f32.mrb[0].mxu0
  %1645 = vmatprep.mubr.bf16.mxu0 %v880
  %1646 = vmatmul.mubr.bf16.gmra.mrb[0].mxu0 %v879
  %v1647 = vpop.f32.mrb[0].mxu0
  %v1648 = vadd.f32 %v238, %v1647
  %v1649 = vpop.f32.mrb[0].mxu0
  %v1650 = vpop.f32.mrb[0].mxu0
  %v1651 = vadd.f32 %v238, %v1650
  %v1652 = vpop.f32.mrb[0].mxu0
  %1653 = vmatprep.mubr.bf16.mxu0 %v882
  %1654 = vmatmul.mubr.bf16.gmra.mrb[0].mxu0 %v881
  %v1655 = vpop.f32.mrb[0].mxu0
  %v1656 = vadd.f32 %v238, %v1655
  %v1657 = vpop.f32.mrb[0].mxu0
  %v1658 = vpop.f32.mrb[0].mxu0
  %v1659 = vadd.f32 %v238, %v1658
  %v1660 = vpop.f32.mrb[0].mxu0
  %1661 = vmatprep.mubr.bf16.mxu0 %v884
  %1662 = vmatmul.mubr.bf16.gmra.mrb[0].mxu0 %v883
  %v1663 = vpop.f32.mrb[0].mxu0
  %v1664 = vadd.f32 %v238, %v1663
  %v1665 = vpop.f32.mrb[0].mxu0
  %v1666 = vpop.f32.mrb[0].mxu0
  %v1667 = vadd.f32 %v238, %v1666
  %v1668 = vpop.f32.mrb[0].mxu0
  %1669 = vmatprep.mubr.bf16.mxu0 %v886
  %1670 = vmatmul.mubr.bf16.gmra.mrb[0].mxu0 %v885
  %v1671 = vpop.f32.mrb[0].mxu0
  %v1672 = vadd.f32 %v238, %v1671
  %v1673 = vpop.f32.mrb[0].mxu0
  %v1674 = vpop.f32.mrb[0].mxu0
  %v1675 = vadd.f32 %v238, %v1674
  %v1676 = vpop.f32.mrb[0].mxu0
  %1677 = vmatprep.mubr.bf16.mxu0 %v888
  %1678 = vmatmul.mubr.bf16.gmra.mrb[0].mxu0 %v887
  %v1679 = vpop.f32.mrb[0].mxu0
  %v1680 = vadd.f32 %v238, %v1679
  %v1681 = vpop.f32.mrb[0].mxu0
  %v1682 = vpop.f32.mrb[0].mxu0
  %v1683 = vadd.f32 %v238, %v1682
  %v1684 = vpop.f32.mrb[0].mxu0
  %1685 = vmatprep.mubr.bf16.mxu0 %v890
  %1686 = vmatmul.mubr.bf16.gmra.mrb[0].mxu0 %v889
  %v1687 = vpop.f32.mrb[0].mxu0
  %v1688 = vadd.f32 %v238, %v1687
  %v1689 = vpop.f32.mrb[0].mxu0
  %v1690 = vpop.f32.mrb[0].mxu0
  %v1691 = vadd.f32 %v238, %v1690
  %v1692 = vpop.f32.mrb[0].mxu0
  %1693 = vmatprep.mubr.bf16.mxu0 %v892
  %1694 = vmatmul.mubr.bf16.gmra.mrb[0].mxu0 %v891
  %v1695 = vpop.f32.mrb[0].mxu0
  %v1696 = vadd.f32 %v238, %v1695
  %v1697 = vpop.f32.mrb[0].mxu0
  %v1698 = vpop.f32.mrb[0].mxu0
  %v1699 = vadd.f32 %v238, %v1698
  %v1700 = vpop.f32.mrb[0].mxu0
  %1701 = vmatprep.mubr.bf16.mxu0 %v894
  %1702 = vmatmul.mubr.bf16.gmra.mrb[0].mxu0 %v893
  %v1703 = vpop.f32.mrb[0].mxu0
  %v1704 = vadd.f32 %v238, %v1703
  %v1705 = vpop.f32.mrb[0].mxu0
  %v1706 = vpop.f32.mrb[0].mxu0
  %v1707 = vadd.f32 %v238, %v1706
  %v1708 = vpop.f32.mrb[0].mxu0
  %1709 = vmatprep.mubr.bf16.mxu0 %v896
  %1710 = vmatmul.mubr.bf16.gmra.mrb[0].mxu0 %v895
  %v1711 = vpop.f32.mrb[0].mxu0
  %v1712 = vadd.f32 %v238, %v1711
  %v1713 = vpop.f32.mrb[0].mxu0
  %v1714 = vpop.f32.mrb[0].mxu0
  %v1715 = vadd.f32 %v238, %v1714
  %v1716 = vpop.f32.mrb[0].mxu0
  %1717 = vmatprep.mubr.bf16.mxu0 %v898
  %1718 = vmatmul.mubr.bf16.gmra.mrb[0].mxu0 %v897
  %v1719 = vpop.f32.mrb[0].mxu0
  %v1720 = vadd.f32 %v238, %v1719
  %v1721 = vpop.f32.mrb[0].mxu0
  %v1722 = vpop.f32.mrb[0].mxu0
  %v1723 = vadd.f32 %v238, %v1722
  %v1724 = vpop.f32.mrb[0].mxu0
  %1725 = vmatprep.mubr.bf16.mxu0 %v900
  %1726 = vmatmul.mubr.bf16.gmra.mrb[0].mxu0 %v899
  %v1727 = vpop.f32.mrb[0].mxu0
  %v1728 = vadd.f32 %v238, %v1727
  %v1729 = vpop.f32.mrb[0].mxu0
  %v1730 = vpop.f32.mrb[0].mxu0
  %v1731 = vadd.f32 %v238, %v1730
  %v1732 = vpop.f32.mrb[0].mxu0
  %1733 = vmatprep.mubr.bf16.mxu0 %v902
  %1734 = vmatmul.mubr.bf16.gmra.mrb[0].mxu0 %v901
  %v1735 = vpop.f32.mrb[0].mxu0
  %v1736 = vadd.f32 %v238, %v1735
  %v1737 = vpop.f32.mrb[0].mxu0
  %v1738 = vpop.f32.mrb[0].mxu0
  %v1739 = vadd.f32 %v238, %v1738
  %v1740 = vpop.f32.mrb[0].mxu0
  %1741 = vmatprep.mubr.bf16.mxu0 %v904
  %1742 = vmatmul.mubr.bf16.gmra.mrb[0].mxu0 %v903
  %v1743 = vpop.f32.mrb[0].mxu0
  %v1744 = vadd.f32 %v238, %v1743
  %v1745 = vpop.f32.mrb[0].mxu0
  %v1746 = vpop.f32.mrb[0].mxu0
  %v1747 = vadd.f32 %v238, %v1746
  %v1748 = vpop.f32.mrb[0].mxu0
  %1749 = vmatprep.mubr.bf16.mxu0 %v906
  %1750 = vmatmul.mubr.bf16.gmra.mrb[0].mxu0 %v905
  %v1751 = vpop.f32.mrb[0].mxu0
  %v1752 = vadd.f32 %v238, %v1751
  %v1753 = vpop.f32.mrb[0].mxu0
  %v1754 = vpop.f32.mrb[0].mxu0
  %v1755 = vadd.f32 %v238, %v1754
  %v1756 = vpop.f32.mrb[0].mxu0
  %1757 = vmatprep.mubr.bf16.mxu0 %v908
  %1758 = vmatmul.mubr.bf16.gmra.mrb[0].mxu0 %v907
  %v1759 = vpop.f32.mrb[0].mxu0
  %v1760 = vadd.f32 %v238, %v1759
  %v1761 = vpop.f32.mrb[0].mxu0
  %v1762 = vpop.f32.mrb[0].mxu0
  %v1763 = vadd.f32 %v238, %v1762
  %v1764 = vpop.f32.mrb[0].mxu0
  %1765 = vmatprep.mubr.bf16.mxu0 %v910
  %1766 = vmatmul.mubr.bf16.gmra.mrb[0].mxu0 %v909
  %v1767 = vpop.f32.mrb[0].mxu0
  %v1768 = vadd.f32 %v238, %v1767
  %v1769 = vpop.f32.mrb[0].mxu0
  %v1770 = vpop.f32.mrb[0].mxu0
  %v1771 = vadd.f32 %v238, %v1770
  %v1772 = vpop.f32.mrb[0].mxu0
  %1773 = vmatprep.mubr.bf16.mxu0 %v912
  %1774 = vmatmul.mubr.bf16.gmra.mrb[0].mxu0 %v911
  %v1775 = vpop.f32.mrb[0].mxu0
  %v1776 = vadd.f32 %v238, %v1775
  %v1777 = vpop.f32.mrb[0].mxu0
  %v1778 = vpop.f32.mrb[0].mxu0
  %v1779 = vadd.f32 %v238, %v1778
  %v1780 = vpop.f32.mrb[0].mxu0
  %1781 = vmatprep.mubr.bf16.mxu0 %v914
  %1782 = vmatmul.mubr.bf16.gmra.mrb[0].mxu0 %v913
  %v1783 = vpop.f32.mrb[0].mxu0
  %v1784 = vadd.f32 %v238, %v1783
  %v1785 = vpop.f32.mrb[0].mxu0
  %v1786 = vpop.f32.mrb[0].mxu0
  %v1787 = vadd.f32 %v238, %v1786
  %v1788 = vpop.f32.mrb[0].mxu0
  %1789 = vmatprep.mubr.bf16.mxu0 %v916
  %1790 = vmatmul.mubr.bf16.gmra.mrb[0].mxu0 %v915
  %v1791 = vpop.f32.mrb[0].mxu0
  %v1792 = vadd.f32 %v238, %v1791
  %v1793 = vpop.f32.mrb[0].mxu0
  %v1794 = vpop.f32.mrb[0].mxu0
  %v1795 = vadd.f32 %v238, %v1794
  %v1796 = vpop.f32.mrb[0].mxu0
  %1797 = vmatprep.mubr.bf16.mxu0 %v918
  %1798 = vmatmul.mubr.bf16.gmra.mrb[0].mxu0 %v917
  %v1799 = vpop.f32.mrb[0].mxu0
  %v1800 = vadd.f32 %v238, %v1799
  %v1801 = vpop.f32.mrb[0].mxu0
  %v1802 = vpop.f32.mrb[0].mxu0
  %v1803 = vadd.f32 %v238, %v1802
  %v1804 = vpop.f32.mrb[0].mxu0
  %1805 = vmatprep.mubr.bf16.mxu0 %v920
  %1806 = vmatmul.mubr.bf16.gmra.mrb[0].mxu0 %v919
  %v1807 = vpop.f32.mrb[0].mxu0
  %v1808 = vadd.f32 %v238, %v1807
  %v1809 = vpop.f32.mrb[0].mxu0
  %v1810 = vpop.f32.mrb[0].mxu0
  %v1811 = vadd.f32 %v238, %v1810
  %v1812 = vpop.f32.mrb[0].mxu0
  %1813 = vmatprep.mubr.bf16.mxu0 %v922
  %1814 = vmatmul.mubr.bf16.gmra.mrb[0].mxu0 %v921
  %v1815 = vpop.f32.mrb[0].mxu0
  %v1816 = vadd.f32 %v238, %v1815
  %v1817 = vpop.f32.mrb[0].mxu0
  %v1818 = vpop.f32.mrb[0].mxu0
  %v1819 = vadd.f32 %v238, %v1818
  %v1820 = vpop.f32.mrb[0].mxu0
  %1821 = vmatprep.mubr.bf16.mxu0 %v924
  %1822 = vmatmul.mubr.bf16.gmra.mrb[0].mxu0 %v923
  %v1823 = vpop.f32.mrb[0].mxu0
  %v1824 = vadd.f32 %v238, %v1823
  %v1825 = vpop.f32.mrb[0].mxu0
  %v1826 = vpop.f32.mrb[0].mxu0
  %v1827 = vadd.f32 %v238, %v1826
  %v1828 = vpop.f32.mrb[0].mxu0
  %1829 = vmatprep.mubr.bf16.mxu0 %v926
  %1830 = vmatmul.mubr.bf16.gmra.mrb[0].mxu0 %v925
  %v1831 = vpop.f32.mrb[0].mxu0
  %v1832 = vadd.f32 %v238, %v1831
  %v1833 = vpop.f32.mrb[0].mxu0
  %v1834 = vpop.f32.mrb[0].mxu0
  %v1835 = vadd.f32 %v238, %v1834
  %v1836 = vpop.f32.mrb[0].mxu0
  %1837 = vmatprep.mubr.bf16.mxu0 %v928
  %1838 = vmatmul.mubr.bf16.gmra.mrb[0].mxu0 %v927
  %v1839 = vpop.f32.mrb[0].mxu0
  %v1840 = vadd.f32 %v238, %v1839
  %v1841 = vpop.f32.mrb[0].mxu0
  %v1842 = vpop.f32.mrb[0].mxu0
  %v1843 = vadd.f32 %v238, %v1842
  %v1844 = vpop.f32.mrb[0].mxu0
  %1845 = vmatprep.mubr.bf16.mxu0 %v930
  %1846 = vmatmul.mubr.bf16.gmra.mrb[0].mxu0 %v929
  %v1847 = vpop.f32.mrb[0].mxu0
  %v1848 = vadd.f32 %v238, %v1847
  %v1849 = vpop.f32.mrb[0].mxu0
  %v1850 = vpop.f32.mrb[0].mxu0
  %v1851 = vadd.f32 %v238, %v1850
  %v1852 = vpop.f32.mrb[0].mxu0
  %1853 = vmatprep.mubr.bf16.mxu0 %v932
  %1854 = vmatmul.mubr.bf16.gmra.mrb[0].mxu0 %v931
  %v1855 = vpop.f32.mrb[0].mxu0
  %v1856 = vadd.f32 %v238, %v1855
  %v1857 = vpop.f32.mrb[0].mxu0
  %v1858 = vpop.f32.mrb[0].mxu0
  %v1859 = vadd.f32 %v238, %v1858
  %v1860 = vpop.f32.mrb[0].mxu0
  %1861 = vmatprep.mubr.bf16.mxu0 %v934
  %1862 = vmatmul.mubr.bf16.gmra.mrb[0].mxu0 %v933
  %v1863 = vpop.f32.mrb[0].mxu0
  %v1864 = vadd.f32 %v238, %v1863
  %v1865 = vpop.f32.mrb[0].mxu0
  %v1866 = vpop.f32.mrb[0].mxu0
  %v1867 = vadd.f32 %v238, %v1866
  %v1868 = vpop.f32.mrb[0].mxu0
  %1869 = vmatprep.mubr.bf16.mxu0 %v936
  %1870 = vmatmul.mubr.bf16.gmra.mrb[0].mxu0 %v935
  %v1871 = vpop.f32.mrb[0].mxu0
  %v1872 = vadd.f32 %v238, %v1871
  %v1873 = vpop.f32.mrb[0].mxu0
  %v1874 = vpop.f32.mrb[0].mxu0
  %v1875 = vadd.f32 %v238, %v1874
  %v1876 = vpop.f32.mrb[0].mxu0
  %1877 = vmatprep.mubr.bf16.mxu0 %v938
  %1878 = vmatmul.mubr.bf16.gmra.mrb[0].mxu0 %v937
  %v1879 = vpop.f32.mrb[0].mxu0
  %v1880 = vadd.f32 %v238, %v1879
  %v1881 = vpop.f32.mrb[0].mxu0
  %v1882 = vpop.f32.mrb[0].mxu0
  %v1883 = vadd.f32 %v238, %v1882
  %v1884 = vpop.f32.mrb[0].mxu0
  %1885 = vmatprep.mubr.bf16.mxu0 %v940
  %1886 = vmatmul.mubr.bf16.gmra.mrb[0].mxu0 %v939
  %v1887 = vpop.f32.mrb[0].mxu0
  %v1888 = vadd.f32 %v238, %v1887
  %v1889 = vpop.f32.mrb[0].mxu0
  %v1890 = vpop.f32.mrb[0].mxu0
  %v1891 = vadd.f32 %v238, %v1890
  %v1892 = vpop.f32.mrb[0].mxu0
  %1893 = vmatprep.mubr.bf16.mxu0 %v942
  %1894 = vmatmul.mubr.bf16.gmra.mrb[0].mxu0 %v941
  %v1895 = vpop.f32.mrb[0].mxu0
  %v1896 = vadd.f32 %v238, %v1895
  %v1897 = vpop.f32.mrb[0].mxu0
  %v1898 = vpop.f32.mrb[0].mxu0
  %v1899 = vadd.f32 %v238, %v1898
  %v1900 = vpop.f32.mrb[0].mxu0
  %1901 = vmatprep.mubr.bf16.mxu0 %v944
  %1902 = vmatmul.mubr.bf16.gmra.mrb[0].mxu0 %v943
  %v1903 = vpop.f32.mrb[0].mxu0
  %v1904 = vadd.f32 %v238, %v1903
  %v1905 = vpop.f32.mrb[0].mxu0
  %v1906 = vpop.f32.mrb[0].mxu0
  %v1907 = vadd.f32 %v238, %v1906
  %v1908 = vpop.f32.mrb[0].mxu0
  %1909 = vmatprep.mubr.bf16.mxu0 %v946
  %1910 = vmatmul.mubr.bf16.gmra.mrb[0].mxu0 %v945
  %v1911 = vpop.f32.mrb[0].mxu0
  %v1912 = vadd.f32 %v238, %v1911
  %v1913 = vpop.f32.mrb[0].mxu0
  %v1914 = vpop.f32.mrb[0].mxu0
  %v1915 = vadd.f32 %v238, %v1914
  %v1916 = vpop.f32.mrb[0].mxu0
  %1917 = vmatprep.mubr.bf16.mxu0 %v948
  %1918 = vmatmul.mubr.bf16.gmra.mrb[0].mxu0 %v947
  %v1919 = vpop.f32.mrb[0].mxu0
  %v1920 = vadd.f32 %v238, %v1919
  %v1921 = vpop.f32.mrb[0].mxu0
  %v1922 = vpop.f32.mrb[0].mxu0
  %v1923 = vadd.f32 %v238, %v1922
  %v1924 = vpop.f32.mrb[0].mxu0
  %1925 = vmatprep.mubr.bf16.mxu0 %v950
  %1926 = vmatmul.mubr.bf16.gmra.mrb[0].mxu0 %v949
  %v1927 = vpop.f32.mrb[0].mxu0
  %v1928 = vadd.f32 %v238, %v1927
  %v1929 = vpop.f32.mrb[0].mxu0
  %v1930 = vpop.f32.mrb[0].mxu0
  %v1931 = vadd.f32 %v238, %v1930
  %v1932 = vpop.f32.mrb[0].mxu0
  %1933 = vmatprep.mubr.bf16.mxu0 %v952
  %1934 = vmatmul.mubr.bf16.gmra.mrb[0].mxu0 %v951
  %v1935 = vpop.f32.mrb[0].mxu0
  %v1936 = vadd.f32 %v238, %v1935
  %v1937 = vpop.f32.mrb[0].mxu0
  %v1938 = vpop.f32.mrb[0].mxu0
  %v1939 = vadd.f32 %v238, %v1938
  %v1940 = vpop.f32.mrb[0].mxu0
  %1941 = vmatprep.mubr.bf16.mxu0 %v954
  %1942 = vmatmul.mubr.bf16.gmra.mrb[0].mxu0 %v953
  %v1943 = vpop.f32.mrb[0].mxu0
  %v1944 = vadd.f32 %v238, %v1943
  %v1945 = vpop.f32.mrb[0].mxu0
  %v1946 = vpop.f32.mrb[0].mxu0
  %v1947 = vadd.f32 %v238, %v1946
  %v1948 = vpop.f32.mrb[0].mxu0
  %1949 = vmatprep.mubr.bf16.mxu0 %v956
  %1950 = vmatmul.mubr.bf16.gmra.mrb[0].mxu0 %v955
  %v1951 = vpop.f32.mrb[0].mxu0
  %v1952 = vadd.f32 %v238, %v1951
  %v1953 = vpop.f32.mrb[0].mxu0
  %v1954 = vpop.f32.mrb[0].mxu0
  %v1955 = vadd.f32 %v238, %v1954
  %v1956 = vpop.f32.mrb[0].mxu0
  %1957 = vmatprep.mubr.bf16.mxu0 %v958
  %1958 = vmatmul.mubr.bf16.gmra.mrb[0].mxu0 %v957
  %v1959 = vpop.f32.mrb[0].mxu0
  %v1960 = vadd.f32 %v238, %v1959
  %v1961 = vpop.f32.mrb[0].mxu0
  %v1962 = vpop.f32.mrb[0].mxu0
  %v1963 = vadd.f32 %v238, %v1962
  %v1964 = vpop.f32.mrb[0].mxu0
  %1965 = vmatprep.mubr.bf16.mxu0 %v960
  %1966 = vmatmul.mubr.bf16.gmra.mrb[0].mxu0 %v959
  %v1967 = vpop.f32.mrb[0].mxu0
  %v1968 = vadd.f32 %v238, %v1967
  %v1969 = vpop.f32.mrb[0].mxu0
  %v1970 = vpop.f32.mrb[0].mxu0
  %v1971 = vadd.f32 %v238, %v1970
  %v1972 = vpop.f32.mrb[0].mxu0
  %1973 = vmatprep.mubr.bf16.mxu0 %v962
  %1974 = vmatmul.mubr.bf16.gmra.mrb[0].mxu0 %v961
  %v1975 = vpop.f32.mrb[0].mxu0
  %v1976 = vadd.f32 %v238, %v1975
  %v1977 = vpop.f32.mrb[0].mxu0
  %v1978 = vpop.f32.mrb[0].mxu0
  %v1979 = vadd.f32 %v238, %v1978
  %v1980 = vpop.f32.mrb[0].mxu0
  %1981 = vmatprep.mubr.bf16.mxu0 %v964
  %1982 = vmatmul.mubr.bf16.gmra.mrb[0].mxu0 %v963
  %v1983 = vpop.f32.mrb[0].mxu0
  %v1984 = vadd.f32 %v238, %v1983
  %v1985 = vpop.f32.mrb[0].mxu0
  %v1986 = vpop.f32.mrb[0].mxu0
  %v1987 = vadd.f32 %v238, %v1986
  %v1988 = vpop.f32.mrb[0].mxu0
  %1989 = vmatprep.mubr.bf16.mxu0 %v966
  %1990 = vmatmul.mubr.bf16.gmra.mrb[0].mxu0 %v965
  %v1991 = vpop.f32.mrb[0].mxu0
  %v1992 = vadd.f32 %v238, %v1991
  %v1993 = vpop.f32.mrb[0].mxu0
  %v1994 = vpop.f32.mrb[0].mxu0
  %v1995 = vadd.f32 %v238, %v1994
  %v1996 = vpop.f32.mrb[0].mxu0
  %1997 = vmatprep.mubr.bf16.mxu0 %v968
  %1998 = vmatmul.mubr.bf16.gmra.mrb[0].mxu0 %v967
  %v1999 = vpop.f32.mrb[0].mxu0
  %v2000 = vadd.f32 %v238, %v1999
  %v2001 = vpop.f32.mrb[0].mxu0
  %v2002 = vpop.f32.mrb[0].mxu0
  %v2003 = vadd.f32 %v238, %v2002
  %v2004 = vpop.f32.mrb[0].mxu0
  %2005 = vmatprep.mubr.bf16.mxu0 %v970
  %2006 = vmatmul.mubr.bf16.gmra.mrb[0].mxu0 %v969
  %v2007 = vpop.f32.mrb[0].mxu0
  %v2008 = vadd.f32 %v238, %v2007
  %v2009 = vpop.f32.mrb[0].mxu0
  %v2010 = vpop.f32.mrb[0].mxu0
  %v2011 = vadd.f32 %v238, %v2010
  %v2012 = vpop.f32.mrb[0].mxu0
  %2013 = vmatprep.mubr.bf16.mxu0 %v972
  %2014 = vmatmul.mubr.bf16.gmra.mrb[0].mxu0 %v971
  %v2015 = vpop.f32.mrb[0].mxu0
  %v2016 = vadd.f32 %v238, %v2015
  %v2017 = vpop.f32.mrb[0].mxu0
  %v2018 = vpop.f32.mrb[0].mxu0
  %v2019 = vpop.f32.mrb[0].mxu0
  %2020 = vdwg.mxu0
  %vm2021 = vcmp.gt.f32.partialorder %v1288, 0.0
  %vm2022 = vcmp.gt.f32.partialorder %v1291, 0.0
  %vm2023 = vcmp.gt.f32.partialorder %v1296, 0.0
  %vm2024 = vcmp.gt.f32.partialorder %v1299, 0.0
  %vm2025 = vcmp.gt.f32.partialorder %v1304, 0.0
  %vm2026 = vcmp.gt.f32.partialorder %v1307, 0.0
  %vm2027 = vcmp.gt.f32.partialorder %v1312, 0.0
  %vm2028 = vcmp.gt.f32.partialorder %v1315, 0.0
  %vm2029 = vcmp.gt.f32.partialorder %v1320, 0.0
  %vm2030 = vcmp.gt.f32.partialorder %v1323, 0.0
  %vm2031 = vcmp.gt.f32.partialorder %v1328, 0.0
  %vm2032 = vcmp.gt.f32.partialorder %v1331, 0.0
  %vm2033 = vcmp.gt.f32.partialorder %v1336, 0.0
  %vm2034 = vcmp.gt.f32.partialorder %v1339, 0.0
  %vm2035 = vcmp.gt.f32.partialorder %v1344, 0.0
  %vm2036 = vcmp.gt.f32.partialorder %v1347, 0.0
  %vm2037 = vcmp.gt.f32.partialorder %v1352, 0.0
  %vm2038 = vcmp.gt.f32.partialorder %v1355, 0.0
  %vm2039 = vcmp.gt.f32.partialorder %v1360, 0.0
  %vm2040 = vcmp.gt.f32.partialorder %v1363, 0.0
  %vm2041 = vcmp.gt.f32.partialorder %v1368, 0.0
  %vm2042 = vcmp.gt.f32.partialorder %v1371, 0.0
  %vm2043 = vcmp.gt.f32.partialorder %v1376, 0.0
  %vm2044 = vcmp.gt.f32.partialorder %v1379, 0.0
  %vm2045 = vcmp.gt.f32.partialorder %v1384, 0.0
  %vm2046 = vcmp.gt.f32.partialorder %v1387, 0.0
  %vm2047 = vcmp.gt.f32.partialorder %v1392, 0.0
  %vm2048 = vcmp.gt.f32.partialorder %v1395, 0.0
  %vm2049 = vcmp.gt.f32.partialorder %v1400, 0.0
  %vm2050 = vcmp.gt.f32.partialorder %v1403, 0.0
  %vm2051 = vcmp.gt.f32.partialorder %v1408, 0.0
  %vm2052 = vcmp.gt.f32.partialorder %v1411, 0.0
  %vm2053 = vcmp.gt.f32.partialorder %v1416, 0.0
  %vm2054 = vcmp.gt.f32.partialorder %v1419, 0.0
  %vm2055 = vcmp.gt.f32.partialorder %v1424, 0.0
  %vm2056 = vcmp.gt.f32.partialorder %v1427, 0.0
  %vm2057 = vcmp.gt.f32.partialorder %v1432, 0.0
  %vm2058 = vcmp.gt.f32.partialorder %v1435, 0.0
  %vm2059 = vcmp.gt.f32.partialorder %v1440, 0.0
  %vm2060 = vcmp.gt.f32.partialorder %v1443, 0.0
  %vm2061 = vcmp.gt.f32.partialorder %v1448, 0.0
  %vm2062 = vcmp.gt.f32.partialorder %v1451, 0.0
  %vm2063 = vcmp.gt.f32.partialorder %v1456, 0.0
  %vm2064 = vcmp.gt.f32.partialorder %v1459, 0.0
  %vm2065 = vcmp.gt.f32.partialorder %v1464, 0.0
  %vm2066 = vcmp.gt.f32.partialorder %v1467, 0.0
  %vm2067 = vcmp.gt.f32.partialorder %v1472, 0.0
  %vm2068 = vcmp.gt.f32.partialorder %v1475, 0.0
  %vm2069 = vcmp.gt.f32.partialorder %v1480, 0.0
  %vm2070 = vcmp.gt.f32.partialorder %v1483, 0.0
  %vm2071 = vcmp.gt.f32.partialorder %v1488, 0.0
  %vm2072 = vcmp.gt.f32.partialorder %v1491, 0.0
  %vm2073 = vcmp.gt.f32.partialorder %v1496, 0.0
  %vm2074 = vcmp.gt.f32.partialorder %v1499, 0.0
  %vm2075 = vcmp.gt.f32.partialorder %v1504, 0.0
  %vm2076 = vcmp.gt.f32.partialorder %v1507, 0.0
  %vm2077 = vcmp.gt.f32.partialorder %v1512, 0.0
  %vm2078 = vcmp.gt.f32.partialorder %v1515, 0.0
  %vm2079 = vcmp.gt.f32.partialorder %v1520, 0.0
  %vm2080 = vcmp.gt.f32.partialorder %v1523, 0.0
  %vm2081 = vcmp.gt.f32.partialorder %v1528, 0.0
  %vm2082 = vcmp.gt.f32.partialorder %v1531, 0.0
  %vm2083 = vcmp.gt.f32.partialorder %v1536, 0.0
  %vm2084 = vcmp.gt.f32.partialorder %v1539, 0.0
  %vm2085 = vcmp.gt.f32.partialorder %v1544, 0.0
  %vm2086 = vcmp.gt.f32.partialorder %v1547, 0.0
  %vm2087 = vcmp.gt.f32.partialorder %v1552, 0.0
  %vm2088 = vcmp.gt.f32.partialorder %v1555, 0.0
  %vm2089 = vcmp.gt.f32.partialorder %v1560, 0.0
  %vm2090 = vcmp.gt.f32.partialorder %v1563, 0.0
  %vm2091 = vcmp.gt.f32.partialorder %v1568, 0.0
  %vm2092 = vcmp.gt.f32.partialorder %v1571, 0.0
  %vm2093 = vcmp.gt.f32.partialorder %v1576, 0.0
  %vm2094 = vcmp.gt.f32.partialorder %v1579, 0.0
  %vm2095 = vcmp.gt.f32.partialorder %v1584, 0.0
  %vm2096 = vcmp.gt.f32.partialorder %v1587, 0.0
  %vm2097 = vcmp.gt.f32.partialorder %v1592, 0.0
  %vm2098 = vcmp.gt.f32.partialorder %v1595, 0.0
  %vm2099 = vcmp.gt.f32.partialorder %v1600, 0.0
  %vm2100 = vcmp.gt.f32.partialorder %v1603, 0.0
  %vm2101 = vcmp.gt.f32.partialorder %v1608, 0.0
  %vm2102 = vcmp.gt.f32.partialorder %v1611, 0.0
  %vm2103 = vcmp.gt.f32.partialorder %v1616, 0.0
  %vm2104 = vcmp.gt.f32.partialorder %v1619, 0.0
  %vm2105 = vcmp.gt.f32.partialorder %v1624, 0.0
  %vm2106 = vcmp.gt.f32.partialorder %v1627, 0.0
  %vm2107 = vcmp.gt.f32.partialorder %v1632, 0.0
  %vm2108 = vcmp.gt.f32.partialorder %v1635, 0.0
  %vm2109 = vcmp.gt.f32.partialorder %v1640, 0.0
  %vm2110 = vcmp.gt.f32.partialorder %v1643, 0.0
  %vm2111 = vcmp.gt.f32.partialorder %v1648, 0.0
  %vm2112 = vcmp.gt.f32.partialorder %v1651, 0.0
  %vm2113 = vcmp.gt.f32.partialorder %v1656, 0.0
  %vm2114 = vcmp.gt.f32.partialorder %v1659, 0.0
  %vm2115 = vcmp.gt.f32.partialorder %v1664, 0.0
  %vm2116 = vcmp.gt.f32.partialorder %v1667, 0.0
  %vm2117 = vcmp.gt.f32.partialorder %v1672, 0.0
  %vm2118 = vcmp.gt.f32.partialorder %v1675, 0.0
  %vm2119 = vcmp.gt.f32.partialorder %v1680, 0.0
  %vm2120 = vcmp.gt.f32.partialorder %v1683, 0.0
  %vm2121 = vcmp.gt.f32.partialorder %v1688, 0.0
  %vm2122 = vcmp.gt.f32.partialorder %v1691, 0.0
  %vm2123 = vcmp.gt.f32.partialorder %v1696, 0.0
  %vm2124 = vcmp.gt.f32.partialorder %v1699, 0.0
  %vm2125 = vcmp.gt.f32.partialorder %v1704, 0.0
  %vm2126 = vcmp.gt.f32.partialorder %v1707, 0.0
  %vm2127 = vcmp.gt.f32.partialorder %v1712, 0.0
  %vm2128 = vcmp.gt.f32.partialorder %v1715, 0.0
  %vm2129 = vcmp.gt.f32.partialorder %v1720, 0.0
  %vm2130 = vcmp.gt.f32.partialorder %v1723, 0.0
  %vm2131 = vcmp.gt.f32.partialorder %v1728, 0.0
  %vm2132 = vcmp.gt.f32.partialorder %v1731, 0.0
  %vm2133 = vcmp.gt.f32.partialorder %v1736, 0.0
  %vm2134 = vcmp.gt.f32.partialorder %v1739, 0.0
  %vm2135 = vcmp.gt.f32.partialorder %v1744, 0.0
  %vm2136 = vcmp.gt.f32.partialorder %v1747, 0.0
  %vm2137 = vcmp.gt.f32.partialorder %v1752, 0.0
  %vm2138 = vcmp.gt.f32.partialorder %v1755, 0.0
  %vm2139 = vcmp.gt.f32.partialorder %v1760, 0.0
  %vm2140 = vcmp.gt.f32.partialorder %v1763, 0.0
  %vm2141 = vcmp.gt.f32.partialorder %v1768, 0.0
  %vm2142 = vcmp.gt.f32.partialorder %v1771, 0.0
  %vm2143 = vcmp.gt.f32.partialorder %v1776, 0.0
  %vm2144 = vcmp.gt.f32.partialorder %v1779, 0.0
  %vm2145 = vcmp.gt.f32.partialorder %v1784, 0.0
  %vm2146 = vcmp.gt.f32.partialorder %v1787, 0.0
  %vm2147 = vcmp.gt.f32.partialorder %v1792, 0.0
  %vm2148 = vcmp.gt.f32.partialorder %v1795, 0.0
  %vm2149 = vcmp.gt.f32.partialorder %v1800, 0.0
  %vm2150 = vcmp.gt.f32.partialorder %v1803, 0.0
  %vm2151 = vcmp.gt.f32.partialorder %v1808, 0.0
  %vm2152 = vcmp.gt.f32.partialorder %v1811, 0.0
  %vm2153 = vcmp.gt.f32.partialorder %v1816, 0.0
  %vm2154 = vcmp.gt.f32.partialorder %v1819, 0.0
  %vm2155 = vcmp.gt.f32.partialorder %v1824, 0.0
  %vm2156 = vcmp.gt.f32.partialorder %v1827, 0.0
  %vm2157 = vcmp.gt.f32.partialorder %v1832, 0.0
  %vm2158 = vcmp.gt.f32.partialorder %v1835, 0.0
  %vm2159 = vcmp.gt.f32.partialorder %v1840, 0.0
  %vm2160 = vcmp.gt.f32.partialorder %v1843, 0.0
  %vm2161 = vcmp.gt.f32.partialorder %v1848, 0.0
  %vm2162 = vcmp.gt.f32.partialorder %v1851, 0.0
  %vm2163 = vcmp.gt.f32.partialorder %v1856, 0.0
  %vm2164 = vcmp.gt.f32.partialorder %v1859, 0.0
  %vm2165 = vcmp.gt.f32.partialorder %v1864, 0.0
  %vm2166 = vcmp.gt.f32.partialorder %v1867, 0.0
  %vm2167 = vcmp.gt.f32.partialorder %v1872, 0.0
  %vm2168 = vcmp.gt.f32.partialorder %v1875, 0.0
  %vm2169 = vcmp.gt.f32.partialorder %v1880, 0.0
  %vm2170 = vcmp.gt.f32.partialorder %v1883, 0.0
  %vm2171 = vcmp.gt.f32.partialorder %v1888, 0.0
  %vm2172 = vcmp.gt.f32.partialorder %v1891, 0.0
  %vm2173 = vcmp.gt.f32.partialorder %v1896, 0.0
  %vm2174 = vcmp.gt.f32.partialorder %v1899, 0.0
  %vm2175 = vcmp.gt.f32.partialorder %v1904, 0.0
  %vm2176 = vcmp.gt.f32.partialorder %v1907, 0.0
  %vm2177 = vcmp.gt.f32.partialorder %v1912, 0.0
  %vm2178 = vcmp.gt.f32.partialorder %v1915, 0.0
  %vm2179 = vcmp.gt.f32.partialorder %v1920, 0.0
  %vm2180 = vcmp.gt.f32.partialorder %v1923, 0.0
  %vm2181 = vcmp.gt.f32.partialorder %v1928, 0.0
  %vm2182 = vcmp.gt.f32.partialorder %v1931, 0.0
  %vm2183 = vcmp.gt.f32.partialorder %v1936, 0.0
  %vm2184 = vcmp.gt.f32.partialorder %v1939, 0.0
  %vm2185 = vcmp.gt.f32.partialorder %v1944, 0.0
  %vm2186 = vcmp.gt.f32.partialorder %v1947, 0.0
  %vm2187 = vcmp.gt.f32.partialorder %v1952, 0.0
  %vm2188 = vcmp.gt.f32.partialorder %v1955, 0.0
  %vm2189 = vcmp.gt.f32.partialorder %v1960, 0.0
  %vm2190 = vcmp.gt.f32.partialorder %v1963, 0.0
  %vm2191 = vcmp.gt.f32.partialorder %v1968, 0.0
  %vm2192 = vcmp.gt.f32.partialorder %v1971, 0.0
  %vm2193 = vcmp.gt.f32.partialorder %v1976, 0.0
  %vm2194 = vcmp.gt.f32.partialorder %v1979, 0.0
  %vm2195 = vcmp.gt.f32.partialorder %v1984, 0.0
  %vm2196 = vcmp.gt.f32.partialorder %v1987, 0.0
  %vm2197 = vcmp.gt.f32.partialorder %v1992, 0.0
  %vm2198 = vcmp.gt.f32.partialorder %v1995, 0.0
  %vm2199 = vcmp.gt.f32.partialorder %v2000, 0.0
  %vm2200 = vcmp.gt.f32.partialorder %v2003, 0.0
  %vm2201 = vcmp.gt.f32.partialorder %v2008, 0.0
  %vm2202 = vcmp.gt.f32.partialorder %v2011, 0.0
  %vm2203 = vcmp.gt.f32.partialorder %v2016, 0.0
  %v2204 = vmul.f32 %v1288, 0.01
  %v2205 = vmul.f32 %v1291, 0.01
  %v2206 = vmul.f32 %v1296, 0.01
  %v2207 = vmul.f32 %v1299, 0.01
  %v2208 = vmul.f32 %v1304, 0.01
  %v2209 = vmul.f32 %v1307, 0.01
  %v2210 = vmul.f32 %v1312, 0.01
  %v2211 = vmul.f32 %v1315, 0.01
  %v2212 = vmul.f32 %v1320, 0.01
  %v2213 = vmul.f32 %v1323, 0.01
  %v2214 = vmul.f32 %v1328, 0.01
  %v2215 = vmul.f32 %v1331, 0.01
  %v2216 = vmul.f32 %v1336, 0.01
  %v2217 = vmul.f32 %v1339, 0.01
  %v2218 = vmul.f32 %v1344, 0.01
  %v2219 = vmul.f32 %v1347, 0.01
  %v2220 = vmul.f32 %v1352, 0.01
  %v2221 = vmul.f32 %v1355, 0.01
  %v2222 = vmul.f32 %v1360, 0.01
  %v2223 = vmul.f32 %v1363, 0.01
  %v2224 = vmul.f32 %v1368, 0.01
  %v2225 = vmul.f32 %v1371, 0.01
  %v2226 = vmul.f32 %v1376, 0.01
  %v2227 = vmul.f32 %v1379, 0.01
  %v2228 = vmul.f32 %v1384, 0.01
  %v2229 = vmul.f32 %v1387, 0.01
  %v2230 = vmul.f32 %v1392, 0.01
  %v2231 = vmul.f32 %v1395, 0.01
  %v2232 = vmul.f32 %v1400, 0.01
  %v2233 = vmul.f32 %v1403, 0.01
  %v2234 = vmul.f32 %v1408, 0.01
  %v2235 = vmul.f32 %v1411, 0.01
  %v2236 = vmul.f32 %v1416, 0.01
  %v2237 = vmul.f32 %v1419, 0.01
  %v2238 = vmul.f32 %v1424, 0.01
  %v2239 = vmul.f32 %v1427, 0.01
  %v2240 = vmul.f32 %v1432, 0.01
  %v2241 = vmul.f32 %v1435, 0.01
  %v2242 = vmul.f32 %v1440, 0.01
  %v2243 = vmul.f32 %v1443, 0.01
  %v2244 = vmul.f32 %v1448, 0.01
  %v2245 = vmul.f32 %v1451, 0.01
  %v2246 = vmul.f32 %v1456, 0.01
  %v2247 = vmul.f32 %v1459, 0.01
  %v2248 = vmul.f32 %v1464, 0.01
  %v2249 = vmul.f32 %v1467, 0.01
  %v2250 = vmul.f32 %v1472, 0.01
  %v2251 = vmul.f32 %v1475, 0.01
  %v2252 = vmul.f32 %v1480, 0.01
  %v2253 = vmul.f32 %v1483, 0.01
  %v2254 = vmul.f32 %v1488, 0.01
  %v2255 = vmul.f32 %v1491, 0.01
  %v2256 = vmul.f32 %v1496, 0.01
  %v2257 = vmul.f32 %v1499, 0.01
  %v2258 = vmul.f32 %v1504, 0.01
  %v2259 = vmul.f32 %v1507, 0.01
  %v2260 = vmul.f32 %v1512, 0.01
  %v2261 = vmul.f32 %v1515, 0.01
  %v2262 = vmul.f32 %v1520, 0.01
  %v2263 = vmul.f32 %v1523, 0.01
  %v2264 = vmul.f32 %v1528, 0.01
  %v2265 = vmul.f32 %v1531, 0.01
  %v2266 = vmul.f32 %v1536, 0.01
  %v2267 = vmul.f32 %v1539, 0.01
  %v2268 = vmul.f32 %v1544, 0.01
  %v2269 = vmul.f32 %v1547, 0.01
  %v2270 = vmul.f32 %v1552, 0.01
  %v2271 = vmul.f32 %v1555, 0.01
  %v2272 = vmul.f32 %v1560, 0.01
  %v2273 = vmul.f32 %v1563, 0.01
  %v2274 = vmul.f32 %v1568, 0.01
  %v2275 = vmul.f32 %v1571, 0.01
  %v2276 = vmul.f32 %v1576, 0.01
  %v2277 = vmul.f32 %v1579, 0.01
  %v2278 = vmul.f32 %v1584, 0.01
  %v2279 = vmul.f32 %v1587, 0.01
  %v2280 = vmul.f32 %v1592, 0.01
  %v2281 = vmul.f32 %v1595, 0.01
  %v2282 = vmul.f32 %v1600, 0.01
  %v2283 = vmul.f32 %v1603, 0.01
  %v2284 = vmul.f32 %v1608, 0.01
  %v2285 = vmul.f32 %v1611, 0.01
  %v2286 = vmul.f32 %v1616, 0.01
  %v2287 = vmul.f32 %v1619, 0.01
  %v2288 = vmul.f32 %v1624, 0.01
  %v2289 = vmul.f32 %v1627, 0.01
  %v2290 = vmul.f32 %v1632, 0.01
  %v2291 = vmul.f32 %v1635, 0.01
  %v2292 = vmul.f32 %v1640, 0.01
  %v2293 = vmul.f32 %v1643, 0.01
  %v2294 = vmul.f32 %v1648, 0.01
  %v2295 = vmul.f32 %v1651, 0.01
  %v2296 = vmul.f32 %v1656, 0.01
  %v2297 = vmul.f32 %v1659, 0.01
  %v2298 = vmul.f32 %v1664, 0.01
  %v2299 = vmul.f32 %v1667, 0.01
  %v2300 = vmul.f32 %v1672, 0.01
  %v2301 = vmul.f32 %v1675, 0.01
  %v2302 = vmul.f32 %v1680, 0.01
  %v2303 = vmul.f32 %v1683, 0.01
  %v2304 = vmul.f32 %v1688, 0.01
  %v2305 = vmul.f32 %v1691, 0.01
  %v2306 = vmul.f32 %v1696, 0.01
  %v2307 = vmul.f32 %v1699, 0.01
  %v2308 = vmul.f32 %v1704, 0.01
  %v2309 = vmul.f32 %v1707, 0.01
  %v2310 = vmul.f32 %v1712, 0.01
  %v2311 = vmul.f32 %v1715, 0.01
  %v2312 = vmul.f32 %v1720, 0.01
  %v2313 = vmul.f32 %v1723, 0.01
  %v2314 = vmul.f32 %v1728, 0.01
  %v2315 = vmul.f32 %v1731, 0.01
  %v2316 = vmul.f32 %v1736, 0.01
  %v2317 = vmul.f32 %v1739, 0.01
  %v2318 = vmul.f32 %v1744, 0.01
  %v2319 = vmul.f32 %v1747, 0.01
  %v2320 = vmul.f32 %v1752, 0.01
  %v2321 = vmul.f32 %v1755, 0.01
  %v2322 = vmul.f32 %v1760, 0.01
  %v2323 = vmul.f32 %v1763, 0.01
  %v2324 = vmul.f32 %v1768, 0.01
  %v2325 = vmul.f32 %v1771, 0.01
  %v2326 = vmul.f32 %v1776, 0.01
  %v2327 = vmul.f32 %v1779, 0.01
  %v2328 = vmul.f32 %v1784, 0.01
  %v2329 = vmul.f32 %v1787, 0.01
  %v2330 = vmul.f32 %v1792, 0.01
  %v2331 = vmul.f32 %v1795, 0.01
  %v2332 = vmul.f32 %v1800, 0.01
  %v2333 = vmul.f32 %v1803, 0.01
  %v2334 = vmul.f32 %v1808, 0.01
  %v2335 = vmul.f32 %v1811, 0.01
  %v2336 = vmul.f32 %v1816, 0.01
  %v2337 = vmul.f32 %v1819, 0.01
  %v2338 = vmul.f32 %v1824, 0.01
  %v2339 = vmul.f32 %v1827, 0.01
  %v2340 = vmul.f32 %v1832, 0.01
  %v2341 = vmul.f32 %v1835, 0.01
  %v2342 = vmul.f32 %v1840, 0.01
  %v2343 = vmul.f32 %v1843, 0.01
  %v2344 = vmul.f32 %v1848, 0.01
  %v2345 = vmul.f32 %v1851, 0.01
  %v2346 = vmul.f32 %v1856, 0.01
  %v2347 = vmul.f32 %v1859, 0.01
  %v2348 = vmul.f32 %v1864, 0.01
  %v2349 = vmul.f32 %v1867, 0.01
  %v2350 = vmul.f32 %v1872, 0.01
  %v2351 = vmul.f32 %v1875, 0.01
  %v2352 = vmul.f32 %v1880, 0.01
  %v2353 = vmul.f32 %v1883, 0.01
  %v2354 = vmul.f32 %v1888, 0.01
  %v2355 = vmul.f32 %v1891, 0.01
  %v2356 = vmul.f32 %v1896, 0.01
  %v2357 = vmul.f32 %v1899, 0.01
  %v2358 = vmul.f32 %v1904, 0.01
  %v2359 = vmul.f32 %v1907, 0.01
  %v2360 = vmul.f32 %v1912, 0.01
  %v2361 = vmul.f32 %v1915, 0.01
  %v2362 = vmul.f32 %v1920, 0.01
  %v2363 = vmul.f32 %v1923, 0.01
  %v2364 = vmul.f32 %v1928, 0.01
  %v2365 = vmul.f32 %v1931, 0.01
  %v2366 = vmul.f32 %v1936, 0.01
  %v2367 = vmul.f32 %v1939, 0.01
  %v2368 = vmul.f32 %v1944, 0.01
  %v2369 = vmul.f32 %v1947, 0.01
  %v2370 = vmul.f32 %v1952, 0.01
  %v2371 = vmul.f32 %v1955, 0.01
  %v2372 = vmul.f32 %v1960, 0.01
  %v2373 = vmul.f32 %v1963, 0.01
  %v2374 = vmul.f32 %v1968, 0.01
  %v2375 = vmul.f32 %v1971, 0.01
  %v2376 = vmul.f32 %v1976, 0.01
  %v2377 = vmul.f32 %v1979, 0.01
  %v2378 = vmul.f32 %v1984, 0.01
  %v2379 = vmul.f32 %v1987, 0.01
  %v2380 = vmul.f32 %v1992, 0.01
  %v2381 = vmul.f32 %v1995, 0.01
  %v2382 = vmul.f32 %v2000, 0.01
  %v2383 = vmul.f32 %v2003, 0.01
  %v2384 = vmul.f32 %v2008, 0.01
  %v2385 = vmul.f32 %v2011, 0.01
  %v2386 = vmul.f32 %v2016, 0.01
  %v2387 = vsel %vm2021, %v1288, %v2204
  %v2388 = vsel %vm2022, %v1291, %v2205
  %v2389 = vsel %vm2023, %v1296, %v2206
  %v2390 = vsel %vm2024, %v1299, %v2207
  %v2391 = vsel %vm2025, %v1304, %v2208
  %v2392 = vsel %vm2026, %v1307, %v2209
  %v2393 = vsel %vm2027, %v1312, %v2210
  %v2394 = vsel %vm2028, %v1315, %v2211
  %v2395 = vsel %vm2029, %v1320, %v2212
  %v2396 = vsel %vm2030, %v1323, %v2213
  %v2397 = vsel %vm2031, %v1328, %v2214
  %v2398 = vsel %vm2032, %v1331, %v2215
  %v2399 = vsel %vm2033, %v1336, %v2216
  %v2400 = vsel %vm2034, %v1339, %v2217
  %v2401 = vsel %vm2035, %v1344, %v2218
  %v2402 = vsel %vm2036, %v1347, %v2219
  %v2403 = vsel %vm2037, %v1352, %v2220
  %v2404 = vsel %vm2038, %v1355, %v2221
  %v2405 = vsel %vm2039, %v1360, %v2222
  %v2406 = vsel %vm2040, %v1363, %v2223
  %v2407 = vsel %vm2041, %v1368, %v2224
  %v2408 = vsel %vm2042, %v1371, %v2225
  %v2409 = vsel %vm2043, %v1376, %v2226
  %v2410 = vsel %vm2044, %v1379, %v2227
  %v2411 = vsel %vm2045, %v1384, %v2228
  %v2412 = vsel %vm2046, %v1387, %v2229
  %v2413 = vsel %vm2047, %v1392, %v2230
  %v2414 = vsel %vm2048, %v1395, %v2231
  %v2415 = vsel %vm2049, %v1400, %v2232
  %v2416 = vsel %vm2050, %v1403, %v2233
  %v2417 = vsel %vm2051, %v1408, %v2234
  %v2418 = vsel %vm2052, %v1411, %v2235
  %v2419 = vsel %vm2053, %v1416, %v2236
  %v2420 = vsel %vm2054, %v1419, %v2237
  %v2421 = vsel %vm2055, %v1424, %v2238
  %v2422 = vsel %vm2056, %v1427, %v2239
  %v2423 = vsel %vm2057, %v1432, %v2240
  %v2424 = vsel %vm2058, %v1435, %v2241
  %v2425 = vsel %vm2059, %v1440, %v2242
  %v2426 = vsel %vm2060, %v1443, %v2243
  %v2427 = vsel %vm2061, %v1448, %v2244
  %v2428 = vsel %vm2062, %v1451, %v2245
  %v2429 = vsel %vm2063, %v1456, %v2246
  %v2430 = vsel %vm2064, %v1459, %v2247
  %v2431 = vsel %vm2065, %v1464, %v2248
  %v2432 = vsel %vm2066, %v1467, %v2249
  %v2433 = vsel %vm2067, %v1472, %v2250
  %v2434 = vsel %vm2068, %v1475, %v2251
  %v2435 = vsel %vm2069, %v1480, %v2252
  %v2436 = vsel %vm2070, %v1483, %v2253
  %v2437 = vsel %vm2071, %v1488, %v2254
  %v2438 = vsel %vm2072, %v1491, %v2255
  %v2439 = vsel %vm2073, %v1496, %v2256
  %v2440 = vsel %vm2074, %v1499, %v2257
  %v2441 = vsel %vm2075, %v1504, %v2258
  %v2442 = vsel %vm2076, %v1507, %v2259
  %v2443 = vsel %vm2077, %v1512, %v2260
  %v2444 = vsel %vm2078, %v1515, %v2261
  %v2445 = vsel %vm2079, %v1520, %v2262
  %v2446 = vsel %vm2080, %v1523, %v2263
  %v2447 = vsel %vm2081, %v1528, %v2264
  %v2448 = vsel %vm2082, %v1531, %v2265
  %v2449 = vsel %vm2083, %v1536, %v2266
  %v2450 = vsel %vm2084, %v1539, %v2267
  %v2451 = vsel %vm2085, %v1544, %v2268
  %v2452 = vsel %vm2086, %v1547, %v2269
  %v2453 = vsel %vm2087, %v1552, %v2270
  %v2454 = vsel %vm2088, %v1555, %v2271
  %v2455 = vsel %vm2089, %v1560, %v2272
  %v2456 = vsel %vm2090, %v1563, %v2273
  %v2457 = vsel %vm2091, %v1568, %v2274
  %v2458 = vsel %vm2092, %v1571, %v2275
  %v2459 = vsel %vm2093, %v1576, %v2276
  %v2460 = vsel %vm2094, %v1579, %v2277
  %v2461 = vsel %vm2095, %v1584, %v2278
  %v2462 = vsel %vm2096, %v1587, %v2279
  %v2463 = vsel %vm2097, %v1592, %v2280
  %v2464 = vsel %vm2098, %v1595, %v2281
  %v2465 = vsel %vm2099, %v1600, %v2282
  %v2466 = vsel %vm2100, %v1603, %v2283
  %v2467 = vsel %vm2101, %v1608, %v2284
  %v2468 = vsel %vm2102, %v1611, %v2285
  %v2469 = vsel %vm2103, %v1616, %v2286
  %v2470 = vsel %vm2104, %v1619, %v2287
  %v2471 = vsel %vm2105, %v1624, %v2288
  %v2472 = vsel %vm2106, %v1627, %v2289
  %v2473 = vsel %vm2107, %v1632, %v2290
  %v2474 = vsel %vm2108, %v1635, %v2291
  %v2475 = vsel %vm2109, %v1640, %v2292
  %v2476 = vsel %vm2110, %v1643, %v2293
  %v2477 = vsel %vm2111, %v1648, %v2294
  %v2478 = vsel %vm2112, %v1651, %v2295
  %v2479 = vsel %vm2113, %v1656, %v2296
  %v2480 = vsel %vm2114, %v1659, %v2297
  %v2481 = vsel %vm2115, %v1664, %v2298
  %v2482 = vsel %vm2116, %v1667, %v2299
  %v2483 = vsel %vm2117, %v1672, %v2300
  %v2484 = vsel %vm2118, %v1675, %v2301
  %v2485 = vsel %vm2119, %v1680, %v2302
  %v2486 = vsel %vm2120, %v1683, %v2303
  %v2487 = vsel %vm2121, %v1688, %v2304
  %v2488 = vsel %vm2122, %v1691, %v2305
  %v2489 = vsel %vm2123, %v1696, %v2306
  %v2490 = vsel %vm2124, %v1699, %v2307
  %v2491 = vsel %vm2125, %v1704, %v2308
  %v2492 = vsel %vm2126, %v1707, %v2309
  %v2493 = vsel %vm2127, %v1712, %v2310
  %v2494 = vsel %vm2128, %v1715, %v2311
  %v2495 = vsel %vm2129, %v1720, %v2312
  %v2496 = vsel %vm2130, %v1723, %v2313
  %v2497 = vsel %vm2131, %v1728, %v2314
  %v2498 = vsel %vm2132, %v1731, %v2315
  %v2499 = vsel %vm2133, %v1736, %v2316
  %v2500 = vsel %vm2134, %v1739, %v2317
  %v2501 = vsel %vm2135, %v1744, %v2318
  %v2502 = vsel %vm2136, %v1747, %v2319
  %v2503 = vsel %vm2137, %v1752, %v2320
  %v2504 = vsel %vm2138, %v1755, %v2321
  %v2505 = vsel %vm2139, %v1760, %v2322
  %v2506 = vsel %vm2140, %v1763, %v2323
  %v2507 = vsel %vm2141, %v1768, %v2324
  %v2508 = vsel %vm2142, %v1771, %v2325
  %v2509 = vsel %vm2143, %v1776, %v2326
  %v2510 = vsel %vm2144, %v1779, %v2327
  %v2511 = vsel %vm2145, %v1784, %v2328
  %v2512 = vsel %vm2146, %v1787, %v2329
  %v2513 = vsel %vm2147, %v1792, %v2330
  %v2514 = vsel %vm2148, %v1795, %v2331
  %v2515 = vsel %vm2149, %v1800, %v2332
  %v2516 = vsel %vm2150, %v1803, %v2333
  %v2517 = vsel %vm2151, %v1808, %v2334
  %v2518 = vsel %vm2152, %v1811, %v2335
  %v2519 = vsel %vm2153, %v1816, %v2336
  %v2520 = vsel %vm2154, %v1819, %v2337
  %v2521 = vsel %vm2155, %v1824, %v2338
  %v2522 = vsel %vm2156, %v1827, %v2339
  %v2523 = vsel %vm2157, %v1832, %v2340
  %v2524 = vsel %vm2158, %v1835, %v2341
  %v2525 = vsel %vm2159, %v1840, %v2342
  %v2526 = vsel %vm2160, %v1843, %v2343
  %v2527 = vsel %vm2161, %v1848, %v2344
  %v2528 = vsel %vm2162, %v1851, %v2345
  %v2529 = vsel %vm2163, %v1856, %v2346
  %v2530 = vsel %vm2164, %v1859, %v2347
  %v2531 = vsel %vm2165, %v1864, %v2348
  %v2532 = vsel %vm2166, %v1867, %v2349
  %v2533 = vsel %vm2167, %v1872, %v2350
  %v2534 = vsel %vm2168, %v1875, %v2351
  %v2535 = vsel %vm2169, %v1880, %v2352
  %v2536 = vsel %vm2170, %v1883, %v2353
  %v2537 = vsel %vm2171, %v1888, %v2354
  %v2538 = vsel %vm2172, %v1891, %v2355
  %v2539 = vsel %vm2173, %v1896, %v2356
  %v2540 = vsel %vm2174, %v1899, %v2357
  %v2541 = vsel %vm2175, %v1904, %v2358
  %v2542 = vsel %vm2176, %v1907, %v2359
  %v2543 = vsel %vm2177, %v1912, %v2360
  %v2544 = vsel %vm2178, %v1915, %v2361
  %v2545 = vsel %vm2179, %v1920, %v2362
  %v2546 = vsel %vm2180, %v1923, %v2363
  %v2547 = vsel %vm2181, %v1928, %v2364
  %v2548 = vsel %vm2182, %v1931, %v2365
  %v2549 = vsel %vm2183, %v1936, %v2366
  %v2550 = vsel %vm2184, %v1939, %v2367
  %v2551 = vsel %vm2185, %v1944, %v2368
  %v2552 = vsel %vm2186, %v1947, %v2369
  %v2553 = vsel %vm2187, %v1952, %v2370
  %v2554 = vsel %vm2188, %v1955, %v2371
  %v2555 = vsel %vm2189, %v1960, %v2372
  %v2556 = vsel %vm2190, %v1963, %v2373
  %v2557 = vsel %vm2191, %v1968, %v2374
  %v2558 = vsel %vm2192, %v1971, %v2375
  %v2559 = vsel %vm2193, %v1976, %v2376
  %v2560 = vsel %vm2194, %v1979, %v2377
  %v2561 = vsel %vm2195, %v1984, %v2378
  %v2562 = vsel %vm2196, %v1987, %v2379
  %v2563 = vsel %vm2197, %v1992, %v2380
  %v2564 = vsel %vm2198, %v1995, %v2381
  %v2565 = vsel %vm2199, %v2000, %v2382
  %v2566 = vsel %vm2200, %v2003, %v2383
  %v2567 = vsel %vm2201, %v2008, %v2384
  %v2568 = vsel %vm2202, %v2011, %v2385
  %v2569 = vsel %vm2203, %v2016, %v2386
  %vm2570 = vcmask 261120
  %2571 = vst.msk [vmem:[%s3] sm:$0xff] %vm2570, %v2387
  %2572 = vst.msk [vmem:[%s3 + $0x8] sm:$0xff] %vm2570, %v2388
  %2573 = vst.msk [vmem:[%s3 + $0x10] sm:$0xff] %vm2570, %v2389
  %2574 = vst.msk [vmem:[%s3 + $0x18] sm:$0xff] %vm2570, %v2390
  %2575 = vst.msk [vmem:[%s3 + $0x20] sm:$0xff] %vm2570, %v2391
  %2576 = vst.msk [vmem:[%s3 + $0x28] sm:$0xff] %vm2570, %v2392
  %2577 = vst.msk [vmem:[%s3 + $0x30] sm:$0xff] %vm2570, %v2393
  %2578 = vst.msk [vmem:[%s3 + $0x38] sm:$0xff] %vm2570, %v2394
  %2579 = vst.msk [vmem:[%s3 + $0x40] sm:$0xff] %vm2570, %v2395
  %2580 = vst.msk [vmem:[%s3 + $0x48] sm:$0xff] %vm2570, %v2396
  %2581 = vst.msk [vmem:[%s3 + $0x50] sm:$0xff] %vm2570, %v2397
  %2582 = vst.msk [vmem:[%s3 + $0x58] sm:$0xff] %vm2570, %v2398
  %2583 = vst.msk [vmem:[%s3 + $0x60] sm:$0xff] %vm2570, %v2399
  %2584 = vst.msk [vmem:[%s3 + $0x68] sm:$0xff] %vm2570, %v2400
  %2585 = vst.msk [vmem:[%s3 + $0x70] sm:$0xff] %vm2570, %v2401
  %2586 = vst.msk [vmem:[%s3 + $0x78] sm:$0xff] %vm2570, %v2402
  %2587 = vst.msk [vmem:[%s3 + $0x80] sm:$0xff] %vm2570, %v2403
  %2588 = vst.msk [vmem:[%s3 + $0x88] sm:$0xff] %vm2570, %v2404
  %2589 = vst.msk [vmem:[%s3 + $0x90] sm:$0xff] %vm2570, %v2405
  %2590 = vst.msk [vmem:[%s3 + $0x98] sm:$0xff] %vm2570, %v2406
  %2591 = vst.msk [vmem:[%s3 + $0xa0] sm:$0xff] %vm2570, %v2407
  %2592 = vst.msk [vmem:[%s3 + $0xa8] sm:$0xff] %vm2570, %v2408
  %2593 = vst.msk [vmem:[%s3 + $0xb0] sm:$0xff] %vm2570, %v2409
  %2594 = vst.msk [vmem:[%s3 + $0xb8] sm:$0xff] %vm2570, %v2410
  %2595 = vst.msk [vmem:[%s3 + $0xc0] sm:$0xff] %vm2570, %v2411
  %2596 = vst.msk [vmem:[%s3 + $0xc8] sm:$0xff] %vm2570, %v2412
  %2597 = vst.msk [vmem:[%s3 + $0xd0] sm:$0xff] %vm2570, %v2413
  %2598 = vst.msk [vmem:[%s3 + $0xd8] sm:$0xff] %vm2570, %v2414
  %2599 = vst.msk [vmem:[%s3 + $0xe0] sm:$0xff] %vm2570, %v2415
  %2600 = vst.msk [vmem:[%s3 + $0xe8] sm:$0xff] %vm2570, %v2416
  %2601 = vst.msk [vmem:[%s3 + $0xf0] sm:$0xff] %vm2570, %v2417
  %2602 = vst.msk [vmem:[%s3 + $0xf8] sm:$0xff] %vm2570, %v2418
  %2603 = vst.msk [vmem:[%s3 + $0x100] sm:$0xff] %vm2570, %v2419
  %2604 = vst.msk [vmem:[%s3 + $0x108] sm:$0xff] %vm2570, %v2420
  %2605 = vst.msk [vmem:[%s3 + $0x110] sm:$0xff] %vm2570, %v2421
  %2606 = vst.msk [vmem:[%s3 + $0x118] sm:$0xff] %vm2570, %v2422
  %2607 = vst.msk [vmem:[%s3 + $0x120] sm:$0xff] %vm2570, %v2423
  %2608 = vst.msk [vmem:[%s3 + $0x128] sm:$0xff] %vm2570, %v2424
  %2609 = vst.msk [vmem:[%s3 + $0x130] sm:$0xff] %vm2570, %v2425
  %2610 = vst.msk [vmem:[%s3 + $0x138] sm:$0xff] %vm2570, %v2426
  %2611 = vst.msk [vmem:[%s3 + $0x140] sm:$0xff] %vm2570, %v2427
  %2612 = vst.msk [vmem:[%s3 + $0x148] sm:$0xff] %vm2570, %v2428
  %2613 = vst.msk [vmem:[%s3 + $0x150] sm:$0xff] %vm2570, %v2429
  %2614 = vst.msk [vmem:[%s3 + $0x158] sm:$0xff] %vm2570, %v2430
  %2615 = vst.msk [vmem:[%s3 + $0x160] sm:$0xff] %vm2570, %v2431
  %2616 = vst.msk [vmem:[%s3 + $0x168] sm:$0xff] %vm2570, %v2432
  %2617 = vst.msk [vmem:[%s3 + $0x170] sm:$0xff] %vm2570, %v2433
  %2618 = vst.msk [vmem:[%s3 + $0x178] sm:$0xff] %vm2570, %v2434
  %2619 = vst.msk [vmem:[%s3 + $0x180] sm:$0xff] %vm2570, %v2435
  %2620 = vst.msk [vmem:[%s3 + $0x188] sm:$0xff] %vm2570, %v2436
  %2621 = vst.msk [vmem:[%s3 + $0x190] sm:$0xff] %vm2570, %v2437
  %2622 = vst.msk [vmem:[%s3 + $0x198] sm:$0xff] %vm2570, %v2438
  %2623 = vst.msk [vmem:[%s3 + $0x1a0] sm:$0xff] %vm2570, %v2439
  %2624 = vst.msk [vmem:[%s3 + $0x1a8] sm:$0xff] %vm2570, %v2440
  %2625 = vst.msk [vmem:[%s3 + $0x1b0] sm:$0xff] %vm2570, %v2441
  %2626 = vst.msk [vmem:[%s3 + $0x1b8] sm:$0xff] %vm2570, %v2442
  %2627 = vst.msk [vmem:[%s3 + $0x1c0] sm:$0xff] %vm2570, %v2443
  %2628 = vst.msk [vmem:[%s3 + $0x1c8] sm:$0xff] %vm2570, %v2444
  %2629 = vst.msk [vmem:[%s3 + $0x1d0] sm:$0xff] %vm2570, %v2445
  %2630 = vst.msk [vmem:[%s3 + $0x1d8] sm:$0xff] %vm2570, %v2446
  %2631 = vst.msk [vmem:[%s3 + $0x1e0] sm:$0xff] %vm2570, %v2447
  %2632 = vst.msk [vmem:[%s3 + $0x1e8] sm:$0xff] %vm2570, %v2448
  %2633 = vst.msk [vmem:[%s3 + $0x1f0] sm:$0xff] %vm2570, %v2449
  %2634 = vst.msk [vmem:[%s3 + $0x1f8] sm:$0xff] %vm2570, %v2450
  %2635 = vst.msk [vmem:[%s3 + $0x200] sm:$0xff] %vm2570, %v2451
  %2636 = vst.msk [vmem:[%s3 + $0x208] sm:$0xff] %vm2570, %v2452
  %2637 = vst.msk [vmem:[%s3 + $0x210] sm:$0xff] %vm2570, %v2453
  %2638 = vst.msk [vmem:[%s3 + $0x218] sm:$0xff] %vm2570, %v2454
  %2639 = vst.msk [vmem:[%s3 + $0x220] sm:$0xff] %vm2570, %v2455
  %2640 = vst.msk [vmem:[%s3 + $0x228] sm:$0xff] %vm2570, %v2456
  %2641 = vst.msk [vmem:[%s3 + $0x230] sm:$0xff] %vm2570, %v2457
  %2642 = vst.msk [vmem:[%s3 + $0x238] sm:$0xff] %vm2570, %v2458
  %2643 = vst.msk [vmem:[%s3 + $0x240] sm:$0xff] %vm2570, %v2459
  %2644 = vst.msk [vmem:[%s3 + $0x248] sm:$0xff] %vm2570, %v2460
  %2645 = vst.msk [vmem:[%s3 + $0x250] sm:$0xff] %vm2570, %v2461
  %2646 = vst.msk [vmem:[%s3 + $0x258] sm:$0xff] %vm2570, %v2462
  %2647 = vst.msk [vmem:[%s3 + $0x260] sm:$0xff] %vm2570, %v2463
  %2648 = vst.msk [vmem:[%s3 + $0x268] sm:$0xff] %vm2570, %v2464
  %2649 = vst.msk [vmem:[%s3 + $0x270] sm:$0xff] %vm2570, %v2465
  %2650 = vst.msk [vmem:[%s3 + $0x278] sm:$0xff] %vm2570, %v2466
  %2651 = vst.msk [vmem:[%s3 + $0x280] sm:$0xff] %vm2570, %v2467
  %2652 = vst.msk [vmem:[%s3 + $0x288] sm:$0xff] %vm2570, %v2468
  %2653 = vst.msk [vmem:[%s3 + $0x290] sm:$0xff] %vm2570, %v2469
  %2654 = vst.msk [vmem:[%s3 + $0x298] sm:$0xff] %vm2570, %v2470
  %2655 = vst.msk [vmem:[%s3 + $0x2a0] sm:$0xff] %vm2570, %v2471
  %2656 = vst.msk [vmem:[%s3 + $0x2a8] sm:$0xff] %vm2570, %v2472
  %2657 = vst.msk [vmem:[%s3 + $0x2b0] sm:$0xff] %vm2570, %v2473
  %2658 = vst.msk [vmem:[%s3 + $0x2b8] sm:$0xff] %vm2570, %v2474
  %2659 = vst.msk [vmem:[%s3 + $0x2c0] sm:$0xff] %vm2570, %v2475
  %2660 = vst.msk [vmem:[%s3 + $0x2c8] sm:$0xff] %vm2570, %v2476
  %2661 = vst.msk [vmem:[%s3 + $0x2d0] sm:$0xff] %vm2570, %v2477
  %2662 = vst.msk [vmem:[%s3 + $0x2d8] sm:$0xff] %vm2570, %v2478
  %2663 = vst.msk [vmem:[%s3 + $0x2e0] sm:$0xff] %vm2570, %v2479
  %2664 = vst.msk [vmem:[%s3 + $0x2e8] sm:$0xff] %vm2570, %v2480
  %2665 = vst.msk [vmem:[%s3 + $0x2f0] sm:$0xff] %vm2570, %v2481
  %2666 = vst.msk [vmem:[%s3 + $0x2f8] sm:$0xff] %vm2570, %v2482
  %2667 = vst.msk [vmem:[%s3 + $0x300] sm:$0xff] %vm2570, %v2483
  %2668 = vst.msk [vmem:[%s3 + $0x308] sm:$0xff] %vm2570, %v2484
  %2669 = vst.msk [vmem:[%s3 + $0x310] sm:$0xff] %vm2570, %v2485
  %2670 = vst.msk [vmem:[%s3 + $0x318] sm:$0xff] %vm2570, %v2486
  %2671 = vst.msk [vmem:[%s3 + $0x320] sm:$0xff] %vm2570, %v2487
  %2672 = vst.msk [vmem:[%s3 + $0x328] sm:$0xff] %vm2570, %v2488
  %2673 = vst.msk [vmem:[%s3 + $0x330] sm:$0xff] %vm2570, %v2489
  %2674 = vst.msk [vmem:[%s3 + $0x338] sm:$0xff] %vm2570, %v2490
  %2675 = vst.msk [vmem:[%s3 + $0x340] sm:$0xff] %vm2570, %v2491
  %2676 = vst.msk [vmem:[%s3 + $0x348] sm:$0xff] %vm2570, %v2492
  %2677 = vst.msk [vmem:[%s3 + $0x350] sm:$0xff] %vm2570, %v2493
  %2678 = vst.msk [vmem:[%s3 + $0x358] sm:$0xff] %vm2570, %v2494
  %2679 = vst.msk [vmem:[%s3 + $0x360] sm:$0xff] %vm2570, %v2495
  %2680 = vst.msk [vmem:[%s3 + $0x368] sm:$0xff] %vm2570, %v2496
  %2681 = vst.msk [vmem:[%s3 + $0x370] sm:$0xff] %vm2570, %v2497
  %2682 = vst.msk [vmem:[%s3 + $0x378] sm:$0xff] %vm2570, %v2498
  %2683 = vst.msk [vmem:[%s3 + $0x380] sm:$0xff] %vm2570, %v2499
  %2684 = vst.msk [vmem:[%s3 + $0x388] sm:$0xff] %vm2570, %v2500
  %2685 = vst.msk [vmem:[%s3 + $0x390] sm:$0xff] %vm2570, %v2501
  %2686 = vst.msk [vmem:[%s3 + $0x398] sm:$0xff] %vm2570, %v2502
  %2687 = vst.msk [vmem:[%s3 + $0x3a0] sm:$0xff] %vm2570, %v2503
  %2688 = vst.msk [vmem:[%s3 + $0x3a8] sm:$0xff] %vm2570, %v2504
  %2689 = vst.msk [vmem:[%s3 + $0x3b0] sm:$0xff] %vm2570, %v2505
  %2690 = vst.msk [vmem:[%s3 + $0x3b8] sm:$0xff] %vm2570, %v2506
  %2691 = vst.msk [vmem:[%s3 + $0x3c0] sm:$0xff] %vm2570, %v2507
  %2692 = vst.msk [vmem:[%s3 + $0x3c8] sm:$0xff] %vm2570, %v2508
  %2693 = vst.msk [vmem:[%s3 + $0x3d0] sm:$0xff] %vm2570, %v2509
  %2694 = vst.msk [vmem:[%s3 + $0x3d8] sm:$0xff] %vm2570, %v2510
  %2695 = vst.msk [vmem:[%s3 + $0x3e0] sm:$0xff] %vm2570, %v2511
  %2696 = vst.msk [vmem:[%s3 + $0x3e8] sm:$0xff] %vm2570, %v2512
  %2697 = vst.msk [vmem:[%s3 + $0x3f0] sm:$0xff] %vm2570, %v2513
  %2698 = vst.msk [vmem:[%s3 + $0x3f8] sm:$0xff] %vm2570, %v2514
  %2699 = vst.msk [vmem:[%s3 + $0x400] sm:$0xff] %vm2570, %v2515
  %2700 = vst.msk [vmem:[%s3 + $0x408] sm:$0xff] %vm2570, %v2516
  %2701 = vst.msk [vmem:[%s3 + $0x410] sm:$0xff] %vm2570, %v2517
  %2702 = vst.msk [vmem:[%s3 + $0x418] sm:$0xff] %vm2570, %v2518
  %2703 = vst.msk [vmem:[%s3 + $0x420] sm:$0xff] %vm2570, %v2519
  %2704 = vst.msk [vmem:[%s3 + $0x428] sm:$0xff] %vm2570, %v2520
  %2705 = vst.msk [vmem:[%s3 + $0x430] sm:$0xff] %vm2570, %v2521
  %2706 = vst.msk [vmem:[%s3 + $0x438] sm:$0xff] %vm2570, %v2522
  %2707 = vst.msk [vmem:[%s3 + $0x440] sm:$0xff] %vm2570, %v2523
  %2708 = vst.msk [vmem:[%s3 + $0x448] sm:$0xff] %vm2570, %v2524
  %2709 = vst.msk [vmem:[%s3 + $0x450] sm:$0xff] %vm2570, %v2525
  %2710 = vst.msk [vmem:[%s3 + $0x458] sm:$0xff] %vm2570, %v2526
  %2711 = vst.msk [vmem:[%s3 + $0x460] sm:$0xff] %vm2570, %v2527
  %2712 = vst.msk [vmem:[%s3 + $0x468] sm:$0xff] %vm2570, %v2528
  %2713 = vst.msk [vmem:[%s3 + $0x470] sm:$0xff] %vm2570, %v2529
  %2714 = vst.msk [vmem:[%s3 + $0x478] sm:$0xff] %vm2570, %v2530
  %2715 = vst.msk [vmem:[%s3 + $0x480] sm:$0xff] %vm2570, %v2531
  %2716 = vst.msk [vmem:[%s3 + $0x488] sm:$0xff] %vm2570, %v2532
  %2717 = vst.msk [vmem:[%s3 + $0x490] sm:$0xff] %vm2570, %v2533
  %2718 = vst.msk [vmem:[%s3 + $0x498] sm:$0xff] %vm2570, %v2534
  %2719 = vst.msk [vmem:[%s3 + $0x4a0] sm:$0xff] %vm2570, %v2535
  %2720 = vst.msk [vmem:[%s3 + $0x4a8] sm:$0xff] %vm2570, %v2536
  %2721 = vst.msk [vmem:[%s3 + $0x4b0] sm:$0xff] %vm2570, %v2537
  %2722 = vst.msk [vmem:[%s3 + $0x4b8] sm:$0xff] %vm2570, %v2538
  %2723 = vst.msk [vmem:[%s3 + $0x4c0] sm:$0xff] %vm2570, %v2539
  %2724 = vst.msk [vmem:[%s3 + $0x4c8] sm:$0xff] %vm2570, %v2540
  %2725 = vst.msk [vmem:[%s3 + $0x4d0] sm:$0xff] %vm2570, %v2541
  %2726 = vst.msk [vmem:[%s3 + $0x4d8] sm:$0xff] %vm2570, %v2542
  %2727 = vst.msk [vmem:[%s3 + $0x4e0] sm:$0xff] %vm2570, %v2543
  %2728 = vst.msk [vmem:[%s3 + $0x4e8] sm:$0xff] %vm2570, %v2544
  %2729 = vst.msk [vmem:[%s3 + $0x4f0] sm:$0xff] %vm2570, %v2545
  %2730 = vst.msk [vmem:[%s3 + $0x4f8] sm:$0xff] %vm2570, %v2546
  %2731 = vst.msk [vmem:[%s3 + $0x500] sm:$0xff] %vm2570, %v2547
  %2732 = vst.msk [vmem:[%s3 + $0x508] sm:$0xff] %vm2570, %v2548
  %2733 = vst.msk [vmem:[%s3 + $0x510] sm:$0xff] %vm2570, %v2549
  %2734 = vst.msk [vmem:[%s3 + $0x518] sm:$0xff] %vm2570, %v2550
  %2735 = vst.msk [vmem:[%s3 + $0x520] sm:$0xff] %vm2570, %v2551
  %2736 = vst.msk [vmem:[%s3 + $0x528] sm:$0xff] %vm2570, %v2552
  %2737 = vst.msk [vmem:[%s3 + $0x530] sm:$0xff] %vm2570, %v2553
  %2738 = vst.msk [vmem:[%s3 + $0x538] sm:$0xff] %vm2570, %v2554
  %2739 = vst.msk [vmem:[%s3 + $0x540] sm:$0xff] %vm2570, %v2555
  %2740 = vst.msk [vmem:[%s3 + $0x548] sm:$0xff] %vm2570, %v2556
  %2741 = vst.msk [vmem:[%s3 + $0x550] sm:$0xff] %vm2570, %v2557
  %2742 = vst.msk [vmem:[%s3 + $0x558] sm:$0xff] %vm2570, %v2558
  %2743 = vst.msk [vmem:[%s3 + $0x560] sm:$0xff] %vm2570, %v2559
  %2744 = vst.msk [vmem:[%s3 + $0x568] sm:$0xff] %vm2570, %v2560
  %2745 = vst.msk [vmem:[%s3 + $0x570] sm:$0xff] %vm2570, %v2561
  %2746 = vst.msk [vmem:[%s3 + $0x578] sm:$0xff] %vm2570, %v2562
  %2747 = vst.msk [vmem:[%s3 + $0x580] sm:$0xff] %vm2570, %v2563
  %2748 = vst.msk [vmem:[%s3 + $0x588] sm:$0xff] %vm2570, %v2564
  %2749 = vst.msk [vmem:[%s3 + $0x590] sm:$0xff] %vm2570, %v2565
  %2750 = vst.msk [vmem:[%s3 + $0x598] sm:$0xff] %vm2570, %v2566
  %2751 = vst.msk [vmem:[%s3 + $0x5a0] sm:$0xff] %vm2570, %v2567
  %2752 = vst.msk [vmem:[%s3 + $0x5a8] sm:$0xff] %vm2570, %v2568
  %vm2753 = vcmask 254976
  %2754 = vst.msk [vmem:[%s3 + $0x5b0] sm:$0x3] %vm2753, %v2569
  %v2755 = vsel %vm2570, %v2387, 0.0
  %v2756 = vsel %vm2570, %v2388, 0.0
  %v2757 = vadd.f32 %v2755, %v2756
  %v2758 = vsel %vm2570, %v2389, 0.0
  %v2759 = vadd.f32 %v2757, %v2758
  %v2760 = vsel %vm2570, %v2390, 0.0
  %v2761 = vadd.f32 %v2759, %v2760
  %v2762 = vsel %vm2570, %v2391, 0.0
  %v2763 = vadd.f32 %v2761, %v2762
  %v2764 = vsel %vm2570, %v2392, 0.0
  %v2765 = vadd.f32 %v2763, %v2764
  %v2766 = vsel %vm2570, %v2393, 0.0
  %v2767 = vadd.f32 %v2765, %v2766
  %v2768 = vsel %vm2570, %v2394, 0.0
  %v2769 = vadd.f32 %v2767, %v2768
  %v2770 = vsel %vm2570, %v2395, 0.0
  %v2771 = vadd.f32 %v2769, %v2770
  %v2772 = vsel %vm2570, %v2396, 0.0
  %v2773 = vadd.f32 %v2771, %v2772
  %v2774 = vsel %vm2570, %v2397, 0.0
  %v2775 = vadd.f32 %v2773, %v2774
  %v2776 = vsel %vm2570, %v2398, 0.0
  %v2777 = vadd.f32 %v2775, %v2776
  %v2778 = vsel %vm2570, %v2399, 0.0
  %v2779 = vadd.f32 %v2777, %v2778
  %v2780 = vsel %vm2570, %v2400, 0.0
  %v2781 = vadd.f32 %v2779, %v2780
  %v2782 = vsel %vm2570, %v2401, 0.0
  %v2783 = vadd.f32 %v2781, %v2782
  %v2784 = vsel %vm2570, %v2402, 0.0
  %v2785 = vadd.f32 %v2783, %v2784
  %v2786 = vsel %vm2570, %v2403, 0.0
  %v2787 = vadd.f32 %v2785, %v2786
  %v2788 = vsel %vm2570, %v2404, 0.0
  %v2789 = vadd.f32 %v2787, %v2788
  %v2790 = vsel %vm2570, %v2405, 0.0
  %v2791 = vadd.f32 %v2789, %v2790
  %v2792 = vsel %vm2570, %v2406, 0.0
  %v2793 = vadd.f32 %v2791, %v2792
  %v2794 = vsel %vm2570, %v2407, 0.0
  %v2795 = vadd.f32 %v2793, %v2794
  %v2796 = vsel %vm2570, %v2408, 0.0
  %v2797 = vadd.f32 %v2795, %v2796
  %v2798 = vsel %vm2570, %v2409, 0.0
  %v2799 = vadd.f32 %v2797, %v2798
  %v2800 = vsel %vm2570, %v2410, 0.0
  %v2801 = vadd.f32 %v2799, %v2800
  %v2802 = vsel %vm2570, %v2411, 0.0
  %v2803 = vadd.f32 %v2801, %v2802
  %v2804 = vsel %vm2570, %v2412, 0.0
  %v2805 = vadd.f32 %v2803, %v2804
  %v2806 = vsel %vm2570, %v2413, 0.0
  %v2807 = vadd.f32 %v2805, %v2806
  %v2808 = vsel %vm2570, %v2414, 0.0
  %v2809 = vadd.f32 %v2807, %v2808
  %v2810 = vsel %vm2570, %v2415, 0.0
  %v2811 = vadd.f32 %v2809, %v2810
  %v2812 = vsel %vm2570, %v2416, 0.0
  %v2813 = vadd.f32 %v2811, %v2812
  %v2814 = vsel %vm2570, %v2417, 0.0
  %v2815 = vadd.f32 %v2813, %v2814
  %v2816 = vsel %vm2570, %v2418, 0.0
  %v2817 = vadd.f32 %v2815, %v2816
  %v2818 = vsel %vm2570, %v2419, 0.0
  %v2819 = vadd.f32 %v2817, %v2818
  %v2820 = vsel %vm2570, %v2420, 0.0
  %v2821 = vadd.f32 %v2819, %v2820
  %v2822 = vsel %vm2570, %v2421, 0.0
  %v2823 = vadd.f32 %v2821, %v2822
  %v2824 = vsel %vm2570, %v2422, 0.0
  %v2825 = vadd.f32 %v2823, %v2824
  %v2826 = vsel %vm2570, %v2423, 0.0
  %v2827 = vadd.f32 %v2825, %v2826
  %v2828 = vsel %vm2570, %v2424, 0.0
  %v2829 = vadd.f32 %v2827, %v2828
  %v2830 = vsel %vm2570, %v2425, 0.0
  %v2831 = vadd.f32 %v2829, %v2830
  %v2832 = vsel %vm2570, %v2426, 0.0
  %v2833 = vadd.f32 %v2831, %v2832
  %v2834 = vsel %vm2570, %v2427, 0.0
  %v2835 = vadd.f32 %v2833, %v2834
  %v2836 = vsel %vm2570, %v2428, 0.0
  %v2837 = vadd.f32 %v2835, %v2836
  %v2838 = vsel %vm2570, %v2429, 0.0
  %v2839 = vadd.f32 %v2837, %v2838
  %v2840 = vsel %vm2570, %v2430, 0.0
  %v2841 = vadd.f32 %v2839, %v2840
  %v2842 = vsel %vm2570, %v2431, 0.0
  %v2843 = vadd.f32 %v2841, %v2842
  %v2844 = vsel %vm2570, %v2432, 0.0
  %v2845 = vadd.f32 %v2843, %v2844
  %v2846 = vsel %vm2570, %v2433, 0.0
  %v2847 = vadd.f32 %v2845, %v2846
  %v2848 = vsel %vm2570, %v2434, 0.0
  %v2849 = vadd.f32 %v2847, %v2848
  %v2850 = vsel %vm2570, %v2435, 0.0
  %v2851 = vadd.f32 %v2849, %v2850
  %v2852 = vsel %vm2570, %v2436, 0.0
  %v2853 = vadd.f32 %v2851, %v2852
  %v2854 = vsel %vm2570, %v2437, 0.0
  %v2855 = vadd.f32 %v2853, %v2854
  %v2856 = vsel %vm2570, %v2438, 0.0
  %v2857 = vadd.f32 %v2855, %v2856
  %v2858 = vsel %vm2570, %v2439, 0.0
  %v2859 = vadd.f32 %v2857, %v2858
  %v2860 = vsel %vm2570, %v2440, 0.0
  %v2861 = vadd.f32 %v2859, %v2860
  %v2862 = vsel %vm2570, %v2441, 0.0
  %v2863 = vadd.f32 %v2861, %v2862
  %v2864 = vsel %vm2570, %v2442, 0.0
  %v2865 = vadd.f32 %v2863, %v2864
  %v2866 = vsel %vm2570, %v2443, 0.0
  %v2867 = vadd.f32 %v2865, %v2866
  %v2868 = vsel %vm2570, %v2444, 0.0
  %v2869 = vadd.f32 %v2867, %v2868
  %v2870 = vsel %vm2570, %v2445, 0.0
  %v2871 = vadd.f32 %v2869, %v2870
  %v2872 = vsel %vm2570, %v2446, 0.0
  %v2873 = vadd.f32 %v2871, %v2872
  %v2874 = vsel %vm2570, %v2447, 0.0
  %v2875 = vadd.f32 %v2873, %v2874
  %v2876 = vsel %vm2570, %v2448, 0.0
  %v2877 = vadd.f32 %v2875, %v2876
  %v2878 = vsel %vm2570, %v2449, 0.0
  %v2879 = vadd.f32 %v2877, %v2878
  %v2880 = vsel %vm2570, %v2450, 0.0
  %v2881 = vadd.f32 %v2879, %v2880
  %v2882 = vsel %vm2570, %v2451, 0.0
  %v2883 = vadd.f32 %v2881, %v2882
  %v2884 = vsel %vm2570, %v2452, 0.0
  %v2885 = vadd.f32 %v2883, %v2884
  %v2886 = vsel %vm2570, %v2453, 0.0
  %v2887 = vadd.f32 %v2885, %v2886
  %v2888 = vsel %vm2570, %v2454, 0.0
  %v2889 = vadd.f32 %v2887, %v2888
  %v2890 = vsel %vm2570, %v2455, 0.0
  %v2891 = vadd.f32 %v2889, %v2890
  %v2892 = vsel %vm2570, %v2456, 0.0
  %v2893 = vadd.f32 %v2891, %v2892
  %v2894 = vsel %vm2570, %v2457, 0.0
  %v2895 = vadd.f32 %v2893, %v2894
  %v2896 = vsel %vm2570, %v2458, 0.0
  %v2897 = vadd.f32 %v2895, %v2896
  %v2898 = vsel %vm2570, %v2459, 0.0
  %v2899 = vadd.f32 %v2897, %v2898
  %v2900 = vsel %vm2570, %v2460, 0.0
  %v2901 = vadd.f32 %v2899, %v2900
  %v2902 = vsel %vm2570, %v2461, 0.0
  %v2903 = vadd.f32 %v2901, %v2902
  %v2904 = vsel %vm2570, %v2462, 0.0
  %v2905 = vadd.f32 %v2903, %v2904
  %v2906 = vsel %vm2570, %v2463, 0.0
  %v2907 = vadd.f32 %v2905, %v2906
  %v2908 = vsel %vm2570, %v2464, 0.0
  %v2909 = vadd.f32 %v2907, %v2908
  %v2910 = vsel %vm2570, %v2465, 0.0
  %v2911 = vadd.f32 %v2909, %v2910
  %v2912 = vsel %vm2570, %v2466, 0.0
  %v2913 = vadd.f32 %v2911, %v2912
  %v2914 = vsel %vm2570, %v2467, 0.0
  %v2915 = vadd.f32 %v2913, %v2914
  %v2916 = vsel %vm2570, %v2468, 0.0
  %v2917 = vadd.f32 %v2915, %v2916
  %v2918 = vsel %vm2570, %v2469, 0.0
  %v2919 = vadd.f32 %v2917, %v2918
  %v2920 = vsel %vm2570, %v2470, 0.0
  %v2921 = vadd.f32 %v2919, %v2920
  %v2922 = vsel %vm2570, %v2471, 0.0
  %v2923 = vadd.f32 %v2921, %v2922
  %v2924 = vsel %vm2570, %v2472, 0.0
  %v2925 = vadd.f32 %v2923, %v2924
  %v2926 = vsel %vm2570, %v2473, 0.0
  %v2927 = vadd.f32 %v2925, %v2926
  %v2928 = vsel %vm2570, %v2474, 0.0
  %v2929 = vadd.f32 %v2927, %v2928
  %v2930 = vsel %vm2570, %v2475, 0.0
  %v2931 = vadd.f32 %v2929, %v2930
  %v2932 = vsel %vm2570, %v2476, 0.0
  %v2933 = vadd.f32 %v2931, %v2932
  %v2934 = vsel %vm2570, %v2477, 0.0
  %v2935 = vadd.f32 %v2933, %v2934
  %v2936 = vsel %vm2570, %v2478, 0.0
  %v2937 = vadd.f32 %v2935, %v2936
  %v2938 = vsel %vm2570, %v2479, 0.0
  %v2939 = vadd.f32 %v2937, %v2938
  %v2940 = vsel %vm2570, %v2480, 0.0
  %v2941 = vadd.f32 %v2939, %v2940
  %v2942 = vsel %vm2570, %v2481, 0.0
  %v2943 = vadd.f32 %v2941, %v2942
  %v2944 = vsel %vm2570, %v2482, 0.0
  %v2945 = vadd.f32 %v2943, %v2944
  %v2946 = vsel %vm2570, %v2483, 0.0
  %v2947 = vadd.f32 %v2945, %v2946
  %v2948 = vsel %vm2570, %v2484, 0.0
  %v2949 = vadd.f32 %v2947, %v2948
  %v2950 = vsel %vm2570, %v2485, 0.0
  %v2951 = vadd.f32 %v2949, %v2950
  %v2952 = vsel %vm2570, %v2486, 0.0
  %v2953 = vadd.f32 %v2951, %v2952
  %v2954 = vsel %vm2570, %v2487, 0.0
  %v2955 = vadd.f32 %v2953, %v2954
  %v2956 = vsel %vm2570, %v2488, 0.0
  %v2957 = vadd.f32 %v2955, %v2956
  %v2958 = vsel %vm2570, %v2489, 0.0
  %v2959 = vadd.f32 %v2957, %v2958
  %v2960 = vsel %vm2570, %v2490, 0.0
  %v2961 = vadd.f32 %v2959, %v2960
  %v2962 = vsel %vm2570, %v2491, 0.0
  %v2963 = vadd.f32 %v2961, %v2962
  %v2964 = vsel %vm2570, %v2492, 0.0
  %v2965 = vadd.f32 %v2963, %v2964
  %v2966 = vsel %vm2570, %v2493, 0.0
  %v2967 = vadd.f32 %v2965, %v2966
  %v2968 = vsel %vm2570, %v2494, 0.0
  %v2969 = vadd.f32 %v2967, %v2968
  %v2970 = vsel %vm2570, %v2495, 0.0
  %v2971 = vadd.f32 %v2969, %v2970
  %v2972 = vsel %vm2570, %v2496, 0.0
  %v2973 = vadd.f32 %v2971, %v2972
  %v2974 = vsel %vm2570, %v2497, 0.0
  %v2975 = vadd.f32 %v2973, %v2974
  %v2976 = vsel %vm2570, %v2498, 0.0
  %v2977 = vadd.f32 %v2975, %v2976
  %v2978 = vsel %vm2570, %v2499, 0.0
  %v2979 = vadd.f32 %v2977, %v2978
  %v2980 = vsel %vm2570, %v2500, 0.0
  %v2981 = vadd.f32 %v2979, %v2980
  %v2982 = vsel %vm2570, %v2501, 0.0
  %v2983 = vadd.f32 %v2981, %v2982
  %v2984 = vsel %vm2570, %v2502, 0.0
  %v2985 = vadd.f32 %v2983, %v2984
  %v2986 = vsel %vm2570, %v2503, 0.0
  %v2987 = vadd.f32 %v2985, %v2986
  %v2988 = vsel %vm2570, %v2504, 0.0
  %v2989 = vadd.f32 %v2987, %v2988
  %v2990 = vsel %vm2570, %v2505, 0.0
  %v2991 = vadd.f32 %v2989, %v2990
  %v2992 = vsel %vm2570, %v2506, 0.0
  %v2993 = vadd.f32 %v2991, %v2992
  %v2994 = vsel %vm2570, %v2507, 0.0
  %v2995 = vadd.f32 %v2993, %v2994
  %v2996 = vsel %vm2570, %v2508, 0.0
  %v2997 = vadd.f32 %v2995, %v2996
  %v2998 = vsel %vm2570, %v2509, 0.0
  %v2999 = vadd.f32 %v2997, %v2998
  %v3000 = vsel %vm2570, %v2510, 0.0
  %v3001 = vadd.f32 %v2999, %v3000
  %v3002 = vsel %vm2570, %v2511, 0.0
  %v3003 = vadd.f32 %v3001, %v3002
  %v3004 = vsel %vm2570, %v2512, 0.0
  %v3005 = vadd.f32 %v3003, %v3004
  %v3006 = vsel %vm2570, %v2513, 0.0
  %v3007 = vadd.f32 %v3005, %v3006
  %v3008 = vsel %vm2570, %v2514, 0.0
  %v3009 = vadd.f32 %v3007, %v3008
  %v3010 = vsel %vm2570, %v2515, 0.0
  %v3011 = vadd.f32 %v3009, %v3010
  %v3012 = vsel %vm2570, %v2516, 0.0
  %v3013 = vadd.f32 %v3011, %v3012
  %v3014 = vsel %vm2570, %v2517, 0.0
  %v3015 = vadd.f32 %v3013, %v3014
  %v3016 = vsel %vm2570, %v2518, 0.0
  %v3017 = vadd.f32 %v3015, %v3016
  %v3018 = vsel %vm2570, %v2519, 0.0
  %v3019 = vadd.f32 %v3017, %v3018
  %v3020 = vsel %vm2570, %v2520, 0.0
  %v3021 = vadd.f32 %v3019, %v3020
  %v3022 = vsel %vm2570, %v2521, 0.0
  %v3023 = vadd.f32 %v3021, %v3022
  %v3024 = vsel %vm2570, %v2522, 0.0
  %v3025 = vadd.f32 %v3023, %v3024
  %v3026 = vsel %vm2570, %v2523, 0.0
  %v3027 = vadd.f32 %v3025, %v3026
  %v3028 = vsel %vm2570, %v2524, 0.0
  %v3029 = vadd.f32 %v3027, %v3028
  %v3030 = vsel %vm2570, %v2525, 0.0
  %v3031 = vadd.f32 %v3029, %v3030
  %v3032 = vsel %vm2570, %v2526, 0.0
  %v3033 = vadd.f32 %v3031, %v3032
  %v3034 = vsel %vm2570, %v2527, 0.0
  %v3035 = vadd.f32 %v3033, %v3034
  %v3036 = vsel %vm2570, %v2528, 0.0
  %v3037 = vadd.f32 %v3035, %v3036
  %v3038 = vsel %vm2570, %v2529, 0.0
  %v3039 = vadd.f32 %v3037, %v3038
  %v3040 = vsel %vm2570, %v2530, 0.0
  %v3041 = vadd.f32 %v3039, %v3040
  %v3042 = vsel %vm2570, %v2531, 0.0
  %v3043 = vadd.f32 %v3041, %v3042
  %v3044 = vsel %vm2570, %v2532, 0.0
  %v3045 = vadd.f32 %v3043, %v3044
  %v3046 = vsel %vm2570, %v2533, 0.0
  %v3047 = vadd.f32 %v3045, %v3046
  %v3048 = vsel %vm2570, %v2534, 0.0
  %v3049 = vadd.f32 %v3047, %v3048
  %v3050 = vsel %vm2570, %v2535, 0.0
  %v3051 = vadd.f32 %v3049, %v3050
  %v3052 = vsel %vm2570, %v2536, 0.0
  %v3053 = vadd.f32 %v3051, %v3052
  %v3054 = vsel %vm2570, %v2537, 0.0
  %v3055 = vadd.f32 %v3053, %v3054
  %v3056 = vsel %vm2570, %v2538, 0.0
  %v3057 = vadd.f32 %v3055, %v3056
  %v3058 = vsel %vm2570, %v2539, 0.0
  %v3059 = vadd.f32 %v3057, %v3058
  %v3060 = vsel %vm2570, %v2540, 0.0
  %v3061 = vadd.f32 %v3059, %v3060
  %v3062 = vsel %vm2570, %v2541, 0.0
  %v3063 = vadd.f32 %v3061, %v3062
  %v3064 = vsel %vm2570, %v2542, 0.0
  %v3065 = vadd.f32 %v3063, %v3064
  %v3066 = vsel %vm2570, %v2543, 0.0
  %v3067 = vadd.f32 %v3065, %v3066
  %v3068 = vsel %vm2570, %v2544, 0.0
  %v3069 = vadd.f32 %v3067, %v3068
  %v3070 = vsel %vm2570, %v2545, 0.0
  %v3071 = vadd.f32 %v3069, %v3070
  %v3072 = vsel %vm2570, %v2546, 0.0
  %v3073 = vadd.f32 %v3071, %v3072
  %v3074 = vsel %vm2570, %v2547, 0.0
  %v3075 = vadd.f32 %v3073, %v3074
  %v3076 = vsel %vm2570, %v2548, 0.0
  %v3077 = vadd.f32 %v3075, %v3076
  %v3078 = vsel %vm2570, %v2549, 0.0
  %v3079 = vadd.f32 %v3077, %v3078
  %v3080 = vsel %vm2570, %v2550, 0.0
  %v3081 = vadd.f32 %v3079, %v3080
  %v3082 = vsel %vm2570, %v2551, 0.0
  %v3083 = vadd.f32 %v3081, %v3082
  %v3084 = vsel %vm2570, %v2552, 0.0
  %v3085 = vadd.f32 %v3083, %v3084
  %v3086 = vsel %vm2570, %v2553, 0.0
  %v3087 = vadd.f32 %v3085, %v3086
  %v3088 = vsel %vm2570, %v2554, 0.0
  %v3089 = vadd.f32 %v3087, %v3088
  %v3090 = vsel %vm2570, %v2555, 0.0
  %v3091 = vadd.f32 %v3089, %v3090
  %v3092 = vsel %vm2570, %v2556, 0.0
  %v3093 = vadd.f32 %v3091, %v3092
  %v3094 = vsel %vm2570, %v2557, 0.0
  %v3095 = vadd.f32 %v3093, %v3094
  %v3096 = vsel %vm2570, %v2558, 0.0
  %v3097 = vadd.f32 %v3095, %v3096
  %v3098 = vsel %vm2570, %v2559, 0.0
  %v3099 = vadd.f32 %v3097, %v3098
  %v3100 = vsel %vm2570, %v2560, 0.0
  %v3101 = vadd.f32 %v3099, %v3100
  %v3102 = vsel %vm2570, %v2561, 0.0
  %v3103 = vadd.f32 %v3101, %v3102
  %v3104 = vsel %vm2570, %v2562, 0.0
  %v3105 = vadd.f32 %v3103, %v3104
  %v3106 = vsel %vm2570, %v2563, 0.0
  %v3107 = vadd.f32 %v3105, %v3106
  %v3108 = vsel %vm2570, %v2564, 0.0
  %v3109 = vadd.f32 %v3107, %v3108
  %v3110 = vsel %vm2570, %v2565, 0.0
  %v3111 = vadd.f32 %v3109, %v3110
  %v3112 = vsel %vm2570, %v2566, 0.0
  %v3113 = vadd.f32 %v3111, %v3112
  %v3114 = vsel %vm2570, %v2567, 0.0
  %v3115 = vadd.f32 %v3113, %v3114
  %v3116 = vsel %vm2570, %v2568, 0.0
  %v3117 = vadd.f32 %v3115, %v3116
  %v3118 = vsel %vm2753, %v2569, 0.0
  %v3119 = vadd.f32 %v3117, %v3118
  %v3120 = vrot.slane %v3119, 4
  %v3121 = vadd.f32 %v3119, %v3120
  %v3122 = vrot.slane %v3121, 2
  %v3123 = vadd.f32 %v3121, %v3122
  %v3124 = vrot.slane %v3123, 1
  %v3125 = vadd.f32 %v3123, %v3124
  %v3126 = vrcp.pop 1458.0
  %v3127 = vmul.f32 %v3125, %v3126
  %vm3128 = vcmask 253952
  %3129 = vst.msk [vmem:[%s4] sm:$0x1] %vm3128, %v3127
  %v3130 = vsub.f32 %v2387, %v3127
  %v3131 = vsub.f32 %v2388, %v3127
  %v3132 = vsub.f32 %v2389, %v3127
  %v3133 = vsub.f32 %v2390, %v3127
  %v3134 = vsub.f32 %v2391, %v3127
  %v3135 = vsub.f32 %v2392, %v3127
  %v3136 = vsub.f32 %v2393, %v3127
  %v3137 = vsub.f32 %v2394, %v3127
  %v3138 = vsub.f32 %v2395, %v3127
  %v3139 = vsub.f32 %v2396, %v3127
  %v3140 = vsub.f32 %v2397, %v3127
  %v3141 = vsub.f32 %v2398, %v3127
  %v3142 = vsub.f32 %v2399, %v3127
  %v3143 = vsub.f32 %v2400, %v3127
  %v3144 = vsub.f32 %v2401, %v3127
  %v3145 = vsub.f32 %v2402, %v3127
  %v3146 = vsub.f32 %v2403, %v3127
  %v3147 = vsub.f32 %v2404, %v3127
  %v3148 = vsub.f32 %v2405, %v3127
  %v3149 = vsub.f32 %v2406, %v3127
  %v3150 = vsub.f32 %v2407, %v3127
  %v3151 = vsub.f32 %v2408, %v3127
  %v3152 = vsub.f32 %v2409, %v3127
  %v3153 = vsub.f32 %v2410, %v3127
  %v3154 = vsub.f32 %v2411, %v3127
  %v3155 = vsub.f32 %v2412, %v3127
  %v3156 = vsub.f32 %v2413, %v3127
  %v3157 = vsub.f32 %v2414, %v3127
  %v3158 = vsub.f32 %v2415, %v3127
  %v3159 = vsub.f32 %v2416, %v3127
  %v3160 = vsub.f32 %v2417, %v3127
  %v3161 = vsub.f32 %v2418, %v3127
  %v3162 = vsub.f32 %v2419, %v3127
  %v3163 = vsub.f32 %v2420, %v3127
  %v3164 = vsub.f32 %v2421, %v3127
  %v3165 = vsub.f32 %v2422, %v3127
  %v3166 = vsub.f32 %v2423, %v3127
  %v3167 = vsub.f32 %v2424, %v3127
  %v3168 = vsub.f32 %v2425, %v3127
  %v3169 = vsub.f32 %v2426, %v3127
  %v3170 = vsub.f32 %v2427, %v3127
  %v3171 = vsub.f32 %v2428, %v3127
  %v3172 = vsub.f32 %v2429, %v3127
  %v3173 = vsub.f32 %v2430, %v3127
  %v3174 = vsub.f32 %v2431, %v3127
  %v3175 = vsub.f32 %v2432, %v3127
  %v3176 = vsub.f32 %v2433, %v3127
  %v3177 = vsub.f32 %v2434, %v3127
  %v3178 = vsub.f32 %v2435, %v3127
  %v3179 = vsub.f32 %v2436, %v3127
  %v3180 = vsub.f32 %v2437, %v3127
  %v3181 = vsub.f32 %v2438, %v3127
  %v3182 = vsub.f32 %v2439, %v3127
  %v3183 = vsub.f32 %v2440, %v3127
  %v3184 = vsub.f32 %v2441, %v3127
  %v3185 = vsub.f32 %v2442, %v3127
  %v3186 = vsub.f32 %v2443, %v3127
  %v3187 = vsub.f32 %v2444, %v3127
  %v3188 = vsub.f32 %v2445, %v3127
  %v3189 = vsub.f32 %v2446, %v3127
  %v3190 = vsub.f32 %v2447, %v3127
  %v3191 = vsub.f32 %v2448, %v3127
  %v3192 = vsub.f32 %v2449, %v3127
  %v3193 = vsub.f32 %v2450, %v3127
  %v3194 = vsub.f32 %v2451, %v3127
  %v3195 = vsub.f32 %v2452, %v3127
  %v3196 = vsub.f32 %v2453, %v3127
  %v3197 = vsub.f32 %v2454, %v3127
  %v3198 = vsub.f32 %v2455, %v3127
  %v3199 = vsub.f32 %v2456, %v3127
  %v3200 = vsub.f32 %v2457, %v3127
  %v3201 = vsub.f32 %v2458, %v3127
  %v3202 = vsub.f32 %v2459, %v3127
  %v3203 = vsub.f32 %v2460, %v3127
  %v3204 = vsub.f32 %v2461, %v3127
  %v3205 = vsub.f32 %v2462, %v3127
  %v3206 = vsub.f32 %v2463, %v3127
  %v3207 = vsub.f32 %v2464, %v3127
  %v3208 = vsub.f32 %v2465, %v3127
  %v3209 = vsub.f32 %v2466, %v3127
  %v3210 = vsub.f32 %v2467, %v3127
  %v3211 = vsub.f32 %v2468, %v3127
  %v3212 = vsub.f32 %v2469, %v3127
  %v3213 = vsub.f32 %v2470, %v3127
  %v3214 = vsub.f32 %v2471, %v3127
  %v3215 = vsub.f32 %v2472, %v3127
  %v3216 = vsub.f32 %v2473, %v3127
  %v3217 = vsub.f32 %v2474, %v3127
  %v3218 = vsub.f32 %v2475, %v3127
  %v3219 = vsub.f32 %v2476, %v3127
  %v3220 = vsub.f32 %v2477, %v3127
  %v3221 = vsub.f32 %v2478, %v3127
  %v3222 = vsub.f32 %v2479, %v3127
  %v3223 = vsub.f32 %v2480, %v3127
  %v3224 = vsub.f32 %v2481, %v3127
  %v3225 = vsub.f32 %v2482, %v3127
  %v3226 = vsub.f32 %v2483, %v3127
  %v3227 = vsub.f32 %v2484, %v3127
  %v3228 = vsub.f32 %v2485, %v3127
  %v3229 = vsub.f32 %v2486, %v3127
  %v3230 = vsub.f32 %v2487, %v3127
  %v3231 = vsub.f32 %v2488, %v3127
  %v3232 = vsub.f32 %v2489, %v3127
  %v3233 = vsub.f32 %v2490, %v3127
  %v3234 = vsub.f32 %v2491, %v3127
  %v3235 = vsub.f32 %v2492, %v3127
  %v3236 = vsub.f32 %v2493, %v3127
  %v3237 = vsub.f32 %v2494, %v3127
  %v3238 = vsub.f32 %v2495, %v3127
  %v3239 = vsub.f32 %v2496, %v3127
  %v3240 = vsub.f32 %v2497, %v3127
  %v3241 = vsub.f32 %v2498, %v3127
  %v3242 = vsub.f32 %v2499, %v3127
  %v3243 = vsub.f32 %v2500, %v3127
  %v3244 = vsub.f32 %v2501, %v3127
  %v3245 = vsub.f32 %v2502, %v3127
  %v3246 = vsub.f32 %v2503, %v3127
  %v3247 = vsub.f32 %v2504, %v3127
  %v3248 = vsub.f32 %v2505, %v3127
  %v3249 = vsub.f32 %v2506, %v3127
  %v3250 = vsub.f32 %v2507, %v3127
  %v3251 = vsub.f32 %v2508, %v3127
  %v3252 = vsub.f32 %v2509, %v3127
  %v3253 = vsub.f32 %v2510, %v3127
  %v3254 = vsub.f32 %v2511, %v3127
  %v3255 = vsub.f32 %v2512, %v3127
  %v3256 = vsub.f32 %v2513, %v3127
  %v3257 = vsub.f32 %v2514, %v3127
  %v3258 = vsub.f32 %v2515, %v3127
  %v3259 = vsub.f32 %v2516, %v3127
  %v3260 = vsub.f32 %v2517, %v3127
  %v3261 = vsub.f32 %v2518, %v3127
  %v3262 = vsub.f32 %v2519, %v3127
  %v3263 = vsub.f32 %v2520, %v3127
  %v3264 = vsub.f32 %v2521, %v3127
  %v3265 = vsub.f32 %v2522, %v3127
  %v3266 = vsub.f32 %v2523, %v3127
  %v3267 = vsub.f32 %v2524, %v3127
  %v3268 = vsub.f32 %v2525, %v3127
  %v3269 = vsub.f32 %v2526, %v3127
  %v3270 = vsub.f32 %v2527, %v3127
  %v3271 = vsub.f32 %v2528, %v3127
  %v3272 = vsub.f32 %v2529, %v3127
  %v3273 = vsub.f32 %v2530, %v3127
  %v3274 = vsub.f32 %v2531, %v3127
  %v3275 = vsub.f32 %v2532, %v3127
  %v3276 = vsub.f32 %v2533, %v3127
  %v3277 = vsub.f32 %v2534, %v3127
  %v3278 = vsub.f32 %v2535, %v3127
  %v3279 = vsub.f32 %v2536, %v3127
  %v3280 = vsub.f32 %v2537, %v3127
  %v3281 = vsub.f32 %v2538, %v3127
  %v3282 = vsub.f32 %v2539, %v3127
  %v3283 = vsub.f32 %v2540, %v3127
  %v3284 = vsub.f32 %v2541, %v3127
  %v3285 = vsub.f32 %v2542, %v3127
  %v3286 = vsub.f32 %v2543, %v3127
  %v3287 = vsub.f32 %v2544, %v3127
  %v3288 = vsub.f32 %v2545, %v3127
  %v3289 = vsub.f32 %v2546, %v3127
  %v3290 = vsub.f32 %v2547, %v3127
  %v3291 = vsub.f32 %v2548, %v3127
  %v3292 = vsub.f32 %v2549, %v3127
  %v3293 = vsub.f32 %v2550, %v3127
  %v3294 = vsub.f32 %v2551, %v3127
  %v3295 = vsub.f32 %v2552, %v3127
  %v3296 = vsub.f32 %v2553, %v3127
  %v3297 = vsub.f32 %v2554, %v3127
  %v3298 = vsub.f32 %v2555, %v3127
  %v3299 = vsub.f32 %v2556, %v3127
  %v3300 = vsub.f32 %v2557, %v3127
  %v3301 = vsub.f32 %v2558, %v3127
  %v3302 = vsub.f32 %v2559, %v3127
  %v3303 = vsub.f32 %v2560, %v3127
  %v3304 = vsub.f32 %v2561, %v3127
  %v3305 = vsub.f32 %v2562, %v3127
  %v3306 = vsub.f32 %v2563, %v3127
  %v3307 = vsub.f32 %v2564, %v3127
  %v3308 = vsub.f32 %v2565, %v3127
  %v3309 = vsub.f32 %v2566, %v3127
  %v3310 = vsub.f32 %v2567, %v3127
  %v3311 = vsub.f32 %v2568, %v3127
  %v3312 = vsub.f32 %v2569, %v3127
  %v3313 = vmul.f32 %v3130, %v3130
  %v3314 = vmul.f32 %v3131, %v3131
  %v3315 = vmul.f32 %v3132, %v3132
  %v3316 = vmul.f32 %v3133, %v3133
  %v3317 = vmul.f32 %v3134, %v3134
  %v3318 = vmul.f32 %v3135, %v3135
  %v3319 = vmul.f32 %v3136, %v3136
  %v3320 = vmul.f32 %v3137, %v3137
  %v3321 = vmul.f32 %v3138, %v3138
  %v3322 = vmul.f32 %v3139, %v3139
  %v3323 = vmul.f32 %v3140, %v3140
  %v3324 = vmul.f32 %v3141, %v3141
  %v3325 = vmul.f32 %v3142, %v3142
  %v3326 = vmul.f32 %v3143, %v3143
  %v3327 = vmul.f32 %v3144, %v3144
  %v3328 = vmul.f32 %v3145, %v3145
  %v3329 = vmul.f32 %v3146, %v3146
  %v3330 = vmul.f32 %v3147, %v3147
  %v3331 = vmul.f32 %v3148, %v3148
  %v3332 = vmul.f32 %v3149, %v3149
  %v3333 = vmul.f32 %v3150, %v3150
  %v3334 = vmul.f32 %v3151, %v3151
  %v3335 = vmul.f32 %v3152, %v3152
  %v3336 = vmul.f32 %v3153, %v3153
  %v3337 = vmul.f32 %v3154, %v3154
  %v3338 = vmul.f32 %v3155, %v3155
  %v3339 = vmul.f32 %v3156, %v3156
  %v3340 = vmul.f32 %v3157, %v3157
  %v3341 = vmul.f32 %v3158, %v3158
  %v3342 = vmul.f32 %v3159, %v3159
  %v3343 = vmul.f32 %v3160, %v3160
  %v3344 = vmul.f32 %v3161, %v3161
  %v3345 = vmul.f32 %v3162, %v3162
  %v3346 = vmul.f32 %v3163, %v3163
  %v3347 = vmul.f32 %v3164, %v3164
  %v3348 = vmul.f32 %v3165, %v3165
  %v3349 = vmul.f32 %v3166, %v3166
  %v3350 = vmul.f32 %v3167, %v3167
  %v3351 = vmul.f32 %v3168, %v3168
  %v3352 = vmul.f32 %v3169, %v3169
  %v3353 = vmul.f32 %v3170, %v3170
  %v3354 = vmul.f32 %v3171, %v3171
  %v3355 = vmul.f32 %v3172, %v3172
  %v3356 = vmul.f32 %v3173, %v3173
  %v3357 = vmul.f32 %v3174, %v3174
  %v3358 = vmul.f32 %v3175, %v3175
  %v3359 = vmul.f32 %v3176, %v3176
  %v3360 = vmul.f32 %v3177, %v3177
  %v3361 = vmul.f32 %v3178, %v3178
  %v3362 = vmul.f32 %v3179, %v3179
  %v3363 = vmul.f32 %v3180, %v3180
  %v3364 = vmul.f32 %v3181, %v3181
  %v3365 = vmul.f32 %v3182, %v3182
  %v3366 = vmul.f32 %v3183, %v3183
  %v3367 = vmul.f32 %v3184, %v3184
  %v3368 = vmul.f32 %v3185, %v3185
  %v3369 = vmul.f32 %v3186, %v3186
  %v3370 = vmul.f32 %v3187, %v3187
  %v3371 = vmul.f32 %v3188, %v3188
  %v3372 = vmul.f32 %v3189, %v3189
  %v3373 = vmul.f32 %v3190, %v3190
  %v3374 = vmul.f32 %v3191, %v3191
  %v3375 = vmul.f32 %v3192, %v3192
  %v3376 = vmul.f32 %v3193, %v3193
  %v3377 = vmul.f32 %v3194, %v3194
  %v3378 = vmul.f32 %v3195, %v3195
  %v3379 = vmul.f32 %v3196, %v3196
  %v3380 = vmul.f32 %v3197, %v3197
  %v3381 = vmul.f32 %v3198, %v3198
  %v3382 = vmul.f32 %v3199, %v3199
  %v3383 = vmul.f32 %v3200, %v3200
  %v3384 = vmul.f32 %v3201, %v3201
  %v3385 = vmul.f32 %v3202, %v3202
  %v3386 = vmul.f32 %v3203, %v3203
  %v3387 = vmul.f32 %v3204, %v3204
  %v3388 = vmul.f32 %v3205, %v3205
  %v3389 = vmul.f32 %v3206, %v3206
  %v3390 = vmul.f32 %v3207, %v3207
  %v3391 = vmul.f32 %v3208, %v3208
  %v3392 = vmul.f32 %v3209, %v3209
  %v3393 = vmul.f32 %v3210, %v3210
  %v3394 = vmul.f32 %v3211, %v3211
  %v3395 = vmul.f32 %v3212, %v3212
  %v3396 = vmul.f32 %v3213, %v3213
  %v3397 = vmul.f32 %v3214, %v3214
  %v3398 = vmul.f32 %v3215, %v3215
  %v3399 = vmul.f32 %v3216, %v3216
  %v3400 = vmul.f32 %v3217, %v3217
  %v3401 = vmul.f32 %v3218, %v3218
  %v3402 = vmul.f32 %v3219, %v3219
  %v3403 = vmul.f32 %v3220, %v3220
  %v3404 = vmul.f32 %v3221, %v3221
  %v3405 = vmul.f32 %v3222, %v3222
  %v3406 = vmul.f32 %v3223, %v3223
  %v3407 = vmul.f32 %v3224, %v3224
  %v3408 = vmul.f32 %v3225, %v3225
  %v3409 = vmul.f32 %v3226, %v3226
  %v3410 = vmul.f32 %v3227, %v3227
  %v3411 = vmul.f32 %v3228, %v3228
  %v3412 = vmul.f32 %v3229, %v3229
  %v3413 = vmul.f32 %v3230, %v3230
  %v3414 = vmul.f32 %v3231, %v3231
  %v3415 = vmul.f32 %v3232, %v3232
  %v3416 = vmul.f32 %v3233, %v3233
  %v3417 = vmul.f32 %v3234, %v3234
  %v3418 = vmul.f32 %v3235, %v3235
  %v3419 = vmul.f32 %v3236, %v3236
  %v3420 = vmul.f32 %v3237, %v3237
  %v3421 = vmul.f32 %v3238, %v3238
  %v3422 = vmul.f32 %v3239, %v3239
  %v3423 = vmul.f32 %v3240, %v3240
  %v3424 = vmul.f32 %v3241, %v3241
  %v3425 = vmul.f32 %v3242, %v3242
  %v3426 = vmul.f32 %v3243, %v3243
  %v3427 = vmul.f32 %v3244, %v3244
  %v3428 = vmul.f32 %v3245, %v3245
  %v3429 = vmul.f32 %v3246, %v3246
  %v3430 = vmul.f32 %v3247, %v3247
  %v3431 = vmul.f32 %v3248, %v3248
  %v3432 = vmul.f32 %v3249, %v3249
  %v3433 = vmul.f32 %v3250, %v3250
  %v3434 = vmul.f32 %v3251, %v3251
  %v3435 = vmul.f32 %v3252, %v3252
  %v3436 = vmul.f32 %v3253, %v3253
  %v3437 = vmul.f32 %v3254, %v3254
  %v3438 = vmul.f32 %v3255, %v3255
  %v3439 = vmul.f32 %v3256, %v3256
  %v3440 = vmul.f32 %v3257, %v3257
  %v3441 = vmul.f32 %v3258, %v3258
  %v3442 = vmul.f32 %v3259, %v3259
  %v3443 = vmul.f32 %v3260, %v3260
  %v3444 = vmul.f32 %v3261, %v3261
  %v3445 = vmul.f32 %v3262, %v3262
  %v3446 = vmul.f32 %v3263, %v3263
  %v3447 = vmul.f32 %v3264, %v3264
  %v3448 = vmul.f32 %v3265, %v3265
  %v3449 = vmul.f32 %v3266, %v3266
  %v3450 = vmul.f32 %v3267, %v3267
  %v3451 = vmul.f32 %v3268, %v3268
  %v3452 = vmul.f32 %v3269, %v3269
  %v3453 = vmul.f32 %v3270, %v3270
  %v3454 = vmul.f32 %v3271, %v3271
  %v3455 = vmul.f32 %v3272, %v3272
  %v3456 = vmul.f32 %v3273, %v3273
  %v3457 = vmul.f32 %v3274, %v3274
  %v3458 = vmul.f32 %v3275, %v3275
  %v3459 = vmul.f32 %v3276, %v3276
  %v3460 = vmul.f32 %v3277, %v3277
  %v3461 = vmul.f32 %v3278, %v3278
  %v3462 = vmul.f32 %v3279, %v3279
  %v3463 = vmul.f32 %v3280, %v3280
  %v3464 = vmul.f32 %v3281, %v3281
  %v3465 = vmul.f32 %v3282, %v3282
  %v3466 = vmul.f32 %v3283, %v3283
  %v3467 = vmul.f32 %v3284, %v3284
  %v3468 = vmul.f32 %v3285, %v3285
  %v3469 = vmul.f32 %v3286, %v3286
  %v3470 = vmul.f32 %v3287, %v3287
  %v3471 = vmul.f32 %v3288, %v3288
  %v3472 = vmul.f32 %v3289, %v3289
  %v3473 = vmul.f32 %v3290, %v3290
  %v3474 = vmul.f32 %v3291, %v3291
  %v3475 = vmul.f32 %v3292, %v3292
  %v3476 = vmul.f32 %v3293, %v3293
  %v3477 = vmul.f32 %v3294, %v3294
  %v3478 = vmul.f32 %v3295, %v3295
  %v3479 = vmul.f32 %v3296, %v3296
  %v3480 = vmul.f32 %v3297, %v3297
  %v3481 = vmul.f32 %v3298, %v3298
  %v3482 = vmul.f32 %v3299, %v3299
  %v3483 = vmul.f32 %v3300, %v3300
  %v3484 = vmul.f32 %v3301, %v3301
  %v3485 = vmul.f32 %v3302, %v3302
  %v3486 = vmul.f32 %v3303, %v3303
  %v3487 = vmul.f32 %v3304, %v3304
  %v3488 = vmul.f32 %v3305, %v3305
  %v3489 = vmul.f32 %v3306, %v3306
  %v3490 = vmul.f32 %v3307, %v3307
  %v3491 = vmul.f32 %v3308, %v3308
  %v3492 = vmul.f32 %v3309, %v3309
  %v3493 = vmul.f32 %v3310, %v3310
  %v3494 = vmul.f32 %v3311, %v3311
  %v3495 = vmul.f32 %v3312, %v3312
  %v3496 = vsel %vm2570, %v3313, 0.0
  %v3497 = vsel %vm2570, %v3314, 0.0
  %v3498 = vadd.f32 %v3496, %v3497
  %v3499 = vsel %vm2570, %v3315, 0.0
  %v3500 = vadd.f32 %v3498, %v3499
  %v3501 = vsel %vm2570, %v3316, 0.0
  %v3502 = vadd.f32 %v3500, %v3501
  %v3503 = vsel %vm2570, %v3317, 0.0
  %v3504 = vadd.f32 %v3502, %v3503
  %v3505 = vsel %vm2570, %v3318, 0.0
  %v3506 = vadd.f32 %v3504, %v3505
  %v3507 = vsel %vm2570, %v3319, 0.0
  %v3508 = vadd.f32 %v3506, %v3507
  %v3509 = vsel %vm2570, %v3320, 0.0
  %v3510 = vadd.f32 %v3508, %v3509
  %v3511 = vsel %vm2570, %v3321, 0.0
  %v3512 = vadd.f32 %v3510, %v3511
  %v3513 = vsel %vm2570, %v3322, 0.0
  %v3514 = vadd.f32 %v3512, %v3513
  %v3515 = vsel %vm2570, %v3323, 0.0
  %v3516 = vadd.f32 %v3514, %v3515
  %v3517 = vsel %vm2570, %v3324, 0.0
  %v3518 = vadd.f32 %v3516, %v3517
  %v3519 = vsel %vm2570, %v3325, 0.0
  %v3520 = vadd.f32 %v3518, %v3519
  %v3521 = vsel %vm2570, %v3326, 0.0
  %v3522 = vadd.f32 %v3520, %v3521
  %v3523 = vsel %vm2570, %v3327, 0.0
  %v3524 = vadd.f32 %v3522, %v3523
  %v3525 = vsel %vm2570, %v3328, 0.0
  %v3526 = vadd.f32 %v3524, %v3525
  %v3527 = vsel %vm2570, %v3329, 0.0
  %v3528 = vadd.f32 %v3526, %v3527
  %v3529 = vsel %vm2570, %v3330, 0.0
  %v3530 = vadd.f32 %v3528, %v3529
  %v3531 = vsel %vm2570, %v3331, 0.0
  %v3532 = vadd.f32 %v3530, %v3531
  %v3533 = vsel %vm2570, %v3332, 0.0
  %v3534 = vadd.f32 %v3532, %v3533
  %v3535 = vsel %vm2570, %v3333, 0.0
  %v3536 = vadd.f32 %v3534, %v3535
  %v3537 = vsel %vm2570, %v3334, 0.0
  %v3538 = vadd.f32 %v3536, %v3537
  %v3539 = vsel %vm2570, %v3335, 0.0
  %v3540 = vadd.f32 %v3538, %v3539
  %v3541 = vsel %vm2570, %v3336, 0.0
  %v3542 = vadd.f32 %v3540, %v3541
  %v3543 = vsel %vm2570, %v3337, 0.0
  %v3544 = vadd.f32 %v3542, %v3543
  %v3545 = vsel %vm2570, %v3338, 0.0
  %v3546 = vadd.f32 %v3544, %v3545
  %v3547 = vsel %vm2570, %v3339, 0.0
  %v3548 = vadd.f32 %v3546, %v3547
  %v3549 = vsel %vm2570, %v3340, 0.0
  %v3550 = vadd.f32 %v3548, %v3549
  %v3551 = vsel %vm2570, %v3341, 0.0
  %v3552 = vadd.f32 %v3550, %v3551
  %v3553 = vsel %vm2570, %v3342, 0.0
  %v3554 = vadd.f32 %v3552, %v3553
  %v3555 = vsel %vm2570, %v3343, 0.0
  %v3556 = vadd.f32 %v3554, %v3555
  %v3557 = vsel %vm2570, %v3344, 0.0
  %v3558 = vadd.f32 %v3556, %v3557
  %v3559 = vsel %vm2570, %v3345, 0.0
  %v3560 = vadd.f32 %v3558, %v3559
  %v3561 = vsel %vm2570, %v3346, 0.0
  %v3562 = vadd.f32 %v3560, %v3561
  %v3563 = vsel %vm2570, %v3347, 0.0
  %v3564 = vadd.f32 %v3562, %v3563
  %v3565 = vsel %vm2570, %v3348, 0.0
  %v3566 = vadd.f32 %v3564, %v3565
  %v3567 = vsel %vm2570, %v3349, 0.0
  %v3568 = vadd.f32 %v3566, %v3567
  %v3569 = vsel %vm2570, %v3350, 0.0
  %v3570 = vadd.f32 %v3568, %v3569
  %v3571 = vsel %vm2570, %v3351, 0.0
  %v3572 = vadd.f32 %v3570, %v3571
  %v3573 = vsel %vm2570, %v3352, 0.0
  %v3574 = vadd.f32 %v3572, %v3573
  %v3575 = vsel %vm2570, %v3353, 0.0
  %v3576 = vadd.f32 %v3574, %v3575
  %v3577 = vsel %vm2570, %v3354, 0.0
  %v3578 = vadd.f32 %v3576, %v3577
  %v3579 = vsel %vm2570, %v3355, 0.0
  %v3580 = vadd.f32 %v3578, %v3579
  %v3581 = vsel %vm2570, %v3356, 0.0
  %v3582 = vadd.f32 %v3580, %v3581
  %v3583 = vsel %vm2570, %v3357, 0.0
  %v3584 = vadd.f32 %v3582, %v3583
  %v3585 = vsel %vm2570, %v3358, 0.0
  %v3586 = vadd.f32 %v3584, %v3585
  %v3587 = vsel %vm2570, %v3359, 0.0
  %v3588 = vadd.f32 %v3586, %v3587
  %v3589 = vsel %vm2570, %v3360, 0.0
  %v3590 = vadd.f32 %v3588, %v3589
  %v3591 = vsel %vm2570, %v3361, 0.0
  %v3592 = vadd.f32 %v3590, %v3591
  %v3593 = vsel %vm2570, %v3362, 0.0
  %v3594 = vadd.f32 %v3592, %v3593
  %v3595 = vsel %vm2570, %v3363, 0.0
  %v3596 = vadd.f32 %v3594, %v3595
  %v3597 = vsel %vm2570, %v3364, 0.0
  %v3598 = vadd.f32 %v3596, %v3597
  %v3599 = vsel %vm2570, %v3365, 0.0
  %v3600 = vadd.f32 %v3598, %v3599
  %v3601 = vsel %vm2570, %v3366, 0.0
  %v3602 = vadd.f32 %v3600, %v3601
  %v3603 = vsel %vm2570, %v3367, 0.0
  %v3604 = vadd.f32 %v3602, %v3603
  %v3605 = vsel %vm2570, %v3368, 0.0
  %v3606 = vadd.f32 %v3604, %v3605
  %v3607 = vsel %vm2570, %v3369, 0.0
  %v3608 = vadd.f32 %v3606, %v3607
  %v3609 = vsel %vm2570, %v3370, 0.0
  %v3610 = vadd.f32 %v3608, %v3609
  %v3611 = vsel %vm2570, %v3371, 0.0
  %v3612 = vadd.f32 %v3610, %v3611
  %v3613 = vsel %vm2570, %v3372, 0.0
  %v3614 = vadd.f32 %v3612, %v3613
  %v3615 = vsel %vm2570, %v3373, 0.0
  %v3616 = vadd.f32 %v3614, %v3615
  %v3617 = vsel %vm2570, %v3374, 0.0
  %v3618 = vadd.f32 %v3616, %v3617
  %v3619 = vsel %vm2570, %v3375, 0.0
  %v3620 = vadd.f32 %v3618, %v3619
  %v3621 = vsel %vm2570, %v3376, 0.0
  %v3622 = vadd.f32 %v3620, %v3621
  %v3623 = vsel %vm2570, %v3377, 0.0
  %v3624 = vadd.f32 %v3622, %v3623
  %v3625 = vsel %vm2570, %v3378, 0.0
  %v3626 = vadd.f32 %v3624, %v3625
  %v3627 = vsel %vm2570, %v3379, 0.0
  %v3628 = vadd.f32 %v3626, %v3627
  %v3629 = vsel %vm2570, %v3380, 0.0
  %v3630 = vadd.f32 %v3628, %v3629
  %v3631 = vsel %vm2570, %v3381, 0.0
  %v3632 = vadd.f32 %v3630, %v3631
  %v3633 = vsel %vm2570, %v3382, 0.0
  %v3634 = vadd.f32 %v3632, %v3633
  %v3635 = vsel %vm2570, %v3383, 0.0
  %v3636 = vadd.f32 %v3634, %v3635
  %v3637 = vsel %vm2570, %v3384, 0.0
  %v3638 = vadd.f32 %v3636, %v3637
  %v3639 = vsel %vm2570, %v3385, 0.0
  %v3640 = vadd.f32 %v3638, %v3639
  %v3641 = vsel %vm2570, %v3386, 0.0
  %v3642 = vadd.f32 %v3640, %v3641
  %v3643 = vsel %vm2570, %v3387, 0.0
  %v3644 = vadd.f32 %v3642, %v3643
  %v3645 = vsel %vm2570, %v3388, 0.0
  %v3646 = vadd.f32 %v3644, %v3645
  %v3647 = vsel %vm2570, %v3389, 0.0
  %v3648 = vadd.f32 %v3646, %v3647
  %v3649 = vsel %vm2570, %v3390, 0.0
  %v3650 = vadd.f32 %v3648, %v3649
  %v3651 = vsel %vm2570, %v3391, 0.0
  %v3652 = vadd.f32 %v3650, %v3651
  %v3653 = vsel %vm2570, %v3392, 0.0
  %v3654 = vadd.f32 %v3652, %v3653
  %v3655 = vsel %vm2570, %v3393, 0.0
  %v3656 = vadd.f32 %v3654, %v3655
  %v3657 = vsel %vm2570, %v3394, 0.0
  %v3658 = vadd.f32 %v3656, %v3657
  %v3659 = vsel %vm2570, %v3395, 0.0
  %v3660 = vadd.f32 %v3658, %v3659
  %v3661 = vsel %vm2570, %v3396, 0.0
  %v3662 = vadd.f32 %v3660, %v3661
  %v3663 = vsel %vm2570, %v3397, 0.0
  %v3664 = vadd.f32 %v3662, %v3663
  %v3665 = vsel %vm2570, %v3398, 0.0
  %v3666 = vadd.f32 %v3664, %v3665
  %v3667 = vsel %vm2570, %v3399, 0.0
  %v3668 = vadd.f32 %v3666, %v3667
  %v3669 = vsel %vm2570, %v3400, 0.0
  %v3670 = vadd.f32 %v3668, %v3669
  %v3671 = vsel %vm2570, %v3401, 0.0
  %v3672 = vadd.f32 %v3670, %v3671
  %v3673 = vsel %vm2570, %v3402, 0.0
  %v3674 = vadd.f32 %v3672, %v3673
  %v3675 = vsel %vm2570, %v3403, 0.0
  %v3676 = vadd.f32 %v3674, %v3675
  %v3677 = vsel %vm2570, %v3404, 0.0
  %v3678 = vadd.f32 %v3676, %v3677
  %v3679 = vsel %vm2570, %v3405, 0.0
  %v3680 = vadd.f32 %v3678, %v3679
  %v3681 = vsel %vm2570, %v3406, 0.0
  %v3682 = vadd.f32 %v3680, %v3681
  %v3683 = vsel %vm2570, %v3407, 0.0
  %v3684 = vadd.f32 %v3682, %v3683
  %v3685 = vsel %vm2570, %v3408, 0.0
  %v3686 = vadd.f32 %v3684, %v3685
  %v3687 = vsel %vm2570, %v3409, 0.0
  %v3688 = vadd.f32 %v3686, %v3687
  %v3689 = vsel %vm2570, %v3410, 0.0
  %v3690 = vadd.f32 %v3688, %v3689
  %v3691 = vsel %vm2570, %v3411, 0.0
  %v3692 = vadd.f32 %v3690, %v3691
  %v3693 = vsel %vm2570, %v3412, 0.0
  %v3694 = vadd.f32 %v3692, %v3693
  %v3695 = vsel %vm2570, %v3413, 0.0
  %v3696 = vadd.f32 %v3694, %v3695
  %v3697 = vsel %vm2570, %v3414, 0.0
  %v3698 = vadd.f32 %v3696, %v3697
  %v3699 = vsel %vm2570, %v3415, 0.0
  %v3700 = vadd.f32 %v3698, %v3699
  %v3701 = vsel %vm2570, %v3416, 0.0
  %v3702 = vadd.f32 %v3700, %v3701
  %v3703 = vsel %vm2570, %v3417, 0.0
  %v3704 = vadd.f32 %v3702, %v3703
  %v3705 = vsel %vm2570, %v3418, 0.0
  %v3706 = vadd.f32 %v3704, %v3705
  %v3707 = vsel %vm2570, %v3419, 0.0
  %v3708 = vadd.f32 %v3706, %v3707
  %v3709 = vsel %vm2570, %v3420, 0.0
  %v3710 = vadd.f32 %v3708, %v3709
  %v3711 = vsel %vm2570, %v3421, 0.0
  %v3712 = vadd.f32 %v3710, %v3711
  %v3713 = vsel %vm2570, %v3422, 0.0
  %v3714 = vadd.f32 %v3712, %v3713
  %v3715 = vsel %vm2570, %v3423, 0.0
  %v3716 = vadd.f32 %v3714, %v3715
  %v3717 = vsel %vm2570, %v3424, 0.0
  %v3718 = vadd.f32 %v3716, %v3717
  %v3719 = vsel %vm2570, %v3425, 0.0
  %v3720 = vadd.f32 %v3718, %v3719
  %v3721 = vsel %vm2570, %v3426, 0.0
  %v3722 = vadd.f32 %v3720, %v3721
  %v3723 = vsel %vm2570, %v3427, 0.0
  %v3724 = vadd.f32 %v3722, %v3723
  %v3725 = vsel %vm2570, %v3428, 0.0
  %v3726 = vadd.f32 %v3724, %v3725
  %v3727 = vsel %vm2570, %v3429, 0.0
  %v3728 = vadd.f32 %v3726, %v3727
  %v3729 = vsel %vm2570, %v3430, 0.0
  %v3730 = vadd.f32 %v3728, %v3729
  %v3731 = vsel %vm2570, %v3431, 0.0
  %v3732 = vadd.f32 %v3730, %v3731
  %v3733 = vsel %vm2570, %v3432, 0.0
  %v3734 = vadd.f32 %v3732, %v3733
  %v3735 = vsel %vm2570, %v3433, 0.0
  %v3736 = vadd.f32 %v3734, %v3735
  %v3737 = vsel %vm2570, %v3434, 0.0
  %v3738 = vadd.f32 %v3736, %v3737
  %v3739 = vsel %vm2570, %v3435, 0.0
  %v3740 = vadd.f32 %v3738, %v3739
  %v3741 = vsel %vm2570, %v3436, 0.0
  %v3742 = vadd.f32 %v3740, %v3741
  %v3743 = vsel %vm2570, %v3437, 0.0
  %v3744 = vadd.f32 %v3742, %v3743
  %v3745 = vsel %vm2570, %v3438, 0.0
  %v3746 = vadd.f32 %v3744, %v3745
  %v3747 = vsel %vm2570, %v3439, 0.0
  %v3748 = vadd.f32 %v3746, %v3747
  %v3749 = vsel %vm2570, %v3440, 0.0
  %v3750 = vadd.f32 %v3748, %v3749
  %v3751 = vsel %vm2570, %v3441, 0.0
  %v3752 = vadd.f32 %v3750, %v3751
  %v3753 = vsel %vm2570, %v3442, 0.0
  %v3754 = vadd.f32 %v3752, %v3753
  %v3755 = vsel %vm2570, %v3443, 0.0
  %v3756 = vadd.f32 %v3754, %v3755
  %v3757 = vsel %vm2570, %v3444, 0.0
  %v3758 = vadd.f32 %v3756, %v3757
  %v3759 = vsel %vm2570, %v3445, 0.0
  %v3760 = vadd.f32 %v3758, %v3759
  %v3761 = vsel %vm2570, %v3446, 0.0
  %v3762 = vadd.f32 %v3760, %v3761
  %v3763 = vsel %vm2570, %v3447, 0.0
  %v3764 = vadd.f32 %v3762, %v3763
  %v3765 = vsel %vm2570, %v3448, 0.0
  %v3766 = vadd.f32 %v3764, %v3765
  %v3767 = vsel %vm2570, %v3449, 0.0
  %v3768 = vadd.f32 %v3766, %v3767
  %v3769 = vsel %vm2570, %v3450, 0.0
  %v3770 = vadd.f32 %v3768, %v3769
  %v3771 = vsel %vm2570, %v3451, 0.0
  %v3772 = vadd.f32 %v3770, %v3771
  %v3773 = vsel %vm2570, %v3452, 0.0
  %v3774 = vadd.f32 %v3772, %v3773
  %v3775 = vsel %vm2570, %v3453, 0.0
  %v3776 = vadd.f32 %v3774, %v3775
  %v3777 = vsel %vm2570, %v3454, 0.0
  %v3778 = vadd.f32 %v3776, %v3777
  %v3779 = vsel %vm2570, %v3455, 0.0
  %v3780 = vadd.f32 %v3778, %v3779
  %v3781 = vsel %vm2570, %v3456, 0.0
  %v3782 = vadd.f32 %v3780, %v3781
  %v3783 = vsel %vm2570, %v3457, 0.0
  %v3784 = vadd.f32 %v3782, %v3783
  %v3785 = vsel %vm2570, %v3458, 0.0
  %v3786 = vadd.f32 %v3784, %v3785
  %v3787 = vsel %vm2570, %v3459, 0.0
  %v3788 = vadd.f32 %v3786, %v3787
  %v3789 = vsel %vm2570, %v3460, 0.0
  %v3790 = vadd.f32 %v3788, %v3789
  %v3791 = vsel %vm2570, %v3461, 0.0
  %v3792 = vadd.f32 %v3790, %v3791
  %v3793 = vsel %vm2570, %v3462, 0.0
  %v3794 = vadd.f32 %v3792, %v3793
  %v3795 = vsel %vm2570, %v3463, 0.0
  %v3796 = vadd.f32 %v3794, %v3795
  %v3797 = vsel %vm2570, %v3464, 0.0
  %v3798 = vadd.f32 %v3796, %v3797
  %v3799 = vsel %vm2570, %v3465, 0.0
  %v3800 = vadd.f32 %v3798, %v3799
  %v3801 = vsel %vm2570, %v3466, 0.0
  %v3802 = vadd.f32 %v3800, %v3801
  %v3803 = vsel %vm2570, %v3467, 0.0
  %v3804 = vadd.f32 %v3802, %v3803
  %v3805 = vsel %vm2570, %v3468, 0.0
  %v3806 = vadd.f32 %v3804, %v3805
  %v3807 = vsel %vm2570, %v3469, 0.0
  %v3808 = vadd.f32 %v3806, %v3807
  %v3809 = vsel %vm2570, %v3470, 0.0
  %v3810 = vadd.f32 %v3808, %v3809
  %v3811 = vsel %vm2570, %v3471, 0.0
  %v3812 = vadd.f32 %v3810, %v3811
  %v3813 = vsel %vm2570, %v3472, 0.0
  %v3814 = vadd.f32 %v3812, %v3813
  %v3815 = vsel %vm2570, %v3473, 0.0
  %v3816 = vadd.f32 %v3814, %v3815
  %v3817 = vsel %vm2570, %v3474, 0.0
  %v3818 = vadd.f32 %v3816, %v3817
  %v3819 = vsel %vm2570, %v3475, 0.0
  %v3820 = vadd.f32 %v3818, %v3819
  %v3821 = vsel %vm2570, %v3476, 0.0
  %v3822 = vadd.f32 %v3820, %v3821
  %v3823 = vsel %vm2570, %v3477, 0.0
  %v3824 = vadd.f32 %v3822, %v3823
  %v3825 = vsel %vm2570, %v3478, 0.0
  %v3826 = vadd.f32 %v3824, %v3825
  %v3827 = vsel %vm2570, %v3479, 0.0
  %v3828 = vadd.f32 %v3826, %v3827
  %v3829 = vsel %vm2570, %v3480, 0.0
  %v3830 = vadd.f32 %v3828, %v3829
  %v3831 = vsel %vm2570, %v3481, 0.0
  %v3832 = vadd.f32 %v3830, %v3831
  %v3833 = vsel %vm2570, %v3482, 0.0
  %v3834 = vadd.f32 %v3832, %v3833
  %v3835 = vsel %vm2570, %v3483, 0.0
  %v3836 = vadd.f32 %v3834, %v3835
  %v3837 = vsel %vm2570, %v3484, 0.0
  %v3838 = vadd.f32 %v3836, %v3837
  %v3839 = vsel %vm2570, %v3485, 0.0
  %v3840 = vadd.f32 %v3838, %v3839
  %v3841 = vsel %vm2570, %v3486, 0.0
  %v3842 = vadd.f32 %v3840, %v3841
  %v3843 = vsel %vm2570, %v3487, 0.0
  %v3844 = vadd.f32 %v3842, %v3843
  %v3845 = vsel %vm2570, %v3488, 0.0
  %v3846 = vadd.f32 %v3844, %v3845
  %v3847 = vsel %vm2570, %v3489, 0.0
  %v3848 = vadd.f32 %v3846, %v3847
  %v3849 = vsel %vm2570, %v3490, 0.0
  %v3850 = vadd.f32 %v3848, %v3849
  %v3851 = vsel %vm2570, %v3491, 0.0
  %v3852 = vadd.f32 %v3850, %v3851
  %v3853 = vsel %vm2570, %v3492, 0.0
  %v3854 = vadd.f32 %v3852, %v3853
  %v3855 = vsel %vm2570, %v3493, 0.0
  %v3856 = vadd.f32 %v3854, %v3855
  %v3857 = vsel %vm2570, %v3494, 0.0
  %v3858 = vadd.f32 %v3856, %v3857
  %v3859 = vsel %vm2753, %v3495, 0.0
  %v3860 = vadd.f32 %v3858, %v3859
  %v3861 = vrot.slane %v3860, 4
  %v3862 = vadd.f32 %v3860, %v3861
  %v3863 = vrot.slane %v3862, 2
  %v3864 = vadd.f32 %v3862, %v3863
  %v3865 = vrot.slane %v3864, 1
  %v3866 = vadd.f32 %v3864, %v3865
  %v3867 = vmul.f32 %v3866, %v3126
  %3868 = vst.msk [vmem:[%s5] sm:$0x1] %vm3128, %v3867
  // Predicated region
  $region14: #{actor_critic_forward.4} parent=0 // pred_check
    _
  $region15: #{actor_critic_forward.4} parent=0 // pred_check_branch
    %3870 = sbr.rel (0) target = $region17
  $region16: #{actor_critic_forward.4} parent=0 // pred_region
    _
  $region17: #{actor_critic_forward.4} parent=0 // pred_fallthru
    _
  // Predicated region
  $region18: #{actor_critic_forward.4} parent=0 // pred_check
    _
  $region19: #{actor_critic_forward.4} parent=0 // pred_check_branch
    %3872 = sbr.rel (0) target = $region21
  $region20: #{actor_critic_forward.4} parent=0 // pred_region
    _
  $region21: #{actor_critic_forward.4} parent=0 // pred_fallthru
    _
  // Predicated region
  $region22: #{actor_critic_forward.4} parent=0 // pred_check
    _
  $region23: #{actor_critic_forward.4} parent=0 // pred_check_branch
    %3874 = sbr.rel (0) target = $region25
  $region24: #{actor_critic_forward.4} parent=0 // pred_region
    _
  $region25: #{actor_critic_forward.4} parent=0 // pred_fallthru
    _
  // Predicated region
  $region26: #{actor_critic_forward.4} parent=0 // pred_check
    _
  $region27: #{actor_critic_forward.4} parent=0 // pred_check_branch
    %3876 = sbr.rel (0) target = $region29
  $region28: #{actor_critic_forward.4} parent=0 // pred_region
    _
  $region29: #{actor_critic_forward.4} parent=0 // pred_fallthru
    _
  // Predicated region
  $region30: #{actor_critic_forward.4} parent=0 // pred_check
    _
  $region31: #{actor_critic_forward.4} parent=0 // pred_check_branch
    %3878 = sbr.rel (0) target = $region33
  $region32: #{actor_critic_forward.4} parent=0 // pred_region
    _
  $region33: #{actor_critic_forward.4} parent=0 // pred_fallthru
    _
  // Predicated region
  $region34: #{actor_critic_forward.4} parent=0 // pred_check
    _
  $region35: #{actor_critic_forward.4} parent=0 // pred_check_branch
    %3880 = sbr.rel (0) target = $region37
  $region36: #{actor_critic_forward.4} parent=0 // pred_region
    _
  $region37: #{actor_critic_forward.4} parent=0 // pred_fallthru
    _

// kernel: actor_critic_forward.5
$region0: #{actor_critic_forward.5}
  #allocation0 [shape = 'u32[]', space=smem, size = 0x4, offset = 0x4, fixed_abs, tag = 'smem constant byte address 0x4 - core index']
  #allocation1 [shape = 'u32[144,128]{1,0:T(1,128)}', space=vmem, size = 0x12000, scoped, tag = 'internal scratch']
  %s0 = inlined_call_operand.vmem [shape: f32[18,3,9,3,32], index: 0, kind: input, shape index: {}]
  %s1 = inlined_call_operand.vmem [shape: f32[1,32], index: 1, kind: input, shape index: {}]
  %s2 = inlined_call_operand.vmem [shape: f32[1,32], index: 2, kind: input, shape index: {}]
  %s3 = inlined_call_operand.vmem [shape: f32[1,32], index: 3, kind: input, shape index: {}]
  %s4 = inlined_call_operand.vmem [shape: f32[1,32], index: 4, kind: input, shape index: {}]
  %s5 = inlined_call_operand.vmem [shape: f32[18,9,32], index: 5, kind: output, shape index: {}]
  %s6 = sld [smem:[#allocation0]]
  $region30: #{actor_critic_forward.5} parent=0
    _
  %s8 = ssub.s32 1, %s6
  %s9 = scalar_select 0, %s8, %s6
  // Predicated region
  $region2: #{actor_critic_forward.5} parent=0 // pred_check
    _
  $region3: #{actor_critic_forward.5} parent=0 // pred_check_branch
    %11 = sbr.rel (0) target = $region5
  $region4: #{actor_critic_forward.5} parent=0 // pred_region
    _
  $region5: #{actor_critic_forward.5} parent=0 // pred_fallthru
    _
  // Predicated region
  $region6: #{actor_critic_forward.5} parent=0 // pred_check
    _
  $region7: #{actor_critic_forward.5} parent=0 // pred_check_branch
    %13 = sbr.rel (0) target = $region9
  $region8: #{actor_critic_forward.5} parent=0 // pred_region
    _
  $region9: #{actor_critic_forward.5} parent=0 // pred_fallthru
    _
  // Predicated region
  $region10: #{actor_critic_forward.5} parent=0 // pred_check
    _
  $region11: #{actor_critic_forward.5} parent=0 // pred_check_branch
    %15 = sbr.rel (0) target = $region13
  $region12: #{actor_critic_forward.5} parent=0 // pred_region
    _
  $region13: #{actor_critic_forward.5} parent=0 // pred_fallthru
    _
  // Predicated region
  $region14: #{actor_critic_forward.5} parent=0 // pred_check
    _
  $region15: #{actor_critic_forward.5} parent=0 // pred_check_branch
    %17 = sbr.rel (0) target = $region17
  $region16: #{actor_critic_forward.5} parent=0 // pred_region
    _
  $region17: #{actor_critic_forward.5} parent=0 // pred_fallthru
    _
  // Predicated region
  $region18: #{actor_critic_forward.5} parent=0 // pred_check
    _
  $region19: #{actor_critic_forward.5} parent=0 // pred_check_branch
    %19 = sbr.rel (0) target = $region21
  $region20: #{actor_critic_forward.5} parent=0 // pred_region
    _
  $region21: #{actor_critic_forward.5} parent=0 // pred_fallthru
    _
  %v20 = vld [vmem:[%s2] sm:$0x1]
  %v21 = vadd.f32 %v20, 1e-05
  %v22 = vrsqrt.pop %v21
  %v23 = vld [vmem:[%s3] sm:$0x1]
  %v24 = vmul.f32 %v23, %v22
  %v25 = vld [vmem:[%s4] sm:$0x1]
  %v26 = vld [vmem:[%s1] sm:$0x1]
  %v27 = vmul.f32 %v26, %v24
  %v28 = vsub.f32 %v25, %v27
  %v29 = vld [vmem:[%s0] sm:$0x7]
  %v30 = vld [vmem:[%s0 + $0x4] sm:$0x7]
  %v31 = vld [vmem:[%s0 + $0x8] sm:$0x7]
  %v32 = vld [vmem:[%s0 + $0xc] sm:$0x7]
  %v33 = vld [vmem:[%s0 + $0x10] sm:$0x7]
  %v34 = vld [vmem:[%s0 + $0x14] sm:$0x7]
  %v35 = vld [vmem:[%s0 + $0x18] sm:$0x7]
  %v36 = vld [vmem:[%s0 + $0x1c] sm:$0x7]
  %v37 = vld [vmem:[%s0 + $0x20] sm:$0x7]
  %v38 = vld [vmem:[%s0 + $0x24] sm:$0x7]
  %v39 = vld [vmem:[%s0 + $0x28] sm:$0x7]
  %v40 = vld [vmem:[%s0 + $0x2c] sm:$0x7]
  %v41 = vld [vmem:[%s0 + $0x30] sm:$0x7]
  %v42 = vld [vmem:[%s0 + $0x34] sm:$0x7]
  %v43 = vld [vmem:[%s0 + $0x38] sm:$0x7]
  %v44 = vld [vmem:[%s0 + $0x3c] sm:$0x7]
  %v45 = vld [vmem:[%s0 + $0x40] sm:$0x7]
  %v46 = vld [vmem:[%s0 + $0x44] sm:$0x7]
  %v47 = vld [vmem:[%s0 + $0x48] sm:$0x7]
  %v48 = vld [vmem:[%s0 + $0x4c] sm:$0x7]
  %v49 = vld [vmem:[%s0 + $0x50] sm:$0x7]
  %v50 = vld [vmem:[%s0 + $0x54] sm:$0x7]
  %v51 = vld [vmem:[%s0 + $0x58] sm:$0x7]
  %v52 = vld [vmem:[%s0 + $0x5c] sm:$0x7]
  %v53 = vld [vmem:[%s0 + $0x60] sm:$0x7]
  %v54 = vld [vmem:[%s0 + $0x64] sm:$0x7]
  %v55 = vld [vmem:[%s0 + $0x68] sm:$0x7]
  %v56 = vld [vmem:[%s0 + $0x6c] sm:$0x7]
  %v57 = vld [vmem:[%s0 + $0x70] sm:$0x7]
  %v58 = vld [vmem:[%s0 + $0x74] sm:$0x7]
  %v59 = vld [vmem:[%s0 + $0x78] sm:$0x7]
  %v60 = vld [vmem:[%s0 + $0x7c] sm:$0x7]
  %v61 = vld [vmem:[%s0 + $0x80] sm:$0x7]
  %v62 = vld [vmem:[%s0 + $0x84] sm:$0x7]
  %v63 = vld [vmem:[%s0 + $0x88] sm:$0x7]
  %v64 = vld [vmem:[%s0 + $0x8c] sm:$0x7]
  %v65 = vld [vmem:[%s0 + $0x90] sm:$0x7]
  %v66 = vld [vmem:[%s0 + $0x94] sm:$0x7]
  %v67 = vld [vmem:[%s0 + $0x98] sm:$0x7]
  %v68 = vld [vmem:[%s0 + $0x9c] sm:$0x7]
  %v69 = vld [vmem:[%s0 + $0xa0] sm:$0x7]
  %v70 = vld [vmem:[%s0 + $0xa4] sm:$0x7]
  %v71 = vld [vmem:[%s0 + $0xa8] sm:$0x7]
  %v72 = vld [vmem:[%s0 + $0xac] sm:$0x7]
  %v73 = vld [vmem:[%s0 + $0xb0] sm:$0x7]
  %v74 = vld [vmem:[%s0 + $0xb4] sm:$0x7]
  %v75 = vld [vmem:[%s0 + $0xb8] sm:$0x7]
  %v76 = vld [vmem:[%s0 + $0xbc] sm:$0x7]
  %v77 = vld [vmem:[%s0 + $0xc0] sm:$0x7]
  %v78 = vld [vmem:[%s0 + $0xc4] sm:$0x7]
  %v79 = vld [vmem:[%s0 + $0xc8] sm:$0x7]
  %v80 = vld [vmem:[%s0 + $0xcc] sm:$0x7]
  %v81 = vld [vmem:[%s0 + $0xd0] sm:$0x7]
  %v82 = vld [vmem:[%s0 + $0xd4] sm:$0x7]
  %v83 = vld [vmem:[%s0 + $0xd8] sm:$0x7]
  %v84 = vld [vmem:[%s0 + $0xdc] sm:$0x7]
  %v85 = vld [vmem:[%s0 + $0xe0] sm:$0x7]
  %v86 = vld [vmem:[%s0 + $0xe4] sm:$0x7]
  %v87 = vld [vmem:[%s0 + $0xe8] sm:$0x7]
  %v88 = vld [vmem:[%s0 + $0xec] sm:$0x7]
  %v89 = vld [vmem:[%s0 + $0xf0] sm:$0x7]
  %v90 = vld [vmem:[%s0 + $0xf4] sm:$0x7]
  %v91 = vld [vmem:[%s0 + $0xf8] sm:$0x7]
  %v92 = vld [vmem:[%s0 + $0xfc] sm:$0x7]
  %v93 = vld [vmem:[%s0 + $0x100] sm:$0x7]
  %v94 = vld [vmem:[%s0 + $0x104] sm:$0x7]
  %v95 = vld [vmem:[%s0 + $0x108] sm:$0x7]
  %v96 = vld [vmem:[%s0 + $0x10c] sm:$0x7]
  %v97 = vld [vmem:[%s0 + $0x110] sm:$0x7]
  %v98 = vld [vmem:[%s0 + $0x114] sm:$0x7]
  %v99 = vld [vmem:[%s0 + $0x118] sm:$0x7]
  %v100 = vld [vmem:[%s0 + $0x11c] sm:$0x7]
  %v101 = vld [vmem:[%s0 + $0x120] sm:$0x7]
  %v102 = vld [vmem:[%s0 + $0x124] sm:$0x7]
  %v103 = vld [vmem:[%s0 + $0x128] sm:$0x7]
  %v104 = vld [vmem:[%s0 + $0x12c] sm:$0x7]
  %v105 = vld [vmem:[%s0 + $0x130] sm:$0x7]
  %v106 = vld [vmem:[%s0 + $0x134] sm:$0x7]
  %v107 = vld [vmem:[%s0 + $0x138] sm:$0x7]
  %v108 = vld [vmem:[%s0 + $0x13c] sm:$0x7]
  %v109 = vld [vmem:[%s0 + $0x140] sm:$0x7]
  %v110 = vld [vmem:[%s0 + $0x144] sm:$0x7]
  %v111 = vld [vmem:[%s0 + $0x148] sm:$0x7]
  %v112 = vld [vmem:[%s0 + $0x14c] sm:$0x7]
  %v113 = vld [vmem:[%s0 + $0x150] sm:$0x7]
  %v114 = vld [vmem:[%s0 + $0x154] sm:$0x7]
  %v115 = vld [vmem:[%s0 + $0x158] sm:$0x7]
  %v116 = vld [vmem:[%s0 + $0x15c] sm:$0x7]
  %v117 = vld [vmem:[%s0 + $0x160] sm:$0x7]
  %v118 = vld [vmem:[%s0 + $0x164] sm:$0x7]
  %v119 = vld [vmem:[%s0 + $0x168] sm:$0x7]
  %v120 = vld [vmem:[%s0 + $0x16c] sm:$0x7]
  %v121 = vld [vmem:[%s0 + $0x170] sm:$0x7]
  %v122 = vld [vmem:[%s0 + $0x174] sm:$0x7]
  %v123 = vld [vmem:[%s0 + $0x178] sm:$0x7]
  %v124 = vld [vmem:[%s0 + $0x17c] sm:$0x7]
  %v125 = vld [vmem:[%s0 + $0x180] sm:$0x7]
  %v126 = vld [vmem:[%s0 + $0x184] sm:$0x7]
  %v127 = vld [vmem:[%s0 + $0x188] sm:$0x7]
  %v128 = vld [vmem:[%s0 + $0x18c] sm:$0x7]
  %v129 = vld [vmem:[%s0 + $0x190] sm:$0x7]
  %v130 = vld [vmem:[%s0 + $0x194] sm:$0x7]
  %v131 = vld [vmem:[%s0 + $0x198] sm:$0x7]
  %v132 = vld [vmem:[%s0 + $0x19c] sm:$0x7]
  %v133 = vld [vmem:[%s0 + $0x1a0] sm:$0x7]
  %v134 = vld [vmem:[%s0 + $0x1a4] sm:$0x7]
  %v135 = vld [vmem:[%s0 + $0x1a8] sm:$0x7]
  %v136 = vld [vmem:[%s0 + $0x1ac] sm:$0x7]
  %v137 = vld [vmem:[%s0 + $0x1b0] sm:$0x7]
  %v138 = vld [vmem:[%s0 + $0x1b4] sm:$0x7]
  %v139 = vld [vmem:[%s0 + $0x1b8] sm:$0x7]
  %v140 = vld [vmem:[%s0 + $0x1bc] sm:$0x7]
  %v141 = vld [vmem:[%s0 + $0x1c0] sm:$0x7]
  %v142 = vld [vmem:[%s0 + $0x1c4] sm:$0x7]
  %v143 = vld [vmem:[%s0 + $0x1c8] sm:$0x7]
  %v144 = vld [vmem:[%s0 + $0x1cc] sm:$0x7]
  %v145 = vld [vmem:[%s0 + $0x1d0] sm:$0x7]
  %v146 = vld [vmem:[%s0 + $0x1d4] sm:$0x7]
  %v147 = vld [vmem:[%s0 + $0x1d8] sm:$0x7]
  %v148 = vld [vmem:[%s0 + $0x1dc] sm:$0x7]
  %v149 = vld [vmem:[%s0 + $0x1e0] sm:$0x7]
  %v150 = vld [vmem:[%s0 + $0x1e4] sm:$0x7]
  %v151 = vld [vmem:[%s0 + $0x1e8] sm:$0x7]
  %v152 = vld [vmem:[%s0 + $0x1ec] sm:$0x7]
  %v153 = vld [vmem:[%s0 + $0x1f0] sm:$0x7]
  %v154 = vld [vmem:[%s0 + $0x1f4] sm:$0x7]
  %v155 = vld [vmem:[%s0 + $0x1f8] sm:$0x7]
  %v156 = vld [vmem:[%s0 + $0x1fc] sm:$0x7]
  %v157 = vld [vmem:[%s0 + $0x200] sm:$0x7]
  %v158 = vld [vmem:[%s0 + $0x204] sm:$0x7]
  %v159 = vld [vmem:[%s0 + $0x208] sm:$0x7]
  %v160 = vld [vmem:[%s0 + $0x20c] sm:$0x7]
  %v161 = vld [vmem:[%s0 + $0x210] sm:$0x7]
  %v162 = vld [vmem:[%s0 + $0x214] sm:$0x7]
  %v163 = vld [vmem:[%s0 + $0x218] sm:$0x7]
  %v164 = vld [vmem:[%s0 + $0x21c] sm:$0x7]
  %v165 = vld [vmem:[%s0 + $0x220] sm:$0x7]
  %v166 = vld [vmem:[%s0 + $0x224] sm:$0x7]
  %v167 = vld [vmem:[%s0 + $0x228] sm:$0x7]
  %v168 = vld [vmem:[%s0 + $0x22c] sm:$0x7]
  %v169 = vld [vmem:[%s0 + $0x230] sm:$0x7]
  %v170 = vld [vmem:[%s0 + $0x234] sm:$0x7]
  %v171 = vld [vmem:[%s0 + $0x238] sm:$0x7]
  %v172 = vld [vmem:[%s0 + $0x23c] sm:$0x7]
  %v173 = vld [vmem:[%s0 + $0x240] sm:$0x7]
  %v174 = vld [vmem:[%s0 + $0x244] sm:$0x7]
  %v175 = vld [vmem:[%s0 + $0x248] sm:$0x7]
  %v176 = vld [vmem:[%s0 + $0x24c] sm:$0x7]
  %v177 = vld [vmem:[%s0 + $0x250] sm:$0x7]
  %v178 = vld [vmem:[%s0 + $0x254] sm:$0x7]
  %v179 = vld [vmem:[%s0 + $0x258] sm:$0x7]
  %v180 = vld [vmem:[%s0 + $0x25c] sm:$0x7]
  %v181 = vld [vmem:[%s0 + $0x260] sm:$0x7]
  %v182 = vld [vmem:[%s0 + $0x264] sm:$0x7]
  %v183 = vld [vmem:[%s0 + $0x268] sm:$0x7]
  %v184 = vld [vmem:[%s0 + $0x26c] sm:$0x7]
  %v185 = vld [vmem:[%s0 + $0x270] sm:$0x7]
  %v186 = vld [vmem:[%s0 + $0x274] sm:$0x7]
  %v187 = vld [vmem:[%s0 + $0x278] sm:$0x7]
  %v188 = vld [vmem:[%s0 + $0x27c] sm:$0x7]
  %v189 = vld [vmem:[%s0 + $0x280] sm:$0x7]
  %v190 = vld [vmem:[%s0 + $0x284] sm:$0x7]
  %v191 = vld [vmem:[%s0 + $0x288] sm:$0x7]
  %v192 = vld [vmem:[%s0 + $0x28c] sm:$0x7]
  %v193 = vld [vmem:[%s0 + $0x290] sm:$0x7]
  %v194 = vld [vmem:[%s0 + $0x294] sm:$0x7]
  %v195 = vld [vmem:[%s0 + $0x298] sm:$0x7]
  %v196 = vld [vmem:[%s0 + $0x29c] sm:$0x7]
  %v197 = vld [vmem:[%s0 + $0x2a0] sm:$0x7]
  %v198 = vld [vmem:[%s0 + $0x2a4] sm:$0x7]
  %v199 = vld [vmem:[%s0 + $0x2a8] sm:$0x7]
  %v200 = vld [vmem:[%s0 + $0x2ac] sm:$0x7]
  %v201 = vld [vmem:[%s0 + $0x2b0] sm:$0x7]
  %v202 = vld [vmem:[%s0 + $0x2b4] sm:$0x7]
  %v203 = vld [vmem:[%s0 + $0x2b8] sm:$0x7]
  %v204 = vld [vmem:[%s0 + $0x2bc] sm:$0x7]
  %v205 = vld [vmem:[%s0 + $0x2c0] sm:$0x7]
  %v206 = vld [vmem:[%s0 + $0x2c4] sm:$0x7]
  %v207 = vld [vmem:[%s0 + $0x2c8] sm:$0x7]
  %v208 = vld [vmem:[%s0 + $0x2cc] sm:$0x7]
  %v209 = vld [vmem:[%s0 + $0x2d0] sm:$0x7]
  %v210 = vld [vmem:[%s0 + $0x2d4] sm:$0x7]
  %v211 = vld [vmem:[%s0 + $0x2d8] sm:$0x7]
  %v212 = vld [vmem:[%s0 + $0x2dc] sm:$0x7]
  %v213 = vld [vmem:[%s0 + $0x2e0] sm:$0x7]
  %v214 = vld [vmem:[%s0 + $0x2e4] sm:$0x7]
  %v215 = vld [vmem:[%s0 + $0x2e8] sm:$0x7]
  %v216 = vld [vmem:[%s0 + $0x2ec] sm:$0x7]
  %v217 = vld [vmem:[%s0 + $0x2f0] sm:$0x7]
  %v218 = vld [vmem:[%s0 + $0x2f4] sm:$0x7]
  %v219 = vld [vmem:[%s0 + $0x2f8] sm:$0x7]
  %v220 = vld [vmem:[%s0 + $0x2fc] sm:$0x7]
  %v221 = vld [vmem:[%s0 + $0x300] sm:$0x7]
  %v222 = vld [vmem:[%s0 + $0x304] sm:$0x7]
  %v223 = vld [vmem:[%s0 + $0x308] sm:$0x7]
  %v224 = vld [vmem:[%s0 + $0x30c] sm:$0x7]
  %v225 = vld [vmem:[%s0 + $0x310] sm:$0x7]
  %v226 = vld [vmem:[%s0 + $0x314] sm:$0x7]
  %v227 = vld [vmem:[%s0 + $0x318] sm:$0x7]
  %v228 = vld [vmem:[%s0 + $0x31c] sm:$0x7]
  %v229 = vld [vmem:[%s0 + $0x320] sm:$0x7]
  %v230 = vld [vmem:[%s0 + $0x324] sm:$0x7]
  %v231 = vld [vmem:[%s0 + $0x328] sm:$0x7]
  %v232 = vld [vmem:[%s0 + $0x32c] sm:$0x7]
  %v233 = vld [vmem:[%s0 + $0x330] sm:$0x7]
  %v234 = vld [vmem:[%s0 + $0x334] sm:$0x7]
  %v235 = vld [vmem:[%s0 + $0x338] sm:$0x7]
  %v236 = vld [vmem:[%s0 + $0x33c] sm:$0x7]
  %v237 = vld [vmem:[%s0 + $0x340] sm:$0x7]
  %v238 = vld [vmem:[%s0 + $0x344] sm:$0x7]
  %v239 = vld [vmem:[%s0 + $0x348] sm:$0x7]
  %v240 = vld [vmem:[%s0 + $0x34c] sm:$0x7]
  %v241 = vld [vmem:[%s0 + $0x350] sm:$0x7]
  %v242 = vld [vmem:[%s0 + $0x354] sm:$0x7]
  %v243 = vld [vmem:[%s0 + $0x358] sm:$0x7]
  %v244 = vld [vmem:[%s0 + $0x35c] sm:$0x7]
  %v245 = vld [vmem:[%s0 + $0x360] sm:$0x7]
  %v246 = vld [vmem:[%s0 + $0x364] sm:$0x7]
  %v247 = vld [vmem:[%s0 + $0x368] sm:$0x7]
  %v248 = vld [vmem:[%s0 + $0x36c] sm:$0x7]
  %v249 = vld [vmem:[%s0 + $0x370] sm:$0x7]
  %v250 = vld [vmem:[%s0 + $0x374] sm:$0x7]
  %v251 = vld [vmem:[%s0 + $0x378] sm:$0x7]
  %v252 = vld [vmem:[%s0 + $0x37c] sm:$0x7]
  %v253 = vld [vmem:[%s0 + $0x380] sm:$0x7]
  %v254 = vld [vmem:[%s0 + $0x384] sm:$0x7]
  %v255 = vld [vmem:[%s0 + $0x388] sm:$0x7]
  %v256 = vld [vmem:[%s0 + $0x38c] sm:$0x7]
  %v257 = vld [vmem:[%s0 + $0x390] sm:$0x7]
  %v258 = vld [vmem:[%s0 + $0x394] sm:$0x7]
  %v259 = vld [vmem:[%s0 + $0x398] sm:$0x7]
  %v260 = vld [vmem:[%s0 + $0x39c] sm:$0x7]
  %v261 = vld [vmem:[%s0 + $0x3a0] sm:$0x7]
  %v262 = vld [vmem:[%s0 + $0x3a4] sm:$0x7]
  %v263 = vld [vmem:[%s0 + $0x3a8] sm:$0x7]
  %v264 = vld [vmem:[%s0 + $0x3ac] sm:$0x7]
  %v265 = vld [vmem:[%s0 + $0x3b0] sm:$0x7]
  %v266 = vld [vmem:[%s0 + $0x3b4] sm:$0x7]
  %v267 = vld [vmem:[%s0 + $0x3b8] sm:$0x7]
  %v268 = vld [vmem:[%s0 + $0x3bc] sm:$0x7]
  %v269 = vld [vmem:[%s0 + $0x3c0] sm:$0x7]
  %v270 = vld [vmem:[%s0 + $0x3c4] sm:$0x7]
  %v271 = vld [vmem:[%s0 + $0x3c8] sm:$0x7]
  %v272 = vld [vmem:[%s0 + $0x3cc] sm:$0x7]
  %v273 = vld [vmem:[%s0 + $0x3d0] sm:$0x7]
  %v274 = vld [vmem:[%s0 + $0x3d4] sm:$0x7]
  %v275 = vld [vmem:[%s0 + $0x3d8] sm:$0x7]
  %v276 = vld [vmem:[%s0 + $0x3dc] sm:$0x7]
  %v277 = vld [vmem:[%s0 + $0x3e0] sm:$0x7]
  %v278 = vld [vmem:[%s0 + $0x3e4] sm:$0x7]
  %v279 = vld [vmem:[%s0 + $0x3e8] sm:$0x7]
  %v280 = vld [vmem:[%s0 + $0x3ec] sm:$0x7]
  %v281 = vld [vmem:[%s0 + $0x3f0] sm:$0x7]
  %v282 = vld [vmem:[%s0 + $0x3f4] sm:$0x7]
  %v283 = vld [vmem:[%s0 + $0x3f8] sm:$0x7]
  %v284 = vld [vmem:[%s0 + $0x3fc] sm:$0x7]
  %v285 = vld [vmem:[%s0 + $0x400] sm:$0x7]
  %v286 = vld [vmem:[%s0 + $0x404] sm:$0x7]
  %v287 = vld [vmem:[%s0 + $0x408] sm:$0x7]
  %v288 = vld [vmem:[%s0 + $0x40c] sm:$0x7]
  %v289 = vld [vmem:[%s0 + $0x410] sm:$0x7]
  %v290 = vld [vmem:[%s0 + $0x414] sm:$0x7]
  %v291 = vld [vmem:[%s0 + $0x418] sm:$0x7]
  %v292 = vld [vmem:[%s0 + $0x41c] sm:$0x7]
  %v293 = vld [vmem:[%s0 + $0x420] sm:$0x7]
  %v294 = vld [vmem:[%s0 + $0x424] sm:$0x7]
  %v295 = vld [vmem:[%s0 + $0x428] sm:$0x7]
  %v296 = vld [vmem:[%s0 + $0x42c] sm:$0x7]
  %v297 = vld [vmem:[%s0 + $0x430] sm:$0x7]
  %v298 = vld [vmem:[%s0 + $0x434] sm:$0x7]
  %v299 = vld [vmem:[%s0 + $0x438] sm:$0x7]
  %v300 = vld [vmem:[%s0 + $0x43c] sm:$0x7]
  %v301 = vld [vmem:[%s0 + $0x440] sm:$0x7]
  %v302 = vld [vmem:[%s0 + $0x444] sm:$0x7]
  %v303 = vld [vmem:[%s0 + $0x448] sm:$0x7]
  %v304 = vld [vmem:[%s0 + $0x44c] sm:$0x7]
  %v305 = vld [vmem:[%s0 + $0x450] sm:$0x7]
  %v306 = vld [vmem:[%s0 + $0x454] sm:$0x7]
  %v307 = vld [vmem:[%s0 + $0x458] sm:$0x7]
  %v308 = vld [vmem:[%s0 + $0x45c] sm:$0x7]
  %v309 = vld [vmem:[%s0 + $0x460] sm:$0x7]
  %v310 = vld [vmem:[%s0 + $0x464] sm:$0x7]
  %v311 = vld [vmem:[%s0 + $0x468] sm:$0x7]
  %v312 = vld [vmem:[%s0 + $0x46c] sm:$0x7]
  %v313 = vld [vmem:[%s0 + $0x470] sm:$0x7]
  %v314 = vld [vmem:[%s0 + $0x474] sm:$0x7]
  %v315 = vld [vmem:[%s0 + $0x478] sm:$0x7]
  %v316 = vld [vmem:[%s0 + $0x47c] sm:$0x7]
  %v317 = vld [vmem:[%s0 + $0x480] sm:$0x7]
  %v318 = vld [vmem:[%s0 + $0x484] sm:$0x7]
  %v319 = vld [vmem:[%s0 + $0x488] sm:$0x7]
  %v320 = vld [vmem:[%s0 + $0x48c] sm:$0x7]
  %v321 = vld [vmem:[%s0 + $0x490] sm:$0x7]
  %v322 = vld [vmem:[%s0 + $0x494] sm:$0x7]
  %v323 = vld [vmem:[%s0 + $0x498] sm:$0x7]
  %v324 = vld [vmem:[%s0 + $0x49c] sm:$0x7]
  %v325 = vld [vmem:[%s0 + $0x4a0] sm:$0x7]
  %v326 = vld [vmem:[%s0 + $0x4a4] sm:$0x7]
  %v327 = vld [vmem:[%s0 + $0x4a8] sm:$0x7]
  %v328 = vld [vmem:[%s0 + $0x4ac] sm:$0x7]
  %v329 = vld [vmem:[%s0 + $0x4b0] sm:$0x7]
  %v330 = vld [vmem:[%s0 + $0x4b4] sm:$0x7]
  %v331 = vld [vmem:[%s0 + $0x4b8] sm:$0x7]
  %v332 = vld [vmem:[%s0 + $0x4bc] sm:$0x7]
  %v333 = vld [vmem:[%s0 + $0x4c0] sm:$0x7]
  %v334 = vld [vmem:[%s0 + $0x4c4] sm:$0x7]
  %v335 = vld [vmem:[%s0 + $0x4c8] sm:$0x7]
  %v336 = vld [vmem:[%s0 + $0x4cc] sm:$0x7]
  %v337 = vld [vmem:[%s0 + $0x4d0] sm:$0x7]
  %v338 = vld [vmem:[%s0 + $0x4d4] sm:$0x7]
  %v339 = vld [vmem:[%s0 + $0x4d8] sm:$0x7]
  %v340 = vld [vmem:[%s0 + $0x4dc] sm:$0x7]
  %v341 = vld [vmem:[%s0 + $0x4e0] sm:$0x7]
  %v342 = vld [vmem:[%s0 + $0x4e4] sm:$0x7]
  %v343 = vld [vmem:[%s0 + $0x4e8] sm:$0x7]
  %v344 = vld [vmem:[%s0 + $0x4ec] sm:$0x7]
  %v345 = vld [vmem:[%s0 + $0x4f0] sm:$0x7]
  %v346 = vld [vmem:[%s0 + $0x4f4] sm:$0x7]
  %v347 = vld [vmem:[%s0 + $0x4f8] sm:$0x7]
  %v348 = vld [vmem:[%s0 + $0x4fc] sm:$0x7]
  %v349 = vld [vmem:[%s0 + $0x500] sm:$0x7]
  %v350 = vld [vmem:[%s0 + $0x504] sm:$0x7]
  %v351 = vld [vmem:[%s0 + $0x508] sm:$0x7]
  %v352 = vld [vmem:[%s0 + $0x50c] sm:$0x7]
  %v353 = vld [vmem:[%s0 + $0x510] sm:$0x7]
  %v354 = vld [vmem:[%s0 + $0x514] sm:$0x7]
  %v355 = vld [vmem:[%s0 + $0x518] sm:$0x7]
  %v356 = vld [vmem:[%s0 + $0x51c] sm:$0x7]
  %v357 = vld [vmem:[%s0 + $0x520] sm:$0x7]
  %v358 = vld [vmem:[%s0 + $0x524] sm:$0x7]
  %v359 = vld [vmem:[%s0 + $0x528] sm:$0x7]
  %v360 = vld [vmem:[%s0 + $0x52c] sm:$0x7]
  %v361 = vld [vmem:[%s0 + $0x530] sm:$0x7]
  %v362 = vld [vmem:[%s0 + $0x534] sm:$0x7]
  %v363 = vld [vmem:[%s0 + $0x538] sm:$0x7]
  %v364 = vld [vmem:[%s0 + $0x53c] sm:$0x7]
  %v365 = vld [vmem:[%s0 + $0x540] sm:$0x7]
  %v366 = vld [vmem:[%s0 + $0x544] sm:$0x7]
  %v367 = vld [vmem:[%s0 + $0x548] sm:$0x7]
  %v368 = vld [vmem:[%s0 + $0x54c] sm:$0x7]
  %v369 = vld [vmem:[%s0 + $0x550] sm:$0x7]
  %v370 = vld [vmem:[%s0 + $0x554] sm:$0x7]
  %v371 = vld [vmem:[%s0 + $0x558] sm:$0x7]
  %v372 = vld [vmem:[%s0 + $0x55c] sm:$0x7]
  %v373 = vld [vmem:[%s0 + $0x560] sm:$0x7]
  %v374 = vld [vmem:[%s0 + $0x564] sm:$0x7]
  %v375 = vld [vmem:[%s0 + $0x568] sm:$0x7]
  %v376 = vld [vmem:[%s0 + $0x56c] sm:$0x7]
  %v377 = vld [vmem:[%s0 + $0x570] sm:$0x7]
  %v378 = vld [vmem:[%s0 + $0x574] sm:$0x7]
  %v379 = vld [vmem:[%s0 + $0x578] sm:$0x7]
  %v380 = vld [vmem:[%s0 + $0x57c] sm:$0x7]
  %v381 = vld [vmem:[%s0 + $0x580] sm:$0x7]
  %v382 = vld [vmem:[%s0 + $0x584] sm:$0x7]
  %v383 = vld [vmem:[%s0 + $0x588] sm:$0x7]
  %v384 = vld [vmem:[%s0 + $0x58c] sm:$0x7]
  %v385 = vld [vmem:[%s0 + $0x590] sm:$0x7]
  %v386 = vld [vmem:[%s0 + $0x594] sm:$0x7]
  %v387 = vld [vmem:[%s0 + $0x598] sm:$0x7]
  %v388 = vld [vmem:[%s0 + $0x59c] sm:$0x7]
  %v389 = vld [vmem:[%s0 + $0x5a0] sm:$0x7]
  %v390 = vld [vmem:[%s0 + $0x5a4] sm:$0x7]
  %v391 = vld [vmem:[%s0 + $0x5a8] sm:$0x7]
  %v392 = vld [vmem:[%s0 + $0x5ac] sm:$0x7]
  %v393 = vld [vmem:[%s0 + $0x5b0] sm:$0x7]
  %v394 = vld [vmem:[%s0 + $0x5b4] sm:$0x7]
  %v395 = vld [vmem:[%s0 + $0x5b8] sm:$0x7]
  %v396 = vld [vmem:[%s0 + $0x5bc] sm:$0x7]
  %v397 = vld [vmem:[%s0 + $0x5c0] sm:$0x7]
  %v398 = vld [vmem:[%s0 + $0x5c4] sm:$0x7]
  %v399 = vld [vmem:[%s0 + $0x5c8] sm:$0x7]
  %v400 = vld [vmem:[%s0 + $0x5cc] sm:$0x7]
  %v401 = vld [vmem:[%s0 + $0x5d0] sm:$0x7]
  %v402 = vld [vmem:[%s0 + $0x5d4] sm:$0x7]
  %v403 = vld [vmem:[%s0 + $0x5d8] sm:$0x7]
  %v404 = vld [vmem:[%s0 + $0x5dc] sm:$0x7]
  %v405 = vld [vmem:[%s0 + $0x5e0] sm:$0x7]
  %v406 = vld [vmem:[%s0 + $0x5e4] sm:$0x7]
  %v407 = vld [vmem:[%s0 + $0x5e8] sm:$0x7]
  %v408 = vld [vmem:[%s0 + $0x5ec] sm:$0x7]
  %v409 = vld [vmem:[%s0 + $0x5f0] sm:$0x7]
  %v410 = vld [vmem:[%s0 + $0x5f4] sm:$0x7]
  %v411 = vld [vmem:[%s0 + $0x5f8] sm:$0x7]
  %v412 = vld [vmem:[%s0 + $0x5fc] sm:$0x7]
  %v413 = vld [vmem:[%s0 + $0x600] sm:$0x7]
  %v414 = vld [vmem:[%s0 + $0x604] sm:$0x7]
  %v415 = vld [vmem:[%s0 + $0x608] sm:$0x7]
  %v416 = vld [vmem:[%s0 + $0x60c] sm:$0x7]
  %v417 = vld [vmem:[%s0 + $0x610] sm:$0x7]
  %v418 = vld [vmem:[%s0 + $0x614] sm:$0x7]
  %v419 = vld [vmem:[%s0 + $0x618] sm:$0x7]
  %v420 = vld [vmem:[%s0 + $0x61c] sm:$0x7]
  %v421 = vld [vmem:[%s0 + $0x620] sm:$0x7]
  %v422 = vld [vmem:[%s0 + $0x624] sm:$0x7]
  %v423 = vld [vmem:[%s0 + $0x628] sm:$0x7]
  %v424 = vld [vmem:[%s0 + $0x62c] sm:$0x7]
  %v425 = vld [vmem:[%s0 + $0x630] sm:$0x7]
  %v426 = vld [vmem:[%s0 + $0x634] sm:$0x7]
  %v427 = vld [vmem:[%s0 + $0x638] sm:$0x7]
  %v428 = vld [vmem:[%s0 + $0x63c] sm:$0x7]
  %v429 = vld [vmem:[%s0 + $0x640] sm:$0x7]
  %v430 = vld [vmem:[%s0 + $0x644] sm:$0x7]
  %v431 = vld [vmem:[%s0 + $0x648] sm:$0x7]
  %v432 = vld [vmem:[%s0 + $0x64c] sm:$0x7]
  %v433 = vld [vmem:[%s0 + $0x650] sm:$0x7]
  %v434 = vld [vmem:[%s0 + $0x654] sm:$0x7]
  %v435 = vld [vmem:[%s0 + $0x658] sm:$0x7]
  %v436 = vld [vmem:[%s0 + $0x65c] sm:$0x7]
  %v437 = vld [vmem:[%s0 + $0x660] sm:$0x7]
  %v438 = vld [vmem:[%s0 + $0x664] sm:$0x7]
  %v439 = vld [vmem:[%s0 + $0x668] sm:$0x7]
  %v440 = vld [vmem:[%s0 + $0x66c] sm:$0x7]
  %v441 = vld [vmem:[%s0 + $0x670] sm:$0x7]
  %v442 = vld [vmem:[%s0 + $0x674] sm:$0x7]
  %v443 = vld [vmem:[%s0 + $0x678] sm:$0x7]
  %v444 = vld [vmem:[%s0 + $0x67c] sm:$0x7]
  %v445 = vld [vmem:[%s0 + $0x680] sm:$0x7]
  %v446 = vld [vmem:[%s0 + $0x684] sm:$0x7]
  %v447 = vld [vmem:[%s0 + $0x688] sm:$0x7]
  %v448 = vld [vmem:[%s0 + $0x68c] sm:$0x7]
  %v449 = vld [vmem:[%s0 + $0x690] sm:$0x7]
  %v450 = vld [vmem:[%s0 + $0x694] sm:$0x7]
  %v451 = vld [vmem:[%s0 + $0x698] sm:$0x7]
  %v452 = vld [vmem:[%s0 + $0x69c] sm:$0x7]
  %v453 = vld [vmem:[%s0 + $0x6a0] sm:$0x7]
  %v454 = vld [vmem:[%s0 + $0x6a4] sm:$0x7]
  %v455 = vld [vmem:[%s0 + $0x6a8] sm:$0x7]
  %v456 = vld [vmem:[%s0 + $0x6ac] sm:$0x7]
  %v457 = vld [vmem:[%s0 + $0x6b0] sm:$0x7]
  %v458 = vld [vmem:[%s0 + $0x6b4] sm:$0x7]
  %v459 = vld [vmem:[%s0 + $0x6b8] sm:$0x7]
  %v460 = vld [vmem:[%s0 + $0x6bc] sm:$0x7]
  %v461 = vld [vmem:[%s0 + $0x6c0] sm:$0x7]
  %v462 = vld [vmem:[%s0 + $0x6c4] sm:$0x7]
  %v463 = vld [vmem:[%s0 + $0x6c8] sm:$0x7]
  %v464 = vld [vmem:[%s0 + $0x6cc] sm:$0x7]
  %v465 = vld [vmem:[%s0 + $0x6d0] sm:$0x7]
  %v466 = vld [vmem:[%s0 + $0x6d4] sm:$0x7]
  %v467 = vld [vmem:[%s0 + $0x6d8] sm:$0x7]
  %v468 = vld [vmem:[%s0 + $0x6dc] sm:$0x7]
  %v469 = vld [vmem:[%s0 + $0x6e0] sm:$0x7]
  %v470 = vld [vmem:[%s0 + $0x6e4] sm:$0x7]
  %v471 = vld [vmem:[%s0 + $0x6e8] sm:$0x7]
  %v472 = vld [vmem:[%s0 + $0x6ec] sm:$0x7]
  %v473 = vld [vmem:[%s0 + $0x6f0] sm:$0x7]
  %v474 = vld [vmem:[%s0 + $0x6f4] sm:$0x7]
  %v475 = vld [vmem:[%s0 + $0x6f8] sm:$0x7]
  %v476 = vld [vmem:[%s0 + $0x6fc] sm:$0x7]
  %v477 = vld [vmem:[%s0 + $0x700] sm:$0x7]
  %v478 = vld [vmem:[%s0 + $0x704] sm:$0x7]
  %v479 = vld [vmem:[%s0 + $0x708] sm:$0x7]
  %v480 = vld [vmem:[%s0 + $0x70c] sm:$0x7]
  %v481 = vld [vmem:[%s0 + $0x710] sm:$0x7]
  %v482 = vld [vmem:[%s0 + $0x714] sm:$0x7]
  %v483 = vld [vmem:[%s0 + $0x718] sm:$0x7]
  %v484 = vld [vmem:[%s0 + $0x71c] sm:$0x7]
  %v485 = vld [vmem:[%s0 + $0x720] sm:$0x7]
  %v486 = vld [vmem:[%s0 + $0x724] sm:$0x7]
  %v487 = vld [vmem:[%s0 + $0x728] sm:$0x7]
  %v488 = vld [vmem:[%s0 + $0x72c] sm:$0x7]
  %v489 = vld [vmem:[%s0 + $0x730] sm:$0x7]
  %v490 = vld [vmem:[%s0 + $0x734] sm:$0x7]
  %v491 = vld [vmem:[%s0 + $0x738] sm:$0x7]
  %v492 = vld [vmem:[%s0 + $0x73c] sm:$0x7]
  %v493 = vld [vmem:[%s0 + $0x740] sm:$0x7]
  %v494 = vld [vmem:[%s0 + $0x744] sm:$0x7]
  %v495 = vld [vmem:[%s0 + $0x748] sm:$0x7]
  %v496 = vld [vmem:[%s0 + $0x74c] sm:$0x7]
  %v497 = vld [vmem:[%s0 + $0x750] sm:$0x7]
  %v498 = vld [vmem:[%s0 + $0x754] sm:$0x7]
  %v499 = vld [vmem:[%s0 + $0x758] sm:$0x7]
  %v500 = vld [vmem:[%s0 + $0x75c] sm:$0x7]
  %v501 = vld [vmem:[%s0 + $0x760] sm:$0x7]
  %v502 = vld [vmem:[%s0 + $0x764] sm:$0x7]
  %v503 = vld [vmem:[%s0 + $0x768] sm:$0x7]
  %v504 = vld [vmem:[%s0 + $0x76c] sm:$0x7]
  %v505 = vld [vmem:[%s0 + $0x770] sm:$0x7]
  %v506 = vld [vmem:[%s0 + $0x774] sm:$0x7]
  %v507 = vld [vmem:[%s0 + $0x778] sm:$0x7]
  %v508 = vld [vmem:[%s0 + $0x77c] sm:$0x7]
  %v509 = vld [vmem:[%s0 + $0x780] sm:$0x7]
  %v510 = vld [vmem:[%s0 + $0x784] sm:$0x7]
  %v511 = vld [vmem:[%s0 + $0x788] sm:$0x7]
  %v512 = vld [vmem:[%s0 + $0x78c] sm:$0x7]
  %v513 = vld [vmem:[%s0 + $0x790] sm:$0x7]
  %v514 = vld [vmem:[%s0 + $0x794] sm:$0x7]
  %v516 = vlaneseq
  %v517 = vshrl.u32 %v516, 7
  %v518 = vsub.s32 0, %v517
  %v519 = vrot.slane %v24, %v518
  %v521 = vmul.f32 %v29, %v519
  %v522 = vmul.f32 %v30, %v519
  %v523 = vmul.f32 %v31, %v519
  %v524 = vmul.f32 %v32, %v519
  %v525 = vmul.f32 %v33, %v519
  %v526 = vmul.f32 %v34, %v519
  %v527 = vmul.f32 %v35, %v519
  %v528 = vmul.f32 %v36, %v519
  %v529 = vmul.f32 %v37, %v519
  %v530 = vmul.f32 %v38, %v519
  %v531 = vmul.f32 %v39, %v519
  %v532 = vmul.f32 %v40, %v519
  %v533 = vmul.f32 %v41, %v519
  %v534 = vmul.f32 %v42, %v519
  %v535 = vmul.f32 %v43, %v519
  %v536 = vmul.f32 %v44, %v519
  %v537 = vmul.f32 %v45, %v519
  %v538 = vmul.f32 %v46, %v519
  %v539 = vmul.f32 %v47, %v519
  %v540 = vmul.f32 %v48, %v519
  %v541 = vmul.f32 %v49, %v519
  %v542 = vmul.f32 %v50, %v519
  %v543 = vmul.f32 %v51, %v519
  %v544 = vmul.f32 %v52, %v519
  %v545 = vmul.f32 %v53, %v519
  %v546 = vmul.f32 %v54, %v519
  %v547 = vmul.f32 %v55, %v519
  %v548 = vmul.f32 %v56, %v519
  %v549 = vmul.f32 %v57, %v519
  %v550 = vmul.f32 %v58, %v519
  %v551 = vmul.f32 %v59, %v519
  %v552 = vmul.f32 %v60, %v519
  %v553 = vmul.f32 %v61, %v519
  %v554 = vmul.f32 %v62, %v519
  %v555 = vmul.f32 %v63, %v519
  %v556 = vmul.f32 %v64, %v519
  %v557 = vmul.f32 %v65, %v519
  %v558 = vmul.f32 %v66, %v519
  %v559 = vmul.f32 %v67, %v519
  %v560 = vmul.f32 %v68, %v519
  %v561 = vmul.f32 %v69, %v519
  %v562 = vmul.f32 %v70, %v519
  %v563 = vmul.f32 %v71, %v519
  %v564 = vmul.f32 %v72, %v519
  %v565 = vmul.f32 %v73, %v519
  %v566 = vmul.f32 %v74, %v519
  %v567 = vmul.f32 %v75, %v519
  %v568 = vmul.f32 %v76, %v519
  %v569 = vmul.f32 %v77, %v519
  %v570 = vmul.f32 %v78, %v519
  %v571 = vmul.f32 %v79, %v519
  %v572 = vmul.f32 %v80, %v519
  %v573 = vmul.f32 %v81, %v519
  %v574 = vmul.f32 %v82, %v519
  %v575 = vmul.f32 %v83, %v519
  %v576 = vmul.f32 %v84, %v519
  %v577 = vmul.f32 %v85, %v519
  %v578 = vmul.f32 %v86, %v519
  %v579 = vmul.f32 %v87, %v519
  %v580 = vmul.f32 %v88, %v519
  %v581 = vmul.f32 %v89, %v519
  %v582 = vmul.f32 %v90, %v519
  %v583 = vmul.f32 %v91, %v519
  %v584 = vmul.f32 %v92, %v519
  %v585 = vmul.f32 %v93, %v519
  %v586 = vmul.f32 %v94, %v519
  %v587 = vmul.f32 %v95, %v519
  %v588 = vmul.f32 %v96, %v519
  %v589 = vmul.f32 %v97, %v519
  %v590 = vmul.f32 %v98, %v519
  %v591 = vmul.f32 %v99, %v519
  %v592 = vmul.f32 %v100, %v519
  %v593 = vmul.f32 %v101, %v519
  %v594 = vmul.f32 %v102, %v519
  %v595 = vmul.f32 %v103, %v519
  %v596 = vmul.f32 %v104, %v519
  %v597 = vmul.f32 %v105, %v519
  %v598 = vmul.f32 %v106, %v519
  %v599 = vmul.f32 %v107, %v519
  %v600 = vmul.f32 %v108, %v519
  %v601 = vmul.f32 %v109, %v519
  %v602 = vmul.f32 %v110, %v519
  %v603 = vmul.f32 %v111, %v519
  %v604 = vmul.f32 %v112, %v519
  %v605 = vmul.f32 %v113, %v519
  %v606 = vmul.f32 %v114, %v519
  %v607 = vmul.f32 %v115, %v519
  %v608 = vmul.f32 %v116, %v519
  %v609 = vmul.f32 %v117, %v519
  %v610 = vmul.f32 %v118, %v519
  %v611 = vmul.f32 %v119, %v519
  %v612 = vmul.f32 %v120, %v519
  %v613 = vmul.f32 %v121, %v519
  %v614 = vmul.f32 %v122, %v519
  %v615 = vmul.f32 %v123, %v519
  %v616 = vmul.f32 %v124, %v519
  %v617 = vmul.f32 %v125, %v519
  %v618 = vmul.f32 %v126, %v519
  %v619 = vmul.f32 %v127, %v519
  %v620 = vmul.f32 %v128, %v519
  %v621 = vmul.f32 %v129, %v519
  %v622 = vmul.f32 %v130, %v519
  %v623 = vmul.f32 %v131, %v519
  %v624 = vmul.f32 %v132, %v519
  %v625 = vmul.f32 %v133, %v519
  %v626 = vmul.f32 %v134, %v519
  %v627 = vmul.f32 %v135, %v519
  %v628 = vmul.f32 %v136, %v519
  %v629 = vmul.f32 %v137, %v519
  %v630 = vmul.f32 %v138, %v519
  %v631 = vmul.f32 %v139, %v519
  %v632 = vmul.f32 %v140, %v519
  %v633 = vmul.f32 %v141, %v519
  %v634 = vmul.f32 %v142, %v519
  %v635 = vmul.f32 %v143, %v519
  %v636 = vmul.f32 %v144, %v519
  %v637 = vmul.f32 %v145, %v519
  %v638 = vmul.f32 %v146, %v519
  %v639 = vmul.f32 %v147, %v519
  %v640 = vmul.f32 %v148, %v519
  %v641 = vmul.f32 %v149, %v519
  %v642 = vmul.f32 %v150, %v519
  %v643 = vmul.f32 %v151, %v519
  %v644 = vmul.f32 %v152, %v519
  %v645 = vmul.f32 %v153, %v519
  %v646 = vmul.f32 %v154, %v519
  %v647 = vmul.f32 %v155, %v519
  %v648 = vmul.f32 %v156, %v519
  %v649 = vmul.f32 %v157, %v519
  %v650 = vmul.f32 %v158, %v519
  %v651 = vmul.f32 %v159, %v519
  %v652 = vmul.f32 %v160, %v519
  %v653 = vmul.f32 %v161, %v519
  %v654 = vmul.f32 %v162, %v519
  %v655 = vmul.f32 %v163, %v519
  %v656 = vmul.f32 %v164, %v519
  %v657 = vmul.f32 %v165, %v519
  %v658 = vmul.f32 %v166, %v519
  %v659 = vmul.f32 %v167, %v519
  %v660 = vmul.f32 %v168, %v519
  %v661 = vmul.f32 %v169, %v519
  %v662 = vmul.f32 %v170, %v519
  %v663 = vmul.f32 %v171, %v519
  %v664 = vmul.f32 %v172, %v519
  %v665 = vmul.f32 %v173, %v519
  %v666 = vmul.f32 %v174, %v519
  %v667 = vmul.f32 %v175, %v519
  %v668 = vmul.f32 %v176, %v519
  %v669 = vmul.f32 %v177, %v519
  %v670 = vmul.f32 %v178, %v519
  %v671 = vmul.f32 %v179, %v519
  %v672 = vmul.f32 %v180, %v519
  %v673 = vmul.f32 %v181, %v519
  %v674 = vmul.f32 %v182, %v519
  %v675 = vmul.f32 %v183, %v519
  %v676 = vmul.f32 %v184, %v519
  %v677 = vmul.f32 %v185, %v519
  %v678 = vmul.f32 %v186, %v519
  %v679 = vmul.f32 %v187, %v519
  %v680 = vmul.f32 %v188, %v519
  %v681 = vmul.f32 %v189, %v519
  %v682 = vmul.f32 %v190, %v519
  %v683 = vmul.f32 %v191, %v519
  %v684 = vmul.f32 %v192, %v519
  %v685 = vmul.f32 %v193, %v519
  %v686 = vmul.f32 %v194, %v519
  %v687 = vmul.f32 %v195, %v519
  %v688 = vmul.f32 %v196, %v519
  %v689 = vmul.f32 %v197, %v519
  %v690 = vmul.f32 %v198, %v519
  %v691 = vmul.f32 %v199, %v519
  %v692 = vmul.f32 %v200, %v519
  %v693 = vmul.f32 %v201, %v519
  %v694 = vmul.f32 %v202, %v519
  %v695 = vmul.f32 %v203, %v519
  %v696 = vmul.f32 %v204, %v519
  %v697 = vmul.f32 %v205, %v519
  %v698 = vmul.f32 %v206, %v519
  %v699 = vmul.f32 %v207, %v519
  %v700 = vmul.f32 %v208, %v519
  %v701 = vmul.f32 %v209, %v519
  %v702 = vmul.f32 %v210, %v519
  %v703 = vmul.f32 %v211, %v519
  %v704 = vmul.f32 %v212, %v519
  %v705 = vmul.f32 %v213, %v519
  %v706 = vmul.f32 %v214, %v519
  %v707 = vmul.f32 %v215, %v519
  %v708 = vmul.f32 %v216, %v519
  %v709 = vmul.f32 %v217, %v519
  %v710 = vmul.f32 %v218, %v519
  %v711 = vmul.f32 %v219, %v519
  %v712 = vmul.f32 %v220, %v519
  %v713 = vmul.f32 %v221, %v519
  %v714 = vmul.f32 %v222, %v519
  %v715 = vmul.f32 %v223, %v519
  %v716 = vmul.f32 %v224, %v519
  %v717 = vmul.f32 %v225, %v519
  %v718 = vmul.f32 %v226, %v519
  %v719 = vmul.f32 %v227, %v519
  %v720 = vmul.f32 %v228, %v519
  %v721 = vmul.f32 %v229, %v519
  %v722 = vmul.f32 %v230, %v519
  %v723 = vmul.f32 %v231, %v519
  %v724 = vmul.f32 %v232, %v519
  %v725 = vmul.f32 %v233, %v519
  %v726 = vmul.f32 %v234, %v519
  %v727 = vmul.f32 %v235, %v519
  %v728 = vmul.f32 %v236, %v519
  %v729 = vmul.f32 %v237, %v519
  %v730 = vmul.f32 %v238, %v519
  %v731 = vmul.f32 %v239, %v519
  %v732 = vmul.f32 %v240, %v519
  %v733 = vmul.f32 %v241, %v519
  %v734 = vmul.f32 %v242, %v519
  %v735 = vmul.f32 %v243, %v519
  %v736 = vmul.f32 %v244, %v519
  %v737 = vmul.f32 %v245, %v519
  %v738 = vmul.f32 %v246, %v519
  %v739 = vmul.f32 %v247, %v519
  %v740 = vmul.f32 %v248, %v519
  %v741 = vmul.f32 %v249, %v519
  %v742 = vmul.f32 %v250, %v519
  %v743 = vmul.f32 %v251, %v519
  %v744 = vmul.f32 %v252, %v519
  %v745 = vmul.f32 %v253, %v519
  %v746 = vmul.f32 %v254, %v519
  %v747 = vmul.f32 %v255, %v519
  %v748 = vmul.f32 %v256, %v519
  %v749 = vmul.f32 %v257, %v519
  %v750 = vmul.f32 %v258, %v519
  %v751 = vmul.f32 %v259, %v519
  %v752 = vmul.f32 %v260, %v519
  %v753 = vmul.f32 %v261, %v519
  %v754 = vmul.f32 %v262, %v519
  %v755 = vmul.f32 %v263, %v519
  %v756 = vmul.f32 %v264, %v519
  %v757 = vmul.f32 %v265, %v519
  %v758 = vmul.f32 %v266, %v519
  %v759 = vmul.f32 %v267, %v519
  %v760 = vmul.f32 %v268, %v519
  %v761 = vmul.f32 %v269, %v519
  %v762 = vmul.f32 %v270, %v519
  %v763 = vmul.f32 %v271, %v519
  %v764 = vmul.f32 %v272, %v519
  %v765 = vmul.f32 %v273, %v519
  %v766 = vmul.f32 %v274, %v519
  %v767 = vmul.f32 %v275, %v519
  %v768 = vmul.f32 %v276, %v519
  %v769 = vmul.f32 %v277, %v519
  %v770 = vmul.f32 %v278, %v519
  %v771 = vmul.f32 %v279, %v519
  %v772 = vmul.f32 %v280, %v519
  %v773 = vmul.f32 %v281, %v519
  %v774 = vmul.f32 %v282, %v519
  %v775 = vmul.f32 %v283, %v519
  %v776 = vmul.f32 %v284, %v519
  %v777 = vmul.f32 %v285, %v519
  %v778 = vmul.f32 %v286, %v519
  %v779 = vmul.f32 %v287, %v519
  %v780 = vmul.f32 %v288, %v519
  %v781 = vmul.f32 %v289, %v519
  %v782 = vmul.f32 %v290, %v519
  %v783 = vmul.f32 %v291, %v519
  %v784 = vmul.f32 %v292, %v519
  %v785 = vmul.f32 %v293, %v519
  %v786 = vmul.f32 %v294, %v519
  %v787 = vmul.f32 %v295, %v519
  %v788 = vmul.f32 %v296, %v519
  %v789 = vmul.f32 %v297, %v519
  %v790 = vmul.f32 %v298, %v519
  %v791 = vmul.f32 %v299, %v519
  %v792 = vmul.f32 %v300, %v519
  %v793 = vmul.f32 %v301, %v519
  %v794 = vmul.f32 %v302, %v519
  %v795 = vmul.f32 %v303, %v519
  %v796 = vmul.f32 %v304, %v519
  %v797 = vmul.f32 %v305, %v519
  %v798 = vmul.f32 %v306, %v519
  %v799 = vmul.f32 %v307, %v519
  %v800 = vmul.f32 %v308, %v519
  %v801 = vmul.f32 %v309, %v519
  %v802 = vmul.f32 %v310, %v519
  %v803 = vmul.f32 %v311, %v519
  %v804 = vmul.f32 %v312, %v519
  %v805 = vmul.f32 %v313, %v519
  %v806 = vmul.f32 %v314, %v519
  %v807 = vmul.f32 %v315, %v519
  %v808 = vmul.f32 %v316, %v519
  %v809 = vmul.f32 %v317, %v519
  %v810 = vmul.f32 %v318, %v519
  %v811 = vmul.f32 %v319, %v519
  %v812 = vmul.f32 %v320, %v519
  %v813 = vmul.f32 %v321, %v519
  %v814 = vmul.f32 %v322, %v519
  %v815 = vmul.f32 %v323, %v519
  %v816 = vmul.f32 %v324, %v519
  %v817 = vmul.f32 %v325, %v519
  %v818 = vmul.f32 %v326, %v519
  %v819 = vmul.f32 %v327, %v519
  %v820 = vmul.f32 %v328, %v519
  %v821 = vmul.f32 %v329, %v519
  %v822 = vmul.f32 %v330, %v519
  %v823 = vmul.f32 %v331, %v519
  %v824 = vmul.f32 %v332, %v519
  %v825 = vmul.f32 %v333, %v519
  %v826 = vmul.f32 %v334, %v519
  %v827 = vmul.f32 %v335, %v519
  %v828 = vmul.f32 %v336, %v519
  %v829 = vmul.f32 %v337, %v519
  %v830 = vmul.f32 %v338, %v519
  %v831 = vmul.f32 %v339, %v519
  %v832 = vmul.f32 %v340, %v519
  %v833 = vmul.f32 %v341, %v519
  %v834 = vmul.f32 %v342, %v519
  %v835 = vmul.f32 %v343, %v519
  %v836 = vmul.f32 %v344, %v519
  %v837 = vmul.f32 %v345, %v519
  %v838 = vmul.f32 %v346, %v519
  %v839 = vmul.f32 %v347, %v519
  %v840 = vmul.f32 %v348, %v519
  %v841 = vmul.f32 %v349, %v519
  %v842 = vmul.f32 %v350, %v519
  %v843 = vmul.f32 %v351, %v519
  %v844 = vmul.f32 %v352, %v519
  %v845 = vmul.f32 %v353, %v519
  %v846 = vmul.f32 %v354, %v519
  %v847 = vmul.f32 %v355, %v519
  %v848 = vmul.f32 %v356, %v519
  %v849 = vmul.f32 %v357, %v519
  %v850 = vmul.f32 %v358, %v519
  %v851 = vmul.f32 %v359, %v519
  %v852 = vmul.f32 %v360, %v519
  %v853 = vmul.f32 %v361, %v519
  %v854 = vmul.f32 %v362, %v519
  %v855 = vmul.f32 %v363, %v519
  %v856 = vmul.f32 %v364, %v519
  %v857 = vmul.f32 %v365, %v519
  %v858 = vmul.f32 %v366, %v519
  %v859 = vmul.f32 %v367, %v519
  %v860 = vmul.f32 %v368, %v519
  %v861 = vmul.f32 %v369, %v519
  %v862 = vmul.f32 %v370, %v519
  %v863 = vmul.f32 %v371, %v519
  %v864 = vmul.f32 %v372, %v519
  %v865 = vmul.f32 %v373, %v519
  %v866 = vmul.f32 %v374, %v519
  %v867 = vmul.f32 %v375, %v519
  %v868 = vmul.f32 %v376, %v519
  %v869 = vmul.f32 %v377, %v519
  %v870 = vmul.f32 %v378, %v519
  %v871 = vmul.f32 %v379, %v519
  %v872 = vmul.f32 %v380, %v519
  %v873 = vmul.f32 %v381, %v519
  %v874 = vmul.f32 %v382, %v519
  %v875 = vmul.f32 %v383, %v519
  %v876 = vmul.f32 %v384, %v519
  %v877 = vmul.f32 %v385, %v519
  %v878 = vmul.f32 %v386, %v519
  %v879 = vmul.f32 %v387, %v519
  %v880 = vmul.f32 %v388, %v519
  %v881 = vmul.f32 %v389, %v519
  %v882 = vmul.f32 %v390, %v519
  %v883 = vmul.f32 %v391, %v519
  %v884 = vmul.f32 %v392, %v519
  %v885 = vmul.f32 %v393, %v519
  %v886 = vmul.f32 %v394, %v519
  %v887 = vmul.f32 %v395, %v519
  %v888 = vmul.f32 %v396, %v519
  %v889 = vmul.f32 %v397, %v519
  %v890 = vmul.f32 %v398, %v519
  %v891 = vmul.f32 %v399, %v519
  %v892 = vmul.f32 %v400, %v519
  %v893 = vmul.f32 %v401, %v519
  %v894 = vmul.f32 %v402, %v519
  %v895 = vmul.f32 %v403, %v519
  %v896 = vmul.f32 %v404, %v519
  %v897 = vmul.f32 %v405, %v519
  %v898 = vmul.f32 %v406, %v519
  %v899 = vmul.f32 %v407, %v519
  %v900 = vmul.f32 %v408, %v519
  %v901 = vmul.f32 %v409, %v519
  %v902 = vmul.f32 %v410, %v519
  %v903 = vmul.f32 %v411, %v519
  %v904 = vmul.f32 %v412, %v519
  %v905 = vmul.f32 %v413, %v519
  %v906 = vmul.f32 %v414, %v519
  %v907 = vmul.f32 %v415, %v519
  %v908 = vmul.f32 %v416, %v519
  %v909 = vmul.f32 %v417, %v519
  %v910 = vmul.f32 %v418, %v519
  %v911 = vmul.f32 %v419, %v519
  %v912 = vmul.f32 %v420, %v519
  %v913 = vmul.f32 %v421, %v519
  %v914 = vmul.f32 %v422, %v519
  %v915 = vmul.f32 %v423, %v519
  %v916 = vmul.f32 %v424, %v519
  %v917 = vmul.f32 %v425, %v519
  %v918 = vmul.f32 %v426, %v519
  %v919 = vmul.f32 %v427, %v519
  %v920 = vmul.f32 %v428, %v519
  %v921 = vmul.f32 %v429, %v519
  %v922 = vmul.f32 %v430, %v519
  %v923 = vmul.f32 %v431, %v519
  %v924 = vmul.f32 %v432, %v519
  %v925 = vmul.f32 %v433, %v519
  %v926 = vmul.f32 %v434, %v519
  %v927 = vmul.f32 %v435, %v519
  %v928 = vmul.f32 %v436, %v519
  %v929 = vmul.f32 %v437, %v519
  %v930 = vmul.f32 %v438, %v519
  %v931 = vmul.f32 %v439, %v519
  %v932 = vmul.f32 %v440, %v519
  %v933 = vmul.f32 %v441, %v519
  %v934 = vmul.f32 %v442, %v519
  %v935 = vmul.f32 %v443, %v519
  %v936 = vmul.f32 %v444, %v519
  %v937 = vmul.f32 %v445, %v519
  %v938 = vmul.f32 %v446, %v519
  %v939 = vmul.f32 %v447, %v519
  %v940 = vmul.f32 %v448, %v519
  %v941 = vmul.f32 %v449, %v519
  %v942 = vmul.f32 %v450, %v519
  %v943 = vmul.f32 %v451, %v519
  %v944 = vmul.f32 %v452, %v519
  %v945 = vmul.f32 %v453, %v519
  %v946 = vmul.f32 %v454, %v519
  %v947 = vmul.f32 %v455, %v519
  %v948 = vmul.f32 %v456, %v519
  %v949 = vmul.f32 %v457, %v519
  %v950 = vmul.f32 %v458, %v519
  %v951 = vmul.f32 %v459, %v519
  %v952 = vmul.f32 %v460, %v519
  %v953 = vmul.f32 %v461, %v519
  %v954 = vmul.f32 %v462, %v519
  %v955 = vmul.f32 %v463, %v519
  %v956 = vmul.f32 %v464, %v519
  %v957 = vmul.f32 %v465, %v519
  %v958 = vmul.f32 %v466, %v519
  %v959 = vmul.f32 %v467, %v519
  %v960 = vmul.f32 %v468, %v519
  %v961 = vmul.f32 %v469, %v519
  %v962 = vmul.f32 %v470, %v519
  %v963 = vmul.f32 %v471, %v519
  %v964 = vmul.f32 %v472, %v519
  %v965 = vmul.f32 %v473, %v519
  %v966 = vmul.f32 %v474, %v519
  %v967 = vmul.f32 %v475, %v519
  %v968 = vmul.f32 %v476, %v519
  %v969 = vmul.f32 %v477, %v519
  %v970 = vmul.f32 %v478, %v519
  %v971 = vmul.f32 %v479, %v519
  %v972 = vmul.f32 %v480, %v519
  %v973 = vmul.f32 %v481, %v519
  %v974 = vmul.f32 %v482, %v519
  %v975 = vmul.f32 %v483, %v519
  %v976 = vmul.f32 %v484, %v519
  %v977 = vmul.f32 %v485, %v519
  %v978 = vmul.f32 %v486, %v519
  %v979 = vmul.f32 %v487, %v519
  %v980 = vmul.f32 %v488, %v519
  %v981 = vmul.f32 %v489, %v519
  %v982 = vmul.f32 %v490, %v519
  %v983 = vmul.f32 %v491, %v519
  %v984 = vmul.f32 %v492, %v519
  %v985 = vmul.f32 %v493, %v519
  %v986 = vmul.f32 %v494, %v519
  %v987 = vmul.f32 %v495, %v519
  %v988 = vmul.f32 %v496, %v519
  %v989 = vmul.f32 %v497, %v519
  %v990 = vmul.f32 %v498, %v519
  %v991 = vmul.f32 %v499, %v519
  %v992 = vmul.f32 %v500, %v519
  %v993 = vmul.f32 %v501, %v519
  %v994 = vmul.f32 %v502, %v519
  %v995 = vmul.f32 %v503, %v519
  %v996 = vmul.f32 %v504, %v519
  %v997 = vmul.f32 %v505, %v519
  %v998 = vmul.f32 %v506, %v519
  %v999 = vmul.f32 %v507, %v519
  %v1000 = vmul.f32 %v508, %v519
  %v1001 = vmul.f32 %v509, %v519
  %v1002 = vmul.f32 %v510, %v519
  %v1003 = vmul.f32 %v511, %v519
  %v1004 = vmul.f32 %v512, %v519
  %v1005 = vmul.f32 %v513, %v519
  %v1006 = vmul.f32 %v514, %v519
  %v1008 = vlaneseq
  %v1009 = vshrl.u32 %v1008, 7
  %v1010 = vsub.s32 0, %v1009
  %v1011 = vrot.slane %v28, %v1010
  %v1013 = vadd.f32 %v521, %v1011
  %v1014 = vadd.f32 %v522, %v1011
  %v1015 = vadd.f32 %v523, %v1011
  %v1016 = vadd.f32 %v524, %v1011
  %v1017 = vadd.f32 %v525, %v1011
  %v1018 = vadd.f32 %v526, %v1011
  %v1019 = vadd.f32 %v527, %v1011
  %v1020 = vadd.f32 %v528, %v1011
  %v1021 = vadd.f32 %v529, %v1011
  %v1022 = vadd.f32 %v530, %v1011
  %v1023 = vadd.f32 %v531, %v1011
  %v1024 = vadd.f32 %v532, %v1011
  %v1025 = vadd.f32 %v533, %v1011
  %v1026 = vadd.f32 %v534, %v1011
  %v1027 = vadd.f32 %v535, %v1011
  %v1028 = vadd.f32 %v536, %v1011
  %v1029 = vadd.f32 %v537, %v1011
  %v1030 = vadd.f32 %v538, %v1011
  %v1031 = vadd.f32 %v539, %v1011
  %v1032 = vadd.f32 %v540, %v1011
  %v1033 = vadd.f32 %v541, %v1011
  %v1034 = vadd.f32 %v542, %v1011
  %v1035 = vadd.f32 %v543, %v1011
  %v1036 = vadd.f32 %v544, %v1011
  %v1037 = vadd.f32 %v545, %v1011
  %v1038 = vadd.f32 %v546, %v1011
  %v1039 = vadd.f32 %v547, %v1011
  %v1040 = vadd.f32 %v548, %v1011
  %v1041 = vadd.f32 %v549, %v1011
  %v1042 = vadd.f32 %v550, %v1011
  %v1043 = vadd.f32 %v551, %v1011
  %v1044 = vadd.f32 %v552, %v1011
  %v1045 = vadd.f32 %v553, %v1011
  %v1046 = vadd.f32 %v554, %v1011
  %v1047 = vadd.f32 %v555, %v1011
  %v1048 = vadd.f32 %v556, %v1011
  %v1049 = vadd.f32 %v557, %v1011
  %v1050 = vadd.f32 %v558, %v1011
  %v1051 = vadd.f32 %v559, %v1011
  %v1052 = vadd.f32 %v560, %v1011
  %v1053 = vadd.f32 %v561, %v1011
  %v1054 = vadd.f32 %v562, %v1011
  %v1055 = vadd.f32 %v563, %v1011
  %v1056 = vadd.f32 %v564, %v1011
  %v1057 = vadd.f32 %v565, %v1011
  %v1058 = vadd.f32 %v566, %v1011
  %v1059 = vadd.f32 %v567, %v1011
  %v1060 = vadd.f32 %v568, %v1011
  %v1061 = vadd.f32 %v569, %v1011
  %v1062 = vadd.f32 %v570, %v1011
  %v1063 = vadd.f32 %v571, %v1011
  %v1064 = vadd.f32 %v572, %v1011
  %v1065 = vadd.f32 %v573, %v1011
  %v1066 = vadd.f32 %v574, %v1011
  %v1067 = vadd.f32 %v575, %v1011
  %v1068 = vadd.f32 %v576, %v1011
  %v1069 = vadd.f32 %v577, %v1011
  %v1070 = vadd.f32 %v578, %v1011
  %v1071 = vadd.f32 %v579, %v1011
  %v1072 = vadd.f32 %v580, %v1011
  %v1073 = vadd.f32 %v581, %v1011
  %v1074 = vadd.f32 %v582, %v1011
  %v1075 = vadd.f32 %v583, %v1011
  %v1076 = vadd.f32 %v584, %v1011
  %v1077 = vadd.f32 %v585, %v1011
  %v1078 = vadd.f32 %v586, %v1011
  %v1079 = vadd.f32 %v587, %v1011
  %v1080 = vadd.f32 %v588, %v1011
  %v1081 = vadd.f32 %v589, %v1011
  %v1082 = vadd.f32 %v590, %v1011
  %v1083 = vadd.f32 %v591, %v1011
  %v1084 = vadd.f32 %v592, %v1011
  %v1085 = vadd.f32 %v593, %v1011
  %v1086 = vadd.f32 %v594, %v1011
  %v1087 = vadd.f32 %v595, %v1011
  %v1088 = vadd.f32 %v596, %v1011
  %v1089 = vadd.f32 %v597, %v1011
  %v1090 = vadd.f32 %v598, %v1011
  %v1091 = vadd.f32 %v599, %v1011
  %v1092 = vadd.f32 %v600, %v1011
  %v1093 = vadd.f32 %v601, %v1011
  %v1094 = vadd.f32 %v602, %v1011
  %v1095 = vadd.f32 %v603, %v1011
  %v1096 = vadd.f32 %v604, %v1011
  %v1097 = vadd.f32 %v605, %v1011
  %v1098 = vadd.f32 %v606, %v1011
  %v1099 = vadd.f32 %v607, %v1011
  %v1100 = vadd.f32 %v608, %v1011
  %v1101 = vadd.f32 %v609, %v1011
  %v1102 = vadd.f32 %v610, %v1011
  %v1103 = vadd.f32 %v611, %v1011
  %v1104 = vadd.f32 %v612, %v1011
  %v1105 = vadd.f32 %v613, %v1011
  %v1106 = vadd.f32 %v614, %v1011
  %v1107 = vadd.f32 %v615, %v1011
  %v1108 = vadd.f32 %v616, %v1011
  %v1109 = vadd.f32 %v617, %v1011
  %v1110 = vadd.f32 %v618, %v1011
  %v1111 = vadd.f32 %v619, %v1011
  %v1112 = vadd.f32 %v620, %v1011
  %v1113 = vadd.f32 %v621, %v1011
  %v1114 = vadd.f32 %v622, %v1011
  %v1115 = vadd.f32 %v623, %v1011
  %v1116 = vadd.f32 %v624, %v1011
  %v1117 = vadd.f32 %v625, %v1011
  %v1118 = vadd.f32 %v626, %v1011
  %v1119 = vadd.f32 %v627, %v1011
  %v1120 = vadd.f32 %v628, %v1011
  %v1121 = vadd.f32 %v629, %v1011
  %v1122 = vadd.f32 %v630, %v1011
  %v1123 = vadd.f32 %v631, %v1011
  %v1124 = vadd.f32 %v632, %v1011
  %v1125 = vadd.f32 %v633, %v1011
  %v1126 = vadd.f32 %v634, %v1011
  %v1127 = vadd.f32 %v635, %v1011
  %v1128 = vadd.f32 %v636, %v1011
  %v1129 = vadd.f32 %v637, %v1011
  %v1130 = vadd.f32 %v638, %v1011
  %v1131 = vadd.f32 %v639, %v1011
  %v1132 = vadd.f32 %v640, %v1011
  %v1133 = vadd.f32 %v641, %v1011
  %v1134 = vadd.f32 %v642, %v1011
  %v1135 = vadd.f32 %v643, %v1011
  %v1136 = vadd.f32 %v644, %v1011
  %v1137 = vadd.f32 %v645, %v1011
  %v1138 = vadd.f32 %v646, %v1011
  %v1139 = vadd.f32 %v647, %v1011
  %v1140 = vadd.f32 %v648, %v1011
  %v1141 = vadd.f32 %v649, %v1011
  %v1142 = vadd.f32 %v650, %v1011
  %v1143 = vadd.f32 %v651, %v1011
  %v1144 = vadd.f32 %v652, %v1011
  %v1145 = vadd.f32 %v653, %v1011
  %v1146 = vadd.f32 %v654, %v1011
  %v1147 = vadd.f32 %v655, %v1011
  %v1148 = vadd.f32 %v656, %v1011
  %v1149 = vadd.f32 %v657, %v1011
  %v1150 = vadd.f32 %v658, %v1011
  %v1151 = vadd.f32 %v659, %v1011
  %v1152 = vadd.f32 %v660, %v1011
  %v1153 = vadd.f32 %v661, %v1011
  %v1154 = vadd.f32 %v662, %v1011
  %v1155 = vadd.f32 %v663, %v1011
  %v1156 = vadd.f32 %v664, %v1011
  %v1157 = vadd.f32 %v665, %v1011
  %v1158 = vadd.f32 %v666, %v1011
  %v1159 = vadd.f32 %v667, %v1011
  %v1160 = vadd.f32 %v668, %v1011
  %v1161 = vadd.f32 %v669, %v1011
  %v1162 = vadd.f32 %v670, %v1011
  %v1163 = vadd.f32 %v671, %v1011
  %v1164 = vadd.f32 %v672, %v1011
  %v1165 = vadd.f32 %v673, %v1011
  %v1166 = vadd.f32 %v674, %v1011
  %v1167 = vadd.f32 %v675, %v1011
  %v1168 = vadd.f32 %v676, %v1011
  %v1169 = vadd.f32 %v677, %v1011
  %v1170 = vadd.f32 %v678, %v1011
  %v1171 = vadd.f32 %v679, %v1011
  %v1172 = vadd.f32 %v680, %v1011
  %v1173 = vadd.f32 %v681, %v1011
  %v1174 = vadd.f32 %v682, %v1011
  %v1175 = vadd.f32 %v683, %v1011
  %v1176 = vadd.f32 %v684, %v1011
  %v1177 = vadd.f32 %v685, %v1011
  %v1178 = vadd.f32 %v686, %v1011
  %v1179 = vadd.f32 %v687, %v1011
  %v1180 = vadd.f32 %v688, %v1011
  %v1181 = vadd.f32 %v689, %v1011
  %v1182 = vadd.f32 %v690, %v1011
  %v1183 = vadd.f32 %v691, %v1011
  %v1184 = vadd.f32 %v692, %v1011
  %v1185 = vadd.f32 %v693, %v1011
  %v1186 = vadd.f32 %v694, %v1011
  %v1187 = vadd.f32 %v695, %v1011
  %v1188 = vadd.f32 %v696, %v1011
  %v1189 = vadd.f32 %v697, %v1011
  %v1190 = vadd.f32 %v698, %v1011
  %v1191 = vadd.f32 %v699, %v1011
  %v1192 = vadd.f32 %v700, %v1011
  %v1193 = vadd.f32 %v701, %v1011
  %v1194 = vadd.f32 %v702, %v1011
  %v1195 = vadd.f32 %v703, %v1011
  %v1196 = vadd.f32 %v704, %v1011
  %v1197 = vadd.f32 %v705, %v1011
  %v1198 = vadd.f32 %v706, %v1011
  %v1199 = vadd.f32 %v707, %v1011
  %v1200 = vadd.f32 %v708, %v1011
  %v1201 = vadd.f32 %v709, %v1011
  %v1202 = vadd.f32 %v710, %v1011
  %v1203 = vadd.f32 %v711, %v1011
  %v1204 = vadd.f32 %v712, %v1011
  %v1205 = vadd.f32 %v713, %v1011
  %v1206 = vadd.f32 %v714, %v1011
  %v1207 = vadd.f32 %v715, %v1011
  %v1208 = vadd.f32 %v716, %v1011
  %v1209 = vadd.f32 %v717, %v1011
  %v1210 = vadd.f32 %v718, %v1011
  %v1211 = vadd.f32 %v719, %v1011
  %v1212 = vadd.f32 %v720, %v1011
  %v1213 = vadd.f32 %v721, %v1011
  %v1214 = vadd.f32 %v722, %v1011
  %v1215 = vadd.f32 %v723, %v1011
  %v1216 = vadd.f32 %v724, %v1011
  %v1217 = vadd.f32 %v725, %v1011
  %v1218 = vadd.f32 %v726, %v1011
  %v1219 = vadd.f32 %v727, %v1011
  %v1220 = vadd.f32 %v728, %v1011
  %v1221 = vadd.f32 %v729, %v1011
  %v1222 = vadd.f32 %v730, %v1011
  %v1223 = vadd.f32 %v731, %v1011
  %v1224 = vadd.f32 %v732, %v1011
  %v1225 = vadd.f32 %v733, %v1011
  %v1226 = vadd.f32 %v734, %v1011
  %v1227 = vadd.f32 %v735, %v1011
  %v1228 = vadd.f32 %v736, %v1011
  %v1229 = vadd.f32 %v737, %v1011
  %v1230 = vadd.f32 %v738, %v1011
  %v1231 = vadd.f32 %v739, %v1011
  %v1232 = vadd.f32 %v740, %v1011
  %v1233 = vadd.f32 %v741, %v1011
  %v1234 = vadd.f32 %v742, %v1011
  %v1235 = vadd.f32 %v743, %v1011
  %v1236 = vadd.f32 %v744, %v1011
  %v1237 = vadd.f32 %v745, %v1011
  %v1238 = vadd.f32 %v746, %v1011
  %v1239 = vadd.f32 %v747, %v1011
  %v1240 = vadd.f32 %v748, %v1011
  %v1241 = vadd.f32 %v749, %v1011
  %v1242 = vadd.f32 %v750, %v1011
  %v1243 = vadd.f32 %v751, %v1011
  %v1244 = vadd.f32 %v752, %v1011
  %v1245 = vadd.f32 %v753, %v1011
  %v1246 = vadd.f32 %v754, %v1011
  %v1247 = vadd.f32 %v755, %v1011
  %v1248 = vadd.f32 %v756, %v1011
  %v1249 = vadd.f32 %v757, %v1011
  %v1250 = vadd.f32 %v758, %v1011
  %v1251 = vadd.f32 %v759, %v1011
  %v1252 = vadd.f32 %v760, %v1011
  %v1253 = vadd.f32 %v761, %v1011
  %v1254 = vadd.f32 %v762, %v1011
  %v1255 = vadd.f32 %v763, %v1011
  %v1256 = vadd.f32 %v764, %v1011
  %v1257 = vadd.f32 %v765, %v1011
  %v1258 = vadd.f32 %v766, %v1011
  %v1259 = vadd.f32 %v767, %v1011
  %v1260 = vadd.f32 %v768, %v1011
  %v1261 = vadd.f32 %v769, %v1011
  %v1262 = vadd.f32 %v770, %v1011
  %v1263 = vadd.f32 %v771, %v1011
  %v1264 = vadd.f32 %v772, %v1011
  %v1265 = vadd.f32 %v773, %v1011
  %v1266 = vadd.f32 %v774, %v1011
  %v1267 = vadd.f32 %v775, %v1011
  %v1268 = vadd.f32 %v776, %v1011
  %v1269 = vadd.f32 %v777, %v1011
  %v1270 = vadd.f32 %v778, %v1011
  %v1271 = vadd.f32 %v779, %v1011
  %v1272 = vadd.f32 %v780, %v1011
  %v1273 = vadd.f32 %v781, %v1011
  %v1274 = vadd.f32 %v782, %v1011
  %v1275 = vadd.f32 %v783, %v1011
  %v1276 = vadd.f32 %v784, %v1011
  %v1277 = vadd.f32 %v785, %v1011
  %v1278 = vadd.f32 %v786, %v1011
  %v1279 = vadd.f32 %v787, %v1011
  %v1280 = vadd.f32 %v788, %v1011
  %v1281 = vadd.f32 %v789, %v1011
  %v1282 = vadd.f32 %v790, %v1011
  %v1283 = vadd.f32 %v791, %v1011
  %v1284 = vadd.f32 %v792, %v1011
  %v1285 = vadd.f32 %v793, %v1011
  %v1286 = vadd.f32 %v794, %v1011
  %v1287 = vadd.f32 %v795, %v1011
  %v1288 = vadd.f32 %v796, %v1011
  %v1289 = vadd.f32 %v797, %v1011
  %v1290 = vadd.f32 %v798, %v1011
  %v1291 = vadd.f32 %v799, %v1011
  %v1292 = vadd.f32 %v800, %v1011
  %v1293 = vadd.f32 %v801, %v1011
  %v1294 = vadd.f32 %v802, %v1011
  %v1295 = vadd.f32 %v803, %v1011
  %v1296 = vadd.f32 %v804, %v1011
  %v1297 = vadd.f32 %v805, %v1011
  %v1298 = vadd.f32 %v806, %v1011
  %v1299 = vadd.f32 %v807, %v1011
  %v1300 = vadd.f32 %v808, %v1011
  %v1301 = vadd.f32 %v809, %v1011
  %v1302 = vadd.f32 %v810, %v1011
  %v1303 = vadd.f32 %v811, %v1011
  %v1304 = vadd.f32 %v812, %v1011
  %v1305 = vadd.f32 %v813, %v1011
  %v1306 = vadd.f32 %v814, %v1011
  %v1307 = vadd.f32 %v815, %v1011
  %v1308 = vadd.f32 %v816, %v1011
  %v1309 = vadd.f32 %v817, %v1011
  %v1310 = vadd.f32 %v818, %v1011
  %v1311 = vadd.f32 %v819, %v1011
  %v1312 = vadd.f32 %v820, %v1011
  %v1313 = vadd.f32 %v821, %v1011
  %v1314 = vadd.f32 %v822, %v1011
  %v1315 = vadd.f32 %v823, %v1011
  %v1316 = vadd.f32 %v824, %v1011
  %v1317 = vadd.f32 %v825, %v1011
  %v1318 = vadd.f32 %v826, %v1011
  %v1319 = vadd.f32 %v827, %v1011
  %v1320 = vadd.f32 %v828, %v1011
  %v1321 = vadd.f32 %v829, %v1011
  %v1322 = vadd.f32 %v830, %v1011
  %v1323 = vadd.f32 %v831, %v1011
  %v1324 = vadd.f32 %v832, %v1011
  %v1325 = vadd.f32 %v833, %v1011
  %v1326 = vadd.f32 %v834, %v1011
  %v1327 = vadd.f32 %v835, %v1011
  %v1328 = vadd.f32 %v836, %v1011
  %v1329 = vadd.f32 %v837, %v1011
  %v1330 = vadd.f32 %v838, %v1011
  %v1331 = vadd.f32 %v839, %v1011
  %v1332 = vadd.f32 %v840, %v1011
  %v1333 = vadd.f32 %v841, %v1011
  %v1334 = vadd.f32 %v842, %v1011
  %v1335 = vadd.f32 %v843, %v1011
  %v1336 = vadd.f32 %v844, %v1011
  %v1337 = vadd.f32 %v845, %v1011
  %v1338 = vadd.f32 %v846, %v1011
  %v1339 = vadd.f32 %v847, %v1011
  %v1340 = vadd.f32 %v848, %v1011
  %v1341 = vadd.f32 %v849, %v1011
  %v1342 = vadd.f32 %v850, %v1011
  %v1343 = vadd.f32 %v851, %v1011
  %v1344 = vadd.f32 %v852, %v1011
  %v1345 = vadd.f32 %v853, %v1011
  %v1346 = vadd.f32 %v854, %v1011
  %v1347 = vadd.f32 %v855, %v1011
  %v1348 = vadd.f32 %v856, %v1011
  %v1349 = vadd.f32 %v857, %v1011
  %v1350 = vadd.f32 %v858, %v1011
  %v1351 = vadd.f32 %v859, %v1011
  %v1352 = vadd.f32 %v860, %v1011
  %v1353 = vadd.f32 %v861, %v1011
  %v1354 = vadd.f32 %v862, %v1011
  %v1355 = vadd.f32 %v863, %v1011
  %v1356 = vadd.f32 %v864, %v1011
  %v1357 = vadd.f32 %v865, %v1011
  %v1358 = vadd.f32 %v866, %v1011
  %v1359 = vadd.f32 %v867, %v1011
  %v1360 = vadd.f32 %v868, %v1011
  %v1361 = vadd.f32 %v869, %v1011
  %v1362 = vadd.f32 %v870, %v1011
  %v1363 = vadd.f32 %v871, %v1011
  %v1364 = vadd.f32 %v872, %v1011
  %v1365 = vadd.f32 %v873, %v1011
  %v1366 = vadd.f32 %v874, %v1011
  %v1367 = vadd.f32 %v875, %v1011
  %v1368 = vadd.f32 %v876, %v1011
  %v1369 = vadd.f32 %v877, %v1011
  %v1370 = vadd.f32 %v878, %v1011
  %v1371 = vadd.f32 %v879, %v1011
  %v1372 = vadd.f32 %v880, %v1011
  %v1373 = vadd.f32 %v881, %v1011
  %v1374 = vadd.f32 %v882, %v1011
  %v1375 = vadd.f32 %v883, %v1011
  %v1376 = vadd.f32 %v884, %v1011
  %v1377 = vadd.f32 %v885, %v1011
  %v1378 = vadd.f32 %v886, %v1011
  %v1379 = vadd.f32 %v887, %v1011
  %v1380 = vadd.f32 %v888, %v1011
  %v1381 = vadd.f32 %v889, %v1011
  %v1382 = vadd.f32 %v890, %v1011
  %v1383 = vadd.f32 %v891, %v1011
  %v1384 = vadd.f32 %v892, %v1011
  %v1385 = vadd.f32 %v893, %v1011
  %v1386 = vadd.f32 %v894, %v1011
  %v1387 = vadd.f32 %v895, %v1011
  %v1388 = vadd.f32 %v896, %v1011
  %v1389 = vadd.f32 %v897, %v1011
  %v1390 = vadd.f32 %v898, %v1011
  %v1391 = vadd.f32 %v899, %v1011
  %v1392 = vadd.f32 %v900, %v1011
  %v1393 = vadd.f32 %v901, %v1011
  %v1394 = vadd.f32 %v902, %v1011
  %v1395 = vadd.f32 %v903, %v1011
  %v1396 = vadd.f32 %v904, %v1011
  %v1397 = vadd.f32 %v905, %v1011
  %v1398 = vadd.f32 %v906, %v1011
  %v1399 = vadd.f32 %v907, %v1011
  %v1400 = vadd.f32 %v908, %v1011
  %v1401 = vadd.f32 %v909, %v1011
  %v1402 = vadd.f32 %v910, %v1011
  %v1403 = vadd.f32 %v911, %v1011
  %v1404 = vadd.f32 %v912, %v1011
  %v1405 = vadd.f32 %v913, %v1011
  %v1406 = vadd.f32 %v914, %v1011
  %v1407 = vadd.f32 %v915, %v1011
  %v1408 = vadd.f32 %v916, %v1011
  %v1409 = vadd.f32 %v917, %v1011
  %v1410 = vadd.f32 %v918, %v1011
  %v1411 = vadd.f32 %v919, %v1011
  %v1412 = vadd.f32 %v920, %v1011
  %v1413 = vadd.f32 %v921, %v1011
  %v1414 = vadd.f32 %v922, %v1011
  %v1415 = vadd.f32 %v923, %v1011
  %v1416 = vadd.f32 %v924, %v1011
  %v1417 = vadd.f32 %v925, %v1011
  %v1418 = vadd.f32 %v926, %v1011
  %v1419 = vadd.f32 %v927, %v1011
  %v1420 = vadd.f32 %v928, %v1011
  %v1421 = vadd.f32 %v929, %v1011
  %v1422 = vadd.f32 %v930, %v1011
  %v1423 = vadd.f32 %v931, %v1011
  %v1424 = vadd.f32 %v932, %v1011
  %v1425 = vadd.f32 %v933, %v1011
  %v1426 = vadd.f32 %v934, %v1011
  %v1427 = vadd.f32 %v935, %v1011
  %v1428 = vadd.f32 %v936, %v1011
  %v1429 = vadd.f32 %v937, %v1011
  %v1430 = vadd.f32 %v938, %v1011
  %v1431 = vadd.f32 %v939, %v1011
  %v1432 = vadd.f32 %v940, %v1011
  %v1433 = vadd.f32 %v941, %v1011
  %v1434 = vadd.f32 %v942, %v1011
  %v1435 = vadd.f32 %v943, %v1011
  %v1436 = vadd.f32 %v944, %v1011
  %v1437 = vadd.f32 %v945, %v1011
  %v1438 = vadd.f32 %v946, %v1011
  %v1439 = vadd.f32 %v947, %v1011
  %v1440 = vadd.f32 %v948, %v1011
  %v1441 = vadd.f32 %v949, %v1011
  %v1442 = vadd.f32 %v950, %v1011
  %v1443 = vadd.f32 %v951, %v1011
  %v1444 = vadd.f32 %v952, %v1011
  %v1445 = vadd.f32 %v953, %v1011
  %v1446 = vadd.f32 %v954, %v1011
  %v1447 = vadd.f32 %v955, %v1011
  %v1448 = vadd.f32 %v956, %v1011
  %v1449 = vadd.f32 %v957, %v1011
  %v1450 = vadd.f32 %v958, %v1011
  %v1451 = vadd.f32 %v959, %v1011
  %v1452 = vadd.f32 %v960, %v1011
  %v1453 = vadd.f32 %v961, %v1011
  %v1454 = vadd.f32 %v962, %v1011
  %v1455 = vadd.f32 %v963, %v1011
  %v1456 = vadd.f32 %v964, %v1011
  %v1457 = vadd.f32 %v965, %v1011
  %v1458 = vadd.f32 %v966, %v1011
  %v1459 = vadd.f32 %v967, %v1011
  %v1460 = vadd.f32 %v968, %v1011
  %v1461 = vadd.f32 %v969, %v1011
  %v1462 = vadd.f32 %v970, %v1011
  %v1463 = vadd.f32 %v971, %v1011
  %v1464 = vadd.f32 %v972, %v1011
  %v1465 = vadd.f32 %v973, %v1011
  %v1466 = vadd.f32 %v974, %v1011
  %v1467 = vadd.f32 %v975, %v1011
  %v1468 = vadd.f32 %v976, %v1011
  %v1469 = vadd.f32 %v977, %v1011
  %v1470 = vadd.f32 %v978, %v1011
  %v1471 = vadd.f32 %v979, %v1011
  %v1472 = vadd.f32 %v980, %v1011
  %v1473 = vadd.f32 %v981, %v1011
  %v1474 = vadd.f32 %v982, %v1011
  %v1475 = vadd.f32 %v983, %v1011
  %v1476 = vadd.f32 %v984, %v1011
  %v1477 = vadd.f32 %v985, %v1011
  %v1478 = vadd.f32 %v986, %v1011
  %v1479 = vadd.f32 %v987, %v1011
  %v1480 = vadd.f32 %v988, %v1011
  %v1481 = vadd.f32 %v989, %v1011
  %v1482 = vadd.f32 %v990, %v1011
  %v1483 = vadd.f32 %v991, %v1011
  %v1484 = vadd.f32 %v992, %v1011
  %v1485 = vadd.f32 %v993, %v1011
  %v1486 = vadd.f32 %v994, %v1011
  %v1487 = vadd.f32 %v995, %v1011
  %v1488 = vadd.f32 %v996, %v1011
  %v1489 = vadd.f32 %v997, %v1011
  %v1490 = vadd.f32 %v998, %v1011
  %v1491 = vadd.f32 %v999, %v1011
  %v1492 = vadd.f32 %v1000, %v1011
  %v1493 = vadd.f32 %v1001, %v1011
  %v1494 = vadd.f32 %v1002, %v1011
  %v1495 = vadd.f32 %v1003, %v1011
  %v1496 = vadd.f32 %v1004, %v1011
  %v1497 = vadd.f32 %v1005, %v1011
  %v1498 = vadd.f32 %v1006, %v1011
  %vm1499 = vcmask 256000
  %v1500 = vsel %vm1499, %v1013, -inf
  %v1501 = vrot.slane %v1500, 4
  %v1502 = vmax.f32 %v1500, %v1501
  %v1503 = vrot.slane %v1502, 2
  %v1504 = vmax.f32 %v1502, %v1503
  %v1505 = vrot.slane %v1504, 1
  %v1506 = vmax.f32 %v1504, %v1505
  %v1507 = vsel %vm1499, %v1014, -inf
  %v1508 = vrot.slane %v1507, 4
  %v1509 = vmax.f32 %v1507, %v1508
  %v1510 = vrot.slane %v1509, 2
  %v1511 = vmax.f32 %v1509, %v1510
  %v1512 = vrot.slane %v1511, 1
  %v1513 = vmax.f32 %v1511, %v1512
  %v1514 = vsel %vm1499, %v1015, -inf
  %v1515 = vrot.slane %v1514, 4
  %v1516 = vmax.f32 %v1514, %v1515
  %v1517 = vrot.slane %v1516, 2
  %v1518 = vmax.f32 %v1516, %v1517
  %v1519 = vrot.slane %v1518, 1
  %v1520 = vmax.f32 %v1518, %v1519
  %v1521 = vsel %vm1499, %v1016, -inf
  %v1522 = vrot.slane %v1521, 4
  %v1523 = vmax.f32 %v1521, %v1522
  %v1524 = vrot.slane %v1523, 2
  %v1525 = vmax.f32 %v1523, %v1524
  %v1526 = vrot.slane %v1525, 1
  %v1527 = vmax.f32 %v1525, %v1526
  %v1528 = vsel %vm1499, %v1017, -inf
  %v1529 = vrot.slane %v1528, 4
  %v1530 = vmax.f32 %v1528, %v1529
  %v1531 = vrot.slane %v1530, 2
  %v1532 = vmax.f32 %v1530, %v1531
  %v1533 = vrot.slane %v1532, 1
  %v1534 = vmax.f32 %v1532, %v1533
  %v1535 = vsel %vm1499, %v1018, -inf
  %v1536 = vrot.slane %v1535, 4
  %v1537 = vmax.f32 %v1535, %v1536
  %v1538 = vrot.slane %v1537, 2
  %v1539 = vmax.f32 %v1537, %v1538
  %v1540 = vrot.slane %v1539, 1
  %v1541 = vmax.f32 %v1539, %v1540
  %v1542 = vsel %vm1499, %v1019, -inf
  %v1543 = vrot.slane %v1542, 4
  %v1544 = vmax.f32 %v1542, %v1543
  %v1545 = vrot.slane %v1544, 2
  %v1546 = vmax.f32 %v1544, %v1545
  %v1547 = vrot.slane %v1546, 1
  %v1548 = vmax.f32 %v1546, %v1547
  %v1549 = vsel %vm1499, %v1020, -inf
  %v1550 = vrot.slane %v1549, 4
  %v1551 = vmax.f32 %v1549, %v1550
  %v1552 = vrot.slane %v1551, 2
  %v1553 = vmax.f32 %v1551, %v1552
  %v1554 = vrot.slane %v1553, 1
  %v1555 = vmax.f32 %v1553, %v1554
  %v1556 = vsel %vm1499, %v1021, -inf
  %v1557 = vrot.slane %v1556, 4
  %v1558 = vmax.f32 %v1556, %v1557
  %v1559 = vrot.slane %v1558, 2
  %v1560 = vmax.f32 %v1558, %v1559
  %v1561 = vrot.slane %v1560, 1
  %v1562 = vmax.f32 %v1560, %v1561
  %v1563 = vsel %vm1499, %v1022, -inf
  %v1564 = vrot.slane %v1563, 4
  %v1565 = vmax.f32 %v1563, %v1564
  %v1566 = vrot.slane %v1565, 2
  %v1567 = vmax.f32 %v1565, %v1566
  %v1568 = vrot.slane %v1567, 1
  %v1569 = vmax.f32 %v1567, %v1568
  %v1570 = vsel %vm1499, %v1023, -inf
  %v1571 = vrot.slane %v1570, 4
  %v1572 = vmax.f32 %v1570, %v1571
  %v1573 = vrot.slane %v1572, 2
  %v1574 = vmax.f32 %v1572, %v1573
  %v1575 = vrot.slane %v1574, 1
  %v1576 = vmax.f32 %v1574, %v1575
  %v1577 = vsel %vm1499, %v1024, -inf
  %v1578 = vrot.slane %v1577, 4
  %v1579 = vmax.f32 %v1577, %v1578
  %v1580 = vrot.slane %v1579, 2
  %v1581 = vmax.f32 %v1579, %v1580
  %v1582 = vrot.slane %v1581, 1
  %v1583 = vmax.f32 %v1581, %v1582
  %v1584 = vsel %vm1499, %v1025, -inf
  %v1585 = vrot.slane %v1584, 4
  %v1586 = vmax.f32 %v1584, %v1585
  %v1587 = vrot.slane %v1586, 2
  %v1588 = vmax.f32 %v1586, %v1587
  %v1589 = vrot.slane %v1588, 1
  %v1590 = vmax.f32 %v1588, %v1589
  %v1591 = vsel %vm1499, %v1026, -inf
  %v1592 = vrot.slane %v1591, 4
  %v1593 = vmax.f32 %v1591, %v1592
  %v1594 = vrot.slane %v1593, 2
  %v1595 = vmax.f32 %v1593, %v1594
  %v1596 = vrot.slane %v1595, 1
  %v1597 = vmax.f32 %v1595, %v1596
  %v1598 = vsel %vm1499, %v1027, -inf
  %v1599 = vrot.slane %v1598, 4
  %v1600 = vmax.f32 %v1598, %v1599
  %v1601 = vrot.slane %v1600, 2
  %v1602 = vmax.f32 %v1600, %v1601
  %v1603 = vrot.slane %v1602, 1
  %v1604 = vmax.f32 %v1602, %v1603
  %v1605 = vsel %vm1499, %v1028, -inf
  %v1606 = vrot.slane %v1605, 4
  %v1607 = vmax.f32 %v1605, %v1606
  %v1608 = vrot.slane %v1607, 2
  %v1609 = vmax.f32 %v1607, %v1608
  %v1610 = vrot.slane %v1609, 1
  %v1611 = vmax.f32 %v1609, %v1610
  %v1612 = vsel %vm1499, %v1029, -inf
  %v1613 = vrot.slane %v1612, 4
  %v1614 = vmax.f32 %v1612, %v1613
  %v1615 = vrot.slane %v1614, 2
  %v1616 = vmax.f32 %v1614, %v1615
  %v1617 = vrot.slane %v1616, 1
  %v1618 = vmax.f32 %v1616, %v1617
  %v1619 = vsel %vm1499, %v1030, -inf
  %v1620 = vrot.slane %v1619, 4
  %v1621 = vmax.f32 %v1619, %v1620
  %v1622 = vrot.slane %v1621, 2
  %v1623 = vmax.f32 %v1621, %v1622
  %v1624 = vrot.slane %v1623, 1
  %v1625 = vmax.f32 %v1623, %v1624
  %v1626 = vsel %vm1499, %v1031, -inf
  %v1627 = vrot.slane %v1626, 4
  %v1628 = vmax.f32 %v1626, %v1627
  %v1629 = vrot.slane %v1628, 2
  %v1630 = vmax.f32 %v1628, %v1629
  %v1631 = vrot.slane %v1630, 1
  %v1632 = vmax.f32 %v1630, %v1631
  %v1633 = vsel %vm1499, %v1032, -inf
  %v1634 = vrot.slane %v1633, 4
  %v1635 = vmax.f32 %v1633, %v1634
  %v1636 = vrot.slane %v1635, 2
  %v1637 = vmax.f32 %v1635, %v1636
  %v1638 = vrot.slane %v1637, 1
  %v1639 = vmax.f32 %v1637, %v1638
  %v1640 = vsel %vm1499, %v1033, -inf
  %v1641 = vrot.slane %v1640, 4
  %v1642 = vmax.f32 %v1640, %v1641
  %v1643 = vrot.slane %v1642, 2
  %v1644 = vmax.f32 %v1642, %v1643
  %v1645 = vrot.slane %v1644, 1
  %v1646 = vmax.f32 %v1644, %v1645
  %v1647 = vsel %vm1499, %v1034, -inf
  %v1648 = vrot.slane %v1647, 4
  %v1649 = vmax.f32 %v1647, %v1648
  %v1650 = vrot.slane %v1649, 2
  %v1651 = vmax.f32 %v1649, %v1650
  %v1652 = vrot.slane %v1651, 1
  %v1653 = vmax.f32 %v1651, %v1652
  %v1654 = vsel %vm1499, %v1035, -inf
  %v1655 = vrot.slane %v1654, 4
  %v1656 = vmax.f32 %v1654, %v1655
  %v1657 = vrot.slane %v1656, 2
  %v1658 = vmax.f32 %v1656, %v1657
  %v1659 = vrot.slane %v1658, 1
  %v1660 = vmax.f32 %v1658, %v1659
  %v1661 = vsel %vm1499, %v1036, -inf
  %v1662 = vrot.slane %v1661, 4
  %v1663 = vmax.f32 %v1661, %v1662
  %v1664 = vrot.slane %v1663, 2
  %v1665 = vmax.f32 %v1663, %v1664
  %v1666 = vrot.slane %v1665, 1
  %v1667 = vmax.f32 %v1665, %v1666
  %v1668 = vsel %vm1499, %v1037, -inf
  %v1669 = vrot.slane %v1668, 4
  %v1670 = vmax.f32 %v1668, %v1669
  %v1671 = vrot.slane %v1670, 2
  %v1672 = vmax.f32 %v1670, %v1671
  %v1673 = vrot.slane %v1672, 1
  %v1674 = vmax.f32 %v1672, %v1673
  %v1675 = vsel %vm1499, %v1038, -inf
  %v1676 = vrot.slane %v1675, 4
  %v1677 = vmax.f32 %v1675, %v1676
  %v1678 = vrot.slane %v1677, 2
  %v1679 = vmax.f32 %v1677, %v1678
  %v1680 = vrot.slane %v1679, 1
  %v1681 = vmax.f32 %v1679, %v1680
  %v1682 = vsel %vm1499, %v1039, -inf
  %v1683 = vrot.slane %v1682, 4
  %v1684 = vmax.f32 %v1682, %v1683
  %v1685 = vrot.slane %v1684, 2
  %v1686 = vmax.f32 %v1684, %v1685
  %v1687 = vrot.slane %v1686, 1
  %v1688 = vmax.f32 %v1686, %v1687
  %v1689 = vsel %vm1499, %v1040, -inf
  %v1690 = vrot.slane %v1689, 4
  %v1691 = vmax.f32 %v1689, %v1690
  %v1692 = vrot.slane %v1691, 2
  %v1693 = vmax.f32 %v1691, %v1692
  %v1694 = vrot.slane %v1693, 1
  %v1695 = vmax.f32 %v1693, %v1694
  %v1696 = vsel %vm1499, %v1041, -inf
  %v1697 = vrot.slane %v1696, 4
  %v1698 = vmax.f32 %v1696, %v1697
  %v1699 = vrot.slane %v1698, 2
  %v1700 = vmax.f32 %v1698, %v1699
  %v1701 = vrot.slane %v1700, 1
  %v1702 = vmax.f32 %v1700, %v1701
  %v1703 = vsel %vm1499, %v1042, -inf
  %v1704 = vrot.slane %v1703, 4
  %v1705 = vmax.f32 %v1703, %v1704
  %v1706 = vrot.slane %v1705, 2
  %v1707 = vmax.f32 %v1705, %v1706
  %v1708 = vrot.slane %v1707, 1
  %v1709 = vmax.f32 %v1707, %v1708
  %v1710 = vsel %vm1499, %v1043, -inf
  %v1711 = vrot.slane %v1710, 4
  %v1712 = vmax.f32 %v1710, %v1711
  %v1713 = vrot.slane %v1712, 2
  %v1714 = vmax.f32 %v1712, %v1713
  %v1715 = vrot.slane %v1714, 1
  %v1716 = vmax.f32 %v1714, %v1715
  %v1717 = vsel %vm1499, %v1044, -inf
  %v1718 = vrot.slane %v1717, 4
  %v1719 = vmax.f32 %v1717, %v1718
  %v1720 = vrot.slane %v1719, 2
  %v1721 = vmax.f32 %v1719, %v1720
  %v1722 = vrot.slane %v1721, 1
  %v1723 = vmax.f32 %v1721, %v1722
  %v1724 = vsel %vm1499, %v1045, -inf
  %v1725 = vrot.slane %v1724, 4
  %v1726 = vmax.f32 %v1724, %v1725
  %v1727 = vrot.slane %v1726, 2
  %v1728 = vmax.f32 %v1726, %v1727
  %v1729 = vrot.slane %v1728, 1
  %v1730 = vmax.f32 %v1728, %v1729
  %v1731 = vsel %vm1499, %v1046, -inf
  %v1732 = vrot.slane %v1731, 4
  %v1733 = vmax.f32 %v1731, %v1732
  %v1734 = vrot.slane %v1733, 2
  %v1735 = vmax.f32 %v1733, %v1734
  %v1736 = vrot.slane %v1735, 1
  %v1737 = vmax.f32 %v1735, %v1736
  %v1738 = vsel %vm1499, %v1047, -inf
  %v1739 = vrot.slane %v1738, 4
  %v1740 = vmax.f32 %v1738, %v1739
  %v1741 = vrot.slane %v1740, 2
  %v1742 = vmax.f32 %v1740, %v1741
  %v1743 = vrot.slane %v1742, 1
  %v1744 = vmax.f32 %v1742, %v1743
  %v1745 = vsel %vm1499, %v1048, -inf
  %v1746 = vrot.slane %v1745, 4
  %v1747 = vmax.f32 %v1745, %v1746
  %v1748 = vrot.slane %v1747, 2
  %v1749 = vmax.f32 %v1747, %v1748
  %v1750 = vrot.slane %v1749, 1
  %v1751 = vmax.f32 %v1749, %v1750
  %v1752 = vsel %vm1499, %v1049, -inf
  %v1753 = vrot.slane %v1752, 4
  %v1754 = vmax.f32 %v1752, %v1753
  %v1755 = vrot.slane %v1754, 2
  %v1756 = vmax.f32 %v1754, %v1755
  %v1757 = vrot.slane %v1756, 1
  %v1758 = vmax.f32 %v1756, %v1757
  %v1759 = vsel %vm1499, %v1050, -inf
  %v1760 = vrot.slane %v1759, 4
  %v1761 = vmax.f32 %v1759, %v1760
  %v1762 = vrot.slane %v1761, 2
  %v1763 = vmax.f32 %v1761, %v1762
  %v1764 = vrot.slane %v1763, 1
  %v1765 = vmax.f32 %v1763, %v1764
  %v1766 = vsel %vm1499, %v1051, -inf
  %v1767 = vrot.slane %v1766, 4
  %v1768 = vmax.f32 %v1766, %v1767
  %v1769 = vrot.slane %v1768, 2
  %v1770 = vmax.f32 %v1768, %v1769
  %v1771 = vrot.slane %v1770, 1
  %v1772 = vmax.f32 %v1770, %v1771
  %v1773 = vsel %vm1499, %v1052, -inf
  %v1774 = vrot.slane %v1773, 4
  %v1775 = vmax.f32 %v1773, %v1774
  %v1776 = vrot.slane %v1775, 2
  %v1777 = vmax.f32 %v1775, %v1776
  %v1778 = vrot.slane %v1777, 1
  %v1779 = vmax.f32 %v1777, %v1778
  %v1780 = vsel %vm1499, %v1053, -inf
  %v1781 = vrot.slane %v1780, 4
  %v1782 = vmax.f32 %v1780, %v1781
  %v1783 = vrot.slane %v1782, 2
  %v1784 = vmax.f32 %v1782, %v1783
  %v1785 = vrot.slane %v1784, 1
  %v1786 = vmax.f32 %v1784, %v1785
  %v1787 = vsel %vm1499, %v1054, -inf
  %v1788 = vrot.slane %v1787, 4
  %v1789 = vmax.f32 %v1787, %v1788
  %v1790 = vrot.slane %v1789, 2
  %v1791 = vmax.f32 %v1789, %v1790
  %v1792 = vrot.slane %v1791, 1
  %v1793 = vmax.f32 %v1791, %v1792
  %v1794 = vsel %vm1499, %v1055, -inf
  %v1795 = vrot.slane %v1794, 4
  %v1796 = vmax.f32 %v1794, %v1795
  %v1797 = vrot.slane %v1796, 2
  %v1798 = vmax.f32 %v1796, %v1797
  %v1799 = vrot.slane %v1798, 1
  %v1800 = vmax.f32 %v1798, %v1799
  %v1801 = vsel %vm1499, %v1056, -inf
  %v1802 = vrot.slane %v1801, 4
  %v1803 = vmax.f32 %v1801, %v1802
  %v1804 = vrot.slane %v1803, 2
  %v1805 = vmax.f32 %v1803, %v1804
  %v1806 = vrot.slane %v1805, 1
  %v1807 = vmax.f32 %v1805, %v1806
  %v1808 = vsel %vm1499, %v1057, -inf
  %v1809 = vrot.slane %v1808, 4
  %v1810 = vmax.f32 %v1808, %v1809
  %v1811 = vrot.slane %v1810, 2
  %v1812 = vmax.f32 %v1810, %v1811
  %v1813 = vrot.slane %v1812, 1
  %v1814 = vmax.f32 %v1812, %v1813
  %v1815 = vsel %vm1499, %v1058, -inf
  %v1816 = vrot.slane %v1815, 4
  %v1817 = vmax.f32 %v1815, %v1816
  %v1818 = vrot.slane %v1817, 2
  %v1819 = vmax.f32 %v1817, %v1818
  %v1820 = vrot.slane %v1819, 1
  %v1821 = vmax.f32 %v1819, %v1820
  %v1822 = vsel %vm1499, %v1059, -inf
  %v1823 = vrot.slane %v1822, 4
  %v1824 = vmax.f32 %v1822, %v1823
  %v1825 = vrot.slane %v1824, 2
  %v1826 = vmax.f32 %v1824, %v1825
  %v1827 = vrot.slane %v1826, 1
  %v1828 = vmax.f32 %v1826, %v1827
  %v1829 = vsel %vm1499, %v1060, -inf
  %v1830 = vrot.slane %v1829, 4
  %v1831 = vmax.f32 %v1829, %v1830
  %v1832 = vrot.slane %v1831, 2
  %v1833 = vmax.f32 %v1831, %v1832
  %v1834 = vrot.slane %v1833, 1
  %v1835 = vmax.f32 %v1833, %v1834
  %v1836 = vsel %vm1499, %v1061, -inf
  %v1837 = vrot.slane %v1836, 4
  %v1838 = vmax.f32 %v1836, %v1837
  %v1839 = vrot.slane %v1838, 2
  %v1840 = vmax.f32 %v1838, %v1839
  %v1841 = vrot.slane %v1840, 1
  %v1842 = vmax.f32 %v1840, %v1841
  %v1843 = vsel %vm1499, %v1062, -inf
  %v1844 = vrot.slane %v1843, 4
  %v1845 = vmax.f32 %v1843, %v1844
  %v1846 = vrot.slane %v1845, 2
  %v1847 = vmax.f32 %v1845, %v1846
  %v1848 = vrot.slane %v1847, 1
  %v1849 = vmax.f32 %v1847, %v1848
  %v1850 = vsel %vm1499, %v1063, -inf
  %v1851 = vrot.slane %v1850, 4
  %v1852 = vmax.f32 %v1850, %v1851
  %v1853 = vrot.slane %v1852, 2
  %v1854 = vmax.f32 %v1852, %v1853
  %v1855 = vrot.slane %v1854, 1
  %v1856 = vmax.f32 %v1854, %v1855
  %v1857 = vsel %vm1499, %v1064, -inf
  %v1858 = vrot.slane %v1857, 4
  %v1859 = vmax.f32 %v1857, %v1858
  %v1860 = vrot.slane %v1859, 2
  %v1861 = vmax.f32 %v1859, %v1860
  %v1862 = vrot.slane %v1861, 1
  %v1863 = vmax.f32 %v1861, %v1862
  %v1864 = vsel %vm1499, %v1065, -inf
  %v1865 = vrot.slane %v1864, 4
  %v1866 = vmax.f32 %v1864, %v1865
  %v1867 = vrot.slane %v1866, 2
  %v1868 = vmax.f32 %v1866, %v1867
  %v1869 = vrot.slane %v1868, 1
  %v1870 = vmax.f32 %v1868, %v1869
  %v1871 = vsel %vm1499, %v1066, -inf
  %v1872 = vrot.slane %v1871, 4
  %v1873 = vmax.f32 %v1871, %v1872
  %v1874 = vrot.slane %v1873, 2
  %v1875 = vmax.f32 %v1873, %v1874
  %v1876 = vrot.slane %v1875, 1
  %v1877 = vmax.f32 %v1875, %v1876
  %v1878 = vsel %vm1499, %v1067, -inf
  %v1879 = vrot.slane %v1878, 4
  %v1880 = vmax.f32 %v1878, %v1879
  %v1881 = vrot.slane %v1880, 2
  %v1882 = vmax.f32 %v1880, %v1881
  %v1883 = vrot.slane %v1882, 1
  %v1884 = vmax.f32 %v1882, %v1883
  %v1885 = vsel %vm1499, %v1068, -inf
  %v1886 = vrot.slane %v1885, 4
  %v1887 = vmax.f32 %v1885, %v1886
  %v1888 = vrot.slane %v1887, 2
  %v1889 = vmax.f32 %v1887, %v1888
  %v1890 = vrot.slane %v1889, 1
  %v1891 = vmax.f32 %v1889, %v1890
  %v1892 = vsel %vm1499, %v1069, -inf
  %v1893 = vrot.slane %v1892, 4
  %v1894 = vmax.f32 %v1892, %v1893
  %v1895 = vrot.slane %v1894, 2
  %v1896 = vmax.f32 %v1894, %v1895
  %v1897 = vrot.slane %v1896, 1
  %v1898 = vmax.f32 %v1896, %v1897
  %v1899 = vsel %vm1499, %v1070, -inf
  %v1900 = vrot.slane %v1899, 4
  %v1901 = vmax.f32 %v1899, %v1900
  %v1902 = vrot.slane %v1901, 2
  %v1903 = vmax.f32 %v1901, %v1902
  %v1904 = vrot.slane %v1903, 1
  %v1905 = vmax.f32 %v1903, %v1904
  %v1906 = vsel %vm1499, %v1071, -inf
  %v1907 = vrot.slane %v1906, 4
  %v1908 = vmax.f32 %v1906, %v1907
  %v1909 = vrot.slane %v1908, 2
  %v1910 = vmax.f32 %v1908, %v1909
  %v1911 = vrot.slane %v1910, 1
  %v1912 = vmax.f32 %v1910, %v1911
  %v1913 = vsel %vm1499, %v1072, -inf
  %v1914 = vrot.slane %v1913, 4
  %v1915 = vmax.f32 %v1913, %v1914
  %v1916 = vrot.slane %v1915, 2
  %v1917 = vmax.f32 %v1915, %v1916
  %v1918 = vrot.slane %v1917, 1
  %v1919 = vmax.f32 %v1917, %v1918
  %v1920 = vsel %vm1499, %v1073, -inf
  %v1921 = vrot.slane %v1920, 4
  %v1922 = vmax.f32 %v1920, %v1921
  %v1923 = vrot.slane %v1922, 2
  %v1924 = vmax.f32 %v1922, %v1923
  %v1925 = vrot.slane %v1924, 1
  %v1926 = vmax.f32 %v1924, %v1925
  %v1927 = vsel %vm1499, %v1074, -inf
  %v1928 = vrot.slane %v1927, 4
  %v1929 = vmax.f32 %v1927, %v1928
  %v1930 = vrot.slane %v1929, 2
  %v1931 = vmax.f32 %v1929, %v1930
  %v1932 = vrot.slane %v1931, 1
  %v1933 = vmax.f32 %v1931, %v1932
  %v1934 = vsel %vm1499, %v1075, -inf
  %v1935 = vrot.slane %v1934, 4
  %v1936 = vmax.f32 %v1934, %v1935
  %v1937 = vrot.slane %v1936, 2
  %v1938 = vmax.f32 %v1936, %v1937
  %v1939 = vrot.slane %v1938, 1
  %v1940 = vmax.f32 %v1938, %v1939
  %v1941 = vsel %vm1499, %v1076, -inf
  %v1942 = vrot.slane %v1941, 4
  %v1943 = vmax.f32 %v1941, %v1942
  %v1944 = vrot.slane %v1943, 2
  %v1945 = vmax.f32 %v1943, %v1944
  %v1946 = vrot.slane %v1945, 1
  %v1947 = vmax.f32 %v1945, %v1946
  %v1948 = vsel %vm1499, %v1077, -inf
  %v1949 = vrot.slane %v1948, 4
  %v1950 = vmax.f32 %v1948, %v1949
  %v1951 = vrot.slane %v1950, 2
  %v1952 = vmax.f32 %v1950, %v1951
  %v1953 = vrot.slane %v1952, 1
  %v1954 = vmax.f32 %v1952, %v1953
  %v1955 = vsel %vm1499, %v1078, -inf
  %v1956 = vrot.slane %v1955, 4
  %v1957 = vmax.f32 %v1955, %v1956
  %v1958 = vrot.slane %v1957, 2
  %v1959 = vmax.f32 %v1957, %v1958
  %v1960 = vrot.slane %v1959, 1
  %v1961 = vmax.f32 %v1959, %v1960
  %v1962 = vsel %vm1499, %v1079, -inf
  %v1963 = vrot.slane %v1962, 4
  %v1964 = vmax.f32 %v1962, %v1963
  %v1965 = vrot.slane %v1964, 2
  %v1966 = vmax.f32 %v1964, %v1965
  %v1967 = vrot.slane %v1966, 1
  %v1968 = vmax.f32 %v1966, %v1967
  %v1969 = vsel %vm1499, %v1080, -inf
  %v1970 = vrot.slane %v1969, 4
  %v1971 = vmax.f32 %v1969, %v1970
  %v1972 = vrot.slane %v1971, 2
  %v1973 = vmax.f32 %v1971, %v1972
  %v1974 = vrot.slane %v1973, 1
  %v1975 = vmax.f32 %v1973, %v1974
  %v1976 = vsel %vm1499, %v1081, -inf
  %v1977 = vrot.slane %v1976, 4
  %v1978 = vmax.f32 %v1976, %v1977
  %v1979 = vrot.slane %v1978, 2
  %v1980 = vmax.f32 %v1978, %v1979
  %v1981 = vrot.slane %v1980, 1
  %v1982 = vmax.f32 %v1980, %v1981
  %v1983 = vsel %vm1499, %v1082, -inf
  %v1984 = vrot.slane %v1983, 4
  %v1985 = vmax.f32 %v1983, %v1984
  %v1986 = vrot.slane %v1985, 2
  %v1987 = vmax.f32 %v1985, %v1986
  %v1988 = vrot.slane %v1987, 1
  %v1989 = vmax.f32 %v1987, %v1988
  %v1990 = vsel %vm1499, %v1083, -inf
  %v1991 = vrot.slane %v1990, 4
  %v1992 = vmax.f32 %v1990, %v1991
  %v1993 = vrot.slane %v1992, 2
  %v1994 = vmax.f32 %v1992, %v1993
  %v1995 = vrot.slane %v1994, 1
  %v1996 = vmax.f32 %v1994, %v1995
  %v1997 = vsel %vm1499, %v1084, -inf
  %v1998 = vrot.slane %v1997, 4
  %v1999 = vmax.f32 %v1997, %v1998
  %v2000 = vrot.slane %v1999, 2
  %v2001 = vmax.f32 %v1999, %v2000
  %v2002 = vrot.slane %v2001, 1
  %v2003 = vmax.f32 %v2001, %v2002
  %v2004 = vsel %vm1499, %v1085, -inf
  %v2005 = vrot.slane %v2004, 4
  %v2006 = vmax.f32 %v2004, %v2005
  %v2007 = vrot.slane %v2006, 2
  %v2008 = vmax.f32 %v2006, %v2007
  %v2009 = vrot.slane %v2008, 1
  %v2010 = vmax.f32 %v2008, %v2009
  %v2011 = vsel %vm1499, %v1086, -inf
  %v2012 = vrot.slane %v2011, 4
  %v2013 = vmax.f32 %v2011, %v2012
  %v2014 = vrot.slane %v2013, 2
  %v2015 = vmax.f32 %v2013, %v2014
  %v2016 = vrot.slane %v2015, 1
  %v2017 = vmax.f32 %v2015, %v2016
  %v2018 = vsel %vm1499, %v1087, -inf
  %v2019 = vrot.slane %v2018, 4
  %v2020 = vmax.f32 %v2018, %v2019
  %v2021 = vrot.slane %v2020, 2
  %v2022 = vmax.f32 %v2020, %v2021
  %v2023 = vrot.slane %v2022, 1
  %v2024 = vmax.f32 %v2022, %v2023
  %v2025 = vsel %vm1499, %v1088, -inf
  %v2026 = vrot.slane %v2025, 4
  %v2027 = vmax.f32 %v2025, %v2026
  %v2028 = vrot.slane %v2027, 2
  %v2029 = vmax.f32 %v2027, %v2028
  %v2030 = vrot.slane %v2029, 1
  %v2031 = vmax.f32 %v2029, %v2030
  %v2032 = vsel %vm1499, %v1089, -inf
  %v2033 = vrot.slane %v2032, 4
  %v2034 = vmax.f32 %v2032, %v2033
  %v2035 = vrot.slane %v2034, 2
  %v2036 = vmax.f32 %v2034, %v2035
  %v2037 = vrot.slane %v2036, 1
  %v2038 = vmax.f32 %v2036, %v2037
  %v2039 = vsel %vm1499, %v1090, -inf
  %v2040 = vrot.slane %v2039, 4
  %v2041 = vmax.f32 %v2039, %v2040
  %v2042 = vrot.slane %v2041, 2
  %v2043 = vmax.f32 %v2041, %v2042
  %v2044 = vrot.slane %v2043, 1
  %v2045 = vmax.f32 %v2043, %v2044
  %v2046 = vsel %vm1499, %v1091, -inf
  %v2047 = vrot.slane %v2046, 4
  %v2048 = vmax.f32 %v2046, %v2047
  %v2049 = vrot.slane %v2048, 2
  %v2050 = vmax.f32 %v2048, %v2049
  %v2051 = vrot.slane %v2050, 1
  %v2052 = vmax.f32 %v2050, %v2051
  %v2053 = vsel %vm1499, %v1092, -inf
  %v2054 = vrot.slane %v2053, 4
  %v2055 = vmax.f32 %v2053, %v2054
  %v2056 = vrot.slane %v2055, 2
  %v2057 = vmax.f32 %v2055, %v2056
  %v2058 = vrot.slane %v2057, 1
  %v2059 = vmax.f32 %v2057, %v2058
  %v2060 = vsel %vm1499, %v1093, -inf
  %v2061 = vrot.slane %v2060, 4
  %v2062 = vmax.f32 %v2060, %v2061
  %v2063 = vrot.slane %v2062, 2
  %v2064 = vmax.f32 %v2062, %v2063
  %v2065 = vrot.slane %v2064, 1
  %v2066 = vmax.f32 %v2064, %v2065
  %v2067 = vsel %vm1499, %v1094, -inf
  %v2068 = vrot.slane %v2067, 4
  %v2069 = vmax.f32 %v2067, %v2068
  %v2070 = vrot.slane %v2069, 2
  %v2071 = vmax.f32 %v2069, %v2070
  %v2072 = vrot.slane %v2071, 1
  %v2073 = vmax.f32 %v2071, %v2072
  %v2074 = vsel %vm1499, %v1095, -inf
  %v2075 = vrot.slane %v2074, 4
  %v2076 = vmax.f32 %v2074, %v2075
  %v2077 = vrot.slane %v2076, 2
  %v2078 = vmax.f32 %v2076, %v2077
  %v2079 = vrot.slane %v2078, 1
  %v2080 = vmax.f32 %v2078, %v2079
  %v2081 = vsel %vm1499, %v1096, -inf
  %v2082 = vrot.slane %v2081, 4
  %v2083 = vmax.f32 %v2081, %v2082
  %v2084 = vrot.slane %v2083, 2
  %v2085 = vmax.f32 %v2083, %v2084
  %v2086 = vrot.slane %v2085, 1
  %v2087 = vmax.f32 %v2085, %v2086
  %v2088 = vsel %vm1499, %v1097, -inf
  %v2089 = vrot.slane %v2088, 4
  %v2090 = vmax.f32 %v2088, %v2089
  %v2091 = vrot.slane %v2090, 2
  %v2092 = vmax.f32 %v2090, %v2091
  %v2093 = vrot.slane %v2092, 1
  %v2094 = vmax.f32 %v2092, %v2093
  %v2095 = vsel %vm1499, %v1098, -inf
  %v2096 = vrot.slane %v2095, 4
  %v2097 = vmax.f32 %v2095, %v2096
  %v2098 = vrot.slane %v2097, 2
  %v2099 = vmax.f32 %v2097, %v2098
  %v2100 = vrot.slane %v2099, 1
  %v2101 = vmax.f32 %v2099, %v2100
  %v2102 = vsel %vm1499, %v1099, -inf
  %v2103 = vrot.slane %v2102, 4
  %v2104 = vmax.f32 %v2102, %v2103
  %v2105 = vrot.slane %v2104, 2
  %v2106 = vmax.f32 %v2104, %v2105
  %v2107 = vrot.slane %v2106, 1
  %v2108 = vmax.f32 %v2106, %v2107
  %v2109 = vsel %vm1499, %v1100, -inf
  %v2110 = vrot.slane %v2109, 4
  %v2111 = vmax.f32 %v2109, %v2110
  %v2112 = vrot.slane %v2111, 2
  %v2113 = vmax.f32 %v2111, %v2112
  %v2114 = vrot.slane %v2113, 1
  %v2115 = vmax.f32 %v2113, %v2114
  %v2116 = vsel %vm1499, %v1101, -inf
  %v2117 = vrot.slane %v2116, 4
  %v2118 = vmax.f32 %v2116, %v2117
  %v2119 = vrot.slane %v2118, 2
  %v2120 = vmax.f32 %v2118, %v2119
  %v2121 = vrot.slane %v2120, 1
  %v2122 = vmax.f32 %v2120, %v2121
  %v2123 = vsel %vm1499, %v1102, -inf
  %v2124 = vrot.slane %v2123, 4
  %v2125 = vmax.f32 %v2123, %v2124
  %v2126 = vrot.slane %v2125, 2
  %v2127 = vmax.f32 %v2125, %v2126
  %v2128 = vrot.slane %v2127, 1
  %v2129 = vmax.f32 %v2127, %v2128
  %v2130 = vsel %vm1499, %v1103, -inf
  %v2131 = vrot.slane %v2130, 4
  %v2132 = vmax.f32 %v2130, %v2131
  %v2133 = vrot.slane %v2132, 2
  %v2134 = vmax.f32 %v2132, %v2133
  %v2135 = vrot.slane %v2134, 1
  %v2136 = vmax.f32 %v2134, %v2135
  %v2137 = vsel %vm1499, %v1104, -inf
  %v2138 = vrot.slane %v2137, 4
  %v2139 = vmax.f32 %v2137, %v2138
  %v2140 = vrot.slane %v2139, 2
  %v2141 = vmax.f32 %v2139, %v2140
  %v2142 = vrot.slane %v2141, 1
  %v2143 = vmax.f32 %v2141, %v2142
  %v2144 = vsel %vm1499, %v1105, -inf
  %v2145 = vrot.slane %v2144, 4
  %v2146 = vmax.f32 %v2144, %v2145
  %v2147 = vrot.slane %v2146, 2
  %v2148 = vmax.f32 %v2146, %v2147
  %v2149 = vrot.slane %v2148, 1
  %v2150 = vmax.f32 %v2148, %v2149
  %v2151 = vsel %vm1499, %v1106, -inf
  %v2152 = vrot.slane %v2151, 4
  %v2153 = vmax.f32 %v2151, %v2152
  %v2154 = vrot.slane %v2153, 2
  %v2155 = vmax.f32 %v2153, %v2154
  %v2156 = vrot.slane %v2155, 1
  %v2157 = vmax.f32 %v2155, %v2156
  %v2158 = vsel %vm1499, %v1107, -inf
  %v2159 = vrot.slane %v2158, 4
  %v2160 = vmax.f32 %v2158, %v2159
  %v2161 = vrot.slane %v2160, 2
  %v2162 = vmax.f32 %v2160, %v2161
  %v2163 = vrot.slane %v2162, 1
  %v2164 = vmax.f32 %v2162, %v2163
  %v2165 = vsel %vm1499, %v1108, -inf
  %v2166 = vrot.slane %v2165, 4
  %v2167 = vmax.f32 %v2165, %v2166
  %v2168 = vrot.slane %v2167, 2
  %v2169 = vmax.f32 %v2167, %v2168
  %v2170 = vrot.slane %v2169, 1
  %v2171 = vmax.f32 %v2169, %v2170
  %v2172 = vsel %vm1499, %v1109, -inf
  %v2173 = vrot.slane %v2172, 4
  %v2174 = vmax.f32 %v2172, %v2173
  %v2175 = vrot.slane %v2174, 2
  %v2176 = vmax.f32 %v2174, %v2175
  %v2177 = vrot.slane %v2176, 1
  %v2178 = vmax.f32 %v2176, %v2177
  %v2179 = vsel %vm1499, %v1110, -inf
  %v2180 = vrot.slane %v2179, 4
  %v2181 = vmax.f32 %v2179, %v2180
  %v2182 = vrot.slane %v2181, 2
  %v2183 = vmax.f32 %v2181, %v2182
  %v2184 = vrot.slane %v2183, 1
  %v2185 = vmax.f32 %v2183, %v2184
  %v2186 = vsel %vm1499, %v1111, -inf
  %v2187 = vrot.slane %v2186, 4
  %v2188 = vmax.f32 %v2186, %v2187
  %v2189 = vrot.slane %v2188, 2
  %v2190 = vmax.f32 %v2188, %v2189
  %v2191 = vrot.slane %v2190, 1
  %v2192 = vmax.f32 %v2190, %v2191
  %v2193 = vsel %vm1499, %v1112, -inf
  %v2194 = vrot.slane %v2193, 4
  %v2195 = vmax.f32 %v2193, %v2194
  %v2196 = vrot.slane %v2195, 2
  %v2197 = vmax.f32 %v2195, %v2196
  %v2198 = vrot.slane %v2197, 1
  %v2199 = vmax.f32 %v2197, %v2198
  %v2200 = vsel %vm1499, %v1113, -inf
  %v2201 = vrot.slane %v2200, 4
  %v2202 = vmax.f32 %v2200, %v2201
  %v2203 = vrot.slane %v2202, 2
  %v2204 = vmax.f32 %v2202, %v2203
  %v2205 = vrot.slane %v2204, 1
  %v2206 = vmax.f32 %v2204, %v2205
  %v2207 = vsel %vm1499, %v1114, -inf
  %v2208 = vrot.slane %v2207, 4
  %v2209 = vmax.f32 %v2207, %v2208
  %v2210 = vrot.slane %v2209, 2
  %v2211 = vmax.f32 %v2209, %v2210
  %v2212 = vrot.slane %v2211, 1
  %v2213 = vmax.f32 %v2211, %v2212
  %v2214 = vsel %vm1499, %v1115, -inf
  %v2215 = vrot.slane %v2214, 4
  %v2216 = vmax.f32 %v2214, %v2215
  %v2217 = vrot.slane %v2216, 2
  %v2218 = vmax.f32 %v2216, %v2217
  %v2219 = vrot.slane %v2218, 1
  %v2220 = vmax.f32 %v2218, %v2219
  %v2221 = vsel %vm1499, %v1116, -inf
  %v2222 = vrot.slane %v2221, 4
  %v2223 = vmax.f32 %v2221, %v2222
  %v2224 = vrot.slane %v2223, 2
  %v2225 = vmax.f32 %v2223, %v2224
  %v2226 = vrot.slane %v2225, 1
  %v2227 = vmax.f32 %v2225, %v2226
  %v2228 = vsel %vm1499, %v1117, -inf
  %v2229 = vrot.slane %v2228, 4
  %v2230 = vmax.f32 %v2228, %v2229
  %v2231 = vrot.slane %v2230, 2
  %v2232 = vmax.f32 %v2230, %v2231
  %v2233 = vrot.slane %v2232, 1
  %v2234 = vmax.f32 %v2232, %v2233
  %v2235 = vsel %vm1499, %v1118, -inf
  %v2236 = vrot.slane %v2235, 4
  %v2237 = vmax.f32 %v2235, %v2236
  %v2238 = vrot.slane %v2237, 2
  %v2239 = vmax.f32 %v2237, %v2238
  %v2240 = vrot.slane %v2239, 1
  %v2241 = vmax.f32 %v2239, %v2240
  %v2242 = vsel %vm1499, %v1119, -inf
  %v2243 = vrot.slane %v2242, 4
  %v2244 = vmax.f32 %v2242, %v2243
  %v2245 = vrot.slane %v2244, 2
  %v2246 = vmax.f32 %v2244, %v2245
  %v2247 = vrot.slane %v2246, 1
  %v2248 = vmax.f32 %v2246, %v2247
  %v2249 = vsel %vm1499, %v1120, -inf
  %v2250 = vrot.slane %v2249, 4
  %v2251 = vmax.f32 %v2249, %v2250
  %v2252 = vrot.slane %v2251, 2
  %v2253 = vmax.f32 %v2251, %v2252
  %v2254 = vrot.slane %v2253, 1
  %v2255 = vmax.f32 %v2253, %v2254
  %v2256 = vsel %vm1499, %v1121, -inf
  %v2257 = vrot.slane %v2256, 4
  %v2258 = vmax.f32 %v2256, %v2257
  %v2259 = vrot.slane %v2258, 2
  %v2260 = vmax.f32 %v2258, %v2259
  %v2261 = vrot.slane %v2260, 1
  %v2262 = vmax.f32 %v2260, %v2261
  %v2263 = vsel %vm1499, %v1122, -inf
  %v2264 = vrot.slane %v2263, 4
  %v2265 = vmax.f32 %v2263, %v2264
  %v2266 = vrot.slane %v2265, 2
  %v2267 = vmax.f32 %v2265, %v2266
  %v2268 = vrot.slane %v2267, 1
  %v2269 = vmax.f32 %v2267, %v2268
  %v2270 = vsel %vm1499, %v1123, -inf
  %v2271 = vrot.slane %v2270, 4
  %v2272 = vmax.f32 %v2270, %v2271
  %v2273 = vrot.slane %v2272, 2
  %v2274 = vmax.f32 %v2272, %v2273
  %v2275 = vrot.slane %v2274, 1
  %v2276 = vmax.f32 %v2274, %v2275
  %v2277 = vsel %vm1499, %v1124, -inf
  %v2278 = vrot.slane %v2277, 4
  %v2279 = vmax.f32 %v2277, %v2278
  %v2280 = vrot.slane %v2279, 2
  %v2281 = vmax.f32 %v2279, %v2280
  %v2282 = vrot.slane %v2281, 1
  %v2283 = vmax.f32 %v2281, %v2282
  %v2284 = vsel %vm1499, %v1125, -inf
  %v2285 = vrot.slane %v2284, 4
  %v2286 = vmax.f32 %v2284, %v2285
  %v2287 = vrot.slane %v2286, 2
  %v2288 = vmax.f32 %v2286, %v2287
  %v2289 = vrot.slane %v2288, 1
  %v2290 = vmax.f32 %v2288, %v2289
  %v2291 = vsel %vm1499, %v1126, -inf
  %v2292 = vrot.slane %v2291, 4
  %v2293 = vmax.f32 %v2291, %v2292
  %v2294 = vrot.slane %v2293, 2
  %v2295 = vmax.f32 %v2293, %v2294
  %v2296 = vrot.slane %v2295, 1
  %v2297 = vmax.f32 %v2295, %v2296
  %v2298 = vsel %vm1499, %v1127, -inf
  %v2299 = vrot.slane %v2298, 4
  %v2300 = vmax.f32 %v2298, %v2299
  %v2301 = vrot.slane %v2300, 2
  %v2302 = vmax.f32 %v2300, %v2301
  %v2303 = vrot.slane %v2302, 1
  %v2304 = vmax.f32 %v2302, %v2303
  %v2305 = vsel %vm1499, %v1128, -inf
  %v2306 = vrot.slane %v2305, 4
  %v2307 = vmax.f32 %v2305, %v2306
  %v2308 = vrot.slane %v2307, 2
  %v2309 = vmax.f32 %v2307, %v2308
  %v2310 = vrot.slane %v2309, 1
  %v2311 = vmax.f32 %v2309, %v2310
  %v2312 = vsel %vm1499, %v1129, -inf
  %v2313 = vrot.slane %v2312, 4
  %v2314 = vmax.f32 %v2312, %v2313
  %v2315 = vrot.slane %v2314, 2
  %v2316 = vmax.f32 %v2314, %v2315
  %v2317 = vrot.slane %v2316, 1
  %v2318 = vmax.f32 %v2316, %v2317
  %v2319 = vsel %vm1499, %v1130, -inf
  %v2320 = vrot.slane %v2319, 4
  %v2321 = vmax.f32 %v2319, %v2320
  %v2322 = vrot.slane %v2321, 2
  %v2323 = vmax.f32 %v2321, %v2322
  %v2324 = vrot.slane %v2323, 1
  %v2325 = vmax.f32 %v2323, %v2324
  %v2326 = vsel %vm1499, %v1131, -inf
  %v2327 = vrot.slane %v2326, 4
  %v2328 = vmax.f32 %v2326, %v2327
  %v2329 = vrot.slane %v2328, 2
  %v2330 = vmax.f32 %v2328, %v2329
  %v2331 = vrot.slane %v2330, 1
  %v2332 = vmax.f32 %v2330, %v2331
  %v2333 = vsel %vm1499, %v1132, -inf
  %v2334 = vrot.slane %v2333, 4
  %v2335 = vmax.f32 %v2333, %v2334
  %v2336 = vrot.slane %v2335, 2
  %v2337 = vmax.f32 %v2335, %v2336
  %v2338 = vrot.slane %v2337, 1
  %v2339 = vmax.f32 %v2337, %v2338
  %v2340 = vsel %vm1499, %v1133, -inf
  %v2341 = vrot.slane %v2340, 4
  %v2342 = vmax.f32 %v2340, %v2341
  %v2343 = vrot.slane %v2342, 2
  %v2344 = vmax.f32 %v2342, %v2343
  %v2345 = vrot.slane %v2344, 1
  %v2346 = vmax.f32 %v2344, %v2345
  %v2347 = vsel %vm1499, %v1134, -inf
  %v2348 = vrot.slane %v2347, 4
  %v2349 = vmax.f32 %v2347, %v2348
  %v2350 = vrot.slane %v2349, 2
  %v2351 = vmax.f32 %v2349, %v2350
  %v2352 = vrot.slane %v2351, 1
  %v2353 = vmax.f32 %v2351, %v2352
  %v2354 = vsel %vm1499, %v1135, -inf
  %v2355 = vrot.slane %v2354, 4
  %v2356 = vmax.f32 %v2354, %v2355
  %v2357 = vrot.slane %v2356, 2
  %v2358 = vmax.f32 %v2356, %v2357
  %v2359 = vrot.slane %v2358, 1
  %v2360 = vmax.f32 %v2358, %v2359
  %v2361 = vsel %vm1499, %v1136, -inf
  %v2362 = vrot.slane %v2361, 4
  %v2363 = vmax.f32 %v2361, %v2362
  %v2364 = vrot.slane %v2363, 2
  %v2365 = vmax.f32 %v2363, %v2364
  %v2366 = vrot.slane %v2365, 1
  %v2367 = vmax.f32 %v2365, %v2366
  %v2368 = vsel %vm1499, %v1137, -inf
  %v2369 = vrot.slane %v2368, 4
  %v2370 = vmax.f32 %v2368, %v2369
  %v2371 = vrot.slane %v2370, 2
  %v2372 = vmax.f32 %v2370, %v2371
  %v2373 = vrot.slane %v2372, 1
  %v2374 = vmax.f32 %v2372, %v2373
  %v2375 = vsel %vm1499, %v1138, -inf
  %v2376 = vrot.slane %v2375, 4
  %v2377 = vmax.f32 %v2375, %v2376
  %v2378 = vrot.slane %v2377, 2
  %v2379 = vmax.f32 %v2377, %v2378
  %v2380 = vrot.slane %v2379, 1
  %v2381 = vmax.f32 %v2379, %v2380
  %v2382 = vsel %vm1499, %v1139, -inf
  %v2383 = vrot.slane %v2382, 4
  %v2384 = vmax.f32 %v2382, %v2383
  %v2385 = vrot.slane %v2384, 2
  %v2386 = vmax.f32 %v2384, %v2385
  %v2387 = vrot.slane %v2386, 1
  %v2388 = vmax.f32 %v2386, %v2387
  %v2389 = vsel %vm1499, %v1140, -inf
  %v2390 = vrot.slane %v2389, 4
  %v2391 = vmax.f32 %v2389, %v2390
  %v2392 = vrot.slane %v2391, 2
  %v2393 = vmax.f32 %v2391, %v2392
  %v2394 = vrot.slane %v2393, 1
  %v2395 = vmax.f32 %v2393, %v2394
  %v2396 = vsel %vm1499, %v1141, -inf
  %v2397 = vrot.slane %v2396, 4
  %v2398 = vmax.f32 %v2396, %v2397
  %v2399 = vrot.slane %v2398, 2
  %v2400 = vmax.f32 %v2398, %v2399
  %v2401 = vrot.slane %v2400, 1
  %v2402 = vmax.f32 %v2400, %v2401
  %v2403 = vsel %vm1499, %v1142, -inf
  %v2404 = vrot.slane %v2403, 4
  %v2405 = vmax.f32 %v2403, %v2404
  %v2406 = vrot.slane %v2405, 2
  %v2407 = vmax.f32 %v2405, %v2406
  %v2408 = vrot.slane %v2407, 1
  %v2409 = vmax.f32 %v2407, %v2408
  %v2410 = vsel %vm1499, %v1143, -inf
  %v2411 = vrot.slane %v2410, 4
  %v2412 = vmax.f32 %v2410, %v2411
  %v2413 = vrot.slane %v2412, 2
  %v2414 = vmax.f32 %v2412, %v2413
  %v2415 = vrot.slane %v2414, 1
  %v2416 = vmax.f32 %v2414, %v2415
  %v2417 = vsel %vm1499, %v1144, -inf
  %v2418 = vrot.slane %v2417, 4
  %v2419 = vmax.f32 %v2417, %v2418
  %v2420 = vrot.slane %v2419, 2
  %v2421 = vmax.f32 %v2419, %v2420
  %v2422 = vrot.slane %v2421, 1
  %v2423 = vmax.f32 %v2421, %v2422
  %v2424 = vsel %vm1499, %v1145, -inf
  %v2425 = vrot.slane %v2424, 4
  %v2426 = vmax.f32 %v2424, %v2425
  %v2427 = vrot.slane %v2426, 2
  %v2428 = vmax.f32 %v2426, %v2427
  %v2429 = vrot.slane %v2428, 1
  %v2430 = vmax.f32 %v2428, %v2429
  %v2431 = vsel %vm1499, %v1146, -inf
  %v2432 = vrot.slane %v2431, 4
  %v2433 = vmax.f32 %v2431, %v2432
  %v2434 = vrot.slane %v2433, 2
  %v2435 = vmax.f32 %v2433, %v2434
  %v2436 = vrot.slane %v2435, 1
  %v2437 = vmax.f32 %v2435, %v2436
  %v2438 = vsel %vm1499, %v1147, -inf
  %v2439 = vrot.slane %v2438, 4
  %v2440 = vmax.f32 %v2438, %v2439
  %v2441 = vrot.slane %v2440, 2
  %v2442 = vmax.f32 %v2440, %v2441
  %v2443 = vrot.slane %v2442, 1
  %v2444 = vmax.f32 %v2442, %v2443
  %v2445 = vsel %vm1499, %v1148, -inf
  %v2446 = vrot.slane %v2445, 4
  %v2447 = vmax.f32 %v2445, %v2446
  %v2448 = vrot.slane %v2447, 2
  %v2449 = vmax.f32 %v2447, %v2448
  %v2450 = vrot.slane %v2449, 1
  %v2451 = vmax.f32 %v2449, %v2450
  %v2452 = vsel %vm1499, %v1149, -inf
  %v2453 = vrot.slane %v2452, 4
  %v2454 = vmax.f32 %v2452, %v2453
  %v2455 = vrot.slane %v2454, 2
  %v2456 = vmax.f32 %v2454, %v2455
  %v2457 = vrot.slane %v2456, 1
  %v2458 = vmax.f32 %v2456, %v2457
  %v2459 = vsel %vm1499, %v1150, -inf
  %v2460 = vrot.slane %v2459, 4
  %v2461 = vmax.f32 %v2459, %v2460
  %v2462 = vrot.slane %v2461, 2
  %v2463 = vmax.f32 %v2461, %v2462
  %v2464 = vrot.slane %v2463, 1
  %v2465 = vmax.f32 %v2463, %v2464
  %v2466 = vsel %vm1499, %v1151, -inf
  %v2467 = vrot.slane %v2466, 4
  %v2468 = vmax.f32 %v2466, %v2467
  %v2469 = vrot.slane %v2468, 2
  %v2470 = vmax.f32 %v2468, %v2469
  %v2471 = vrot.slane %v2470, 1
  %v2472 = vmax.f32 %v2470, %v2471
  %v2473 = vsel %vm1499, %v1152, -inf
  %v2474 = vrot.slane %v2473, 4
  %v2475 = vmax.f32 %v2473, %v2474
  %v2476 = vrot.slane %v2475, 2
  %v2477 = vmax.f32 %v2475, %v2476
  %v2478 = vrot.slane %v2477, 1
  %v2479 = vmax.f32 %v2477, %v2478
  %v2480 = vsel %vm1499, %v1153, -inf
  %v2481 = vrot.slane %v2480, 4
  %v2482 = vmax.f32 %v2480, %v2481
  %v2483 = vrot.slane %v2482, 2
  %v2484 = vmax.f32 %v2482, %v2483
  %v2485 = vrot.slane %v2484, 1
  %v2486 = vmax.f32 %v2484, %v2485
  %v2487 = vsel %vm1499, %v1154, -inf
  %v2488 = vrot.slane %v2487, 4
  %v2489 = vmax.f32 %v2487, %v2488
  %v2490 = vrot.slane %v2489, 2
  %v2491 = vmax.f32 %v2489, %v2490
  %v2492 = vrot.slane %v2491, 1
  %v2493 = vmax.f32 %v2491, %v2492
  %v2494 = vsel %vm1499, %v1155, -inf
  %v2495 = vrot.slane %v2494, 4
  %v2496 = vmax.f32 %v2494, %v2495
  %v2497 = vrot.slane %v2496, 2
  %v2498 = vmax.f32 %v2496, %v2497
  %v2499 = vrot.slane %v2498, 1
  %v2500 = vmax.f32 %v2498, %v2499
  %v2501 = vsel %vm1499, %v1156, -inf
  %v2502 = vrot.slane %v2501, 4
  %v2503 = vmax.f32 %v2501, %v2502
  %v2504 = vrot.slane %v2503, 2
  %v2505 = vmax.f32 %v2503, %v2504
  %v2506 = vrot.slane %v2505, 1
  %v2507 = vmax.f32 %v2505, %v2506
  %v2508 = vsel %vm1499, %v1157, -inf
  %v2509 = vrot.slane %v2508, 4
  %v2510 = vmax.f32 %v2508, %v2509
  %v2511 = vrot.slane %v2510, 2
  %v2512 = vmax.f32 %v2510, %v2511
  %v2513 = vrot.slane %v2512, 1
  %v2514 = vmax.f32 %v2512, %v2513
  %v2515 = vsel %vm1499, %v1158, -inf
  %v2516 = vrot.slane %v2515, 4
  %v2517 = vmax.f32 %v2515, %v2516
  %v2518 = vrot.slane %v2517, 2
  %v2519 = vmax.f32 %v2517, %v2518
  %v2520 = vrot.slane %v2519, 1
  %v2521 = vmax.f32 %v2519, %v2520
  %v2522 = vsel %vm1499, %v1159, -inf
  %v2523 = vrot.slane %v2522, 4
  %v2524 = vmax.f32 %v2522, %v2523
  %v2525 = vrot.slane %v2524, 2
  %v2526 = vmax.f32 %v2524, %v2525
  %v2527 = vrot.slane %v2526, 1
  %v2528 = vmax.f32 %v2526, %v2527
  %v2529 = vsel %vm1499, %v1160, -inf
  %v2530 = vrot.slane %v2529, 4
  %v2531 = vmax.f32 %v2529, %v2530
  %v2532 = vrot.slane %v2531, 2
  %v2533 = vmax.f32 %v2531, %v2532
  %v2534 = vrot.slane %v2533, 1
  %v2535 = vmax.f32 %v2533, %v2534
  %v2536 = vsel %vm1499, %v1161, -inf
  %v2537 = vrot.slane %v2536, 4
  %v2538 = vmax.f32 %v2536, %v2537
  %v2539 = vrot.slane %v2538, 2
  %v2540 = vmax.f32 %v2538, %v2539
  %v2541 = vrot.slane %v2540, 1
  %v2542 = vmax.f32 %v2540, %v2541
  %v2543 = vsel %vm1499, %v1162, -inf
  %v2544 = vrot.slane %v2543, 4
  %v2545 = vmax.f32 %v2543, %v2544
  %v2546 = vrot.slane %v2545, 2
  %v2547 = vmax.f32 %v2545, %v2546
  %v2548 = vrot.slane %v2547, 1
  %v2549 = vmax.f32 %v2547, %v2548
  %v2550 = vsel %vm1499, %v1163, -inf
  %v2551 = vrot.slane %v2550, 4
  %v2552 = vmax.f32 %v2550, %v2551
  %v2553 = vrot.slane %v2552, 2
  %v2554 = vmax.f32 %v2552, %v2553
  %v2555 = vrot.slane %v2554, 1
  %v2556 = vmax.f32 %v2554, %v2555
  %v2557 = vsel %vm1499, %v1164, -inf
  %v2558 = vrot.slane %v2557, 4
  %v2559 = vmax.f32 %v2557, %v2558
  %v2560 = vrot.slane %v2559, 2
  %v2561 = vmax.f32 %v2559, %v2560
  %v2562 = vrot.slane %v2561, 1
  %v2563 = vmax.f32 %v2561, %v2562
  %v2564 = vsel %vm1499, %v1165, -inf
  %v2565 = vrot.slane %v2564, 4
  %v2566 = vmax.f32 %v2564, %v2565
  %v2567 = vrot.slane %v2566, 2
  %v2568 = vmax.f32 %v2566, %v2567
  %v2569 = vrot.slane %v2568, 1
  %v2570 = vmax.f32 %v2568, %v2569
  %v2571 = vsel %vm1499, %v1166, -inf
  %v2572 = vrot.slane %v2571, 4
  %v2573 = vmax.f32 %v2571, %v2572
  %v2574 = vrot.slane %v2573, 2
  %v2575 = vmax.f32 %v2573, %v2574
  %v2576 = vrot.slane %v2575, 1
  %v2577 = vmax.f32 %v2575, %v2576
  %v2578 = vsel %vm1499, %v1167, -inf
  %v2579 = vrot.slane %v2578, 4
  %v2580 = vmax.f32 %v2578, %v2579
  %v2581 = vrot.slane %v2580, 2
  %v2582 = vmax.f32 %v2580, %v2581
  %v2583 = vrot.slane %v2582, 1
  %v2584 = vmax.f32 %v2582, %v2583
  %v2585 = vsel %vm1499, %v1168, -inf
  %v2586 = vrot.slane %v2585, 4
  %v2587 = vmax.f32 %v2585, %v2586
  %v2588 = vrot.slane %v2587, 2
  %v2589 = vmax.f32 %v2587, %v2588
  %v2590 = vrot.slane %v2589, 1
  %v2591 = vmax.f32 %v2589, %v2590
  %v2592 = vsel %vm1499, %v1169, -inf
  %v2593 = vrot.slane %v2592, 4
  %v2594 = vmax.f32 %v2592, %v2593
  %v2595 = vrot.slane %v2594, 2
  %v2596 = vmax.f32 %v2594, %v2595
  %v2597 = vrot.slane %v2596, 1
  %v2598 = vmax.f32 %v2596, %v2597
  %v2599 = vsel %vm1499, %v1170, -inf
  %v2600 = vrot.slane %v2599, 4
  %v2601 = vmax.f32 %v2599, %v2600
  %v2602 = vrot.slane %v2601, 2
  %v2603 = vmax.f32 %v2601, %v2602
  %v2604 = vrot.slane %v2603, 1
  %v2605 = vmax.f32 %v2603, %v2604
  %v2606 = vsel %vm1499, %v1171, -inf
  %v2607 = vrot.slane %v2606, 4
  %v2608 = vmax.f32 %v2606, %v2607
  %v2609 = vrot.slane %v2608, 2
  %v2610 = vmax.f32 %v2608, %v2609
  %v2611 = vrot.slane %v2610, 1
  %v2612 = vmax.f32 %v2610, %v2611
  %v2613 = vsel %vm1499, %v1172, -inf
  %v2614 = vrot.slane %v2613, 4
  %v2615 = vmax.f32 %v2613, %v2614
  %v2616 = vrot.slane %v2615, 2
  %v2617 = vmax.f32 %v2615, %v2616
  %v2618 = vrot.slane %v2617, 1
  %v2619 = vmax.f32 %v2617, %v2618
  %v2620 = vsel %vm1499, %v1173, -inf
  %v2621 = vrot.slane %v2620, 4
  %v2622 = vmax.f32 %v2620, %v2621
  %v2623 = vrot.slane %v2622, 2
  %v2624 = vmax.f32 %v2622, %v2623
  %v2625 = vrot.slane %v2624, 1
  %v2626 = vmax.f32 %v2624, %v2625
  %v2627 = vsel %vm1499, %v1174, -inf
  %v2628 = vrot.slane %v2627, 4
  %v2629 = vmax.f32 %v2627, %v2628
  %v2630 = vrot.slane %v2629, 2
  %v2631 = vmax.f32 %v2629, %v2630
  %v2632 = vrot.slane %v2631, 1
  %v2633 = vmax.f32 %v2631, %v2632
  %v2634 = vsel %vm1499, %v1175, -inf
  %v2635 = vrot.slane %v2634, 4
  %v2636 = vmax.f32 %v2634, %v2635
  %v2637 = vrot.slane %v2636, 2
  %v2638 = vmax.f32 %v2636, %v2637
  %v2639 = vrot.slane %v2638, 1
  %v2640 = vmax.f32 %v2638, %v2639
  %v2641 = vsel %vm1499, %v1176, -inf
  %v2642 = vrot.slane %v2641, 4
  %v2643 = vmax.f32 %v2641, %v2642
  %v2644 = vrot.slane %v2643, 2
  %v2645 = vmax.f32 %v2643, %v2644
  %v2646 = vrot.slane %v2645, 1
  %v2647 = vmax.f32 %v2645, %v2646
  %v2648 = vsel %vm1499, %v1177, -inf
  %v2649 = vrot.slane %v2648, 4
  %v2650 = vmax.f32 %v2648, %v2649
  %v2651 = vrot.slane %v2650, 2
  %v2652 = vmax.f32 %v2650, %v2651
  %v2653 = vrot.slane %v2652, 1
  %v2654 = vmax.f32 %v2652, %v2653
  %v2655 = vsel %vm1499, %v1178, -inf
  %v2656 = vrot.slane %v2655, 4
  %v2657 = vmax.f32 %v2655, %v2656
  %v2658 = vrot.slane %v2657, 2
  %v2659 = vmax.f32 %v2657, %v2658
  %v2660 = vrot.slane %v2659, 1
  %v2661 = vmax.f32 %v2659, %v2660
  %v2662 = vsel %vm1499, %v1179, -inf
  %v2663 = vrot.slane %v2662, 4
  %v2664 = vmax.f32 %v2662, %v2663
  %v2665 = vrot.slane %v2664, 2
  %v2666 = vmax.f32 %v2664, %v2665
  %v2667 = vrot.slane %v2666, 1
  %v2668 = vmax.f32 %v2666, %v2667
  %v2669 = vsel %vm1499, %v1180, -inf
  %v2670 = vrot.slane %v2669, 4
  %v2671 = vmax.f32 %v2669, %v2670
  %v2672 = vrot.slane %v2671, 2
  %v2673 = vmax.f32 %v2671, %v2672
  %v2674 = vrot.slane %v2673, 1
  %v2675 = vmax.f32 %v2673, %v2674
  %v2676 = vsel %vm1499, %v1181, -inf
  %v2677 = vrot.slane %v2676, 4
  %v2678 = vmax.f32 %v2676, %v2677
  %v2679 = vrot.slane %v2678, 2
  %v2680 = vmax.f32 %v2678, %v2679
  %v2681 = vrot.slane %v2680, 1
  %v2682 = vmax.f32 %v2680, %v2681
  %v2683 = vsel %vm1499, %v1182, -inf
  %v2684 = vrot.slane %v2683, 4
  %v2685 = vmax.f32 %v2683, %v2684
  %v2686 = vrot.slane %v2685, 2
  %v2687 = vmax.f32 %v2685, %v2686
  %v2688 = vrot.slane %v2687, 1
  %v2689 = vmax.f32 %v2687, %v2688
  %v2690 = vsel %vm1499, %v1183, -inf
  %v2691 = vrot.slane %v2690, 4
  %v2692 = vmax.f32 %v2690, %v2691
  %v2693 = vrot.slane %v2692, 2
  %v2694 = vmax.f32 %v2692, %v2693
  %v2695 = vrot.slane %v2694, 1
  %v2696 = vmax.f32 %v2694, %v2695
  %v2697 = vsel %vm1499, %v1184, -inf
  %v2698 = vrot.slane %v2697, 4
  %v2699 = vmax.f32 %v2697, %v2698
  %v2700 = vrot.slane %v2699, 2
  %v2701 = vmax.f32 %v2699, %v2700
  %v2702 = vrot.slane %v2701, 1
  %v2703 = vmax.f32 %v2701, %v2702
  %v2704 = vsel %vm1499, %v1185, -inf
  %v2705 = vrot.slane %v2704, 4
  %v2706 = vmax.f32 %v2704, %v2705
  %v2707 = vrot.slane %v2706, 2
  %v2708 = vmax.f32 %v2706, %v2707
  %v2709 = vrot.slane %v2708, 1
  %v2710 = vmax.f32 %v2708, %v2709
  %v2711 = vsel %vm1499, %v1186, -inf
  %v2712 = vrot.slane %v2711, 4
  %v2713 = vmax.f32 %v2711, %v2712
  %v2714 = vrot.slane %v2713, 2
  %v2715 = vmax.f32 %v2713, %v2714
  %v2716 = vrot.slane %v2715, 1
  %v2717 = vmax.f32 %v2715, %v2716
  %v2718 = vsel %vm1499, %v1187, -inf
  %v2719 = vrot.slane %v2718, 4
  %v2720 = vmax.f32 %v2718, %v2719
  %v2721 = vrot.slane %v2720, 2
  %v2722 = vmax.f32 %v2720, %v2721
  %v2723 = vrot.slane %v2722, 1
  %v2724 = vmax.f32 %v2722, %v2723
  %v2725 = vsel %vm1499, %v1188, -inf
  %v2726 = vrot.slane %v2725, 4
  %v2727 = vmax.f32 %v2725, %v2726
  %v2728 = vrot.slane %v2727, 2
  %v2729 = vmax.f32 %v2727, %v2728
  %v2730 = vrot.slane %v2729, 1
  %v2731 = vmax.f32 %v2729, %v2730
  %v2732 = vsel %vm1499, %v1189, -inf
  %v2733 = vrot.slane %v2732, 4
  %v2734 = vmax.f32 %v2732, %v2733
  %v2735 = vrot.slane %v2734, 2
  %v2736 = vmax.f32 %v2734, %v2735
  %v2737 = vrot.slane %v2736, 1
  %v2738 = vmax.f32 %v2736, %v2737
  %v2739 = vsel %vm1499, %v1190, -inf
  %v2740 = vrot.slane %v2739, 4
  %v2741 = vmax.f32 %v2739, %v2740
  %v2742 = vrot.slane %v2741, 2
  %v2743 = vmax.f32 %v2741, %v2742
  %v2744 = vrot.slane %v2743, 1
  %v2745 = vmax.f32 %v2743, %v2744
  %v2746 = vsel %vm1499, %v1191, -inf
  %v2747 = vrot.slane %v2746, 4
  %v2748 = vmax.f32 %v2746, %v2747
  %v2749 = vrot.slane %v2748, 2
  %v2750 = vmax.f32 %v2748, %v2749
  %v2751 = vrot.slane %v2750, 1
  %v2752 = vmax.f32 %v2750, %v2751
  %v2753 = vsel %vm1499, %v1192, -inf
  %v2754 = vrot.slane %v2753, 4
  %v2755 = vmax.f32 %v2753, %v2754
  %v2756 = vrot.slane %v2755, 2
  %v2757 = vmax.f32 %v2755, %v2756
  %v2758 = vrot.slane %v2757, 1
  %v2759 = vmax.f32 %v2757, %v2758
  %v2760 = vsel %vm1499, %v1193, -inf
  %v2761 = vrot.slane %v2760, 4
  %v2762 = vmax.f32 %v2760, %v2761
  %v2763 = vrot.slane %v2762, 2
  %v2764 = vmax.f32 %v2762, %v2763
  %v2765 = vrot.slane %v2764, 1
  %v2766 = vmax.f32 %v2764, %v2765
  %v2767 = vsel %vm1499, %v1194, -inf
  %v2768 = vrot.slane %v2767, 4
  %v2769 = vmax.f32 %v2767, %v2768
  %v2770 = vrot.slane %v2769, 2
  %v2771 = vmax.f32 %v2769, %v2770
  %v2772 = vrot.slane %v2771, 1
  %v2773 = vmax.f32 %v2771, %v2772
  %v2774 = vsel %vm1499, %v1195, -inf
  %v2775 = vrot.slane %v2774, 4
  %v2776 = vmax.f32 %v2774, %v2775
  %v2777 = vrot.slane %v2776, 2
  %v2778 = vmax.f32 %v2776, %v2777
  %v2779 = vrot.slane %v2778, 1
  %v2780 = vmax.f32 %v2778, %v2779
  %v2781 = vsel %vm1499, %v1196, -inf
  %v2782 = vrot.slane %v2781, 4
  %v2783 = vmax.f32 %v2781, %v2782
  %v2784 = vrot.slane %v2783, 2
  %v2785 = vmax.f32 %v2783, %v2784
  %v2786 = vrot.slane %v2785, 1
  %v2787 = vmax.f32 %v2785, %v2786
  %v2788 = vsel %vm1499, %v1197, -inf
  %v2789 = vrot.slane %v2788, 4
  %v2790 = vmax.f32 %v2788, %v2789
  %v2791 = vrot.slane %v2790, 2
  %v2792 = vmax.f32 %v2790, %v2791
  %v2793 = vrot.slane %v2792, 1
  %v2794 = vmax.f32 %v2792, %v2793
  %v2795 = vsel %vm1499, %v1198, -inf
  %v2796 = vrot.slane %v2795, 4
  %v2797 = vmax.f32 %v2795, %v2796
  %v2798 = vrot.slane %v2797, 2
  %v2799 = vmax.f32 %v2797, %v2798
  %v2800 = vrot.slane %v2799, 1
  %v2801 = vmax.f32 %v2799, %v2800
  %v2802 = vsel %vm1499, %v1199, -inf
  %v2803 = vrot.slane %v2802, 4
  %v2804 = vmax.f32 %v2802, %v2803
  %v2805 = vrot.slane %v2804, 2
  %v2806 = vmax.f32 %v2804, %v2805
  %v2807 = vrot.slane %v2806, 1
  %v2808 = vmax.f32 %v2806, %v2807
  %v2809 = vsel %vm1499, %v1200, -inf
  %v2810 = vrot.slane %v2809, 4
  %v2811 = vmax.f32 %v2809, %v2810
  %v2812 = vrot.slane %v2811, 2
  %v2813 = vmax.f32 %v2811, %v2812
  %v2814 = vrot.slane %v2813, 1
  %v2815 = vmax.f32 %v2813, %v2814
  %v2816 = vsel %vm1499, %v1201, -inf
  %v2817 = vrot.slane %v2816, 4
  %v2818 = vmax.f32 %v2816, %v2817
  %v2819 = vrot.slane %v2818, 2
  %v2820 = vmax.f32 %v2818, %v2819
  %v2821 = vrot.slane %v2820, 1
  %v2822 = vmax.f32 %v2820, %v2821
  %v2823 = vsel %vm1499, %v1202, -inf
  %v2824 = vrot.slane %v2823, 4
  %v2825 = vmax.f32 %v2823, %v2824
  %v2826 = vrot.slane %v2825, 2
  %v2827 = vmax.f32 %v2825, %v2826
  %v2828 = vrot.slane %v2827, 1
  %v2829 = vmax.f32 %v2827, %v2828
  %v2830 = vsel %vm1499, %v1203, -inf
  %v2831 = vrot.slane %v2830, 4
  %v2832 = vmax.f32 %v2830, %v2831
  %v2833 = vrot.slane %v2832, 2
  %v2834 = vmax.f32 %v2832, %v2833
  %v2835 = vrot.slane %v2834, 1
  %v2836 = vmax.f32 %v2834, %v2835
  %v2837 = vsel %vm1499, %v1204, -inf
  %v2838 = vrot.slane %v2837, 4
  %v2839 = vmax.f32 %v2837, %v2838
  %v2840 = vrot.slane %v2839, 2
  %v2841 = vmax.f32 %v2839, %v2840
  %v2842 = vrot.slane %v2841, 1
  %v2843 = vmax.f32 %v2841, %v2842
  %v2844 = vsel %vm1499, %v1205, -inf
  %v2845 = vrot.slane %v2844, 4
  %v2846 = vmax.f32 %v2844, %v2845
  %v2847 = vrot.slane %v2846, 2
  %v2848 = vmax.f32 %v2846, %v2847
  %v2849 = vrot.slane %v2848, 1
  %v2850 = vmax.f32 %v2848, %v2849
  %v2851 = vsel %vm1499, %v1206, -inf
  %v2852 = vrot.slane %v2851, 4
  %v2853 = vmax.f32 %v2851, %v2852
  %v2854 = vrot.slane %v2853, 2
  %v2855 = vmax.f32 %v2853, %v2854
  %v2856 = vrot.slane %v2855, 1
  %v2857 = vmax.f32 %v2855, %v2856
  %v2858 = vsel %vm1499, %v1207, -inf
  %v2859 = vrot.slane %v2858, 4
  %v2860 = vmax.f32 %v2858, %v2859
  %v2861 = vrot.slane %v2860, 2
  %v2862 = vmax.f32 %v2860, %v2861
  %v2863 = vrot.slane %v2862, 1
  %v2864 = vmax.f32 %v2862, %v2863
  %v2865 = vsel %vm1499, %v1208, -inf
  %v2866 = vrot.slane %v2865, 4
  %v2867 = vmax.f32 %v2865, %v2866
  %v2868 = vrot.slane %v2867, 2
  %v2869 = vmax.f32 %v2867, %v2868
  %v2870 = vrot.slane %v2869, 1
  %v2871 = vmax.f32 %v2869, %v2870
  %v2872 = vsel %vm1499, %v1209, -inf
  %v2873 = vrot.slane %v2872, 4
  %v2874 = vmax.f32 %v2872, %v2873
  %v2875 = vrot.slane %v2874, 2
  %v2876 = vmax.f32 %v2874, %v2875
  %v2877 = vrot.slane %v2876, 1
  %v2878 = vmax.f32 %v2876, %v2877
  %v2879 = vsel %vm1499, %v1210, -inf
  %v2880 = vrot.slane %v2879, 4
  %v2881 = vmax.f32 %v2879, %v2880
  %v2882 = vrot.slane %v2881, 2
  %v2883 = vmax.f32 %v2881, %v2882
  %v2884 = vrot.slane %v2883, 1
  %v2885 = vmax.f32 %v2883, %v2884
  %v2886 = vsel %vm1499, %v1211, -inf
  %v2887 = vrot.slane %v2886, 4
  %v2888 = vmax.f32 %v2886, %v2887
  %v2889 = vrot.slane %v2888, 2
  %v2890 = vmax.f32 %v2888, %v2889
  %v2891 = vrot.slane %v2890, 1
  %v2892 = vmax.f32 %v2890, %v2891
  %v2893 = vsel %vm1499, %v1212, -inf
  %v2894 = vrot.slane %v2893, 4
  %v2895 = vmax.f32 %v2893, %v2894
  %v2896 = vrot.slane %v2895, 2
  %v2897 = vmax.f32 %v2895, %v2896
  %v2898 = vrot.slane %v2897, 1
  %v2899 = vmax.f32 %v2897, %v2898
  %v2900 = vsel %vm1499, %v1213, -inf
  %v2901 = vrot.slane %v2900, 4
  %v2902 = vmax.f32 %v2900, %v2901
  %v2903 = vrot.slane %v2902, 2
  %v2904 = vmax.f32 %v2902, %v2903
  %v2905 = vrot.slane %v2904, 1
  %v2906 = vmax.f32 %v2904, %v2905
  %v2907 = vsel %vm1499, %v1214, -inf
  %v2908 = vrot.slane %v2907, 4
  %v2909 = vmax.f32 %v2907, %v2908
  %v2910 = vrot.slane %v2909, 2
  %v2911 = vmax.f32 %v2909, %v2910
  %v2912 = vrot.slane %v2911, 1
  %v2913 = vmax.f32 %v2911, %v2912
  %v2914 = vsel %vm1499, %v1215, -inf
  %v2915 = vrot.slane %v2914, 4
  %v2916 = vmax.f32 %v2914, %v2915
  %v2917 = vrot.slane %v2916, 2
  %v2918 = vmax.f32 %v2916, %v2917
  %v2919 = vrot.slane %v2918, 1
  %v2920 = vmax.f32 %v2918, %v2919
  %v2921 = vsel %vm1499, %v1216, -inf
  %v2922 = vrot.slane %v2921, 4
  %v2923 = vmax.f32 %v2921, %v2922
  %v2924 = vrot.slane %v2923, 2
  %v2925 = vmax.f32 %v2923, %v2924
  %v2926 = vrot.slane %v2925, 1
  %v2927 = vmax.f32 %v2925, %v2926
  %v2928 = vsel %vm1499, %v1217, -inf
  %v2929 = vrot.slane %v2928, 4
  %v2930 = vmax.f32 %v2928, %v2929
  %v2931 = vrot.slane %v2930, 2
  %v2932 = vmax.f32 %v2930, %v2931
  %v2933 = vrot.slane %v2932, 1
  %v2934 = vmax.f32 %v2932, %v2933
  %v2935 = vsel %vm1499, %v1218, -inf
  %v2936 = vrot.slane %v2935, 4
  %v2937 = vmax.f32 %v2935, %v2936
  %v2938 = vrot.slane %v2937, 2
  %v2939 = vmax.f32 %v2937, %v2938
  %v2940 = vrot.slane %v2939, 1
  %v2941 = vmax.f32 %v2939, %v2940
  %v2942 = vsel %vm1499, %v1219, -inf
  %v2943 = vrot.slane %v2942, 4
  %v2944 = vmax.f32 %v2942, %v2943
  %v2945 = vrot.slane %v2944, 2
  %v2946 = vmax.f32 %v2944, %v2945
  %v2947 = vrot.slane %v2946, 1
  %v2948 = vmax.f32 %v2946, %v2947
  %v2949 = vsel %vm1499, %v1220, -inf
  %v2950 = vrot.slane %v2949, 4
  %v2951 = vmax.f32 %v2949, %v2950
  %v2952 = vrot.slane %v2951, 2
  %v2953 = vmax.f32 %v2951, %v2952
  %v2954 = vrot.slane %v2953, 1
  %v2955 = vmax.f32 %v2953, %v2954
  %v2956 = vsel %vm1499, %v1221, -inf
  %v2957 = vrot.slane %v2956, 4
  %v2958 = vmax.f32 %v2956, %v2957
  %v2959 = vrot.slane %v2958, 2
  %v2960 = vmax.f32 %v2958, %v2959
  %v2961 = vrot.slane %v2960, 1
  %v2962 = vmax.f32 %v2960, %v2961
  %v2963 = vsel %vm1499, %v1222, -inf
  %v2964 = vrot.slane %v2963, 4
  %v2965 = vmax.f32 %v2963, %v2964
  %v2966 = vrot.slane %v2965, 2
  %v2967 = vmax.f32 %v2965, %v2966
  %v2968 = vrot.slane %v2967, 1
  %v2969 = vmax.f32 %v2967, %v2968
  %v2970 = vsel %vm1499, %v1223, -inf
  %v2971 = vrot.slane %v2970, 4
  %v2972 = vmax.f32 %v2970, %v2971
  %v2973 = vrot.slane %v2972, 2
  %v2974 = vmax.f32 %v2972, %v2973
  %v2975 = vrot.slane %v2974, 1
  %v2976 = vmax.f32 %v2974, %v2975
  %v2977 = vsel %vm1499, %v1224, -inf
  %v2978 = vrot.slane %v2977, 4
  %v2979 = vmax.f32 %v2977, %v2978
  %v2980 = vrot.slane %v2979, 2
  %v2981 = vmax.f32 %v2979, %v2980
  %v2982 = vrot.slane %v2981, 1
  %v2983 = vmax.f32 %v2981, %v2982
  %v2984 = vsel %vm1499, %v1225, -inf
  %v2985 = vrot.slane %v2984, 4
  %v2986 = vmax.f32 %v2984, %v2985
  %v2987 = vrot.slane %v2986, 2
  %v2988 = vmax.f32 %v2986, %v2987
  %v2989 = vrot.slane %v2988, 1
  %v2990 = vmax.f32 %v2988, %v2989
  %v2991 = vsel %vm1499, %v1226, -inf
  %v2992 = vrot.slane %v2991, 4
  %v2993 = vmax.f32 %v2991, %v2992
  %v2994 = vrot.slane %v2993, 2
  %v2995 = vmax.f32 %v2993, %v2994
  %v2996 = vrot.slane %v2995, 1
  %v2997 = vmax.f32 %v2995, %v2996
  %v2998 = vsel %vm1499, %v1227, -inf
  %v2999 = vrot.slane %v2998, 4
  %v3000 = vmax.f32 %v2998, %v2999
  %v3001 = vrot.slane %v3000, 2
  %v3002 = vmax.f32 %v3000, %v3001
  %v3003 = vrot.slane %v3002, 1
  %v3004 = vmax.f32 %v3002, %v3003
  %v3005 = vsel %vm1499, %v1228, -inf
  %v3006 = vrot.slane %v3005, 4
  %v3007 = vmax.f32 %v3005, %v3006
  %v3008 = vrot.slane %v3007, 2
  %v3009 = vmax.f32 %v3007, %v3008
  %v3010 = vrot.slane %v3009, 1
  %v3011 = vmax.f32 %v3009, %v3010
  %v3012 = vsel %vm1499, %v1229, -inf
  %v3013 = vrot.slane %v3012, 4
  %v3014 = vmax.f32 %v3012, %v3013
  %v3015 = vrot.slane %v3014, 2
  %v3016 = vmax.f32 %v3014, %v3015
  %v3017 = vrot.slane %v3016, 1
  %v3018 = vmax.f32 %v3016, %v3017
  %v3019 = vsel %vm1499, %v1230, -inf
  %v3020 = vrot.slane %v3019, 4
  %v3021 = vmax.f32 %v3019, %v3020
  %v3022 = vrot.slane %v3021, 2
  %v3023 = vmax.f32 %v3021, %v3022
  %v3024 = vrot.slane %v3023, 1
  %v3025 = vmax.f32 %v3023, %v3024
  %v3026 = vsel %vm1499, %v1231, -inf
  %v3027 = vrot.slane %v3026, 4
  %v3028 = vmax.f32 %v3026, %v3027
  %v3029 = vrot.slane %v3028, 2
  %v3030 = vmax.f32 %v3028, %v3029
  %v3031 = vrot.slane %v3030, 1
  %v3032 = vmax.f32 %v3030, %v3031
  %v3033 = vsel %vm1499, %v1232, -inf
  %v3034 = vrot.slane %v3033, 4
  %v3035 = vmax.f32 %v3033, %v3034
  %v3036 = vrot.slane %v3035, 2
  %v3037 = vmax.f32 %v3035, %v3036
  %v3038 = vrot.slane %v3037, 1
  %v3039 = vmax.f32 %v3037, %v3038
  %v3040 = vsel %vm1499, %v1233, -inf
  %v3041 = vrot.slane %v3040, 4
  %v3042 = vmax.f32 %v3040, %v3041
  %v3043 = vrot.slane %v3042, 2
  %v3044 = vmax.f32 %v3042, %v3043
  %v3045 = vrot.slane %v3044, 1
  %v3046 = vmax.f32 %v3044, %v3045
  %v3047 = vsel %vm1499, %v1234, -inf
  %v3048 = vrot.slane %v3047, 4
  %v3049 = vmax.f32 %v3047, %v3048
  %v3050 = vrot.slane %v3049, 2
  %v3051 = vmax.f32 %v3049, %v3050
  %v3052 = vrot.slane %v3051, 1
  %v3053 = vmax.f32 %v3051, %v3052
  %v3054 = vsel %vm1499, %v1235, -inf
  %v3055 = vrot.slane %v3054, 4
  %v3056 = vmax.f32 %v3054, %v3055
  %v3057 = vrot.slane %v3056, 2
  %v3058 = vmax.f32 %v3056, %v3057
  %v3059 = vrot.slane %v3058, 1
  %v3060 = vmax.f32 %v3058, %v3059
  %v3061 = vsel %vm1499, %v1236, -inf
  %v3062 = vrot.slane %v3061, 4
  %v3063 = vmax.f32 %v3061, %v3062
  %v3064 = vrot.slane %v3063, 2
  %v3065 = vmax.f32 %v3063, %v3064
  %v3066 = vrot.slane %v3065, 1
  %v3067 = vmax.f32 %v3065, %v3066
  %v3068 = vsel %vm1499, %v1237, -inf
  %v3069 = vrot.slane %v3068, 4
  %v3070 = vmax.f32 %v3068, %v3069
  %v3071 = vrot.slane %v3070, 2
  %v3072 = vmax.f32 %v3070, %v3071
  %v3073 = vrot.slane %v3072, 1
  %v3074 = vmax.f32 %v3072, %v3073
  %v3075 = vsel %vm1499, %v1238, -inf
  %v3076 = vrot.slane %v3075, 4
  %v3077 = vmax.f32 %v3075, %v3076
  %v3078 = vrot.slane %v3077, 2
  %v3079 = vmax.f32 %v3077, %v3078
  %v3080 = vrot.slane %v3079, 1
  %v3081 = vmax.f32 %v3079, %v3080
  %v3082 = vsel %vm1499, %v1239, -inf
  %v3083 = vrot.slane %v3082, 4
  %v3084 = vmax.f32 %v3082, %v3083
  %v3085 = vrot.slane %v3084, 2
  %v3086 = vmax.f32 %v3084, %v3085
  %v3087 = vrot.slane %v3086, 1
  %v3088 = vmax.f32 %v3086, %v3087
  %v3089 = vsel %vm1499, %v1240, -inf
  %v3090 = vrot.slane %v3089, 4
  %v3091 = vmax.f32 %v3089, %v3090
  %v3092 = vrot.slane %v3091, 2
  %v3093 = vmax.f32 %v3091, %v3092
  %v3094 = vrot.slane %v3093, 1
  %v3095 = vmax.f32 %v3093, %v3094
  %v3096 = vsel %vm1499, %v1241, -inf
  %v3097 = vrot.slane %v3096, 4
  %v3098 = vmax.f32 %v3096, %v3097
  %v3099 = vrot.slane %v3098, 2
  %v3100 = vmax.f32 %v3098, %v3099
  %v3101 = vrot.slane %v3100, 1
  %v3102 = vmax.f32 %v3100, %v3101
  %v3103 = vsel %vm1499, %v1242, -inf
  %v3104 = vrot.slane %v3103, 4
  %v3105 = vmax.f32 %v3103, %v3104
  %v3106 = vrot.slane %v3105, 2
  %v3107 = vmax.f32 %v3105, %v3106
  %v3108 = vrot.slane %v3107, 1
  %v3109 = vmax.f32 %v3107, %v3108
  %v3110 = vsel %vm1499, %v1243, -inf
  %v3111 = vrot.slane %v3110, 4
  %v3112 = vmax.f32 %v3110, %v3111
  %v3113 = vrot.slane %v3112, 2
  %v3114 = vmax.f32 %v3112, %v3113
  %v3115 = vrot.slane %v3114, 1
  %v3116 = vmax.f32 %v3114, %v3115
  %v3117 = vsel %vm1499, %v1244, -inf
  %v3118 = vrot.slane %v3117, 4
  %v3119 = vmax.f32 %v3117, %v3118
  %v3120 = vrot.slane %v3119, 2
  %v3121 = vmax.f32 %v3119, %v3120
  %v3122 = vrot.slane %v3121, 1
  %v3123 = vmax.f32 %v3121, %v3122
  %v3124 = vsel %vm1499, %v1245, -inf
  %v3125 = vrot.slane %v3124, 4
  %v3126 = vmax.f32 %v3124, %v3125
  %v3127 = vrot.slane %v3126, 2
  %v3128 = vmax.f32 %v3126, %v3127
  %v3129 = vrot.slane %v3128, 1
  %v3130 = vmax.f32 %v3128, %v3129
  %v3131 = vsel %vm1499, %v1246, -inf
  %v3132 = vrot.slane %v3131, 4
  %v3133 = vmax.f32 %v3131, %v3132
  %v3134 = vrot.slane %v3133, 2
  %v3135 = vmax.f32 %v3133, %v3134
  %v3136 = vrot.slane %v3135, 1
  %v3137 = vmax.f32 %v3135, %v3136
  %v3138 = vsel %vm1499, %v1247, -inf
  %v3139 = vrot.slane %v3138, 4
  %v3140 = vmax.f32 %v3138, %v3139
  %v3141 = vrot.slane %v3140, 2
  %v3142 = vmax.f32 %v3140, %v3141
  %v3143 = vrot.slane %v3142, 1
  %v3144 = vmax.f32 %v3142, %v3143
  %v3145 = vsel %vm1499, %v1248, -inf
  %v3146 = vrot.slane %v3145, 4
  %v3147 = vmax.f32 %v3145, %v3146
  %v3148 = vrot.slane %v3147, 2
  %v3149 = vmax.f32 %v3147, %v3148
  %v3150 = vrot.slane %v3149, 1
  %v3151 = vmax.f32 %v3149, %v3150
  %v3152 = vsel %vm1499, %v1249, -inf
  %v3153 = vrot.slane %v3152, 4
  %v3154 = vmax.f32 %v3152, %v3153
  %v3155 = vrot.slane %v3154, 2
  %v3156 = vmax.f32 %v3154, %v3155
  %v3157 = vrot.slane %v3156, 1
  %v3158 = vmax.f32 %v3156, %v3157
  %v3159 = vsel %vm1499, %v1250, -inf
  %v3160 = vrot.slane %v3159, 4
  %v3161 = vmax.f32 %v3159, %v3160
  %v3162 = vrot.slane %v3161, 2
  %v3163 = vmax.f32 %v3161, %v3162
  %v3164 = vrot.slane %v3163, 1
  %v3165 = vmax.f32 %v3163, %v3164
  %v3166 = vsel %vm1499, %v1251, -inf
  %v3167 = vrot.slane %v3166, 4
  %v3168 = vmax.f32 %v3166, %v3167
  %v3169 = vrot.slane %v3168, 2
  %v3170 = vmax.f32 %v3168, %v3169
  %v3171 = vrot.slane %v3170, 1
  %v3172 = vmax.f32 %v3170, %v3171
  %v3173 = vsel %vm1499, %v1252, -inf
  %v3174 = vrot.slane %v3173, 4
  %v3175 = vmax.f32 %v3173, %v3174
  %v3176 = vrot.slane %v3175, 2
  %v3177 = vmax.f32 %v3175, %v3176
  %v3178 = vrot.slane %v3177, 1
  %v3179 = vmax.f32 %v3177, %v3178
  %v3180 = vsel %vm1499, %v1253, -inf
  %v3181 = vrot.slane %v3180, 4
  %v3182 = vmax.f32 %v3180, %v3181
  %v3183 = vrot.slane %v3182, 2
  %v3184 = vmax.f32 %v3182, %v3183
  %v3185 = vrot.slane %v3184, 1
  %v3186 = vmax.f32 %v3184, %v3185
  %v3187 = vsel %vm1499, %v1254, -inf
  %v3188 = vrot.slane %v3187, 4
  %v3189 = vmax.f32 %v3187, %v3188
  %v3190 = vrot.slane %v3189, 2
  %v3191 = vmax.f32 %v3189, %v3190
  %v3192 = vrot.slane %v3191, 1
  %v3193 = vmax.f32 %v3191, %v3192
  %v3194 = vsel %vm1499, %v1255, -inf
  %v3195 = vrot.slane %v3194, 4
  %v3196 = vmax.f32 %v3194, %v3195
  %v3197 = vrot.slane %v3196, 2
  %v3198 = vmax.f32 %v3196, %v3197
  %v3199 = vrot.slane %v3198, 1
  %v3200 = vmax.f32 %v3198, %v3199
  %v3201 = vsel %vm1499, %v1256, -inf
  %v3202 = vrot.slane %v3201, 4
  %v3203 = vmax.f32 %v3201, %v3202
  %v3204 = vrot.slane %v3203, 2
  %v3205 = vmax.f32 %v3203, %v3204
  %v3206 = vrot.slane %v3205, 1
  %v3207 = vmax.f32 %v3205, %v3206
  %v3208 = vsel %vm1499, %v1257, -inf
  %v3209 = vrot.slane %v3208, 4
  %v3210 = vmax.f32 %v3208, %v3209
  %v3211 = vrot.slane %v3210, 2
  %v3212 = vmax.f32 %v3210, %v3211
  %v3213 = vrot.slane %v3212, 1
  %v3214 = vmax.f32 %v3212, %v3213
  %v3215 = vsel %vm1499, %v1258, -inf
  %v3216 = vrot.slane %v3215, 4
  %v3217 = vmax.f32 %v3215, %v3216
  %v3218 = vrot.slane %v3217, 2
  %v3219 = vmax.f32 %v3217, %v3218
  %v3220 = vrot.slane %v3219, 1
  %v3221 = vmax.f32 %v3219, %v3220
  %v3222 = vsel %vm1499, %v1259, -inf
  %v3223 = vrot.slane %v3222, 4
  %v3224 = vmax.f32 %v3222, %v3223
  %v3225 = vrot.slane %v3224, 2
  %v3226 = vmax.f32 %v3224, %v3225
  %v3227 = vrot.slane %v3226, 1
  %v3228 = vmax.f32 %v3226, %v3227
  %v3229 = vsel %vm1499, %v1260, -inf
  %v3230 = vrot.slane %v3229, 4
  %v3231 = vmax.f32 %v3229, %v3230
  %v3232 = vrot.slane %v3231, 2
  %v3233 = vmax.f32 %v3231, %v3232
  %v3234 = vrot.slane %v3233, 1
  %v3235 = vmax.f32 %v3233, %v3234
  %v3236 = vsel %vm1499, %v1261, -inf
  %v3237 = vrot.slane %v3236, 4
  %v3238 = vmax.f32 %v3236, %v3237
  %v3239 = vrot.slane %v3238, 2
  %v3240 = vmax.f32 %v3238, %v3239
  %v3241 = vrot.slane %v3240, 1
  %v3242 = vmax.f32 %v3240, %v3241
  %v3243 = vsel %vm1499, %v1262, -inf
  %v3244 = vrot.slane %v3243, 4
  %v3245 = vmax.f32 %v3243, %v3244
  %v3246 = vrot.slane %v3245, 2
  %v3247 = vmax.f32 %v3245, %v3246
  %v3248 = vrot.slane %v3247, 1
  %v3249 = vmax.f32 %v3247, %v3248
  %v3250 = vsel %vm1499, %v1263, -inf
  %v3251 = vrot.slane %v3250, 4
  %v3252 = vmax.f32 %v3250, %v3251
  %v3253 = vrot.slane %v3252, 2
  %v3254 = vmax.f32 %v3252, %v3253
  %v3255 = vrot.slane %v3254, 1
  %v3256 = vmax.f32 %v3254, %v3255
  %v3257 = vsel %vm1499, %v1264, -inf
  %v3258 = vrot.slane %v3257, 4
  %v3259 = vmax.f32 %v3257, %v3258
  %v3260 = vrot.slane %v3259, 2
  %v3261 = vmax.f32 %v3259, %v3260
  %v3262 = vrot.slane %v3261, 1
  %v3263 = vmax.f32 %v3261, %v3262
  %v3264 = vsel %vm1499, %v1265, -inf
  %v3265 = vrot.slane %v3264, 4
  %v3266 = vmax.f32 %v3264, %v3265
  %v3267 = vrot.slane %v3266, 2
  %v3268 = vmax.f32 %v3266, %v3267
  %v3269 = vrot.slane %v3268, 1
  %v3270 = vmax.f32 %v3268, %v3269
  %v3271 = vsel %vm1499, %v1266, -inf
  %v3272 = vrot.slane %v3271, 4
  %v3273 = vmax.f32 %v3271, %v3272
  %v3274 = vrot.slane %v3273, 2
  %v3275 = vmax.f32 %v3273, %v3274
  %v3276 = vrot.slane %v3275, 1
  %v3277 = vmax.f32 %v3275, %v3276
  %v3278 = vsel %vm1499, %v1267, -inf
  %v3279 = vrot.slane %v3278, 4
  %v3280 = vmax.f32 %v3278, %v3279
  %v3281 = vrot.slane %v3280, 2
  %v3282 = vmax.f32 %v3280, %v3281
  %v3283 = vrot.slane %v3282, 1
  %v3284 = vmax.f32 %v3282, %v3283
  %v3285 = vsel %vm1499, %v1268, -inf
  %v3286 = vrot.slane %v3285, 4
  %v3287 = vmax.f32 %v3285, %v3286
  %v3288 = vrot.slane %v3287, 2
  %v3289 = vmax.f32 %v3287, %v3288
  %v3290 = vrot.slane %v3289, 1
  %v3291 = vmax.f32 %v3289, %v3290
  %v3292 = vsel %vm1499, %v1269, -inf
  %v3293 = vrot.slane %v3292, 4
  %v3294 = vmax.f32 %v3292, %v3293
  %v3295 = vrot.slane %v3294, 2
  %v3296 = vmax.f32 %v3294, %v3295
  %v3297 = vrot.slane %v3296, 1
  %v3298 = vmax.f32 %v3296, %v3297
  %v3299 = vsel %vm1499, %v1270, -inf
  %v3300 = vrot.slane %v3299, 4
  %v3301 = vmax.f32 %v3299, %v3300
  %v3302 = vrot.slane %v3301, 2
  %v3303 = vmax.f32 %v3301, %v3302
  %v3304 = vrot.slane %v3303, 1
  %v3305 = vmax.f32 %v3303, %v3304
  %v3306 = vsel %vm1499, %v1271, -inf
  %v3307 = vrot.slane %v3306, 4
  %v3308 = vmax.f32 %v3306, %v3307
  %v3309 = vrot.slane %v3308, 2
  %v3310 = vmax.f32 %v3308, %v3309
  %v3311 = vrot.slane %v3310, 1
  %v3312 = vmax.f32 %v3310, %v3311
  %v3313 = vsel %vm1499, %v1272, -inf
  %v3314 = vrot.slane %v3313, 4
  %v3315 = vmax.f32 %v3313, %v3314
  %v3316 = vrot.slane %v3315, 2
  %v3317 = vmax.f32 %v3315, %v3316
  %v3318 = vrot.slane %v3317, 1
  %v3319 = vmax.f32 %v3317, %v3318
  %v3320 = vsel %vm1499, %v1273, -inf
  %v3321 = vrot.slane %v3320, 4
  %v3322 = vmax.f32 %v3320, %v3321
  %v3323 = vrot.slane %v3322, 2
  %v3324 = vmax.f32 %v3322, %v3323
  %v3325 = vrot.slane %v3324, 1
  %v3326 = vmax.f32 %v3324, %v3325
  %v3327 = vsel %vm1499, %v1274, -inf
  %v3328 = vrot.slane %v3327, 4
  %v3329 = vmax.f32 %v3327, %v3328
  %v3330 = vrot.slane %v3329, 2
  %v3331 = vmax.f32 %v3329, %v3330
  %v3332 = vrot.slane %v3331, 1
  %v3333 = vmax.f32 %v3331, %v3332
  %v3334 = vsel %vm1499, %v1275, -inf
  %v3335 = vrot.slane %v3334, 4
  %v3336 = vmax.f32 %v3334, %v3335
  %v3337 = vrot.slane %v3336, 2
  %v3338 = vmax.f32 %v3336, %v3337
  %v3339 = vrot.slane %v3338, 1
  %v3340 = vmax.f32 %v3338, %v3339
  %v3341 = vsel %vm1499, %v1276, -inf
  %v3342 = vrot.slane %v3341, 4
  %v3343 = vmax.f32 %v3341, %v3342
  %v3344 = vrot.slane %v3343, 2
  %v3345 = vmax.f32 %v3343, %v3344
  %v3346 = vrot.slane %v3345, 1
  %v3347 = vmax.f32 %v3345, %v3346
  %v3348 = vsel %vm1499, %v1277, -inf
  %v3349 = vrot.slane %v3348, 4
  %v3350 = vmax.f32 %v3348, %v3349
  %v3351 = vrot.slane %v3350, 2
  %v3352 = vmax.f32 %v3350, %v3351
  %v3353 = vrot.slane %v3352, 1
  %v3354 = vmax.f32 %v3352, %v3353
  %v3355 = vsel %vm1499, %v1278, -inf
  %v3356 = vrot.slane %v3355, 4
  %v3357 = vmax.f32 %v3355, %v3356
  %v3358 = vrot.slane %v3357, 2
  %v3359 = vmax.f32 %v3357, %v3358
  %v3360 = vrot.slane %v3359, 1
  %v3361 = vmax.f32 %v3359, %v3360
  %v3362 = vsel %vm1499, %v1279, -inf
  %v3363 = vrot.slane %v3362, 4
  %v3364 = vmax.f32 %v3362, %v3363
  %v3365 = vrot.slane %v3364, 2
  %v3366 = vmax.f32 %v3364, %v3365
  %v3367 = vrot.slane %v3366, 1
  %v3368 = vmax.f32 %v3366, %v3367
  %v3369 = vsel %vm1499, %v1280, -inf
  %v3370 = vrot.slane %v3369, 4
  %v3371 = vmax.f32 %v3369, %v3370
  %v3372 = vrot.slane %v3371, 2
  %v3373 = vmax.f32 %v3371, %v3372
  %v3374 = vrot.slane %v3373, 1
  %v3375 = vmax.f32 %v3373, %v3374
  %v3376 = vsel %vm1499, %v1281, -inf
  %v3377 = vrot.slane %v3376, 4
  %v3378 = vmax.f32 %v3376, %v3377
  %v3379 = vrot.slane %v3378, 2
  %v3380 = vmax.f32 %v3378, %v3379
  %v3381 = vrot.slane %v3380, 1
  %v3382 = vmax.f32 %v3380, %v3381
  %v3383 = vsel %vm1499, %v1282, -inf
  %v3384 = vrot.slane %v3383, 4
  %v3385 = vmax.f32 %v3383, %v3384
  %v3386 = vrot.slane %v3385, 2
  %v3387 = vmax.f32 %v3385, %v3386
  %v3388 = vrot.slane %v3387, 1
  %v3389 = vmax.f32 %v3387, %v3388
  %v3390 = vsel %vm1499, %v1283, -inf
  %v3391 = vrot.slane %v3390, 4
  %v3392 = vmax.f32 %v3390, %v3391
  %v3393 = vrot.slane %v3392, 2
  %v3394 = vmax.f32 %v3392, %v3393
  %v3395 = vrot.slane %v3394, 1
  %v3396 = vmax.f32 %v3394, %v3395
  %v3397 = vsel %vm1499, %v1284, -inf
  %v3398 = vrot.slane %v3397, 4
  %v3399 = vmax.f32 %v3397, %v3398
  %v3400 = vrot.slane %v3399, 2
  %v3401 = vmax.f32 %v3399, %v3400
  %v3402 = vrot.slane %v3401, 1
  %v3403 = vmax.f32 %v3401, %v3402
  %v3404 = vsel %vm1499, %v1285, -inf
  %v3405 = vrot.slane %v3404, 4
  %v3406 = vmax.f32 %v3404, %v3405
  %v3407 = vrot.slane %v3406, 2
  %v3408 = vmax.f32 %v3406, %v3407
  %v3409 = vrot.slane %v3408, 1
  %v3410 = vmax.f32 %v3408, %v3409
  %v3411 = vsel %vm1499, %v1286, -inf
  %v3412 = vrot.slane %v3411, 4
  %v3413 = vmax.f32 %v3411, %v3412
  %v3414 = vrot.slane %v3413, 2
  %v3415 = vmax.f32 %v3413, %v3414
  %v3416 = vrot.slane %v3415, 1
  %v3417 = vmax.f32 %v3415, %v3416
  %v3418 = vsel %vm1499, %v1287, -inf
  %v3419 = vrot.slane %v3418, 4
  %v3420 = vmax.f32 %v3418, %v3419
  %v3421 = vrot.slane %v3420, 2
  %v3422 = vmax.f32 %v3420, %v3421
  %v3423 = vrot.slane %v3422, 1
  %v3424 = vmax.f32 %v3422, %v3423
  %v3425 = vsel %vm1499, %v1288, -inf
  %v3426 = vrot.slane %v3425, 4
  %v3427 = vmax.f32 %v3425, %v3426
  %v3428 = vrot.slane %v3427, 2
  %v3429 = vmax.f32 %v3427, %v3428
  %v3430 = vrot.slane %v3429, 1
  %v3431 = vmax.f32 %v3429, %v3430
  %v3432 = vsel %vm1499, %v1289, -inf
  %v3433 = vrot.slane %v3432, 4
  %v3434 = vmax.f32 %v3432, %v3433
  %v3435 = vrot.slane %v3434, 2
  %v3436 = vmax.f32 %v3434, %v3435
  %v3437 = vrot.slane %v3436, 1
  %v3438 = vmax.f32 %v3436, %v3437
  %v3439 = vsel %vm1499, %v1290, -inf
  %v3440 = vrot.slane %v3439, 4
  %v3441 = vmax.f32 %v3439, %v3440
  %v3442 = vrot.slane %v3441, 2
  %v3443 = vmax.f32 %v3441, %v3442
  %v3444 = vrot.slane %v3443, 1
  %v3445 = vmax.f32 %v3443, %v3444
  %v3446 = vsel %vm1499, %v1291, -inf
  %v3447 = vrot.slane %v3446, 4
  %v3448 = vmax.f32 %v3446, %v3447
  %v3449 = vrot.slane %v3448, 2
  %v3450 = vmax.f32 %v3448, %v3449
  %v3451 = vrot.slane %v3450, 1
  %v3452 = vmax.f32 %v3450, %v3451
  %v3453 = vsel %vm1499, %v1292, -inf
  %v3454 = vrot.slane %v3453, 4
  %v3455 = vmax.f32 %v3453, %v3454
  %v3456 = vrot.slane %v3455, 2
  %v3457 = vmax.f32 %v3455, %v3456
  %v3458 = vrot.slane %v3457, 1
  %v3459 = vmax.f32 %v3457, %v3458
  %v3460 = vsel %vm1499, %v1293, -inf
  %v3461 = vrot.slane %v3460, 4
  %v3462 = vmax.f32 %v3460, %v3461
  %v3463 = vrot.slane %v3462, 2
  %v3464 = vmax.f32 %v3462, %v3463
  %v3465 = vrot.slane %v3464, 1
  %v3466 = vmax.f32 %v3464, %v3465
  %v3467 = vsel %vm1499, %v1294, -inf
  %v3468 = vrot.slane %v3467, 4
  %v3469 = vmax.f32 %v3467, %v3468
  %v3470 = vrot.slane %v3469, 2
  %v3471 = vmax.f32 %v3469, %v3470
  %v3472 = vrot.slane %v3471, 1
  %v3473 = vmax.f32 %v3471, %v3472
  %v3474 = vsel %vm1499, %v1295, -inf
  %v3475 = vrot.slane %v3474, 4
  %v3476 = vmax.f32 %v3474, %v3475
  %v3477 = vrot.slane %v3476, 2
  %v3478 = vmax.f32 %v3476, %v3477
  %v3479 = vrot.slane %v3478, 1
  %v3480 = vmax.f32 %v3478, %v3479
  %v3481 = vsel %vm1499, %v1296, -inf
  %v3482 = vrot.slane %v3481, 4
  %v3483 = vmax.f32 %v3481, %v3482
  %v3484 = vrot.slane %v3483, 2
  %v3485 = vmax.f32 %v3483, %v3484
  %v3486 = vrot.slane %v3485, 1
  %v3487 = vmax.f32 %v3485, %v3486
  %v3488 = vsel %vm1499, %v1297, -inf
  %v3489 = vrot.slane %v3488, 4
  %v3490 = vmax.f32 %v3488, %v3489
  %v3491 = vrot.slane %v3490, 2
  %v3492 = vmax.f32 %v3490, %v3491
  %v3493 = vrot.slane %v3492, 1
  %v3494 = vmax.f32 %v3492, %v3493
  %v3495 = vsel %vm1499, %v1298, -inf
  %v3496 = vrot.slane %v3495, 4
  %v3497 = vmax.f32 %v3495, %v3496
  %v3498 = vrot.slane %v3497, 2
  %v3499 = vmax.f32 %v3497, %v3498
  %v3500 = vrot.slane %v3499, 1
  %v3501 = vmax.f32 %v3499, %v3500
  %v3502 = vsel %vm1499, %v1299, -inf
  %v3503 = vrot.slane %v3502, 4
  %v3504 = vmax.f32 %v3502, %v3503
  %v3505 = vrot.slane %v3504, 2
  %v3506 = vmax.f32 %v3504, %v3505
  %v3507 = vrot.slane %v3506, 1
  %v3508 = vmax.f32 %v3506, %v3507
  %v3509 = vsel %vm1499, %v1300, -inf
  %v3510 = vrot.slane %v3509, 4
  %v3511 = vmax.f32 %v3509, %v3510
  %v3512 = vrot.slane %v3511, 2
  %v3513 = vmax.f32 %v3511, %v3512
  %v3514 = vrot.slane %v3513, 1
  %v3515 = vmax.f32 %v3513, %v3514
  %v3516 = vsel %vm1499, %v1301, -inf
  %v3517 = vrot.slane %v3516, 4
  %v3518 = vmax.f32 %v3516, %v3517
  %v3519 = vrot.slane %v3518, 2
  %v3520 = vmax.f32 %v3518, %v3519
  %v3521 = vrot.slane %v3520, 1
  %v3522 = vmax.f32 %v3520, %v3521
  %v3523 = vsel %vm1499, %v1302, -inf
  %v3524 = vrot.slane %v3523, 4
  %v3525 = vmax.f32 %v3523, %v3524
  %v3526 = vrot.slane %v3525, 2
  %v3527 = vmax.f32 %v3525, %v3526
  %v3528 = vrot.slane %v3527, 1
  %v3529 = vmax.f32 %v3527, %v3528
  %v3530 = vsel %vm1499, %v1303, -inf
  %v3531 = vrot.slane %v3530, 4
  %v3532 = vmax.f32 %v3530, %v3531
  %v3533 = vrot.slane %v3532, 2
  %v3534 = vmax.f32 %v3532, %v3533
  %v3535 = vrot.slane %v3534, 1
  %v3536 = vmax.f32 %v3534, %v3535
  %v3537 = vsel %vm1499, %v1304, -inf
  %v3538 = vrot.slane %v3537, 4
  %v3539 = vmax.f32 %v3537, %v3538
  %v3540 = vrot.slane %v3539, 2
  %v3541 = vmax.f32 %v3539, %v3540
  %v3542 = vrot.slane %v3541, 1
  %v3543 = vmax.f32 %v3541, %v3542
  %v3544 = vsel %vm1499, %v1305, -inf
  %v3545 = vrot.slane %v3544, 4
  %v3546 = vmax.f32 %v3544, %v3545
  %v3547 = vrot.slane %v3546, 2
  %v3548 = vmax.f32 %v3546, %v3547
  %v3549 = vrot.slane %v3548, 1
  %v3550 = vmax.f32 %v3548, %v3549
  %v3551 = vsel %vm1499, %v1306, -inf
  %v3552 = vrot.slane %v3551, 4
  %v3553 = vmax.f32 %v3551, %v3552
  %v3554 = vrot.slane %v3553, 2
  %v3555 = vmax.f32 %v3553, %v3554
  %v3556 = vrot.slane %v3555, 1
  %v3557 = vmax.f32 %v3555, %v3556
  %v3558 = vsel %vm1499, %v1307, -inf
  %v3559 = vrot.slane %v3558, 4
  %v3560 = vmax.f32 %v3558, %v3559
  %v3561 = vrot.slane %v3560, 2
  %v3562 = vmax.f32 %v3560, %v3561
  %v3563 = vrot.slane %v3562, 1
  %v3564 = vmax.f32 %v3562, %v3563
  %v3565 = vsel %vm1499, %v1308, -inf
  %v3566 = vrot.slane %v3565, 4
  %v3567 = vmax.f32 %v3565, %v3566
  %v3568 = vrot.slane %v3567, 2
  %v3569 = vmax.f32 %v3567, %v3568
  %v3570 = vrot.slane %v3569, 1
  %v3571 = vmax.f32 %v3569, %v3570
  %v3572 = vsel %vm1499, %v1309, -inf
  %v3573 = vrot.slane %v3572, 4
  %v3574 = vmax.f32 %v3572, %v3573
  %v3575 = vrot.slane %v3574, 2
  %v3576 = vmax.f32 %v3574, %v3575
  %v3577 = vrot.slane %v3576, 1
  %v3578 = vmax.f32 %v3576, %v3577
  %v3579 = vsel %vm1499, %v1310, -inf
  %v3580 = vrot.slane %v3579, 4
  %v3581 = vmax.f32 %v3579, %v3580
  %v3582 = vrot.slane %v3581, 2
  %v3583 = vmax.f32 %v3581, %v3582
  %v3584 = vrot.slane %v3583, 1
  %v3585 = vmax.f32 %v3583, %v3584
  %v3586 = vsel %vm1499, %v1311, -inf
  %v3587 = vrot.slane %v3586, 4
  %v3588 = vmax.f32 %v3586, %v3587
  %v3589 = vrot.slane %v3588, 2
  %v3590 = vmax.f32 %v3588, %v3589
  %v3591 = vrot.slane %v3590, 1
  %v3592 = vmax.f32 %v3590, %v3591
  %v3593 = vsel %vm1499, %v1312, -inf
  %v3594 = vrot.slane %v3593, 4
  %v3595 = vmax.f32 %v3593, %v3594
  %v3596 = vrot.slane %v3595, 2
  %v3597 = vmax.f32 %v3595, %v3596
  %v3598 = vrot.slane %v3597, 1
  %v3599 = vmax.f32 %v3597, %v3598
  %v3600 = vsel %vm1499, %v1313, -inf
  %v3601 = vrot.slane %v3600, 4
  %v3602 = vmax.f32 %v3600, %v3601
  %v3603 = vrot.slane %v3602, 2
  %v3604 = vmax.f32 %v3602, %v3603
  %v3605 = vrot.slane %v3604, 1
  %v3606 = vmax.f32 %v3604, %v3605
  %v3607 = vsel %vm1499, %v1314, -inf
  %v3608 = vrot.slane %v3607, 4
  %v3609 = vmax.f32 %v3607, %v3608
  %v3610 = vrot.slane %v3609, 2
  %v3611 = vmax.f32 %v3609, %v3610
  %v3612 = vrot.slane %v3611, 1
  %v3613 = vmax.f32 %v3611, %v3612
  %v3614 = vsel %vm1499, %v1315, -inf
  %v3615 = vrot.slane %v3614, 4
  %v3616 = vmax.f32 %v3614, %v3615
  %v3617 = vrot.slane %v3616, 2
  %v3618 = vmax.f32 %v3616, %v3617
  %v3619 = vrot.slane %v3618, 1
  %v3620 = vmax.f32 %v3618, %v3619
  %v3621 = vsel %vm1499, %v1316, -inf
  %v3622 = vrot.slane %v3621, 4
  %v3623 = vmax.f32 %v3621, %v3622
  %v3624 = vrot.slane %v3623, 2
  %v3625 = vmax.f32 %v3623, %v3624
  %v3626 = vrot.slane %v3625, 1
  %v3627 = vmax.f32 %v3625, %v3626
  %v3628 = vsel %vm1499, %v1317, -inf
  %v3629 = vrot.slane %v3628, 4
  %v3630 = vmax.f32 %v3628, %v3629
  %v3631 = vrot.slane %v3630, 2
  %v3632 = vmax.f32 %v3630, %v3631
  %v3633 = vrot.slane %v3632, 1
  %v3634 = vmax.f32 %v3632, %v3633
  %v3635 = vsel %vm1499, %v1318, -inf
  %v3636 = vrot.slane %v3635, 4
  %v3637 = vmax.f32 %v3635, %v3636
  %v3638 = vrot.slane %v3637, 2
  %v3639 = vmax.f32 %v3637, %v3638
  %v3640 = vrot.slane %v3639, 1
  %v3641 = vmax.f32 %v3639, %v3640
  %v3642 = vsel %vm1499, %v1319, -inf
  %v3643 = vrot.slane %v3642, 4
  %v3644 = vmax.f32 %v3642, %v3643
  %v3645 = vrot.slane %v3644, 2
  %v3646 = vmax.f32 %v3644, %v3645
  %v3647 = vrot.slane %v3646, 1
  %v3648 = vmax.f32 %v3646, %v3647
  %v3649 = vsel %vm1499, %v1320, -inf
  %v3650 = vrot.slane %v3649, 4
  %v3651 = vmax.f32 %v3649, %v3650
  %v3652 = vrot.slane %v3651, 2
  %v3653 = vmax.f32 %v3651, %v3652
  %v3654 = vrot.slane %v3653, 1
  %v3655 = vmax.f32 %v3653, %v3654
  %v3656 = vsel %vm1499, %v1321, -inf
  %v3657 = vrot.slane %v3656, 4
  %v3658 = vmax.f32 %v3656, %v3657
  %v3659 = vrot.slane %v3658, 2
  %v3660 = vmax.f32 %v3658, %v3659
  %v3661 = vrot.slane %v3660, 1
  %v3662 = vmax.f32 %v3660, %v3661
  %v3663 = vsel %vm1499, %v1322, -inf
  %v3664 = vrot.slane %v3663, 4
  %v3665 = vmax.f32 %v3663, %v3664
  %v3666 = vrot.slane %v3665, 2
  %v3667 = vmax.f32 %v3665, %v3666
  %v3668 = vrot.slane %v3667, 1
  %v3669 = vmax.f32 %v3667, %v3668
  %v3670 = vsel %vm1499, %v1323, -inf
  %v3671 = vrot.slane %v3670, 4
  %v3672 = vmax.f32 %v3670, %v3671
  %v3673 = vrot.slane %v3672, 2
  %v3674 = vmax.f32 %v3672, %v3673
  %v3675 = vrot.slane %v3674, 1
  %v3676 = vmax.f32 %v3674, %v3675
  %v3677 = vsel %vm1499, %v1324, -inf
  %v3678 = vrot.slane %v3677, 4
  %v3679 = vmax.f32 %v3677, %v3678
  %v3680 = vrot.slane %v3679, 2
  %v3681 = vmax.f32 %v3679, %v3680
  %v3682 = vrot.slane %v3681, 1
  %v3683 = vmax.f32 %v3681, %v3682
  %v3684 = vsel %vm1499, %v1325, -inf
  %v3685 = vrot.slane %v3684, 4
  %v3686 = vmax.f32 %v3684, %v3685
  %v3687 = vrot.slane %v3686, 2
  %v3688 = vmax.f32 %v3686, %v3687
  %v3689 = vrot.slane %v3688, 1
  %v3690 = vmax.f32 %v3688, %v3689
  %v3691 = vsel %vm1499, %v1326, -inf
  %v3692 = vrot.slane %v3691, 4
  %v3693 = vmax.f32 %v3691, %v3692
  %v3694 = vrot.slane %v3693, 2
  %v3695 = vmax.f32 %v3693, %v3694
  %v3696 = vrot.slane %v3695, 1
  %v3697 = vmax.f32 %v3695, %v3696
  %v3698 = vsel %vm1499, %v1327, -inf
  %v3699 = vrot.slane %v3698, 4
  %v3700 = vmax.f32 %v3698, %v3699
  %v3701 = vrot.slane %v3700, 2
  %v3702 = vmax.f32 %v3700, %v3701
  %v3703 = vrot.slane %v3702, 1
  %v3704 = vmax.f32 %v3702, %v3703
  %v3705 = vsel %vm1499, %v1328, -inf
  %v3706 = vrot.slane %v3705, 4
  %v3707 = vmax.f32 %v3705, %v3706
  %v3708 = vrot.slane %v3707, 2
  %v3709 = vmax.f32 %v3707, %v3708
  %v3710 = vrot.slane %v3709, 1
  %v3711 = vmax.f32 %v3709, %v3710
  %v3712 = vsel %vm1499, %v1329, -inf
  %v3713 = vrot.slane %v3712, 4
  %v3714 = vmax.f32 %v3712, %v3713
  %v3715 = vrot.slane %v3714, 2
  %v3716 = vmax.f32 %v3714, %v3715
  %v3717 = vrot.slane %v3716, 1
  %v3718 = vmax.f32 %v3716, %v3717
  %v3719 = vsel %vm1499, %v1330, -inf
  %v3720 = vrot.slane %v3719, 4
  %v3721 = vmax.f32 %v3719, %v3720
  %v3722 = vrot.slane %v3721, 2
  %v3723 = vmax.f32 %v3721, %v3722
  %v3724 = vrot.slane %v3723, 1
  %v3725 = vmax.f32 %v3723, %v3724
  %v3726 = vsel %vm1499, %v1331, -inf
  %v3727 = vrot.slane %v3726, 4
  %v3728 = vmax.f32 %v3726, %v3727
  %v3729 = vrot.slane %v3728, 2
  %v3730 = vmax.f32 %v3728, %v3729
  %v3731 = vrot.slane %v3730, 1
  %v3732 = vmax.f32 %v3730, %v3731
  %v3733 = vsel %vm1499, %v1332, -inf
  %v3734 = vrot.slane %v3733, 4
  %v3735 = vmax.f32 %v3733, %v3734
  %v3736 = vrot.slane %v3735, 2
  %v3737 = vmax.f32 %v3735, %v3736
  %v3738 = vrot.slane %v3737, 1
  %v3739 = vmax.f32 %v3737, %v3738
  %v3740 = vsel %vm1499, %v1333, -inf
  %v3741 = vrot.slane %v3740, 4
  %v3742 = vmax.f32 %v3740, %v3741
  %v3743 = vrot.slane %v3742, 2
  %v3744 = vmax.f32 %v3742, %v3743
  %v3745 = vrot.slane %v3744, 1
  %v3746 = vmax.f32 %v3744, %v3745
  %v3747 = vsel %vm1499, %v1334, -inf
  %v3748 = vrot.slane %v3747, 4
  %v3749 = vmax.f32 %v3747, %v3748
  %v3750 = vrot.slane %v3749, 2
  %v3751 = vmax.f32 %v3749, %v3750
  %v3752 = vrot.slane %v3751, 1
  %v3753 = vmax.f32 %v3751, %v3752
  %v3754 = vsel %vm1499, %v1335, -inf
  %v3755 = vrot.slane %v3754, 4
  %v3756 = vmax.f32 %v3754, %v3755
  %v3757 = vrot.slane %v3756, 2
  %v3758 = vmax.f32 %v3756, %v3757
  %v3759 = vrot.slane %v3758, 1
  %v3760 = vmax.f32 %v3758, %v3759
  %v3761 = vsel %vm1499, %v1336, -inf
  %v3762 = vrot.slane %v3761, 4
  %v3763 = vmax.f32 %v3761, %v3762
  %v3764 = vrot.slane %v3763, 2
  %v3765 = vmax.f32 %v3763, %v3764
  %v3766 = vrot.slane %v3765, 1
  %v3767 = vmax.f32 %v3765, %v3766
  %v3768 = vsel %vm1499, %v1337, -inf
  %v3769 = vrot.slane %v3768, 4
  %v3770 = vmax.f32 %v3768, %v3769
  %v3771 = vrot.slane %v3770, 2
  %v3772 = vmax.f32 %v3770, %v3771
  %v3773 = vrot.slane %v3772, 1
  %v3774 = vmax.f32 %v3772, %v3773
  %v3775 = vsel %vm1499, %v1338, -inf
  %v3776 = vrot.slane %v3775, 4
  %v3777 = vmax.f32 %v3775, %v3776
  %v3778 = vrot.slane %v3777, 2
  %v3779 = vmax.f32 %v3777, %v3778
  %v3780 = vrot.slane %v3779, 1
  %v3781 = vmax.f32 %v3779, %v3780
  %v3782 = vsel %vm1499, %v1339, -inf
  %v3783 = vrot.slane %v3782, 4
  %v3784 = vmax.f32 %v3782, %v3783
  %v3785 = vrot.slane %v3784, 2
  %v3786 = vmax.f32 %v3784, %v3785
  %v3787 = vrot.slane %v3786, 1
  %v3788 = vmax.f32 %v3786, %v3787
  %v3789 = vsel %vm1499, %v1340, -inf
  %v3790 = vrot.slane %v3789, 4
  %v3791 = vmax.f32 %v3789, %v3790
  %v3792 = vrot.slane %v3791, 2
  %v3793 = vmax.f32 %v3791, %v3792
  %v3794 = vrot.slane %v3793, 1
  %v3795 = vmax.f32 %v3793, %v3794
  %v3796 = vsel %vm1499, %v1341, -inf
  %v3797 = vrot.slane %v3796, 4
  %v3798 = vmax.f32 %v3796, %v3797
  %v3799 = vrot.slane %v3798, 2
  %v3800 = vmax.f32 %v3798, %v3799
  %v3801 = vrot.slane %v3800, 1
  %v3802 = vmax.f32 %v3800, %v3801
  %v3803 = vsel %vm1499, %v1342, -inf
  %v3804 = vrot.slane %v3803, 4
  %v3805 = vmax.f32 %v3803, %v3804
  %v3806 = vrot.slane %v3805, 2
  %v3807 = vmax.f32 %v3805, %v3806
  %v3808 = vrot.slane %v3807, 1
  %v3809 = vmax.f32 %v3807, %v3808
  %v3810 = vsel %vm1499, %v1343, -inf
  %v3811 = vrot.slane %v3810, 4
  %v3812 = vmax.f32 %v3810, %v3811
  %v3813 = vrot.slane %v3812, 2
  %v3814 = vmax.f32 %v3812, %v3813
  %v3815 = vrot.slane %v3814, 1
  %v3816 = vmax.f32 %v3814, %v3815
  %v3817 = vsel %vm1499, %v1344, -inf
  %v3818 = vrot.slane %v3817, 4
  %v3819 = vmax.f32 %v3817, %v3818
  %v3820 = vrot.slane %v3819, 2
  %v3821 = vmax.f32 %v3819, %v3820
  %v3822 = vrot.slane %v3821, 1
  %v3823 = vmax.f32 %v3821, %v3822
  %v3824 = vsel %vm1499, %v1345, -inf
  %v3825 = vrot.slane %v3824, 4
  %v3826 = vmax.f32 %v3824, %v3825
  %v3827 = vrot.slane %v3826, 2
  %v3828 = vmax.f32 %v3826, %v3827
  %v3829 = vrot.slane %v3828, 1
  %v3830 = vmax.f32 %v3828, %v3829
  %v3831 = vsel %vm1499, %v1346, -inf
  %v3832 = vrot.slane %v3831, 4
  %v3833 = vmax.f32 %v3831, %v3832
  %v3834 = vrot.slane %v3833, 2
  %v3835 = vmax.f32 %v3833, %v3834
  %v3836 = vrot.slane %v3835, 1
  %v3837 = vmax.f32 %v3835, %v3836
  %v3838 = vsel %vm1499, %v1347, -inf
  %v3839 = vrot.slane %v3838, 4
  %v3840 = vmax.f32 %v3838, %v3839
  %v3841 = vrot.slane %v3840, 2
  %v3842 = vmax.f32 %v3840, %v3841
  %v3843 = vrot.slane %v3842, 1
  %v3844 = vmax.f32 %v3842, %v3843
  %v3845 = vsel %vm1499, %v1348, -inf
  %v3846 = vrot.slane %v3845, 4
  %v3847 = vmax.f32 %v3845, %v3846
  %v3848 = vrot.slane %v3847, 2
  %v3849 = vmax.f32 %v3847, %v3848
  %v3850 = vrot.slane %v3849, 1
  %v3851 = vmax.f32 %v3849, %v3850
  %v3852 = vsel %vm1499, %v1349, -inf
  %v3853 = vrot.slane %v3852, 4
  %v3854 = vmax.f32 %v3852, %v3853
  %v3855 = vrot.slane %v3854, 2
  %v3856 = vmax.f32 %v3854, %v3855
  %v3857 = vrot.slane %v3856, 1
  %v3858 = vmax.f32 %v3856, %v3857
  %v3859 = vsel %vm1499, %v1350, -inf
  %v3860 = vrot.slane %v3859, 4
  %v3861 = vmax.f32 %v3859, %v3860
  %v3862 = vrot.slane %v3861, 2
  %v3863 = vmax.f32 %v3861, %v3862
  %v3864 = vrot.slane %v3863, 1
  %v3865 = vmax.f32 %v3863, %v3864
  %v3866 = vsel %vm1499, %v1351, -inf
  %v3867 = vrot.slane %v3866, 4
  %v3868 = vmax.f32 %v3866, %v3867
  %v3869 = vrot.slane %v3868, 2
  %v3870 = vmax.f32 %v3868, %v3869
  %v3871 = vrot.slane %v3870, 1
  %v3872 = vmax.f32 %v3870, %v3871
  %v3873 = vsel %vm1499, %v1352, -inf
  %v3874 = vrot.slane %v3873, 4
  %v3875 = vmax.f32 %v3873, %v3874
  %v3876 = vrot.slane %v3875, 2
  %v3877 = vmax.f32 %v3875, %v3876
  %v3878 = vrot.slane %v3877, 1
  %v3879 = vmax.f32 %v3877, %v3878
  %v3880 = vsel %vm1499, %v1353, -inf
  %v3881 = vrot.slane %v3880, 4
  %v3882 = vmax.f32 %v3880, %v3881
  %v3883 = vrot.slane %v3882, 2
  %v3884 = vmax.f32 %v3882, %v3883
  %v3885 = vrot.slane %v3884, 1
  %v3886 = vmax.f32 %v3884, %v3885
  %v3887 = vsel %vm1499, %v1354, -inf
  %v3888 = vrot.slane %v3887, 4
  %v3889 = vmax.f32 %v3887, %v3888
  %v3890 = vrot.slane %v3889, 2
  %v3891 = vmax.f32 %v3889, %v3890
  %v3892 = vrot.slane %v3891, 1
  %v3893 = vmax.f32 %v3891, %v3892
  %v3894 = vsel %vm1499, %v1355, -inf
  %v3895 = vrot.slane %v3894, 4
  %v3896 = vmax.f32 %v3894, %v3895
  %v3897 = vrot.slane %v3896, 2
  %v3898 = vmax.f32 %v3896, %v3897
  %v3899 = vrot.slane %v3898, 1
  %v3900 = vmax.f32 %v3898, %v3899
  %v3901 = vsel %vm1499, %v1356, -inf
  %v3902 = vrot.slane %v3901, 4
  %v3903 = vmax.f32 %v3901, %v3902
  %v3904 = vrot.slane %v3903, 2
  %v3905 = vmax.f32 %v3903, %v3904
  %v3906 = vrot.slane %v3905, 1
  %v3907 = vmax.f32 %v3905, %v3906
  %v3908 = vsel %vm1499, %v1357, -inf
  %v3909 = vrot.slane %v3908, 4
  %v3910 = vmax.f32 %v3908, %v3909
  %v3911 = vrot.slane %v3910, 2
  %v3912 = vmax.f32 %v3910, %v3911
  %v3913 = vrot.slane %v3912, 1
  %v3914 = vmax.f32 %v3912, %v3913
  %v3915 = vsel %vm1499, %v1358, -inf
  %v3916 = vrot.slane %v3915, 4
  %v3917 = vmax.f32 %v3915, %v3916
  %v3918 = vrot.slane %v3917, 2
  %v3919 = vmax.f32 %v3917, %v3918
  %v3920 = vrot.slane %v3919, 1
  %v3921 = vmax.f32 %v3919, %v3920
  %v3922 = vsel %vm1499, %v1359, -inf
  %v3923 = vrot.slane %v3922, 4
  %v3924 = vmax.f32 %v3922, %v3923
  %v3925 = vrot.slane %v3924, 2
  %v3926 = vmax.f32 %v3924, %v3925
  %v3927 = vrot.slane %v3926, 1
  %v3928 = vmax.f32 %v3926, %v3927
  %v3929 = vsel %vm1499, %v1360, -inf
  %v3930 = vrot.slane %v3929, 4
  %v3931 = vmax.f32 %v3929, %v3930
  %v3932 = vrot.slane %v3931, 2
  %v3933 = vmax.f32 %v3931, %v3932
  %v3934 = vrot.slane %v3933, 1
  %v3935 = vmax.f32 %v3933, %v3934
  %v3936 = vsel %vm1499, %v1361, -inf
  %v3937 = vrot.slane %v3936, 4
  %v3938 = vmax.f32 %v3936, %v3937
  %v3939 = vrot.slane %v3938, 2
  %v3940 = vmax.f32 %v3938, %v3939
  %v3941 = vrot.slane %v3940, 1
  %v3942 = vmax.f32 %v3940, %v3941
  %v3943 = vsel %vm1499, %v1362, -inf
  %v3944 = vrot.slane %v3943, 4
  %v3945 = vmax.f32 %v3943, %v3944
  %v3946 = vrot.slane %v3945, 2
  %v3947 = vmax.f32 %v3945, %v3946
  %v3948 = vrot.slane %v3947, 1
  %v3949 = vmax.f32 %v3947, %v3948
  %v3950 = vsel %vm1499, %v1363, -inf
  %v3951 = vrot.slane %v3950, 4
  %v3952 = vmax.f32 %v3950, %v3951
  %v3953 = vrot.slane %v3952, 2
  %v3954 = vmax.f32 %v3952, %v3953
  %v3955 = vrot.slane %v3954, 1
  %v3956 = vmax.f32 %v3954, %v3955
  %v3957 = vsel %vm1499, %v1364, -inf
  %v3958 = vrot.slane %v3957, 4
  %v3959 = vmax.f32 %v3957, %v3958
  %v3960 = vrot.slane %v3959, 2
  %v3961 = vmax.f32 %v3959, %v3960
  %v3962 = vrot.slane %v3961, 1
  %v3963 = vmax.f32 %v3961, %v3962
  %v3964 = vsel %vm1499, %v1365, -inf
  %v3965 = vrot.slane %v3964, 4
  %v3966 = vmax.f32 %v3964, %v3965
  %v3967 = vrot.slane %v3966, 2
  %v3968 = vmax.f32 %v3966, %v3967
  %v3969 = vrot.slane %v3968, 1
  %v3970 = vmax.f32 %v3968, %v3969
  %v3971 = vsel %vm1499, %v1366, -inf
  %v3972 = vrot.slane %v3971, 4
  %v3973 = vmax.f32 %v3971, %v3972
  %v3974 = vrot.slane %v3973, 2
  %v3975 = vmax.f32 %v3973, %v3974
  %v3976 = vrot.slane %v3975, 1
  %v3977 = vmax.f32 %v3975, %v3976
  %v3978 = vsel %vm1499, %v1367, -inf
  %v3979 = vrot.slane %v3978, 4
  %v3980 = vmax.f32 %v3978, %v3979
  %v3981 = vrot.slane %v3980, 2
  %v3982 = vmax.f32 %v3980, %v3981
  %v3983 = vrot.slane %v3982, 1
  %v3984 = vmax.f32 %v3982, %v3983
  %v3985 = vsel %vm1499, %v1368, -inf
  %v3986 = vrot.slane %v3985, 4
  %v3987 = vmax.f32 %v3985, %v3986
  %v3988 = vrot.slane %v3987, 2
  %v3989 = vmax.f32 %v3987, %v3988
  %v3990 = vrot.slane %v3989, 1
  %v3991 = vmax.f32 %v3989, %v3990
  %v3992 = vsel %vm1499, %v1369, -inf
  %v3993 = vrot.slane %v3992, 4
  %v3994 = vmax.f32 %v3992, %v3993
  %v3995 = vrot.slane %v3994, 2
  %v3996 = vmax.f32 %v3994, %v3995
  %v3997 = vrot.slane %v3996, 1
  %v3998 = vmax.f32 %v3996, %v3997
  %v3999 = vsel %vm1499, %v1370, -inf
  %v4000 = vrot.slane %v3999, 4
  %v4001 = vmax.f32 %v3999, %v4000
  %v4002 = vrot.slane %v4001, 2
  %v4003 = vmax.f32 %v4001, %v4002
  %v4004 = vrot.slane %v4003, 1
  %v4005 = vmax.f32 %v4003, %v4004
  %v4006 = vsel %vm1499, %v1371, -inf
  %v4007 = vrot.slane %v4006, 4
  %v4008 = vmax.f32 %v4006, %v4007
  %v4009 = vrot.slane %v4008, 2
  %v4010 = vmax.f32 %v4008, %v4009
  %v4011 = vrot.slane %v4010, 1
  %v4012 = vmax.f32 %v4010, %v4011
  %v4013 = vsel %vm1499, %v1372, -inf
  %v4014 = vrot.slane %v4013, 4
  %v4015 = vmax.f32 %v4013, %v4014
  %v4016 = vrot.slane %v4015, 2
  %v4017 = vmax.f32 %v4015, %v4016
  %v4018 = vrot.slane %v4017, 1
  %v4019 = vmax.f32 %v4017, %v4018
  %v4020 = vsel %vm1499, %v1373, -inf
  %v4021 = vrot.slane %v4020, 4
  %v4022 = vmax.f32 %v4020, %v4021
  %v4023 = vrot.slane %v4022, 2
  %v4024 = vmax.f32 %v4022, %v4023
  %v4025 = vrot.slane %v4024, 1
  %v4026 = vmax.f32 %v4024, %v4025
  %v4027 = vsel %vm1499, %v1374, -inf
  %v4028 = vrot.slane %v4027, 4
  %v4029 = vmax.f32 %v4027, %v4028
  %v4030 = vrot.slane %v4029, 2
  %v4031 = vmax.f32 %v4029, %v4030
  %v4032 = vrot.slane %v4031, 1
  %v4033 = vmax.f32 %v4031, %v4032
  %v4034 = vsel %vm1499, %v1375, -inf
  %v4035 = vrot.slane %v4034, 4
  %v4036 = vmax.f32 %v4034, %v4035
  %v4037 = vrot.slane %v4036, 2
  %v4038 = vmax.f32 %v4036, %v4037
  %v4039 = vrot.slane %v4038, 1
  %v4040 = vmax.f32 %v4038, %v4039
  %v4041 = vsel %vm1499, %v1376, -inf
  %v4042 = vrot.slane %v4041, 4
  %v4043 = vmax.f32 %v4041, %v4042
  %v4044 = vrot.slane %v4043, 2
  %v4045 = vmax.f32 %v4043, %v4044
  %v4046 = vrot.slane %v4045, 1
  %v4047 = vmax.f32 %v4045, %v4046
  %v4048 = vsel %vm1499, %v1377, -inf
  %v4049 = vrot.slane %v4048, 4
  %v4050 = vmax.f32 %v4048, %v4049
  %v4051 = vrot.slane %v4050, 2
  %v4052 = vmax.f32 %v4050, %v4051
  %v4053 = vrot.slane %v4052, 1
  %v4054 = vmax.f32 %v4052, %v4053
  %v4055 = vsel %vm1499, %v1378, -inf
  %v4056 = vrot.slane %v4055, 4
  %v4057 = vmax.f32 %v4055, %v4056
  %v4058 = vrot.slane %v4057, 2
  %v4059 = vmax.f32 %v4057, %v4058
  %v4060 = vrot.slane %v4059, 1
  %v4061 = vmax.f32 %v4059, %v4060
  %v4062 = vsel %vm1499, %v1379, -inf
  %v4063 = vrot.slane %v4062, 4
  %v4064 = vmax.f32 %v4062, %v4063
  %v4065 = vrot.slane %v4064, 2
  %v4066 = vmax.f32 %v4064, %v4065
  %v4067 = vrot.slane %v4066, 1
  %v4068 = vmax.f32 %v4066, %v4067
  %v4069 = vsel %vm1499, %v1380, -inf
  %v4070 = vrot.slane %v4069, 4
  %v4071 = vmax.f32 %v4069, %v4070
  %v4072 = vrot.slane %v4071, 2
  %v4073 = vmax.f32 %v4071, %v4072
  %v4074 = vrot.slane %v4073, 1
  %v4075 = vmax.f32 %v4073, %v4074
  %v4076 = vsel %vm1499, %v1381, -inf
  %v4077 = vrot.slane %v4076, 4
  %v4078 = vmax.f32 %v4076, %v4077
  %v4079 = vrot.slane %v4078, 2
  %v4080 = vmax.f32 %v4078, %v4079
  %v4081 = vrot.slane %v4080, 1
  %v4082 = vmax.f32 %v4080, %v4081
  %v4083 = vsel %vm1499, %v1382, -inf
  %v4084 = vrot.slane %v4083, 4
  %v4085 = vmax.f32 %v4083, %v4084
  %v4086 = vrot.slane %v4085, 2
  %v4087 = vmax.f32 %v4085, %v4086
  %v4088 = vrot.slane %v4087, 1
  %v4089 = vmax.f32 %v4087, %v4088
  %v4090 = vsel %vm1499, %v1383, -inf
  %v4091 = vrot.slane %v4090, 4
  %v4092 = vmax.f32 %v4090, %v4091
  %v4093 = vrot.slane %v4092, 2
  %v4094 = vmax.f32 %v4092, %v4093
  %v4095 = vrot.slane %v4094, 1
  %v4096 = vmax.f32 %v4094, %v4095
  %v4097 = vsel %vm1499, %v1384, -inf
  %v4098 = vrot.slane %v4097, 4
  %v4099 = vmax.f32 %v4097, %v4098
  %v4100 = vrot.slane %v4099, 2
  %v4101 = vmax.f32 %v4099, %v4100
  %v4102 = vrot.slane %v4101, 1
  %v4103 = vmax.f32 %v4101, %v4102
  %v4104 = vsel %vm1499, %v1385, -inf
  %v4105 = vrot.slane %v4104, 4
  %v4106 = vmax.f32 %v4104, %v4105
  %v4107 = vrot.slane %v4106, 2
  %v4108 = vmax.f32 %v4106, %v4107
  %v4109 = vrot.slane %v4108, 1
  %v4110 = vmax.f32 %v4108, %v4109
  %v4111 = vsel %vm1499, %v1386, -inf
  %v4112 = vrot.slane %v4111, 4
  %v4113 = vmax.f32 %v4111, %v4112
  %v4114 = vrot.slane %v4113, 2
  %v4115 = vmax.f32 %v4113, %v4114
  %v4116 = vrot.slane %v4115, 1
  %v4117 = vmax.f32 %v4115, %v4116
  %v4118 = vsel %vm1499, %v1387, -inf
  %v4119 = vrot.slane %v4118, 4
  %v4120 = vmax.f32 %v4118, %v4119
  %v4121 = vrot.slane %v4120, 2
  %v4122 = vmax.f32 %v4120, %v4121
  %v4123 = vrot.slane %v4122, 1
  %v4124 = vmax.f32 %v4122, %v4123
  %v4125 = vsel %vm1499, %v1388, -inf
  %v4126 = vrot.slane %v4125, 4
  %v4127 = vmax.f32 %v4125, %v4126
  %v4128 = vrot.slane %v4127, 2
  %v4129 = vmax.f32 %v4127, %v4128
  %v4130 = vrot.slane %v4129, 1
  %v4131 = vmax.f32 %v4129, %v4130
  %v4132 = vsel %vm1499, %v1389, -inf
  %v4133 = vrot.slane %v4132, 4
  %v4134 = vmax.f32 %v4132, %v4133
  %v4135 = vrot.slane %v4134, 2
  %v4136 = vmax.f32 %v4134, %v4135
  %v4137 = vrot.slane %v4136, 1
  %v4138 = vmax.f32 %v4136, %v4137
  %v4139 = vsel %vm1499, %v1390, -inf
  %v4140 = vrot.slane %v4139, 4
  %v4141 = vmax.f32 %v4139, %v4140
  %v4142 = vrot.slane %v4141, 2
  %v4143 = vmax.f32 %v4141, %v4142
  %v4144 = vrot.slane %v4143, 1
  %v4145 = vmax.f32 %v4143, %v4144
  %v4146 = vsel %vm1499, %v1391, -inf
  %v4147 = vrot.slane %v4146, 4
  %v4148 = vmax.f32 %v4146, %v4147
  %v4149 = vrot.slane %v4148, 2
  %v4150 = vmax.f32 %v4148, %v4149
  %v4151 = vrot.slane %v4150, 1
  %v4152 = vmax.f32 %v4150, %v4151
  %v4153 = vsel %vm1499, %v1392, -inf
  %v4154 = vrot.slane %v4153, 4
  %v4155 = vmax.f32 %v4153, %v4154
  %v4156 = vrot.slane %v4155, 2
  %v4157 = vmax.f32 %v4155, %v4156
  %v4158 = vrot.slane %v4157, 1
  %v4159 = vmax.f32 %v4157, %v4158
  %v4160 = vsel %vm1499, %v1393, -inf
  %v4161 = vrot.slane %v4160, 4
  %v4162 = vmax.f32 %v4160, %v4161
  %v4163 = vrot.slane %v4162, 2
  %v4164 = vmax.f32 %v4162, %v4163
  %v4165 = vrot.slane %v4164, 1
  %v4166 = vmax.f32 %v4164, %v4165
  %v4167 = vsel %vm1499, %v1394, -inf
  %v4168 = vrot.slane %v4167, 4
  %v4169 = vmax.f32 %v4167, %v4168
  %v4170 = vrot.slane %v4169, 2
  %v4171 = vmax.f32 %v4169, %v4170
  %v4172 = vrot.slane %v4171, 1
  %v4173 = vmax.f32 %v4171, %v4172
  %v4174 = vsel %vm1499, %v1395, -inf
  %v4175 = vrot.slane %v4174, 4
  %v4176 = vmax.f32 %v4174, %v4175
  %v4177 = vrot.slane %v4176, 2
  %v4178 = vmax.f32 %v4176, %v4177
  %v4179 = vrot.slane %v4178, 1
  %v4180 = vmax.f32 %v4178, %v4179
  %v4181 = vsel %vm1499, %v1396, -inf
  %v4182 = vrot.slane %v4181, 4
  %v4183 = vmax.f32 %v4181, %v4182
  %v4184 = vrot.slane %v4183, 2
  %v4185 = vmax.f32 %v4183, %v4184
  %v4186 = vrot.slane %v4185, 1
  %v4187 = vmax.f32 %v4185, %v4186
  %v4188 = vsel %vm1499, %v1397, -inf
  %v4189 = vrot.slane %v4188, 4
  %v4190 = vmax.f32 %v4188, %v4189
  %v4191 = vrot.slane %v4190, 2
  %v4192 = vmax.f32 %v4190, %v4191
  %v4193 = vrot.slane %v4192, 1
  %v4194 = vmax.f32 %v4192, %v4193
  %v4195 = vsel %vm1499, %v1398, -inf
  %v4196 = vrot.slane %v4195, 4
  %v4197 = vmax.f32 %v4195, %v4196
  %v4198 = vrot.slane %v4197, 2
  %v4199 = vmax.f32 %v4197, %v4198
  %v4200 = vrot.slane %v4199, 1
  %v4201 = vmax.f32 %v4199, %v4200
  %v4202 = vsel %vm1499, %v1399, -inf
  %v4203 = vrot.slane %v4202, 4
  %v4204 = vmax.f32 %v4202, %v4203
  %v4205 = vrot.slane %v4204, 2
  %v4206 = vmax.f32 %v4204, %v4205
  %v4207 = vrot.slane %v4206, 1
  %v4208 = vmax.f32 %v4206, %v4207
  %v4209 = vsel %vm1499, %v1400, -inf
  %v4210 = vrot.slane %v4209, 4
  %v4211 = vmax.f32 %v4209, %v4210
  %v4212 = vrot.slane %v4211, 2
  %v4213 = vmax.f32 %v4211, %v4212
  %v4214 = vrot.slane %v4213, 1
  %v4215 = vmax.f32 %v4213, %v4214
  %v4216 = vsel %vm1499, %v1401, -inf
  %v4217 = vrot.slane %v4216, 4
  %v4218 = vmax.f32 %v4216, %v4217
  %v4219 = vrot.slane %v4218, 2
  %v4220 = vmax.f32 %v4218, %v4219
  %v4221 = vrot.slane %v4220, 1
  %v4222 = vmax.f32 %v4220, %v4221
  %v4223 = vsel %vm1499, %v1402, -inf
  %v4224 = vrot.slane %v4223, 4
  %v4225 = vmax.f32 %v4223, %v4224
  %v4226 = vrot.slane %v4225, 2
  %v4227 = vmax.f32 %v4225, %v4226
  %v4228 = vrot.slane %v4227, 1
  %v4229 = vmax.f32 %v4227, %v4228
  %v4230 = vsel %vm1499, %v1403, -inf
  %v4231 = vrot.slane %v4230, 4
  %v4232 = vmax.f32 %v4230, %v4231
  %v4233 = vrot.slane %v4232, 2
  %v4234 = vmax.f32 %v4232, %v4233
  %v4235 = vrot.slane %v4234, 1
  %v4236 = vmax.f32 %v4234, %v4235
  %v4237 = vsel %vm1499, %v1404, -inf
  %v4238 = vrot.slane %v4237, 4
  %v4239 = vmax.f32 %v4237, %v4238
  %v4240 = vrot.slane %v4239, 2
  %v4241 = vmax.f32 %v4239, %v4240
  %v4242 = vrot.slane %v4241, 1
  %v4243 = vmax.f32 %v4241, %v4242
  %v4244 = vsel %vm1499, %v1405, -inf
  %v4245 = vrot.slane %v4244, 4
  %v4246 = vmax.f32 %v4244, %v4245
  %v4247 = vrot.slane %v4246, 2
  %v4248 = vmax.f32 %v4246, %v4247
  %v4249 = vrot.slane %v4248, 1
  %v4250 = vmax.f32 %v4248, %v4249
  %v4251 = vsel %vm1499, %v1406, -inf
  %v4252 = vrot.slane %v4251, 4
  %v4253 = vmax.f32 %v4251, %v4252
  %v4254 = vrot.slane %v4253, 2
  %v4255 = vmax.f32 %v4253, %v4254
  %v4256 = vrot.slane %v4255, 1
  %v4257 = vmax.f32 %v4255, %v4256
  %v4258 = vsel %vm1499, %v1407, -inf
  %v4259 = vrot.slane %v4258, 4
  %v4260 = vmax.f32 %v4258, %v4259
  %v4261 = vrot.slane %v4260, 2
  %v4262 = vmax.f32 %v4260, %v4261
  %v4263 = vrot.slane %v4262, 1
  %v4264 = vmax.f32 %v4262, %v4263
  %v4265 = vsel %vm1499, %v1408, -inf
  %v4266 = vrot.slane %v4265, 4
  %v4267 = vmax.f32 %v4265, %v4266
  %v4268 = vrot.slane %v4267, 2
  %v4269 = vmax.f32 %v4267, %v4268
  %v4270 = vrot.slane %v4269, 1
  %v4271 = vmax.f32 %v4269, %v4270
  %v4272 = vsel %vm1499, %v1409, -inf
  %v4273 = vrot.slane %v4272, 4
  %v4274 = vmax.f32 %v4272, %v4273
  %v4275 = vrot.slane %v4274, 2
  %v4276 = vmax.f32 %v4274, %v4275
  %v4277 = vrot.slane %v4276, 1
  %v4278 = vmax.f32 %v4276, %v4277
  %v4279 = vsel %vm1499, %v1410, -inf
  %v4280 = vrot.slane %v4279, 4
  %v4281 = vmax.f32 %v4279, %v4280
  %v4282 = vrot.slane %v4281, 2
  %v4283 = vmax.f32 %v4281, %v4282
  %v4284 = vrot.slane %v4283, 1
  %v4285 = vmax.f32 %v4283, %v4284
  %v4286 = vsel %vm1499, %v1411, -inf
  %v4287 = vrot.slane %v4286, 4
  %v4288 = vmax.f32 %v4286, %v4287
  %v4289 = vrot.slane %v4288, 2
  %v4290 = vmax.f32 %v4288, %v4289
  %v4291 = vrot.slane %v4290, 1
  %v4292 = vmax.f32 %v4290, %v4291
  %v4293 = vsel %vm1499, %v1412, -inf
  %v4294 = vrot.slane %v4293, 4
  %v4295 = vmax.f32 %v4293, %v4294
  %v4296 = vrot.slane %v4295, 2
  %v4297 = vmax.f32 %v4295, %v4296
  %v4298 = vrot.slane %v4297, 1
  %v4299 = vmax.f32 %v4297, %v4298
  %v4300 = vsel %vm1499, %v1413, -inf
  %v4301 = vrot.slane %v4300, 4
  %v4302 = vmax.f32 %v4300, %v4301
  %v4303 = vrot.slane %v4302, 2
  %v4304 = vmax.f32 %v4302, %v4303
  %v4305 = vrot.slane %v4304, 1
  %v4306 = vmax.f32 %v4304, %v4305
  %v4307 = vsel %vm1499, %v1414, -inf
  %v4308 = vrot.slane %v4307, 4
  %v4309 = vmax.f32 %v4307, %v4308
  %v4310 = vrot.slane %v4309, 2
  %v4311 = vmax.f32 %v4309, %v4310
  %v4312 = vrot.slane %v4311, 1
  %v4313 = vmax.f32 %v4311, %v4312
  %v4314 = vsel %vm1499, %v1415, -inf
  %v4315 = vrot.slane %v4314, 4
  %v4316 = vmax.f32 %v4314, %v4315
  %v4317 = vrot.slane %v4316, 2
  %v4318 = vmax.f32 %v4316, %v4317
  %v4319 = vrot.slane %v4318, 1
  %v4320 = vmax.f32 %v4318, %v4319
  %v4321 = vsel %vm1499, %v1416, -inf
  %v4322 = vrot.slane %v4321, 4
  %v4323 = vmax.f32 %v4321, %v4322
  %v4324 = vrot.slane %v4323, 2
  %v4325 = vmax.f32 %v4323, %v4324
  %v4326 = vrot.slane %v4325, 1
  %v4327 = vmax.f32 %v4325, %v4326
  %v4328 = vsel %vm1499, %v1417, -inf
  %v4329 = vrot.slane %v4328, 4
  %v4330 = vmax.f32 %v4328, %v4329
  %v4331 = vrot.slane %v4330, 2
  %v4332 = vmax.f32 %v4330, %v4331
  %v4333 = vrot.slane %v4332, 1
  %v4334 = vmax.f32 %v4332, %v4333
  %v4335 = vsel %vm1499, %v1418, -inf
  %v4336 = vrot.slane %v4335, 4
  %v4337 = vmax.f32 %v4335, %v4336
  %v4338 = vrot.slane %v4337, 2
  %v4339 = vmax.f32 %v4337, %v4338
  %v4340 = vrot.slane %v4339, 1
  %v4341 = vmax.f32 %v4339, %v4340
  %v4342 = vsel %vm1499, %v1419, -inf
  %v4343 = vrot.slane %v4342, 4
  %v4344 = vmax.f32 %v4342, %v4343
  %v4345 = vrot.slane %v4344, 2
  %v4346 = vmax.f32 %v4344, %v4345
  %v4347 = vrot.slane %v4346, 1
  %v4348 = vmax.f32 %v4346, %v4347
  %v4349 = vsel %vm1499, %v1420, -inf
  %v4350 = vrot.slane %v4349, 4
  %v4351 = vmax.f32 %v4349, %v4350
  %v4352 = vrot.slane %v4351, 2
  %v4353 = vmax.f32 %v4351, %v4352
  %v4354 = vrot.slane %v4353, 1
  %v4355 = vmax.f32 %v4353, %v4354
  %v4356 = vsel %vm1499, %v1421, -inf
  %v4357 = vrot.slane %v4356, 4
  %v4358 = vmax.f32 %v4356, %v4357
  %v4359 = vrot.slane %v4358, 2
  %v4360 = vmax.f32 %v4358, %v4359
  %v4361 = vrot.slane %v4360, 1
  %v4362 = vmax.f32 %v4360, %v4361
  %v4363 = vsel %vm1499, %v1422, -inf
  %v4364 = vrot.slane %v4363, 4
  %v4365 = vmax.f32 %v4363, %v4364
  %v4366 = vrot.slane %v4365, 2
  %v4367 = vmax.f32 %v4365, %v4366
  %v4368 = vrot.slane %v4367, 1
  %v4369 = vmax.f32 %v4367, %v4368
  %v4370 = vsel %vm1499, %v1423, -inf
  %v4371 = vrot.slane %v4370, 4
  %v4372 = vmax.f32 %v4370, %v4371
  %v4373 = vrot.slane %v4372, 2
  %v4374 = vmax.f32 %v4372, %v4373
  %v4375 = vrot.slane %v4374, 1
  %v4376 = vmax.f32 %v4374, %v4375
  %v4377 = vsel %vm1499, %v1424, -inf
  %v4378 = vrot.slane %v4377, 4
  %v4379 = vmax.f32 %v4377, %v4378
  %v4380 = vrot.slane %v4379, 2
  %v4381 = vmax.f32 %v4379, %v4380
  %v4382 = vrot.slane %v4381, 1
  %v4383 = vmax.f32 %v4381, %v4382
  %v4384 = vsel %vm1499, %v1425, -inf
  %v4385 = vrot.slane %v4384, 4
  %v4386 = vmax.f32 %v4384, %v4385
  %v4387 = vrot.slane %v4386, 2
  %v4388 = vmax.f32 %v4386, %v4387
  %v4389 = vrot.slane %v4388, 1
  %v4390 = vmax.f32 %v4388, %v4389
  %v4391 = vsel %vm1499, %v1426, -inf
  %v4392 = vrot.slane %v4391, 4
  %v4393 = vmax.f32 %v4391, %v4392
  %v4394 = vrot.slane %v4393, 2
  %v4395 = vmax.f32 %v4393, %v4394
  %v4396 = vrot.slane %v4395, 1
  %v4397 = vmax.f32 %v4395, %v4396
  %v4398 = vsel %vm1499, %v1427, -inf
  %v4399 = vrot.slane %v4398, 4
  %v4400 = vmax.f32 %v4398, %v4399
  %v4401 = vrot.slane %v4400, 2
  %v4402 = vmax.f32 %v4400, %v4401
  %v4403 = vrot.slane %v4402, 1
  %v4404 = vmax.f32 %v4402, %v4403
  %v4405 = vsel %vm1499, %v1428, -inf
  %v4406 = vrot.slane %v4405, 4
  %v4407 = vmax.f32 %v4405, %v4406
  %v4408 = vrot.slane %v4407, 2
  %v4409 = vmax.f32 %v4407, %v4408
  %v4410 = vrot.slane %v4409, 1
  %v4411 = vmax.f32 %v4409, %v4410
  %v4412 = vsel %vm1499, %v1429, -inf
  %v4413 = vrot.slane %v4412, 4
  %v4414 = vmax.f32 %v4412, %v4413
  %v4415 = vrot.slane %v4414, 2
  %v4416 = vmax.f32 %v4414, %v4415
  %v4417 = vrot.slane %v4416, 1
  %v4418 = vmax.f32 %v4416, %v4417
  %v4419 = vsel %vm1499, %v1430, -inf
  %v4420 = vrot.slane %v4419, 4
  %v4421 = vmax.f32 %v4419, %v4420
  %v4422 = vrot.slane %v4421, 2
  %v4423 = vmax.f32 %v4421, %v4422
  %v4424 = vrot.slane %v4423, 1
  %v4425 = vmax.f32 %v4423, %v4424
  %v4426 = vsel %vm1499, %v1431, -inf
  %v4427 = vrot.slane %v4426, 4
  %v4428 = vmax.f32 %v4426, %v4427
  %v4429 = vrot.slane %v4428, 2
  %v4430 = vmax.f32 %v4428, %v4429
  %v4431 = vrot.slane %v4430, 1
  %v4432 = vmax.f32 %v4430, %v4431
  %v4433 = vsel %vm1499, %v1432, -inf
  %v4434 = vrot.slane %v4433, 4
  %v4435 = vmax.f32 %v4433, %v4434
  %v4436 = vrot.slane %v4435, 2
  %v4437 = vmax.f32 %v4435, %v4436
  %v4438 = vrot.slane %v4437, 1
  %v4439 = vmax.f32 %v4437, %v4438
  %v4440 = vsel %vm1499, %v1433, -inf
  %v4441 = vrot.slane %v4440, 4
  %v4442 = vmax.f32 %v4440, %v4441
  %v4443 = vrot.slane %v4442, 2
  %v4444 = vmax.f32 %v4442, %v4443
  %v4445 = vrot.slane %v4444, 1
  %v4446 = vmax.f32 %v4444, %v4445
  %v4447 = vsel %vm1499, %v1434, -inf
  %v4448 = vrot.slane %v4447, 4
  %v4449 = vmax.f32 %v4447, %v4448
  %v4450 = vrot.slane %v4449, 2
  %v4451 = vmax.f32 %v4449, %v4450
  %v4452 = vrot.slane %v4451, 1
  %v4453 = vmax.f32 %v4451, %v4452
  %v4454 = vsel %vm1499, %v1435, -inf
  %v4455 = vrot.slane %v4454, 4
  %v4456 = vmax.f32 %v4454, %v4455
  %v4457 = vrot.slane %v4456, 2
  %v4458 = vmax.f32 %v4456, %v4457
  %v4459 = vrot.slane %v4458, 1
  %v4460 = vmax.f32 %v4458, %v4459
  %v4461 = vsel %vm1499, %v1436, -inf
  %v4462 = vrot.slane %v4461, 4
  %v4463 = vmax.f32 %v4461, %v4462
  %v4464 = vrot.slane %v4463, 2
  %v4465 = vmax.f32 %v4463, %v4464
  %v4466 = vrot.slane %v4465, 1
  %v4467 = vmax.f32 %v4465, %v4466
  %v4468 = vsel %vm1499, %v1437, -inf
  %v4469 = vrot.slane %v4468, 4
  %v4470 = vmax.f32 %v4468, %v4469
  %v4471 = vrot.slane %v4470, 2
  %v4472 = vmax.f32 %v4470, %v4471
  %v4473 = vrot.slane %v4472, 1
  %v4474 = vmax.f32 %v4472, %v4473
  %v4475 = vsel %vm1499, %v1438, -inf
  %v4476 = vrot.slane %v4475, 4
  %v4477 = vmax.f32 %v4475, %v4476
  %v4478 = vrot.slane %v4477, 2
  %v4479 = vmax.f32 %v4477, %v4478
  %v4480 = vrot.slane %v4479, 1
  %v4481 = vmax.f32 %v4479, %v4480
  %v4482 = vsel %vm1499, %v1439, -inf
  %v4483 = vrot.slane %v4482, 4
  %v4484 = vmax.f32 %v4482, %v4483
  %v4485 = vrot.slane %v4484, 2
  %v4486 = vmax.f32 %v4484, %v4485
  %v4487 = vrot.slane %v4486, 1
  %v4488 = vmax.f32 %v4486, %v4487
  %v4489 = vsel %vm1499, %v1440, -inf
  %v4490 = vrot.slane %v4489, 4
  %v4491 = vmax.f32 %v4489, %v4490
  %v4492 = vrot.slane %v4491, 2
  %v4493 = vmax.f32 %v4491, %v4492
  %v4494 = vrot.slane %v4493, 1
  %v4495 = vmax.f32 %v4493, %v4494
  %v4496 = vsel %vm1499, %v1441, -inf
  %v4497 = vrot.slane %v4496, 4
  %v4498 = vmax.f32 %v4496, %v4497
  %v4499 = vrot.slane %v4498, 2
  %v4500 = vmax.f32 %v4498, %v4499
  %v4501 = vrot.slane %v4500, 1
  %v4502 = vmax.f32 %v4500, %v4501
  %v4503 = vsel %vm1499, %v1442, -inf
  %v4504 = vrot.slane %v4503, 4
  %v4505 = vmax.f32 %v4503, %v4504
  %v4506 = vrot.slane %v4505, 2
  %v4507 = vmax.f32 %v4505, %v4506
  %v4508 = vrot.slane %v4507, 1
  %v4509 = vmax.f32 %v4507, %v4508
  %v4510 = vsel %vm1499, %v1443, -inf
  %v4511 = vrot.slane %v4510, 4
  %v4512 = vmax.f32 %v4510, %v4511
  %v4513 = vrot.slane %v4512, 2
  %v4514 = vmax.f32 %v4512, %v4513
  %v4515 = vrot.slane %v4514, 1
  %v4516 = vmax.f32 %v4514, %v4515
  %v4517 = vsel %vm1499, %v1444, -inf
  %v4518 = vrot.slane %v4517, 4
  %v4519 = vmax.f32 %v4517, %v4518
  %v4520 = vrot.slane %v4519, 2
  %v4521 = vmax.f32 %v4519, %v4520
  %v4522 = vrot.slane %v4521, 1
  %v4523 = vmax.f32 %v4521, %v4522
  %v4524 = vsel %vm1499, %v1445, -inf
  %v4525 = vrot.slane %v4524, 4
  %v4526 = vmax.f32 %v4524, %v4525
  %v4527 = vrot.slane %v4526, 2
  %v4528 = vmax.f32 %v4526, %v4527
  %v4529 = vrot.slane %v4528, 1
  %v4530 = vmax.f32 %v4528, %v4529
  %v4531 = vsel %vm1499, %v1446, -inf
  %v4532 = vrot.slane %v4531, 4
  %v4533 = vmax.f32 %v4531, %v4532
  %v4534 = vrot.slane %v4533, 2
  %v4535 = vmax.f32 %v4533, %v4534
  %v4536 = vrot.slane %v4535, 1
  %v4537 = vmax.f32 %v4535, %v4536
  %v4538 = vsel %vm1499, %v1447, -inf
  %v4539 = vrot.slane %v4538, 4
  %v4540 = vmax.f32 %v4538, %v4539
  %v4541 = vrot.slane %v4540, 2
  %v4542 = vmax.f32 %v4540, %v4541
  %v4543 = vrot.slane %v4542, 1
  %v4544 = vmax.f32 %v4542, %v4543
  %v4545 = vsel %vm1499, %v1448, -inf
  %v4546 = vrot.slane %v4545, 4
  %v4547 = vmax.f32 %v4545, %v4546
  %v4548 = vrot.slane %v4547, 2
  %v4549 = vmax.f32 %v4547, %v4548
  %v4550 = vrot.slane %v4549, 1
  %v4551 = vmax.f32 %v4549, %v4550
  %v4552 = vsel %vm1499, %v1449, -inf
  %v4553 = vrot.slane %v4552, 4
  %v4554 = vmax.f32 %v4552, %v4553
  %v4555 = vrot.slane %v4554, 2
  %v4556 = vmax.f32 %v4554, %v4555
  %v4557 = vrot.slane %v4556, 1
  %v4558 = vmax.f32 %v4556, %v4557
  %v4559 = vsel %vm1499, %v1450, -inf
  %v4560 = vrot.slane %v4559, 4
  %v4561 = vmax.f32 %v4559, %v4560
  %v4562 = vrot.slane %v4561, 2
  %v4563 = vmax.f32 %v4561, %v4562
  %v4564 = vrot.slane %v4563, 1
  %v4565 = vmax.f32 %v4563, %v4564
  %v4566 = vsel %vm1499, %v1451, -inf
  %v4567 = vrot.slane %v4566, 4
  %v4568 = vmax.f32 %v4566, %v4567
  %v4569 = vrot.slane %v4568, 2
  %v4570 = vmax.f32 %v4568, %v4569
  %v4571 = vrot.slane %v4570, 1
  %v4572 = vmax.f32 %v4570, %v4571
  %v4573 = vsel %vm1499, %v1452, -inf
  %v4574 = vrot.slane %v4573, 4
  %v4575 = vmax.f32 %v4573, %v4574
  %v4576 = vrot.slane %v4575, 2
  %v4577 = vmax.f32 %v4575, %v4576
  %v4578 = vrot.slane %v4577, 1
  %v4579 = vmax.f32 %v4577, %v4578
  %v4580 = vsel %vm1499, %v1453, -inf
  %v4581 = vrot.slane %v4580, 4
  %v4582 = vmax.f32 %v4580, %v4581
  %v4583 = vrot.slane %v4582, 2
  %v4584 = vmax.f32 %v4582, %v4583
  %v4585 = vrot.slane %v4584, 1
  %v4586 = vmax.f32 %v4584, %v4585
  %v4587 = vsel %vm1499, %v1454, -inf
  %v4588 = vrot.slane %v4587, 4
  %v4589 = vmax.f32 %v4587, %v4588
  %v4590 = vrot.slane %v4589, 2
  %v4591 = vmax.f32 %v4589, %v4590
  %v4592 = vrot.slane %v4591, 1
  %v4593 = vmax.f32 %v4591, %v4592
  %v4594 = vsel %vm1499, %v1455, -inf
  %v4595 = vrot.slane %v4594, 4
  %v4596 = vmax.f32 %v4594, %v4595
  %v4597 = vrot.slane %v4596, 2
  %v4598 = vmax.f32 %v4596, %v4597
  %v4599 = vrot.slane %v4598, 1
  %v4600 = vmax.f32 %v4598, %v4599
  %v4601 = vsel %vm1499, %v1456, -inf
  %v4602 = vrot.slane %v4601, 4
  %v4603 = vmax.f32 %v4601, %v4602
  %v4604 = vrot.slane %v4603, 2
  %v4605 = vmax.f32 %v4603, %v4604
  %v4606 = vrot.slane %v4605, 1
  %v4607 = vmax.f32 %v4605, %v4606
  %v4608 = vsel %vm1499, %v1457, -inf
  %v4609 = vrot.slane %v4608, 4
  %v4610 = vmax.f32 %v4608, %v4609
  %v4611 = vrot.slane %v4610, 2
  %v4612 = vmax.f32 %v4610, %v4611
  %v4613 = vrot.slane %v4612, 1
  %v4614 = vmax.f32 %v4612, %v4613
  %v4615 = vsel %vm1499, %v1458, -inf
  %v4616 = vrot.slane %v4615, 4
  %v4617 = vmax.f32 %v4615, %v4616
  %v4618 = vrot.slane %v4617, 2
  %v4619 = vmax.f32 %v4617, %v4618
  %v4620 = vrot.slane %v4619, 1
  %v4621 = vmax.f32 %v4619, %v4620
  %v4622 = vsel %vm1499, %v1459, -inf
  %v4623 = vrot.slane %v4622, 4
  %v4624 = vmax.f32 %v4622, %v4623
  %v4625 = vrot.slane %v4624, 2
  %v4626 = vmax.f32 %v4624, %v4625
  %v4627 = vrot.slane %v4626, 1
  %v4628 = vmax.f32 %v4626, %v4627
  %v4629 = vsel %vm1499, %v1460, -inf
  %v4630 = vrot.slane %v4629, 4
  %v4631 = vmax.f32 %v4629, %v4630
  %v4632 = vrot.slane %v4631, 2
  %v4633 = vmax.f32 %v4631, %v4632
  %v4634 = vrot.slane %v4633, 1
  %v4635 = vmax.f32 %v4633, %v4634
  %v4636 = vsel %vm1499, %v1461, -inf
  %v4637 = vrot.slane %v4636, 4
  %v4638 = vmax.f32 %v4636, %v4637
  %v4639 = vrot.slane %v4638, 2
  %v4640 = vmax.f32 %v4638, %v4639
  %v4641 = vrot.slane %v4640, 1
  %v4642 = vmax.f32 %v4640, %v4641
  %v4643 = vsel %vm1499, %v1462, -inf
  %v4644 = vrot.slane %v4643, 4
  %v4645 = vmax.f32 %v4643, %v4644
  %v4646 = vrot.slane %v4645, 2
  %v4647 = vmax.f32 %v4645, %v4646
  %v4648 = vrot.slane %v4647, 1
  %v4649 = vmax.f32 %v4647, %v4648
  %v4650 = vsel %vm1499, %v1463, -inf
  %v4651 = vrot.slane %v4650, 4
  %v4652 = vmax.f32 %v4650, %v4651
  %v4653 = vrot.slane %v4652, 2
  %v4654 = vmax.f32 %v4652, %v4653
  %v4655 = vrot.slane %v4654, 1
  %v4656 = vmax.f32 %v4654, %v4655
  %v4657 = vsel %vm1499, %v1464, -inf
  %v4658 = vrot.slane %v4657, 4
  %v4659 = vmax.f32 %v4657, %v4658
  %v4660 = vrot.slane %v4659, 2
  %v4661 = vmax.f32 %v4659, %v4660
  %v4662 = vrot.slane %v4661, 1
  %v4663 = vmax.f32 %v4661, %v4662
  %v4664 = vsel %vm1499, %v1465, -inf
  %v4665 = vrot.slane %v4664, 4
  %v4666 = vmax.f32 %v4664, %v4665
  %v4667 = vrot.slane %v4666, 2
  %v4668 = vmax.f32 %v4666, %v4667
  %v4669 = vrot.slane %v4668, 1
  %v4670 = vmax.f32 %v4668, %v4669
  %v4671 = vsel %vm1499, %v1466, -inf
  %v4672 = vrot.slane %v4671, 4
  %v4673 = vmax.f32 %v4671, %v4672
  %v4674 = vrot.slane %v4673, 2
  %v4675 = vmax.f32 %v4673, %v4674
  %v4676 = vrot.slane %v4675, 1
  %v4677 = vmax.f32 %v4675, %v4676
  %v4678 = vsel %vm1499, %v1467, -inf
  %v4679 = vrot.slane %v4678, 4
  %v4680 = vmax.f32 %v4678, %v4679
  %v4681 = vrot.slane %v4680, 2
  %v4682 = vmax.f32 %v4680, %v4681
  %v4683 = vrot.slane %v4682, 1
  %v4684 = vmax.f32 %v4682, %v4683
  %v4685 = vsel %vm1499, %v1468, -inf
  %v4686 = vrot.slane %v4685, 4
  %v4687 = vmax.f32 %v4685, %v4686
  %v4688 = vrot.slane %v4687, 2
  %v4689 = vmax.f32 %v4687, %v4688
  %v4690 = vrot.slane %v4689, 1
  %v4691 = vmax.f32 %v4689, %v4690
  %v4692 = vsel %vm1499, %v1469, -inf
  %v4693 = vrot.slane %v4692, 4
  %v4694 = vmax.f32 %v4692, %v4693
  %v4695 = vrot.slane %v4694, 2
  %v4696 = vmax.f32 %v4694, %v4695
  %v4697 = vrot.slane %v4696, 1
  %v4698 = vmax.f32 %v4696, %v4697
  %v4699 = vsel %vm1499, %v1470, -inf
  %v4700 = vrot.slane %v4699, 4
  %v4701 = vmax.f32 %v4699, %v4700
  %v4702 = vrot.slane %v4701, 2
  %v4703 = vmax.f32 %v4701, %v4702
  %v4704 = vrot.slane %v4703, 1
  %v4705 = vmax.f32 %v4703, %v4704
  %v4706 = vsel %vm1499, %v1471, -inf
  %v4707 = vrot.slane %v4706, 4
  %v4708 = vmax.f32 %v4706, %v4707
  %v4709 = vrot.slane %v4708, 2
  %v4710 = vmax.f32 %v4708, %v4709
  %v4711 = vrot.slane %v4710, 1
  %v4712 = vmax.f32 %v4710, %v4711
  %v4713 = vsel %vm1499, %v1472, -inf
  %v4714 = vrot.slane %v4713, 4
  %v4715 = vmax.f32 %v4713, %v4714
  %v4716 = vrot.slane %v4715, 2
  %v4717 = vmax.f32 %v4715, %v4716
  %v4718 = vrot.slane %v4717, 1
  %v4719 = vmax.f32 %v4717, %v4718
  %v4720 = vsel %vm1499, %v1473, -inf
  %v4721 = vrot.slane %v4720, 4
  %v4722 = vmax.f32 %v4720, %v4721
  %v4723 = vrot.slane %v4722, 2
  %v4724 = vmax.f32 %v4722, %v4723
  %v4725 = vrot.slane %v4724, 1
  %v4726 = vmax.f32 %v4724, %v4725
  %v4727 = vsel %vm1499, %v1474, -inf
  %v4728 = vrot.slane %v4727, 4
  %v4729 = vmax.f32 %v4727, %v4728
  %v4730 = vrot.slane %v4729, 2
  %v4731 = vmax.f32 %v4729, %v4730
  %v4732 = vrot.slane %v4731, 1
  %v4733 = vmax.f32 %v4731, %v4732
  %v4734 = vsel %vm1499, %v1475, -inf
  %v4735 = vrot.slane %v4734, 4
  %v4736 = vmax.f32 %v4734, %v4735
  %v4737 = vrot.slane %v4736, 2
  %v4738 = vmax.f32 %v4736, %v4737
  %v4739 = vrot.slane %v4738, 1
  %v4740 = vmax.f32 %v4738, %v4739
  %v4741 = vsel %vm1499, %v1476, -inf
  %v4742 = vrot.slane %v4741, 4
  %v4743 = vmax.f32 %v4741, %v4742
  %v4744 = vrot.slane %v4743, 2
  %v4745 = vmax.f32 %v4743, %v4744
  %v4746 = vrot.slane %v4745, 1
  %v4747 = vmax.f32 %v4745, %v4746
  %v4748 = vsel %vm1499, %v1477, -inf
  %v4749 = vrot.slane %v4748, 4
  %v4750 = vmax.f32 %v4748, %v4749
  %v4751 = vrot.slane %v4750, 2
  %v4752 = vmax.f32 %v4750, %v4751
  %v4753 = vrot.slane %v4752, 1
  %v4754 = vmax.f32 %v4752, %v4753
  %v4755 = vsel %vm1499, %v1478, -inf
  %v4756 = vrot.slane %v4755, 4
  %v4757 = vmax.f32 %v4755, %v4756
  %v4758 = vrot.slane %v4757, 2
  %v4759 = vmax.f32 %v4757, %v4758
  %v4760 = vrot.slane %v4759, 1
  %v4761 = vmax.f32 %v4759, %v4760
  %v4762 = vsel %vm1499, %v1479, -inf
  %v4763 = vrot.slane %v4762, 4
  %v4764 = vmax.f32 %v4762, %v4763
  %v4765 = vrot.slane %v4764, 2
  %v4766 = vmax.f32 %v4764, %v4765
  %v4767 = vrot.slane %v4766, 1
  %v4768 = vmax.f32 %v4766, %v4767
  %v4769 = vsel %vm1499, %v1480, -inf
  %v4770 = vrot.slane %v4769, 4
  %v4771 = vmax.f32 %v4769, %v4770
  %v4772 = vrot.slane %v4771, 2
  %v4773 = vmax.f32 %v4771, %v4772
  %v4774 = vrot.slane %v4773, 1
  %v4775 = vmax.f32 %v4773, %v4774
  %v4776 = vsel %vm1499, %v1481, -inf
  %v4777 = vrot.slane %v4776, 4
  %v4778 = vmax.f32 %v4776, %v4777
  %v4779 = vrot.slane %v4778, 2
  %v4780 = vmax.f32 %v4778, %v4779
  %v4781 = vrot.slane %v4780, 1
  %v4782 = vmax.f32 %v4780, %v4781
  %v4783 = vsel %vm1499, %v1482, -inf
  %v4784 = vrot.slane %v4783, 4
  %v4785 = vmax.f32 %v4783, %v4784
  %v4786 = vrot.slane %v4785, 2
  %v4787 = vmax.f32 %v4785, %v4786
  %v4788 = vrot.slane %v4787, 1
  %v4789 = vmax.f32 %v4787, %v4788
  %v4790 = vsel %vm1499, %v1483, -inf
  %v4791 = vrot.slane %v4790, 4
  %v4792 = vmax.f32 %v4790, %v4791
  %v4793 = vrot.slane %v4792, 2
  %v4794 = vmax.f32 %v4792, %v4793
  %v4795 = vrot.slane %v4794, 1
  %v4796 = vmax.f32 %v4794, %v4795
  %v4797 = vsel %vm1499, %v1484, -inf
  %v4798 = vrot.slane %v4797, 4
  %v4799 = vmax.f32 %v4797, %v4798
  %v4800 = vrot.slane %v4799, 2
  %v4801 = vmax.f32 %v4799, %v4800
  %v4802 = vrot.slane %v4801, 1
  %v4803 = vmax.f32 %v4801, %v4802
  %v4804 = vsel %vm1499, %v1485, -inf
  %v4805 = vrot.slane %v4804, 4
  %v4806 = vmax.f32 %v4804, %v4805
  %v4807 = vrot.slane %v4806, 2
  %v4808 = vmax.f32 %v4806, %v4807
  %v4809 = vrot.slane %v4808, 1
  %v4810 = vmax.f32 %v4808, %v4809
  %v4811 = vsel %vm1499, %v1486, -inf
  %v4812 = vrot.slane %v4811, 4
  %v4813 = vmax.f32 %v4811, %v4812
  %v4814 = vrot.slane %v4813, 2
  %v4815 = vmax.f32 %v4813, %v4814
  %v4816 = vrot.slane %v4815, 1
  %v4817 = vmax.f32 %v4815, %v4816
  %v4818 = vsel %vm1499, %v1487, -inf
  %v4819 = vrot.slane %v4818, 4
  %v4820 = vmax.f32 %v4818, %v4819
  %v4821 = vrot.slane %v4820, 2
  %v4822 = vmax.f32 %v4820, %v4821
  %v4823 = vrot.slane %v4822, 1
  %v4824 = vmax.f32 %v4822, %v4823
  %v4825 = vsel %vm1499, %v1488, -inf
  %v4826 = vrot.slane %v4825, 4
  %v4827 = vmax.f32 %v4825, %v4826
  %v4828 = vrot.slane %v4827, 2
  %v4829 = vmax.f32 %v4827, %v4828
  %v4830 = vrot.slane %v4829, 1
  %v4831 = vmax.f32 %v4829, %v4830
  %v4832 = vsel %vm1499, %v1489, -inf
  %v4833 = vrot.slane %v4832, 4
  %v4834 = vmax.f32 %v4832, %v4833
  %v4835 = vrot.slane %v4834, 2
  %v4836 = vmax.f32 %v4834, %v4835
  %v4837 = vrot.slane %v4836, 1
  %v4838 = vmax.f32 %v4836, %v4837
  %v4839 = vsel %vm1499, %v1490, -inf
  %v4840 = vrot.slane %v4839, 4
  %v4841 = vmax.f32 %v4839, %v4840
  %v4842 = vrot.slane %v4841, 2
  %v4843 = vmax.f32 %v4841, %v4842
  %v4844 = vrot.slane %v4843, 1
  %v4845 = vmax.f32 %v4843, %v4844
  %v4846 = vsel %vm1499, %v1491, -inf
  %v4847 = vrot.slane %v4846, 4
  %v4848 = vmax.f32 %v4846, %v4847
  %v4849 = vrot.slane %v4848, 2
  %v4850 = vmax.f32 %v4848, %v4849
  %v4851 = vrot.slane %v4850, 1
  %v4852 = vmax.f32 %v4850, %v4851
  %v4853 = vsel %vm1499, %v1492, -inf
  %v4854 = vrot.slane %v4853, 4
  %v4855 = vmax.f32 %v4853, %v4854
  %v4856 = vrot.slane %v4855, 2
  %v4857 = vmax.f32 %v4855, %v4856
  %v4858 = vrot.slane %v4857, 1
  %v4859 = vmax.f32 %v4857, %v4858
  %v4860 = vsel %vm1499, %v1493, -inf
  %v4861 = vrot.slane %v4860, 4
  %v4862 = vmax.f32 %v4860, %v4861
  %v4863 = vrot.slane %v4862, 2
  %v4864 = vmax.f32 %v4862, %v4863
  %v4865 = vrot.slane %v4864, 1
  %v4866 = vmax.f32 %v4864, %v4865
  %v4867 = vsel %vm1499, %v1494, -inf
  %v4868 = vrot.slane %v4867, 4
  %v4869 = vmax.f32 %v4867, %v4868
  %v4870 = vrot.slane %v4869, 2
  %v4871 = vmax.f32 %v4869, %v4870
  %v4872 = vrot.slane %v4871, 1
  %v4873 = vmax.f32 %v4871, %v4872
  %v4874 = vsel %vm1499, %v1495, -inf
  %v4875 = vrot.slane %v4874, 4
  %v4876 = vmax.f32 %v4874, %v4875
  %v4877 = vrot.slane %v4876, 2
  %v4878 = vmax.f32 %v4876, %v4877
  %v4879 = vrot.slane %v4878, 1
  %v4880 = vmax.f32 %v4878, %v4879
  %v4881 = vsel %vm1499, %v1496, -inf
  %v4882 = vrot.slane %v4881, 4
  %v4883 = vmax.f32 %v4881, %v4882
  %v4884 = vrot.slane %v4883, 2
  %v4885 = vmax.f32 %v4883, %v4884
  %v4886 = vrot.slane %v4885, 1
  %v4887 = vmax.f32 %v4885, %v4886
  %v4888 = vsel %vm1499, %v1497, -inf
  %v4889 = vrot.slane %v4888, 4
  %v4890 = vmax.f32 %v4888, %v4889
  %v4891 = vrot.slane %v4890, 2
  %v4892 = vmax.f32 %v4890, %v4891
  %v4893 = vrot.slane %v4892, 1
  %v4894 = vmax.f32 %v4892, %v4893
  %v4895 = vsel %vm1499, %v1498, -inf
  %v4896 = vrot.slane %v4895, 4
  %v4897 = vmax.f32 %v4895, %v4896
  %v4898 = vrot.slane %v4897, 2
  %v4899 = vmax.f32 %v4897, %v4898
  %v4900 = vrot.slane %v4899, 1
  %v4901 = vmax.f32 %v4899, %v4900
  %v4902 = vmax.f32 %v1506, %v1569
  %v4903 = vmax.f32 %v1513, %v1576
  %v4904 = vmax.f32 %v1520, %v1583
  %v4905 = vmax.f32 %v1527, %v1590
  %v4906 = vmax.f32 %v1534, %v1597
  %v4907 = vmax.f32 %v1541, %v1604
  %v4908 = vmax.f32 %v1548, %v1611
  %v4909 = vmax.f32 %v1555, %v1618
  %v4910 = vmax.f32 %v1562, %v1625
  %v4911 = vmax.f32 %v1695, %v1758
  %v4912 = vmax.f32 %v1702, %v1765
  %v4913 = vmax.f32 %v1709, %v1772
  %v4914 = vmax.f32 %v1716, %v1779
  %v4915 = vmax.f32 %v1723, %v1786
  %v4916 = vmax.f32 %v1730, %v1793
  %v4917 = vmax.f32 %v1737, %v1800
  %v4918 = vmax.f32 %v1744, %v1807
  %v4919 = vmax.f32 %v1751, %v1814
  %v4920 = vmax.f32 %v1884, %v1947
  %v4921 = vmax.f32 %v1891, %v1954
  %v4922 = vmax.f32 %v1898, %v1961
  %v4923 = vmax.f32 %v1905, %v1968
  %v4924 = vmax.f32 %v1912, %v1975
  %v4925 = vmax.f32 %v1919, %v1982
  %v4926 = vmax.f32 %v1926, %v1989
  %v4927 = vmax.f32 %v1933, %v1996
  %v4928 = vmax.f32 %v1940, %v2003
  %v4929 = vmax.f32 %v2073, %v2136
  %v4930 = vmax.f32 %v2080, %v2143
  %v4931 = vmax.f32 %v2087, %v2150
  %v4932 = vmax.f32 %v2094, %v2157
  %v4933 = vmax.f32 %v2101, %v2164
  %v4934 = vmax.f32 %v2108, %v2171
  %v4935 = vmax.f32 %v2115, %v2178
  %v4936 = vmax.f32 %v2122, %v2185
  %v4937 = vmax.f32 %v2129, %v2192
  %v4938 = vmax.f32 %v2262, %v2325
  %v4939 = vmax.f32 %v2269, %v2332
  %v4940 = vmax.f32 %v2276, %v2339
  %v4941 = vmax.f32 %v2283, %v2346
  %v4942 = vmax.f32 %v2290, %v2353
  %v4943 = vmax.f32 %v2297, %v2360
  %v4944 = vmax.f32 %v2304, %v2367
  %v4945 = vmax.f32 %v2311, %v2374
  %v4946 = vmax.f32 %v2318, %v2381
  %v4947 = vmax.f32 %v2451, %v2514
  %v4948 = vmax.f32 %v2458, %v2521
  %v4949 = vmax.f32 %v2465, %v2528
  %v4950 = vmax.f32 %v2472, %v2535
  %v4951 = vmax.f32 %v2479, %v2542
  %v4952 = vmax.f32 %v2486, %v2549
  %v4953 = vmax.f32 %v2493, %v2556
  %v4954 = vmax.f32 %v2500, %v2563
  %v4955 = vmax.f32 %v2507, %v2570
  %v4956 = vmax.f32 %v2640, %v2703
  %v4957 = vmax.f32 %v2647, %v2710
  %v4958 = vmax.f32 %v2654, %v2717
  %v4959 = vmax.f32 %v2661, %v2724
  %v4960 = vmax.f32 %v2668, %v2731
  %v4961 = vmax.f32 %v2675, %v2738
  %v4962 = vmax.f32 %v2682, %v2745
  %v4963 = vmax.f32 %v2689, %v2752
  %v4964 = vmax.f32 %v2696, %v2759
  %v4965 = vmax.f32 %v2829, %v2892
  %v4966 = vmax.f32 %v2836, %v2899
  %v4967 = vmax.f32 %v2843, %v2906
  %v4968 = vmax.f32 %v2850, %v2913
  %v4969 = vmax.f32 %v2857, %v2920
  %v4970 = vmax.f32 %v2864, %v2927
  %v4971 = vmax.f32 %v2871, %v2934
  %v4972 = vmax.f32 %v2878, %v2941
  %v4973 = vmax.f32 %v2885, %v2948
  %v4974 = vmax.f32 %v3018, %v3081
  %v4975 = vmax.f32 %v3025, %v3088
  %v4976 = vmax.f32 %v3032, %v3095
  %v4977 = vmax.f32 %v3039, %v3102
  %v4978 = vmax.f32 %v3046, %v3109
  %v4979 = vmax.f32 %v3053, %v3116
  %v4980 = vmax.f32 %v3060, %v3123
  %v4981 = vmax.f32 %v3067, %v3130
  %v4982 = vmax.f32 %v3074, %v3137
  %v4983 = vmax.f32 %v3207, %v3270
  %v4984 = vmax.f32 %v3214, %v3277
  %v4985 = vmax.f32 %v3221, %v3284
  %v4986 = vmax.f32 %v3228, %v3291
  %v4987 = vmax.f32 %v3235, %v3298
  %v4988 = vmax.f32 %v3242, %v3305
  %v4989 = vmax.f32 %v3249, %v3312
  %v4990 = vmax.f32 %v3256, %v3319
  %v4991 = vmax.f32 %v3263, %v3326
  %v4992 = vmax.f32 %v3396, %v3459
  %v4993 = vmax.f32 %v3403, %v3466
  %v4994 = vmax.f32 %v3410, %v3473
  %v4995 = vmax.f32 %v3417, %v3480
  %v4996 = vmax.f32 %v3424, %v3487
  %v4997 = vmax.f32 %v3431, %v3494
  %v4998 = vmax.f32 %v3438, %v3501
  %v4999 = vmax.f32 %v3445, %v3508
  %v5000 = vmax.f32 %v3452, %v3515
  %v5001 = vmax.f32 %v3585, %v3648
  %v5002 = vmax.f32 %v3592, %v3655
  %v5003 = vmax.f32 %v3599, %v3662
  %v5004 = vmax.f32 %v3606, %v3669
  %v5005 = vmax.f32 %v3613, %v3676
  %v5006 = vmax.f32 %v3620, %v3683
  %v5007 = vmax.f32 %v3627, %v3690
  %v5008 = vmax.f32 %v3634, %v3697
  %v5009 = vmax.f32 %v3641, %v3704
  %v5010 = vmax.f32 %v3774, %v3837
  %v5011 = vmax.f32 %v3781, %v3844
  %v5012 = vmax.f32 %v3788, %v3851
  %v5013 = vmax.f32 %v3795, %v3858
  %v5014 = vmax.f32 %v3802, %v3865
  %v5015 = vmax.f32 %v3809, %v3872
  %v5016 = vmax.f32 %v3816, %v3879
  %v5017 = vmax.f32 %v3823, %v3886
  %v5018 = vmax.f32 %v3830, %v3893
  %v5019 = vmax.f32 %v3963, %v4026
  %v5020 = vmax.f32 %v3970, %v4033
  %v5021 = vmax.f32 %v3977, %v4040
  %v5022 = vmax.f32 %v3984, %v4047
  %v5023 = vmax.f32 %v3991, %v4054
  %v5024 = vmax.f32 %v3998, %v4061
  %v5025 = vmax.f32 %v4005, %v4068
  %v5026 = vmax.f32 %v4012, %v4075
  %v5027 = vmax.f32 %v4019, %v4082
  %v5028 = vmax.f32 %v4152, %v4215
  %v5029 = vmax.f32 %v4159, %v4222
  %v5030 = vmax.f32 %v4166, %v4229
  %v5031 = vmax.f32 %v4173, %v4236
  %v5032 = vmax.f32 %v4180, %v4243
  %v5033 = vmax.f32 %v4187, %v4250
  %v5034 = vmax.f32 %v4194, %v4257
  %v5035 = vmax.f32 %v4201, %v4264
  %v5036 = vmax.f32 %v4208, %v4271
  %v5037 = vmax.f32 %v4341, %v4404
  %v5038 = vmax.f32 %v4348, %v4411
  %v5039 = vmax.f32 %v4355, %v4418
  %v5040 = vmax.f32 %v4362, %v4425
  %v5041 = vmax.f32 %v4369, %v4432
  %v5042 = vmax.f32 %v4376, %v4439
  %v5043 = vmax.f32 %v4383, %v4446
  %v5044 = vmax.f32 %v4390, %v4453
  %v5045 = vmax.f32 %v4397, %v4460
  %v5046 = vmax.f32 %v4530, %v4593
  %v5047 = vmax.f32 %v4537, %v4600
  %v5048 = vmax.f32 %v4544, %v4607
  %v5049 = vmax.f32 %v4551, %v4614
  %v5050 = vmax.f32 %v4558, %v4621
  %v5051 = vmax.f32 %v4565, %v4628
  %v5052 = vmax.f32 %v4572, %v4635
  %v5053 = vmax.f32 %v4579, %v4642
  %v5054 = vmax.f32 %v4586, %v4649
  %v5055 = vmax.f32 %v4719, %v4782
  %v5056 = vmax.f32 %v4726, %v4789
  %v5057 = vmax.f32 %v4733, %v4796
  %v5058 = vmax.f32 %v4740, %v4803
  %v5059 = vmax.f32 %v4747, %v4810
  %v5060 = vmax.f32 %v4754, %v4817
  %v5061 = vmax.f32 %v4761, %v4824
  %v5062 = vmax.f32 %v4768, %v4831
  %v5063 = vmax.f32 %v4775, %v4838
  %v5064 = vmax.f32 %v4902, %v1632
  %v5065 = vmax.f32 %v4903, %v1639
  %v5066 = vmax.f32 %v4904, %v1646
  %v5067 = vmax.f32 %v4905, %v1653
  %v5068 = vmax.f32 %v4906, %v1660
  %v5069 = vmax.f32 %v4907, %v1667
  %v5070 = vmax.f32 %v4908, %v1674
  %v5071 = vmax.f32 %v4909, %v1681
  %v5072 = vmax.f32 %v4910, %v1688
  %v5073 = vmax.f32 %v4911, %v1821
  %v5074 = vmax.f32 %v4912, %v1828
  %v5075 = vmax.f32 %v4913, %v1835
  %v5076 = vmax.f32 %v4914, %v1842
  %v5077 = vmax.f32 %v4915, %v1849
  %v5078 = vmax.f32 %v4916, %v1856
  %v5079 = vmax.f32 %v4917, %v1863
  %v5080 = vmax.f32 %v4918, %v1870
  %v5081 = vmax.f32 %v4919, %v1877
  %v5082 = vmax.f32 %v4920, %v2010
  %v5083 = vmax.f32 %v4921, %v2017
  %v5084 = vmax.f32 %v4922, %v2024
  %v5085 = vmax.f32 %v4923, %v2031
  %v5086 = vmax.f32 %v4924, %v2038
  %v5087 = vmax.f32 %v4925, %v2045
  %v5088 = vmax.f32 %v4926, %v2052
  %v5089 = vmax.f32 %v4927, %v2059
  %v5090 = vmax.f32 %v4928, %v2066
  %v5091 = vmax.f32 %v4929, %v2199
  %v5092 = vmax.f32 %v4930, %v2206
  %v5093 = vmax.f32 %v4931, %v2213
  %v5094 = vmax.f32 %v4932, %v2220
  %v5095 = vmax.f32 %v4933, %v2227
  %v5096 = vmax.f32 %v4934, %v2234
  %v5097 = vmax.f32 %v4935, %v2241
  %v5098 = vmax.f32 %v4936, %v2248
  %v5099 = vmax.f32 %v4937, %v2255
  %v5100 = vmax.f32 %v4938, %v2388
  %v5101 = vmax.f32 %v4939, %v2395
  %v5102 = vmax.f32 %v4940, %v2402
  %v5103 = vmax.f32 %v4941, %v2409
  %v5104 = vmax.f32 %v4942, %v2416
  %v5105 = vmax.f32 %v4943, %v2423
  %v5106 = vmax.f32 %v4944, %v2430
  %v5107 = vmax.f32 %v4945, %v2437
  %v5108 = vmax.f32 %v4946, %v2444
  %v5109 = vmax.f32 %v4947, %v2577
  %v5110 = vmax.f32 %v4948, %v2584
  %v5111 = vmax.f32 %v4949, %v2591
  %v5112 = vmax.f32 %v4950, %v2598
  %v5113 = vmax.f32 %v4951, %v2605
  %v5114 = vmax.f32 %v4952, %v2612
  %v5115 = vmax.f32 %v4953, %v2619
  %v5116 = vmax.f32 %v4954, %v2626
  %v5117 = vmax.f32 %v4955, %v2633
  %v5118 = vmax.f32 %v4956, %v2766
  %v5119 = vmax.f32 %v4957, %v2773
  %v5120 = vmax.f32 %v4958, %v2780
  %v5121 = vmax.f32 %v4959, %v2787
  %v5122 = vmax.f32 %v4960, %v2794
  %v5123 = vmax.f32 %v4961, %v2801
  %v5124 = vmax.f32 %v4962, %v2808
  %v5125 = vmax.f32 %v4963, %v2815
  %v5126 = vmax.f32 %v4964, %v2822
  %v5127 = vmax.f32 %v4965, %v2955
  %v5128 = vmax.f32 %v4966, %v2962
  %v5129 = vmax.f32 %v4967, %v2969
  %v5130 = vmax.f32 %v4968, %v2976
  %v5131 = vmax.f32 %v4969, %v2983
  %v5132 = vmax.f32 %v4970, %v2990
  %v5133 = vmax.f32 %v4971, %v2997
  %v5134 = vmax.f32 %v4972, %v3004
  %v5135 = vmax.f32 %v4973, %v3011
  %v5136 = vmax.f32 %v4974, %v3144
  %v5137 = vmax.f32 %v4975, %v3151
  %v5138 = vmax.f32 %v4976, %v3158
  %v5139 = vmax.f32 %v4977, %v3165
  %v5140 = vmax.f32 %v4978, %v3172
  %v5141 = vmax.f32 %v4979, %v3179
  %v5142 = vmax.f32 %v4980, %v3186
  %v5143 = vmax.f32 %v4981, %v3193
  %v5144 = vmax.f32 %v4982, %v3200
  %v5145 = vmax.f32 %v4983, %v3333
  %v5146 = vmax.f32 %v4984, %v3340
  %v5147 = vmax.f32 %v4985, %v3347
  %v5148 = vmax.f32 %v4986, %v3354
  %v5149 = vmax.f32 %v4987, %v3361
  %v5150 = vmax.f32 %v4988, %v3368
  %v5151 = vmax.f32 %v4989, %v3375
  %v5152 = vmax.f32 %v4990, %v3382
  %v5153 = vmax.f32 %v4991, %v3389
  %v5154 = vmax.f32 %v4992, %v3522
  %v5155 = vmax.f32 %v4993, %v3529
  %v5156 = vmax.f32 %v4994, %v3536
  %v5157 = vmax.f32 %v4995, %v3543
  %v5158 = vmax.f32 %v4996, %v3550
  %v5159 = vmax.f32 %v4997, %v3557
  %v5160 = vmax.f32 %v4998, %v3564
  %v5161 = vmax.f32 %v4999, %v3571
  %v5162 = vmax.f32 %v5000, %v3578
  %v5163 = vmax.f32 %v5001, %v3711
  %v5164 = vmax.f32 %v5002, %v3718
  %v5165 = vmax.f32 %v5003, %v3725
  %v5166 = vmax.f32 %v5004, %v3732
  %v5167 = vmax.f32 %v5005, %v3739
  %v5168 = vmax.f32 %v5006, %v3746
  %v5169 = vmax.f32 %v5007, %v3753
  %v5170 = vmax.f32 %v5008, %v3760
  %v5171 = vmax.f32 %v5009, %v3767
  %v5172 = vmax.f32 %v5010, %v3900
  %v5173 = vmax.f32 %v5011, %v3907
  %v5174 = vmax.f32 %v5012, %v3914
  %v5175 = vmax.f32 %v5013, %v3921
  %v5176 = vmax.f32 %v5014, %v3928
  %v5177 = vmax.f32 %v5015, %v3935
  %v5178 = vmax.f32 %v5016, %v3942
  %v5179 = vmax.f32 %v5017, %v3949
  %v5180 = vmax.f32 %v5018, %v3956
  %v5181 = vmax.f32 %v5019, %v4089
  %v5182 = vmax.f32 %v5020, %v4096
  %v5183 = vmax.f32 %v5021, %v4103
  %v5184 = vmax.f32 %v5022, %v4110
  %v5185 = vmax.f32 %v5023, %v4117
  %v5186 = vmax.f32 %v5024, %v4124
  %v5187 = vmax.f32 %v5025, %v4131
  %v5188 = vmax.f32 %v5026, %v4138
  %v5189 = vmax.f32 %v5027, %v4145
  %v5190 = vmax.f32 %v5028, %v4278
  %v5191 = vmax.f32 %v5029, %v4285
  %v5192 = vmax.f32 %v5030, %v4292
  %v5193 = vmax.f32 %v5031, %v4299
  %v5194 = vmax.f32 %v5032, %v4306
  %v5195 = vmax.f32 %v5033, %v4313
  %v5196 = vmax.f32 %v5034, %v4320
  %v5197 = vmax.f32 %v5035, %v4327
  %v5198 = vmax.f32 %v5036, %v4334
  %v5199 = vmax.f32 %v5037, %v4467
  %v5200 = vmax.f32 %v5038, %v4474
  %v5201 = vmax.f32 %v5039, %v4481
  %v5202 = vmax.f32 %v5040, %v4488
  %v5203 = vmax.f32 %v5041, %v4495
  %v5204 = vmax.f32 %v5042, %v4502
  %v5205 = vmax.f32 %v5043, %v4509
  %v5206 = vmax.f32 %v5044, %v4516
  %v5207 = vmax.f32 %v5045, %v4523
  %v5208 = vmax.f32 %v5046, %v4656
  %v5209 = vmax.f32 %v5047, %v4663
  %v5210 = vmax.f32 %v5048, %v4670
  %v5211 = vmax.f32 %v5049, %v4677
  %v5212 = vmax.f32 %v5050, %v4684
  %v5213 = vmax.f32 %v5051, %v4691
  %v5214 = vmax.f32 %v5052, %v4698
  %v5215 = vmax.f32 %v5053, %v4705
  %v5216 = vmax.f32 %v5054, %v4712
  %v5217 = vmax.f32 %v5055, %v4845
  %v5218 = vmax.f32 %v5056, %v4852
  %v5219 = vmax.f32 %v5057, %v4859
  %v5220 = vmax.f32 %v5058, %v4866
  %v5221 = vmax.f32 %v5059, %v4873
  %v5222 = vmax.f32 %v5060, %v4880
  %v5223 = vmax.f32 %v5061, %v4887
  %v5224 = vmax.f32 %v5062, %v4894
  %v5225 = vmax.f32 %v5063, %v4901
  %vm5388 = vcmask 1041409
  %v5389 = vsel %vm5388, %v5065, %v5064
  %vm5390 = vcmask 1042434
  %v5391 = vsel %vm5390, %v5066, %v5389
  %vm5392 = vcmask 1043459
  %v5393 = vsel %vm5392, %v5067, %v5391
  %vm5394 = vcmask 1044484
  %v5395 = vsel %vm5394, %v5068, %v5393
  %vm5396 = vcmask 1045509
  %v5397 = vsel %vm5396, %v5069, %v5395
  %vm5398 = vcmask 1046534
  %v5399 = vsel %vm5398, %v5070, %v5397
  %vm5400 = vcmask 1047559
  %v5401 = vsel %vm5400, %v5071, %v5399
  %v5402 = vsel %vm5388, %v5074, %v5073
  %v5403 = vsel %vm5390, %v5075, %v5402
  %v5404 = vsel %vm5392, %v5076, %v5403
  %v5405 = vsel %vm5394, %v5077, %v5404
  %v5406 = vsel %vm5396, %v5078, %v5405
  %v5407 = vsel %vm5398, %v5079, %v5406
  %v5408 = vsel %vm5400, %v5080, %v5407
  %v5409 = vsel %vm5388, %v5083, %v5082
  %v5410 = vsel %vm5390, %v5084, %v5409
  %v5411 = vsel %vm5392, %v5085, %v5410
  %v5412 = vsel %vm5394, %v5086, %v5411
  %v5413 = vsel %vm5396, %v5087, %v5412
  %v5414 = vsel %vm5398, %v5088, %v5413
  %v5415 = vsel %vm5400, %v5089, %v5414
  %v5416 = vsel %vm5388, %v5092, %v5091
  %v5417 = vsel %vm5390, %v5093, %v5416
  %v5418 = vsel %vm5392, %v5094, %v5417
  %v5419 = vsel %vm5394, %v5095, %v5418
  %v5420 = vsel %vm5396, %v5096, %v5419
  %v5421 = vsel %vm5398, %v5097, %v5420
  %v5422 = vsel %vm5400, %v5098, %v5421
  %v5423 = vsel %vm5388, %v5101, %v5100
  %v5424 = vsel %vm5390, %v5102, %v5423
  %v5425 = vsel %vm5392, %v5103, %v5424
  %v5426 = vsel %vm5394, %v5104, %v5425
  %v5427 = vsel %vm5396, %v5105, %v5426
  %v5428 = vsel %vm5398, %v5106, %v5427
  %v5429 = vsel %vm5400, %v5107, %v5428
  %v5430 = vsel %vm5388, %v5110, %v5109
  %v5431 = vsel %vm5390, %v5111, %v5430
  %v5432 = vsel %vm5392, %v5112, %v5431
  %v5433 = vsel %vm5394, %v5113, %v5432
  %v5434 = vsel %vm5396, %v5114, %v5433
  %v5435 = vsel %vm5398, %v5115, %v5434
  %v5436 = vsel %vm5400, %v5116, %v5435
  %v5437 = vsel %vm5388, %v5119, %v5118
  %v5438 = vsel %vm5390, %v5120, %v5437
  %v5439 = vsel %vm5392, %v5121, %v5438
  %v5440 = vsel %vm5394, %v5122, %v5439
  %v5441 = vsel %vm5396, %v5123, %v5440
  %v5442 = vsel %vm5398, %v5124, %v5441
  %v5443 = vsel %vm5400, %v5125, %v5442
  %v5444 = vsel %vm5388, %v5128, %v5127
  %v5445 = vsel %vm5390, %v5129, %v5444
  %v5446 = vsel %vm5392, %v5130, %v5445
  %v5447 = vsel %vm5394, %v5131, %v5446
  %v5448 = vsel %vm5396, %v5132, %v5447
  %v5449 = vsel %vm5398, %v5133, %v5448
  %v5450 = vsel %vm5400, %v5134, %v5449
  %v5451 = vsel %vm5388, %v5137, %v5136
  %v5452 = vsel %vm5390, %v5138, %v5451
  %v5453 = vsel %vm5392, %v5139, %v5452
  %v5454 = vsel %vm5394, %v5140, %v5453
  %v5455 = vsel %vm5396, %v5141, %v5454
  %v5456 = vsel %vm5398, %v5142, %v5455
  %v5457 = vsel %vm5400, %v5143, %v5456
  %v5458 = vsel %vm5388, %v5146, %v5145
  %v5459 = vsel %vm5390, %v5147, %v5458
  %v5460 = vsel %vm5392, %v5148, %v5459
  %v5461 = vsel %vm5394, %v5149, %v5460
  %v5462 = vsel %vm5396, %v5150, %v5461
  %v5463 = vsel %vm5398, %v5151, %v5462
  %v5464 = vsel %vm5400, %v5152, %v5463
  %v5465 = vsel %vm5388, %v5155, %v5154
  %v5466 = vsel %vm5390, %v5156, %v5465
  %v5467 = vsel %vm5392, %v5157, %v5466
  %v5468 = vsel %vm5394, %v5158, %v5467
  %v5469 = vsel %vm5396, %v5159, %v5468
  %v5470 = vsel %vm5398, %v5160, %v5469
  %v5471 = vsel %vm5400, %v5161, %v5470
  %v5472 = vsel %vm5388, %v5164, %v5163
  %v5473 = vsel %vm5390, %v5165, %v5472
  %v5474 = vsel %vm5392, %v5166, %v5473
  %v5475 = vsel %vm5394, %v5167, %v5474
  %v5476 = vsel %vm5396, %v5168, %v5475
  %v5477 = vsel %vm5398, %v5169, %v5476
  %v5478 = vsel %vm5400, %v5170, %v5477
  %v5479 = vsel %vm5388, %v5173, %v5172
  %v5480 = vsel %vm5390, %v5174, %v5479
  %v5481 = vsel %vm5392, %v5175, %v5480
  %v5482 = vsel %vm5394, %v5176, %v5481
  %v5483 = vsel %vm5396, %v5177, %v5482
  %v5484 = vsel %vm5398, %v5178, %v5483
  %v5485 = vsel %vm5400, %v5179, %v5484
  %v5486 = vsel %vm5388, %v5182, %v5181
  %v5487 = vsel %vm5390, %v5183, %v5486
  %v5488 = vsel %vm5392, %v5184, %v5487
  %v5489 = vsel %vm5394, %v5185, %v5488
  %v5490 = vsel %vm5396, %v5186, %v5489
  %v5491 = vsel %vm5398, %v5187, %v5490
  %v5492 = vsel %vm5400, %v5188, %v5491
  %v5493 = vsel %vm5388, %v5191, %v5190
  %v5494 = vsel %vm5390, %v5192, %v5493
  %v5495 = vsel %vm5392, %v5193, %v5494
  %v5496 = vsel %vm5394, %v5194, %v5495
  %v5497 = vsel %vm5396, %v5195, %v5496
  %v5498 = vsel %vm5398, %v5196, %v5497
  %v5499 = vsel %vm5400, %v5197, %v5498
  %v5500 = vsel %vm5388, %v5200, %v5199
  %v5501 = vsel %vm5390, %v5201, %v5500
  %v5502 = vsel %vm5392, %v5202, %v5501
  %v5503 = vsel %vm5394, %v5203, %v5502
  %v5504 = vsel %vm5396, %v5204, %v5503
  %v5505 = vsel %vm5398, %v5205, %v5504
  %v5506 = vsel %vm5400, %v5206, %v5505
  %v5507 = vsel %vm5388, %v5209, %v5208
  %v5508 = vsel %vm5390, %v5210, %v5507
  %v5509 = vsel %vm5392, %v5211, %v5508
  %v5510 = vsel %vm5394, %v5212, %v5509
  %v5511 = vsel %vm5396, %v5213, %v5510
  %v5512 = vsel %vm5398, %v5214, %v5511
  %v5513 = vsel %vm5400, %v5215, %v5512
  %v5514 = vsel %vm5388, %v5218, %v5217
  %v5515 = vsel %vm5390, %v5219, %v5514
  %v5516 = vsel %vm5392, %v5220, %v5515
  %v5517 = vsel %vm5394, %v5221, %v5516
  %v5518 = vsel %vm5396, %v5222, %v5517
  %v5519 = vsel %vm5398, %v5223, %v5518
  %v5520 = vsel %vm5400, %v5224, %v5519
  %vm5557 = vcmask 261120
  %5558 = vst.msk [vmem:[%s5] sm:$0xff] %vm5557, %v5401
  %vm5559 = vcmask 253952
  %5560 = vst.msk [vmem:[%s5 + $0x8] sm:$0x1] %vm5559, %v5072
  %5561 = vst.msk [vmem:[%s5 + $0x10] sm:$0xff] %vm5557, %v5408
  %5562 = vst.msk [vmem:[%s5 + $0x18] sm:$0x1] %vm5559, %v5081
  %5563 = vst.msk [vmem:[%s5 + $0x20] sm:$0xff] %vm5557, %v5415
  %5564 = vst.msk [vmem:[%s5 + $0x28] sm:$0x1] %vm5559, %v5090
  %5565 = vst.msk [vmem:[%s5 + $0x30] sm:$0xff] %vm5557, %v5422
  %5566 = vst.msk [vmem:[%s5 + $0x38] sm:$0x1] %vm5559, %v5099
  %5567 = vst.msk [vmem:[%s5 + $0x40] sm:$0xff] %vm5557, %v5429
  %5568 = vst.msk [vmem:[%s5 + $0x48] sm:$0x1] %vm5559, %v5108
  %5569 = vst.msk [vmem:[%s5 + $0x50] sm:$0xff] %vm5557, %v5436
  %5570 = vst.msk [vmem:[%s5 + $0x58] sm:$0x1] %vm5559, %v5117
  %5571 = vst.msk [vmem:[%s5 + $0x60] sm:$0xff] %vm5557, %v5443
  %5572 = vst.msk [vmem:[%s5 + $0x68] sm:$0x1] %vm5559, %v5126
  %5573 = vst.msk [vmem:[%s5 + $0x70] sm:$0xff] %vm5557, %v5450
  %5574 = vst.msk [vmem:[%s5 + $0x78] sm:$0x1] %vm5559, %v5135
  %5575 = vst.msk [vmem:[%s5 + $0x80] sm:$0xff] %vm5557, %v5457
  %5576 = vst.msk [vmem:[%s5 + $0x88] sm:$0x1] %vm5559, %v5144
  %5577 = vst.msk [vmem:[%s5 + $0x90] sm:$0xff] %vm5557, %v5464
  %5578 = vst.msk [vmem:[%s5 + $0x98] sm:$0x1] %vm5559, %v5153
  %5579 = vst.msk [vmem:[%s5 + $0xa0] sm:$0xff] %vm5557, %v5471
  %5580 = vst.msk [vmem:[%s5 + $0xa8] sm:$0x1] %vm5559, %v5162
  %5581 = vst.msk [vmem:[%s5 + $0xb0] sm:$0xff] %vm5557, %v5478
  %5582 = vst.msk [vmem:[%s5 + $0xb8] sm:$0x1] %vm5559, %v5171
  %5583 = vst.msk [vmem:[%s5 + $0xc0] sm:$0xff] %vm5557, %v5485
  %5584 = vst.msk [vmem:[%s5 + $0xc8] sm:$0x1] %vm5559, %v5180
  %5585 = vst.msk [vmem:[%s5 + $0xd0] sm:$0xff] %vm5557, %v5492
  %5586 = vst.msk [vmem:[%s5 + $0xd8] sm:$0x1] %vm5559, %v5189
  %5587 = vst.msk [vmem:[%s5 + $0xe0] sm:$0xff] %vm5557, %v5499
  %5588 = vst.msk [vmem:[%s5 + $0xe8] sm:$0x1] %vm5559, %v5198
  %5589 = vst.msk [vmem:[%s5 + $0xf0] sm:$0xff] %vm5557, %v5506
  %5590 = vst.msk [vmem:[%s5 + $0xf8] sm:$0x1] %vm5559, %v5207
  %5591 = vst.msk [vmem:[%s5 + $0x100] sm:$0xff] %vm5557, %v5513
  %5592 = vst.msk [vmem:[%s5 + $0x108] sm:$0x1] %vm5559, %v5216
  %5593 = vst.msk [vmem:[%s5 + $0x110] sm:$0xff] %vm5557, %v5520
  %5594 = vst.msk [vmem:[%s5 + $0x118] sm:$0x1] %vm5559, %v5225
  // Predicated region
  $region22: #{actor_critic_forward.5} parent=0 // pred_check
    _
  $region23: #{actor_critic_forward.5} parent=0 // pred_check_branch
    %5596 = sbr.rel (0) target = $region25
  $region24: #{actor_critic_forward.5} parent=0 // pred_region
    _
  $region25: #{actor_critic_forward.5} parent=0 // pred_fallthru
    _
  // Predicated region
  $region26: #{actor_critic_forward.5} parent=0 // pred_check
    _
  $region27: #{actor_critic_forward.5} parent=0 // pred_check_branch
    %5598 = sbr.rel (0) target = $region29
  $region28: #{actor_critic_forward.5} parent=0 // pred_region
    _
  $region29: #{actor_critic_forward.5} parent=0 // pred_fallthru
    _

// kernel: actor_critic_forward.6
$region0: #{actor_critic_forward.6}
  #allocation0 [shape = 'u32[]', space=smem, size = 0x4, offset = 0x4, fixed_abs, tag = 'smem constant byte address 0x4 - core index']
  #allocation1 [shape = 'u32[144,128]{1,0:T(1,128)}', space=vmem, size = 0x12000, scoped, tag = 'internal scratch']
  %s0 = inlined_call_operand.vmem [shape: bf16[18,800], index: 0, kind: input, shape index: {}]
  %s1 = inlined_call_operand.vmem [shape: bf16[800,64], index: 1, kind: input, shape index: {}]
  %s2 = inlined_call_operand.vmem [shape: f32[1,64], index: 2, kind: input, shape index: {}]
  %s3 = inlined_call_operand.vmem [shape: f32[18,64], index: 3, kind: output, shape index: {0}]
  %s4 = inlined_call_operand.vmem [shape: f32[1,64], index: 4, kind: output, shape index: {1}]
  %s5 = inlined_call_operand.vmem [shape: f32[1,64], index: 5, kind: output, shape index: {2}]
  %6 = xla_tuple %s3, %s4, %s5
  %s7 = sld [smem:[#allocation0]]
  $region38: #{actor_critic_forward.6} parent=0
    _
  %s9 = ssub.s32 1, %s7
  %s10 = scalar_select 0, %s9, %s7
  // Predicated region
  $region2: #{actor_critic_forward.6} parent=0 // pred_check
    _
  $region3: #{actor_critic_forward.6} parent=0 // pred_check_branch
    %12 = sbr.rel (0) target = $region5
  $region4: #{actor_critic_forward.6} parent=0 // pred_region
    _
  $region5: #{actor_critic_forward.6} parent=0 // pred_fallthru
    _
  // Predicated region
  $region6: #{actor_critic_forward.6} parent=0 // pred_check
    _
  $region7: #{actor_critic_forward.6} parent=0 // pred_check_branch
    %14 = sbr.rel (0) target = $region9
  $region8: #{actor_critic_forward.6} parent=0 // pred_region
    _
  $region9: #{actor_critic_forward.6} parent=0 // pred_fallthru
    _
  // Predicated region
  $region10: #{actor_critic_forward.6} parent=0 // pred_check
    _
  $region11: #{actor_critic_forward.6} parent=0 // pred_check_branch
    %16 = sbr.rel (0) target = $region13
  $region12: #{actor_critic_forward.6} parent=0 // pred_region
    _
  $region13: #{actor_critic_forward.6} parent=0 // pred_fallthru
    _
  %v18 = vld [vmem:[%s0] sm:$0xff]
  %v19 = vld [vmem:[%s0 + $0x8] sm:$0xff]
  %v20 = vld [vmem:[%s0 + $0x10] sm:$0xff]
  %v21 = vld [vmem:[%s0 + $0x18] sm:$0xf]
  %v22 = vld [vmem:[%s0 + $0x1c] sm:$0xff]
  %v23 = vld [vmem:[%s0 + $0x24] sm:$0xff]
  %v24 = vld [vmem:[%s0 + $0x2c] sm:$0xff]
  %v25 = vld [vmem:[%s0 + $0x34] sm:$0xf]
  %v26 = vld [vmem:[%s0 + $0x38] sm:$0x11]
  %v27 = vld [vmem:[%s0 + $0x40] sm:$0x11]
  %v28 = vld [vmem:[%s0 + $0x48] sm:$0x11]
  %v29 = vld [vmem:[%s0 + $0x50] sm:$0x1]
  %v30 = vld [vmem:[%s1] sm:$0xf]
  %v31 = vld [vmem:[%s1 + $0x4] sm:$0xf]
  %v32 = vld [vmem:[%s1 + $0x8] sm:$0xf]
  %v33 = vld [vmem:[%s1 + $0xc] sm:$0xf]
  %v34 = vld [vmem:[%s1 + $0x10] sm:$0xf]
  %v35 = vld [vmem:[%s1 + $0x14] sm:$0xf]
  %v36 = vld [vmem:[%s1 + $0x18] sm:$0xf]
  %v37 = vld [vmem:[%s1 + $0x1c] sm:$0xf]
  %v38 = vld [vmem:[%s1 + $0x20] sm:$0xf]
  %v39 = vld [vmem:[%s1 + $0x24] sm:$0xf]
  %v40 = vld [vmem:[%s1 + $0x28] sm:$0xf]
  %v41 = vld [vmem:[%s1 + $0x2c] sm:$0xf]
  %v42 = vld [vmem:[%s1 + $0x30] sm:$0xf]
  %v43 = vld [vmem:[%s1 + $0x34] sm:$0xf]
  %v44 = vld [vmem:[%s1 + $0x38] sm:$0xf]
  %v45 = vld [vmem:[%s1 + $0x3c] sm:$0xf]
  %v46 = vld [vmem:[%s1 + $0x40] sm:$0xf]
  %v47 = vld [vmem:[%s1 + $0x44] sm:$0xf]
  %v48 = vld [vmem:[%s1 + $0x48] sm:$0xf]
  %v49 = vld [vmem:[%s1 + $0x4c] sm:$0xf]
  %v50 = vld [vmem:[%s1 + $0x50] sm:$0xf]
  %v51 = vld [vmem:[%s1 + $0x54] sm:$0xf]
  %v52 = vld [vmem:[%s1 + $0x58] sm:$0xf]
  %v53 = vld [vmem:[%s1 + $0x5c] sm:$0xf]
  %v54 = vld [vmem:[%s1 + $0x60] sm:$0xf]
  %v55 = vld [vmem:[%s1 + $0x64] sm:$0xf]
  %v56 = vld [vmem:[%s1 + $0x68] sm:$0xf]
  %v57 = vld [vmem:[%s1 + $0x6c] sm:$0xf]
  %v58 = vld [vmem:[%s1 + $0x70] sm:$0xf]
  %v59 = vld [vmem:[%s1 + $0x74] sm:$0xf]
  %v60 = vld [vmem:[%s1 + $0x78] sm:$0xf]
  %v61 = vld [vmem:[%s1 + $0x7c] sm:$0xf]
  %v62 = vld [vmem:[%s1 + $0x80] sm:$0xf]
  %v63 = vld [vmem:[%s1 + $0x84] sm:$0xf]
  %v64 = vld [vmem:[%s1 + $0x88] sm:$0xf]
  %v65 = vld [vmem:[%s1 + $0x8c] sm:$0xf]
  %v66 = vld [vmem:[%s1 + $0x90] sm:$0xf]
  %v67 = vld [vmem:[%s1 + $0x94] sm:$0xf]
  %v68 = vld [vmem:[%s1 + $0x98] sm:$0xf]
  %v69 = vld [vmem:[%s1 + $0x9c] sm:$0xf]
  %v70 = vld [vmem:[%s1 + $0xa0] sm:$0xf]
  %v71 = vld [vmem:[%s1 + $0xa4] sm:$0xf]
  %v72 = vld [vmem:[%s1 + $0xa8] sm:$0xf]
  %v73 = vld [vmem:[%s1 + $0xac] sm:$0xf]
  %v74 = vld [vmem:[%s1 + $0xb0] sm:$0xf]
  %v75 = vld [vmem:[%s1 + $0xb4] sm:$0xf]
  %v76 = vld [vmem:[%s1 + $0xb8] sm:$0xf]
  %v77 = vld [vmem:[%s1 + $0xbc] sm:$0xf]
  %v78 = vld [vmem:[%s1 + $0xc0] sm:$0xf]
  %v79 = vld [vmem:[%s1 + $0xc4] sm:$0xf]
  %v80 = vld [vmem:[%s1 + $0xc8] sm:$0xf]
  %v81 = vld [vmem:[%s1 + $0xcc] sm:$0xf]
  %v82 = vld [vmem:[%s1 + $0xd0] sm:$0xf]
  %v83 = vld [vmem:[%s1 + $0xd4] sm:$0xf]
  %v84 = vld [vmem:[%s1 + $0xd8] sm:$0xf]
  %v85 = vld [vmem:[%s1 + $0xdc] sm:$0xf]
  %v86 = vld [vmem:[%s1 + $0xe0] sm:$0xf]
  %v87 = vld [vmem:[%s1 + $0xe4] sm:$0xf]
  %v88 = vld [vmem:[%s1 + $0xe8] sm:$0xf]
  %v89 = vld [vmem:[%s1 + $0xec] sm:$0xf]
  %v90 = vld [vmem:[%s1 + $0xf0] sm:$0xf]
  %v91 = vld [vmem:[%s1 + $0xf4] sm:$0xf]
  %v92 = vld [vmem:[%s1 + $0xf8] sm:$0xf]
  %v93 = vld [vmem:[%s1 + $0xfc] sm:$0xf]
  %v94 = vld [vmem:[%s1 + $0x100] sm:$0xf]
  %v95 = vld [vmem:[%s1 + $0x104] sm:$0xf]
  %v96 = vld [vmem:[%s1 + $0x108] sm:$0xf]
  %v97 = vld [vmem:[%s1 + $0x10c] sm:$0xf]
  %v98 = vld [vmem:[%s1 + $0x110] sm:$0xf]
  %v99 = vld [vmem:[%s1 + $0x114] sm:$0xf]
  %v100 = vld [vmem:[%s1 + $0x118] sm:$0xf]
  %v101 = vld [vmem:[%s1 + $0x11c] sm:$0xf]
  %v102 = vld [vmem:[%s1 + $0x120] sm:$0xf]
  %v103 = vld [vmem:[%s1 + $0x124] sm:$0xf]
  %v104 = vld [vmem:[%s1 + $0x128] sm:$0xf]
  %v105 = vld [vmem:[%s1 + $0x12c] sm:$0xf]
  %v106 = vld [vmem:[%s1 + $0x130] sm:$0xf]
  %v107 = vld [vmem:[%s1 + $0x134] sm:$0xf]
  %v108 = vld [vmem:[%s1 + $0x138] sm:$0xf]
  %v109 = vld [vmem:[%s1 + $0x13c] sm:$0xf]
  %v110 = vld [vmem:[%s1 + $0x140] sm:$0xf]
  %v111 = vld [vmem:[%s1 + $0x144] sm:$0xf]
  %v112 = vld [vmem:[%s1 + $0x148] sm:$0xf]
  %v113 = vld [vmem:[%s1 + $0x14c] sm:$0xf]
  %v114 = vld [vmem:[%s1 + $0x150] sm:$0xf]
  %v115 = vld [vmem:[%s1 + $0x154] sm:$0xf]
  %v116 = vld [vmem:[%s1 + $0x158] sm:$0xf]
  %v117 = vld [vmem:[%s1 + $0x15c] sm:$0xf]
  %v118 = vld [vmem:[%s1 + $0x160] sm:$0xf]
  %v119 = vld [vmem:[%s1 + $0x164] sm:$0xf]
  %v120 = vld [vmem:[%s1 + $0x168] sm:$0xf]
  %v121 = vld [vmem:[%s1 + $0x16c] sm:$0xf]
  %v122 = vld [vmem:[%s1 + $0x170] sm:$0xf]
  %v123 = vld [vmem:[%s1 + $0x174] sm:$0xf]
  %v124 = vld [vmem:[%s1 + $0x178] sm:$0xf]
  %v125 = vld [vmem:[%s1 + $0x17c] sm:$0xf]
  %v126 = vld [vmem:[%s1 + $0x180] sm:$0xf]
  %v127 = vld [vmem:[%s1 + $0x184] sm:$0xf]
  %v128 = vld [vmem:[%s1 + $0x188] sm:$0xf]
  %v129 = vld [vmem:[%s1 + $0x18c] sm:$0xf]
  %v130 = vld [vmem:[%s2] sm:$0x1]
  %v132 = vlaneseq
  %v133 = vshrl.u32 %v132, 7
  %v134 = vsub.s32 0, %v133
  %v135 = vrot.slane %v130, %v134
  %v149 = vunpack.c.l.b16 %v18
  %v150 = vunpack.c.h.b16 %v18
  %v151 = vunpack.c.l.b16 %v19
  %v152 = vunpack.c.h.b16 %v19
  %v153 = vunpack.c.l.b16 %v20
  %v154 = vunpack.c.h.b16 %v20
  %v155 = vunpack.c.l.b16 %v21
  %v156 = vunpack.c.l.b16 %v22
  %v157 = vunpack.c.h.b16 %v22
  %v158 = vunpack.c.l.b16 %v23
  %v159 = vunpack.c.h.b16 %v23
  %v160 = vunpack.c.l.b16 %v24
  %v161 = vunpack.c.h.b16 %v24
  %v162 = vunpack.c.l.b16 %v25
  %v163 = vunpack.c.l.b16 %v26
  %v164 = vunpack.c.h.b16 %v26
  %v165 = vunpack.c.l.b16 %v27
  %v166 = vunpack.c.h.b16 %v27
  %v167 = vunpack.c.l.b16 %v28
  %v168 = vunpack.c.h.b16 %v28
  %v169 = vunpack.c.l.b16 %v29
  %v170 = vpack.c.b16 %v156, %v149
  %v171 = vpack.c.b16 %v157, %v150
  %v172 = vpack.c.b16 %v158, %v151
  %v173 = vpack.c.b16 %v159, %v152
  %v174 = vpack.c.b16 %v160, %v153
  %v175 = vpack.c.b16 %v161, %v154
  %v176 = vpack.c.b16 %v162, %v155
  %v177 = vpack.c.b16 %v163, %v163
  %v178 = vpack.c.b16 %v164, %v164
  %v179 = vpack.c.b16 %v165, %v165
  %v180 = vpack.c.b16 %v166, %v166
  %v181 = vpack.c.b16 %v167, %v167
  %v182 = vpack.c.b16 %v168, %v168
  %v183 = vpack.c.b16 %v169, %v169
  %v296 = vunpack.c.l.b16 %v30
  %v297 = vunpack.c.l.b16 %v31
  %v298 = vunpack.c.l.b16 %v32
  %v299 = vunpack.c.l.b16 %v33
  %v300 = vunpack.c.l.b16 %v34
  %v301 = vunpack.c.l.b16 %v35
  %v302 = vunpack.c.l.b16 %v36
  %v303 = vunpack.c.l.b16 %v37
  %v304 = vunpack.c.l.b16 %v38
  %v305 = vunpack.c.l.b16 %v39
  %v306 = vunpack.c.l.b16 %v40
  %v307 = vunpack.c.l.b16 %v41
  %v308 = vunpack.c.l.b16 %v42
  %v309 = vunpack.c.l.b16 %v43
  %v310 = vunpack.c.l.b16 %v44
  %v311 = vunpack.c.l.b16 %v45
  %v312 = vunpack.c.l.b16 %v46
  %v313 = vunpack.c.l.b16 %v47
  %v314 = vunpack.c.l.b16 %v48
  %v315 = vunpack.c.l.b16 %v49
  %v316 = vunpack.c.l.b16 %v50
  %v317 = vunpack.c.l.b16 %v51
  %v318 = vunpack.c.l.b16 %v52
  %v319 = vunpack.c.l.b16 %v53
  %v320 = vunpack.c.l.b16 %v54
  %v321 = vunpack.c.l.b16 %v55
  %v322 = vunpack.c.l.b16 %v56
  %v323 = vunpack.c.l.b16 %v57
  %v324 = vunpack.c.l.b16 %v58
  %v325 = vunpack.c.l.b16 %v59
  %v326 = vunpack.c.l.b16 %v60
  %v327 = vunpack.c.l.b16 %v61
  %v328 = vunpack.c.l.b16 %v62
  %v329 = vunpack.c.l.b16 %v63
  %v330 = vunpack.c.l.b16 %v64
  %v331 = vunpack.c.l.b16 %v65
  %v332 = vunpack.c.l.b16 %v66
  %v333 = vunpack.c.l.b16 %v67
  %v334 = vunpack.c.l.b16 %v68
  %v335 = vunpack.c.l.b16 %v69
  %v336 = vunpack.c.l.b16 %v70
  %v337 = vunpack.c.l.b16 %v71
  %v338 = vunpack.c.l.b16 %v72
  %v339 = vunpack.c.l.b16 %v73
  %v340 = vunpack.c.l.b16 %v74
  %v341 = vunpack.c.l.b16 %v75
  %v342 = vunpack.c.l.b16 %v76
  %v343 = vunpack.c.l.b16 %v77
  %v344 = vunpack.c.l.b16 %v78
  %v345 = vunpack.c.l.b16 %v79
  %v346 = vunpack.c.l.b16 %v80
  %v347 = vunpack.c.l.b16 %v81
  %v348 = vunpack.c.l.b16 %v82
  %v349 = vunpack.c.l.b16 %v83
  %v350 = vunpack.c.l.b16 %v84
  %v351 = vunpack.c.l.b16 %v85
  %v352 = vunpack.c.l.b16 %v86
  %v353 = vunpack.c.l.b16 %v87
  %v354 = vunpack.c.l.b16 %v88
  %v355 = vunpack.c.l.b16 %v89
  %v356 = vunpack.c.l.b16 %v90
  %v357 = vunpack.c.l.b16 %v91
  %v358 = vunpack.c.l.b16 %v92
  %v359 = vunpack.c.l.b16 %v93
  %v360 = vunpack.c.l.b16 %v94
  %v361 = vunpack.c.l.b16 %v95
  %v362 = vunpack.c.l.b16 %v96
  %v363 = vunpack.c.l.b16 %v97
  %v364 = vunpack.c.l.b16 %v98
  %v365 = vunpack.c.l.b16 %v99
  %v366 = vunpack.c.l.b16 %v100
  %v367 = vunpack.c.l.b16 %v101
  %v368 = vunpack.c.l.b16 %v102
  %v369 = vunpack.c.l.b16 %v103
  %v370 = vunpack.c.l.b16 %v104
  %v371 = vunpack.c.l.b16 %v105
  %v372 = vunpack.c.l.b16 %v106
  %v373 = vunpack.c.l.b16 %v107
  %v374 = vunpack.c.l.b16 %v108
  %v375 = vunpack.c.l.b16 %v109
  %v376 = vunpack.c.l.b16 %v110
  %v377 = vunpack.c.l.b16 %v111
  %v378 = vunpack.c.l.b16 %v112
  %v379 = vunpack.c.l.b16 %v113
  %v380 = vunpack.c.l.b16 %v114
  %v381 = vunpack.c.l.b16 %v115
  %v382 = vunpack.c.l.b16 %v116
  %v383 = vunpack.c.l.b16 %v117
  %v384 = vunpack.c.l.b16 %v118
  %v385 = vunpack.c.l.b16 %v119
  %v386 = vunpack.c.l.b16 %v120
  %v387 = vunpack.c.l.b16 %v121
  %v388 = vunpack.c.l.b16 %v122
  %v389 = vunpack.c.l.b16 %v123
  %v390 = vunpack.c.l.b16 %v124
  %v391 = vunpack.c.l.b16 %v125
  %v392 = vunpack.c.l.b16 %v126
  %v393 = vunpack.c.l.b16 %v127
  %v394 = vunpack.c.l.b16 %v128
  %v395 = vunpack.c.l.b16 %v129
  %v396 = vpack.c.b16 %v297, %v296
  %v397 = vpack.c.b16 %v299, %v298
  %v398 = vpack.c.b16 %v301, %v300
  %v399 = vpack.c.b16 %v303, %v302
  %v400 = vpack.c.b16 %v305, %v304
  %v401 = vpack.c.b16 %v307, %v306
  %v402 = vpack.c.b16 %v309, %v308
  %v403 = vpack.c.b16 %v311, %v310
  %v404 = vpack.c.b16 %v313, %v312
  %v405 = vpack.c.b16 %v315, %v314
  %v406 = vpack.c.b16 %v317, %v316
  %v407 = vpack.c.b16 %v319, %v318
  %v408 = vpack.c.b16 %v321, %v320
  %v409 = vpack.c.b16 %v323, %v322
  %v410 = vpack.c.b16 %v325, %v324
  %v411 = vpack.c.b16 %v327, %v326
  %v412 = vpack.c.b16 %v329, %v328
  %v413 = vpack.c.b16 %v331, %v330
  %v414 = vpack.c.b16 %v333, %v332
  %v415 = vpack.c.b16 %v335, %v334
  %v416 = vpack.c.b16 %v337, %v336
  %v417 = vpack.c.b16 %v339, %v338
  %v418 = vpack.c.b16 %v341, %v340
  %v419 = vpack.c.b16 %v343, %v342
  %v420 = vpack.c.b16 %v345, %v344
  %v421 = vpack.c.b16 %v347, %v346
  %v422 = vpack.c.b16 %v349, %v348
  %v423 = vpack.c.b16 %v351, %v350
  %v424 = vpack.c.b16 %v353, %v352
  %v425 = vpack.c.b16 %v355, %v354
  %v426 = vpack.c.b16 %v357, %v356
  %v427 = vpack.c.b16 %v359, %v358
  %v428 = vpack.c.b16 %v361, %v360
  %v429 = vpack.c.b16 %v363, %v362
  %v430 = vpack.c.b16 %v365, %v364
  %v431 = vpack.c.b16 %v367, %v366
  %v432 = vpack.c.b16 %v369, %v368
  %v433 = vpack.c.b16 %v371, %v370
  %v434 = vpack.c.b16 %v373, %v372
  %v435 = vpack.c.b16 %v375, %v374
  %v436 = vpack.c.b16 %v377, %v376
  %v437 = vpack.c.b16 %v379, %v378
  %v438 = vpack.c.b16 %v381, %v380
  %v439 = vpack.c.b16 %v383, %v382
  %v440 = vpack.c.b16 %v385, %v384
  %v441 = vpack.c.b16 %v387, %v386
  %v442 = vpack.c.b16 %v389, %v388
  %v443 = vpack.c.b16 %v391, %v390
  %v444 = vpack.c.b16 %v393, %v392
  %v445 = vpack.c.b16 %v395, %v394
  %vm496 = vcmask 261120
  %v498 = vsel %vm496, %v176, 0
  %v501 = vsel %vm496, %v183, 0
  %503 = vmatprep.subr.bf16.mxu0 0
  %504 = vmatpush1.bf16.msra.mxu0 %v396
  %505 = vmatprep.subr.bf16.mxu0 0
  %506 = vmatpush1.bf16.msra.mxu0 %v397
  %507 = vmatprep.subr.bf16.mxu0 0
  %508 = vmatpush1.bf16.msra.mxu0 %v398
  %509 = vmatprep.subr.bf16.mxu0 0
  %510 = vmatpush1.bf16.msra.mxu0 %v399
  %511 = vmatprep.subr.bf16.mxu0 0
  %512 = vmatpush1.bf16.msra.mxu0 %v400
  %513 = vmatprep.subr.bf16.mxu0 0
  %514 = vmatpush1.bf16.msra.mxu0 %v401
  %515 = vmatprep.subr.bf16.mxu0 0
  %516 = vmatpush1.bf16.msra.mxu0 %v402
  %517 = vmatprep.subr.bf16.mxu0 0
  %518 = vmatpush1.bf16.msra.mxu0 %v403
  %519 = vmatprep.subr.bf16.mxu0 0
  %520 = vmatpush1.bf16.msra.mxu0 %v404
  %521 = vmatprep.subr.bf16.mxu0 0
  %522 = vmatpush1.bf16.msra.mxu0 %v405
  %523 = vmatprep.subr.bf16.mxu0 0
  %524 = vmatpush1.bf16.msra.mxu0 %v406
  %525 = vmatprep.subr.bf16.mxu0 0
  %526 = vmatpush1.bf16.msra.mxu0 %v407
  %527 = vmatprep.subr.bf16.mxu0 0
  %528 = vmatpush1.bf16.msra.mxu0 %v408
  %529 = vmatprep.subr.bf16.mxu0 0
  %530 = vmatpush1.bf16.msra.mxu0 %v409
  %531 = vmatprep.subr.bf16.mxu0 0
  %532 = vmatpush1.bf16.msra.mxu0 %v410
  %533 = vmatprep.subr.bf16.mxu0 0
  %534 = vmatpush1.bf16.msra.mxu0 %v411
  %535 = vmatprep.mubr.bf16.mxu0 %v171
  %536 = vmatmul.mubr.bf16.gmra.mrb[0].mxu0 %v170
  %v537 = vpop.f32.mrb[0].mxu0
  %v538 = vadd.f32 %v135, %v537
  %v539 = vpop.f32.mrb[0].mxu0
  %v540 = vpop.f32.mrb[0].mxu0
  %v541 = vadd.f32 %v135, %v540
  %v542 = vpop.f32.mrb[0].mxu0
  %543 = vmatprep.mubr.bf16.mxu0 %v178
  %544 = vmatmul.mubr.bf16.gmra.mrb[0].mxu0 %v177
  %v545 = vpop.f32.mrb[0].mxu0
  %v546 = vadd.f32 %v135, %v545
  %v547 = vpop.f32.mrb[0].mxu0
  %v548 = vpop.f32.mrb[0].mxu0
  %v549 = vpop.f32.mrb[0].mxu0
  %550 = vdwg.mxu0
  %551 = vmatprep.subr.bf16.mxu0 0
  %552 = vmatpush1.bf16.msra.mxu0 %v412
  %553 = vmatprep.subr.bf16.mxu0 0
  %554 = vmatpush1.bf16.msra.mxu0 %v413
  %555 = vmatprep.subr.bf16.mxu0 0
  %556 = vmatpush1.bf16.msra.mxu0 %v414
  %557 = vmatprep.subr.bf16.mxu0 0
  %558 = vmatpush1.bf16.msra.mxu0 %v415
  %559 = vmatprep.subr.bf16.mxu0 0
  %560 = vmatpush1.bf16.msra.mxu0 %v416
  %561 = vmatprep.subr.bf16.mxu0 0
  %562 = vmatpush1.bf16.msra.mxu0 %v417
  %563 = vmatprep.subr.bf16.mxu0 0
  %564 = vmatpush1.bf16.msra.mxu0 %v418
  %565 = vmatprep.subr.bf16.mxu0 0
  %566 = vmatpush1.bf16.msra.mxu0 %v419
  %567 = vmatprep.subr.bf16.mxu0 0
  %568 = vmatpush1.bf16.msra.mxu0 %v420
  %569 = vmatprep.subr.bf16.mxu0 0
  %570 = vmatpush1.bf16.msra.mxu0 %v421
  %571 = vmatprep.subr.bf16.mxu0 0
  %572 = vmatpush1.bf16.msra.mxu0 %v422
  %573 = vmatprep.subr.bf16.mxu0 0
  %574 = vmatpush1.bf16.msra.mxu0 %v423
  %575 = vmatprep.subr.bf16.mxu0 0
  %576 = vmatpush1.bf16.msra.mxu0 %v424
  %577 = vmatprep.subr.bf16.mxu0 0
  %578 = vmatpush1.bf16.msra.mxu0 %v425
  %579 = vmatprep.subr.bf16.mxu0 0
  %580 = vmatpush1.bf16.msra.mxu0 %v426
  %581 = vmatprep.subr.bf16.mxu0 0
  %582 = vmatpush1.bf16.msra.mxu0 %v427
  %583 = vmatprep.mubr.bf16.mxu0 %v173
  %584 = vmatmul.mubr.bf16.gmra.mrb[0].mxu0 %v172
  %v585 = vpop.f32.mrb[0].mxu0
  %v586 = vadd.f32 %v538, %v585
  %v587 = vpop.f32.mrb[0].mxu0
  %v588 = vpop.f32.mrb[0].mxu0
  %v589 = vadd.f32 %v541, %v588
  %v590 = vpop.f32.mrb[0].mxu0
  %591 = vmatprep.mubr.bf16.mxu0 %v180
  %592 = vmatmul.mubr.bf16.gmra.mrb[0].mxu0 %v179
  %v593 = vpop.f32.mrb[0].mxu0
  %v594 = vadd.f32 %v546, %v593
  %v595 = vpop.f32.mrb[0].mxu0
  %v596 = vpop.f32.mrb[0].mxu0
  %v597 = vpop.f32.mrb[0].mxu0
  %598 = vdwg.mxu0
  %599 = vmatprep.subr.bf16.mxu0 0
  %600 = vmatpush1.bf16.msra.mxu0 %v428
  %601 = vmatprep.subr.bf16.mxu0 0
  %602 = vmatpush1.bf16.msra.mxu0 %v429
  %603 = vmatprep.subr.bf16.mxu0 0
  %604 = vmatpush1.bf16.msra.mxu0 %v430
  %605 = vmatprep.subr.bf16.mxu0 0
  %606 = vmatpush1.bf16.msra.mxu0 %v431
  %607 = vmatprep.subr.bf16.mxu0 0
  %608 = vmatpush1.bf16.msra.mxu0 %v432
  %609 = vmatprep.subr.bf16.mxu0 0
  %610 = vmatpush1.bf16.msra.mxu0 %v433
  %611 = vmatprep.subr.bf16.mxu0 0
  %612 = vmatpush1.bf16.msra.mxu0 %v434
  %613 = vmatprep.subr.bf16.mxu0 0
  %614 = vmatpush1.bf16.msra.mxu0 %v435
  %615 = vmatprep.subr.bf16.mxu0 0
  %616 = vmatpush1.bf16.msra.mxu0 %v436
  %617 = vmatprep.subr.bf16.mxu0 0
  %618 = vmatpush1.bf16.msra.mxu0 %v437
  %619 = vmatprep.subr.bf16.mxu0 0
  %620 = vmatpush1.bf16.msra.mxu0 %v438
  %621 = vmatprep.subr.bf16.mxu0 0
  %622 = vmatpush1.bf16.msra.mxu0 %v439
  %623 = vmatprep.subr.bf16.mxu0 0
  %624 = vmatpush1.bf16.msra.mxu0 %v440
  %625 = vmatprep.subr.bf16.mxu0 0
  %626 = vmatpush1.bf16.msra.mxu0 %v441
  %627 = vmatprep.subr.bf16.mxu0 0
  %628 = vmatpush1.bf16.msra.mxu0 %v442
  %629 = vmatprep.subr.bf16.mxu0 0
  %630 = vmatpush1.bf16.msra.mxu0 %v443
  %631 = vmatprep.mubr.bf16.mxu0 %v175
  %632 = vmatmul.mubr.bf16.gmra.mrb[0].mxu0 %v174
  %v633 = vpop.f32.mrb[0].mxu0
  %v634 = vadd.f32 %v586, %v633
  %v635 = vpop.f32.mrb[0].mxu0
  %v636 = vpop.f32.mrb[0].mxu0
  %v637 = vadd.f32 %v589, %v636
  %v638 = vpop.f32.mrb[0].mxu0
  %639 = vmatprep.mubr.bf16.mxu0 %v182
  %640 = vmatmul.mubr.bf16.gmra.mrb[0].mxu0 %v181
  %v641 = vpop.f32.mrb[0].mxu0
  %v642 = vadd.f32 %v594, %v641
  %v643 = vpop.f32.mrb[0].mxu0
  %v644 = vpop.f32.mrb[0].mxu0
  %v645 = vpop.f32.mrb[0].mxu0
  %646 = vdwg.mxu0
  %647 = vmatprep.subr.bf16.mxu0 0
  %648 = vmatpush1.bf16.msra.mxu0 %v444
  %649 = vmatprep.subr.bf16.mxu0 0
  %650 = vmatpush1.bf16.msra.mxu0 %v445
  %651 = vmatprep.subr.bf16.mxu0 0
  %652 = vmatpush1.bf16.msra.mxu0 0
  %653 = vmatprep.subr.bf16.mxu0 0
  %654 = vmatpush1.bf16.msra.mxu0 0
  %655 = vmatprep.subr.bf16.mxu0 0
  %656 = vmatpush1.bf16.msra.mxu0 0
  %657 = vmatprep.subr.bf16.mxu0 0
  %658 = vmatpush1.bf16.msra.mxu0 0
  %659 = vmatprep.subr.bf16.mxu0 0
  %660 = vmatpush1.bf16.msra.mxu0 0
  %661 = vmatprep.subr.bf16.mxu0 0
  %662 = vmatpush1.bf16.msra.mxu0 0
  %663 = vmatprep.subr.bf16.mxu0 0
  %664 = vmatpush1.bf16.msra.mxu0 0
  %665 = vmatprep.subr.bf16.mxu0 0
  %666 = vmatpush1.bf16.msra.mxu0 0
  %667 = vmatprep.subr.bf16.mxu0 0
  %668 = vmatpush1.bf16.msra.mxu0 0
  %669 = vmatprep.subr.bf16.mxu0 0
  %670 = vmatpush1.bf16.msra.mxu0 0
  %671 = vmatprep.subr.bf16.mxu0 0
  %672 = vmatpush1.bf16.msra.mxu0 0
  %673 = vmatprep.subr.bf16.mxu0 0
  %674 = vmatpush1.bf16.msra.mxu0 0
  %675 = vmatprep.subr.bf16.mxu0 0
  %676 = vmatpush1.bf16.msra.mxu0 0
  %677 = vmatprep.subr.bf16.mxu0 0
  %678 = vmatpush1.bf16.msra.mxu0 0
  %679 = vmatprep.mubr.bf16.mxu0 0
  %680 = vmatmul.mubr.bf16.gmra.mrb[0].mxu0 %v498
  %v681 = vpop.f32.mrb[0].mxu0
  %v682 = vadd.f32 %v634, %v681
  %v683 = vpop.f32.mrb[0].mxu0
  %v684 = vpop.f32.mrb[0].mxu0
  %v685 = vadd.f32 %v637, %v684
  %v686 = vpop.f32.mrb[0].mxu0
  %687 = vmatprep.mubr.bf16.mxu0 0
  %688 = vmatmul.mubr.bf16.gmra.mrb[0].mxu0 %v501
  %v689 = vpop.f32.mrb[0].mxu0
  %v690 = vadd.f32 %v642, %v689
  %v691 = vpop.f32.mrb[0].mxu0
  %v692 = vpop.f32.mrb[0].mxu0
  %v693 = vpop.f32.mrb[0].mxu0
  %694 = vdwg.mxu0
  %vm695 = vcmp.gt.f32.partialorder %v682, 0.0
  %vm696 = vcmp.gt.f32.partialorder %v685, 0.0
  %vm697 = vcmp.gt.f32.partialorder %v690, 0.0
  %v698 = vmul.f32 %v682, 0.01
  %v699 = vmul.f32 %v685, 0.01
  %v700 = vmul.f32 %v690, 0.01
  %v701 = vsel %vm695, %v682, %v698
  %v702 = vsel %vm696, %v685, %v699
  %v703 = vsel %vm697, %v690, %v700
  %vm704 = vcmask 523264
  %705 = vst.msk [vmem:[%s3] sm:$0xff] %vm704, %v701
  %706 = vst.msk [vmem:[%s3 + $0x8] sm:$0xff] %vm704, %v702
  %vm707 = vcmask 517120
  %708 = vst.msk [vmem:[%s3 + $0x10] sm:$0x3] %vm707, %v703
  %v709 = vsel %vm704, %v701, 0.0
  %v710 = vsel %vm704, %v702, 0.0
  %v711 = vadd.f32 %v709, %v710
  %v712 = vsel %vm707, %v703, 0.0
  %v713 = vadd.f32 %v711, %v712
  %v714 = vrot.slane %v713, 4
  %v715 = vadd.f32 %v713, %v714
  %v716 = vrot.slane %v715, 2
  %v717 = vadd.f32 %v715, %v716
  %v718 = vrot.slane %v717, 1
  %v719 = vadd.f32 %v717, %v718
  %v720 = vrcp.pop 18.0
  %v721 = vmul.f32 %v719, %v720
  %vm722 = vcmask 516096
  %723 = vst.msk [vmem:[%s4] sm:$0x1] %vm722, %v721
  %v724 = vsub.f32 %v701, %v721
  %v725 = vsub.f32 %v702, %v721
  %v726 = vsub.f32 %v703, %v721
  %v727 = vmul.f32 %v724, %v724
  %v728 = vmul.f32 %v725, %v725
  %v729 = vmul.f32 %v726, %v726
  %v730 = vsel %vm704, %v727, 0.0
  %v731 = vsel %vm704, %v728, 0.0
  %v732 = vadd.f32 %v730, %v731
  %v733 = vsel %vm707, %v729, 0.0
  %v734 = vadd.f32 %v732, %v733
  %v735 = vrot.slane %v734, 4
  %v736 = vadd.f32 %v734, %v735
  %v737 = vrot.slane %v736, 2
  %v738 = vadd.f32 %v736, %v737
  %v739 = vrot.slane %v738, 1
  %v740 = vadd.f32 %v738, %v739
  %v741 = vmul.f32 %v740, %v720
  %742 = vst.msk [vmem:[%s5] sm:$0x1] %vm722, %v741
  // Predicated region
  $region14: #{actor_critic_forward.6} parent=0 // pred_check
    _
  $region15: #{actor_critic_forward.6} parent=0 // pred_check_branch
    %744 = sbr.rel (0) target = $region17
  $region16: #{actor_critic_forward.6} parent=0 // pred_region
    _
  $region17: #{actor_critic_forward.6} parent=0 // pred_fallthru
    _
  // Predicated region
  $region18: #{actor_critic_forward.6} parent=0 // pred_check
    _
  $region19: #{actor_critic_forward.6} parent=0 // pred_check_branch
    %746 = sbr.rel (0) target = $region21
  $region20: #{actor_critic_forward.6} parent=0 // pred_region
    _
  $region21: #{actor_critic_forward.6} parent=0 // pred_fallthru
    _
  // Predicated region
  $region22: #{actor_critic_forward.6} parent=0 // pred_check
    _
  $region23: #{actor_critic_forward.6} parent=0 // pred_check_branch
    %748 = sbr.rel (0) target = $region25
  $region24: #{actor_critic_forward.6} parent=0 // pred_region
    _
  $region25: #{actor_critic_forward.6} parent=0 // pred_fallthru
    _
  // Predicated region
  $region26: #{actor_critic_forward.6} parent=0 // pred_check
    _
  $region27: #{actor_critic_forward.6} parent=0 // pred_check_branch
    %750 = sbr.rel (0) target = $region29
  $region28: #{actor_critic_forward.6} parent=0 // pred_region
    _
  $region29: #{actor_critic_forward.6} parent=0 // pred_fallthru
    _
  // Predicated region
  $region30: #{actor_critic_forward.6} parent=0 // pred_check
    _
  $region31: #{actor_critic_forward.6} parent=0 // pred_check_branch
    %752 = sbr.rel (0) target = $region33
  $region32: #{actor_critic_forward.6} parent=0 // pred_region
    _
  $region33: #{actor_critic_forward.6} parent=0 // pred_fallthru
    _
  // Predicated region
  $region34: #{actor_critic_forward.6} parent=0 // pred_check
    _
  $region35: #{actor_critic_forward.6} parent=0 // pred_check_branch
    %754 = sbr.rel (0) target = $region37
  $region36: #{actor_critic_forward.6} parent=0 // pred_region
    _
  $region37: #{actor_critic_forward.6} parent=0 // pred_fallthru
    _

// kernel: actor_critic_forward.7
$region0: #{actor_critic_forward.7}
  #allocation0 [shape = 'u32[]', space=smem, size = 0x4, offset = 0x4, fixed_abs, tag = 'smem constant byte address 0x4 - core index']
  #allocation1 [shape = 'u32[144,128]{1,0:T(1,128)}', space=vmem, size = 0x12000, scoped, tag = 'internal scratch']
  %s0 = inlined_call_operand.vmem [shape: f32[2,9,64], index: 0, kind: input, shape index: {}]
  %s1 = inlined_call_operand.vmem [shape: f32[1,64], index: 1, kind: input, shape index: {}]
  %s2 = inlined_call_operand.vmem [shape: f32[1,64], index: 2, kind: input, shape index: {}]
  %s3 = inlined_call_operand.vmem [shape: f32[1,64], index: 3, kind: input, shape index: {}]
  %s4 = inlined_call_operand.vmem [shape: f32[1,64], index: 4, kind: input, shape index: {}]
  %s5 = inlined_call_operand.vmem [shape: f32[64,5], index: 5, kind: input, shape index: {}]
  %s6 = inlined_call_operand.vmem [shape: f32[1,5], index: 6, kind: input, shape index: {}]
  %s7 = inlined_call_operand.vmem [shape: f32[2,5], index: 7, kind: output, shape index: {}]
  %s8 = sld [smem:[#allocation0]]
  $region38: #{actor_critic_forward.7} parent=0
    _
  %s10 = ssub.s32 1, %s8
  %s11 = scalar_select 0, %s10, %s8
  // Predicated region
  $region2: #{actor_critic_forward.7} parent=0 // pred_check
    _
  $region3: #{actor_critic_forward.7} parent=0 // pred_check_branch
    %13 = sbr.rel (0) target = $region5
  $region4: #{actor_critic_forward.7} parent=0 // pred_region
    _
  $region5: #{actor_critic_forward.7} parent=0 // pred_fallthru
    _
  // Predicated region
  $region6: #{actor_critic_forward.7} parent=0 // pred_check
    _
  $region7: #{actor_critic_forward.7} parent=0 // pred_check_branch
    %15 = sbr.rel (0) target = $region9
  $region8: #{actor_critic_forward.7} parent=0 // pred_region
    _
  $region9: #{actor_critic_forward.7} parent=0 // pred_fallthru
    _
  // Predicated region
  $region10: #{actor_critic_forward.7} parent=0 // pred_check
    _
  $region11: #{actor_critic_forward.7} parent=0 // pred_check_branch
    %17 = sbr.rel (0) target = $region13
  $region12: #{actor_critic_forward.7} parent=0 // pred_region
    _
  $region13: #{actor_critic_forward.7} parent=0 // pred_fallthru
    _
  // Predicated region
  $region14: #{actor_critic_forward.7} parent=0 // pred_check
    _
  $region15: #{actor_critic_forward.7} parent=0 // pred_check_branch
    %19 = sbr.rel (0) target = $region17
  $region16: #{actor_critic_forward.7} parent=0 // pred_region
    _
  $region17: #{actor_critic_forward.7} parent=0 // pred_fallthru
    _
  // Predicated region
  $region18: #{actor_critic_forward.7} parent=0 // pred_check
    _
  $region19: #{actor_critic_forward.7} parent=0 // pred_check_branch
    %21 = sbr.rel (0) target = $region21
  $region20: #{actor_critic_forward.7} parent=0 // pred_region
    _
  $region21: #{actor_critic_forward.7} parent=0 // pred_fallthru
    _
  // Predicated region
  $region22: #{actor_critic_forward.7} parent=0 // pred_check
    _
  $region23: #{actor_critic_forward.7} parent=0 // pred_check_branch
    %23 = sbr.rel (0) target = $region25
  $region24: #{actor_critic_forward.7} parent=0 // pred_region
    _
  $region25: #{actor_critic_forward.7} parent=0 // pred_fallthru
    _
  // Predicated region
  $region26: #{actor_critic_forward.7} parent=0 // pred_check
    _
  $region27: #{actor_critic_forward.7} parent=0 // pred_check_branch
    %25 = sbr.rel (0) target = $region29
  $region28: #{actor_critic_forward.7} parent=0 // pred_region
    _
  $region29: #{actor_critic_forward.7} parent=0 // pred_fallthru
    _
  %v26 = vld [vmem:[%s2] sm:$0x1]
  %v27 = vadd.f32 %v26, 1e-05
  %v28 = vrsqrt.pop %v27
  %v29 = vld [vmem:[%s3] sm:$0x1]
  %v30 = vmul.f32 %v29, %v28
  %v31 = vld [vmem:[%s4] sm:$0x1]
  %v32 = vld [vmem:[%s1] sm:$0x1]
  %v33 = vmul.f32 %v32, %v30
  %v34 = vsub.f32 %v31, %v33
  %v35 = vld [vmem:[%s0] sm:$0xff]
  %v36 = vld [vmem:[%s0 + $0x8] sm:$0x1]
  %v37 = vld [vmem:[%s0 + $0x10] sm:$0xff]
  %v38 = vld [vmem:[%s0 + $0x18] sm:$0x1]
  %v40 = vlaneseq
  %v41 = vshrl.u32 %v40, 7
  %v42 = vsub.s32 0, %v41
  %v43 = vrot.slane %v30, %v42
  %v45 = vmul.f32 %v35, %v43
  %v46 = vmul.f32 %v36, %v43
  %v47 = vmul.f32 %v37, %v43
  %v48 = vmul.f32 %v38, %v43
  %v50 = vlaneseq
  %v51 = vshrl.u32 %v50, 7
  %v52 = vsub.s32 0, %v51
  %v53 = vrot.slane %v34, %v52
  %v55 = vadd.f32 %v45, %v53
  %v56 = vadd.f32 %v46, %v53
  %v57 = vadd.f32 %v47, %v53
  %v58 = vadd.f32 %v48, %v53
  %vm59 = vcmask 523264
  %v60 = vsel %vm59, %v55, -inf
  %vm61 = vcmask 516096
  %v62 = vsel %vm61, %v56, -inf
  %v63 = vmax.f32 %v60, %v62
  %v64 = vrot.slane %v63, 4
  %v65 = vmax.f32 %v63, %v64
  %v66 = vrot.slane %v65, 2
  %v67 = vmax.f32 %v65, %v66
  %v68 = vrot.slane %v67, 1
  %v69 = vmax.f32 %v67, %v68
  %v70 = vsel %vm59, %v57, -inf
  %v71 = vsel %vm61, %v58, -inf
  %v72 = vmax.f32 %v70, %v71
  %v73 = vrot.slane %v72, 4
  %v74 = vmax.f32 %v72, %v73
  %v75 = vrot.slane %v74, 2
  %v76 = vmax.f32 %v74, %v75
  %v77 = vrot.slane %v76, 1
  %v78 = vmax.f32 %v76, %v77
  %v79 = vld [vmem:[%s5] sm:$0xff]
  %v80 = vld [vmem:[%s5 + $0x8] sm:$0xff]
  %v81 = vld [vmem:[%s5 + $0x10] sm:$0xff]
  %v82 = vld [vmem:[%s5 + $0x18] sm:$0xff]
  %v83 = vld [vmem:[%s5 + $0x20] sm:$0xff]
  %v84 = vld [vmem:[%s5 + $0x28] sm:$0xff]
  %v85 = vld [vmem:[%s5 + $0x30] sm:$0xff]
  %v86 = vld [vmem:[%s5 + $0x38] sm:$0xff]
  %v87 = vld [vmem:[%s6] sm:$0x1]
  %v89 = vlaneseq
  %v90 = vshrl.u32 %v89, 7
  %v91 = vsub.s32 0, %v90
  %v92 = vrot.slane %v87, %v91
  %vm96 = vcmask 1041409
  %v97 = vsel %vm96, %v78, %v69
  %v98 = vsel %vm59, %v97, 0
  %100 = vmatprep.subr.mxu0 0.0
  %101 = vmatpush1.msra.mxu0 %v79
  %102 = vmatprep.subr.mxu0 0.0
  %103 = vmatpush1.msra.mxu0 %v80
  %104 = vmatprep.subr.mxu0 0.0
  %105 = vmatpush1.msra.mxu0 %v81
  %106 = vmatprep.subr.mxu0 0.0
  %107 = vmatpush1.msra.mxu0 %v82
  %108 = vmatprep.subr.mxu0 0.0
  %109 = vmatpush1.msra.mxu0 %v83
  %110 = vmatprep.subr.mxu0 0.0
  %111 = vmatpush1.msra.mxu0 %v84
  %112 = vmatprep.subr.mxu0 0.0
  %113 = vmatpush1.msra.mxu0 %v85
  %114 = vmatprep.subr.mxu0 0.0
  %115 = vmatpush1.msra.mxu0 %v86
  %116 = vmatprep.subr.mxu0 0.0
  %117 = vmatpush1.msra.mxu0 0.0
  %118 = vmatprep.subr.mxu0 0.0
  %119 = vmatpush1.msra.mxu0 0.0
  %120 = vmatprep.subr.mxu0 0.0
  %121 = vmatpush1.msra.mxu0 0.0
  %122 = vmatprep.subr.mxu0 0.0
  %123 = vmatpush1.msra.mxu0 0.0
  %124 = vmatprep.subr.mxu0 0.0
  %125 = vmatpush1.msra.mxu0 0.0
  %126 = vmatprep.subr.mxu0 0.0
  %127 = vmatpush1.msra.mxu0 0.0
  %128 = vmatprep.subr.mxu0 0.0
  %129 = vmatpush1.msra.mxu0 0.0
  %130 = vmatprep.subr.mxu0 0.0
  %131 = vmatpush1.msra.mxu0 0.0
  %132 = vmatprep.subr.mxu0 0.0
  %133 = vmatpush1.msra.mxu0 0.0
  %134 = vmatprep.subr.mxu0 0.0
  %135 = vmatpush1.msra.mxu0 0.0
  %136 = vmatprep.subr.mxu0 0.0
  %137 = vmatpush1.msra.mxu0 0.0
  %138 = vmatprep.subr.mxu0 0.0
  %139 = vmatpush1.msra.mxu0 0.0
  %140 = vmatprep.subr.mxu0 0.0
  %141 = vmatpush1.msra.mxu0 0.0
  %142 = vmatprep.subr.mxu0 0.0
  %143 = vmatpush1.msra.mxu0 0.0
  %144 = vmatprep.subr.mxu0 0.0
  %145 = vmatpush1.msra.mxu0 0.0
  %146 = vmatprep.subr.mxu0 0.0
  %147 = vmatpush1.msra.mxu0 0.0
  %148 = vmatprep.subr.mxu0 0.0
  %149 = vmatpush1.msra.mxu0 0.0
  %150 = vmatprep.subr.mxu0 0.0
  %151 = vmatpush1.msra.mxu0 0.0
  %152 = vmatprep.subr.mxu0 0.0
  %153 = vmatpush1.msra.mxu0 0.0
  %154 = vmatprep.subr.mxu0 0.0
  %155 = vmatpush1.msra.mxu0 0.0
  %156 = vmatprep.subr.mxu0 0.0
  %157 = vmatpush1.msra.mxu0 0.0
  %158 = vmatprep.subr.mxu0 0.0
  %159 = vmatpush1.msra.mxu0 0.0
  %160 = vmatprep.subr.mxu0 0.0
  %161 = vmatpush1.msra.mxu0 0.0
  %162 = vmatprep.subr.mxu0 0.0
  %163 = vmatpush1.msra.mxu0 0.0
  %164 = vmatprep.mubr.f32.mxu0 0.0
  %165 = vmatmul.mubr.f32.gmra.mrb[0].mxu0 %v98
  %v166 = vpop.f32.mrb[0].mxu0
  %v167 = vadd.f32 %v92, %v166
  %v168 = vpop.f32.mrb[0].mxu0
  %169 = vdwg.mxu0
  %vm170 = vcmask 33792
  %171 = vst.msk [vmem:[%s7] sm:$0x3] %vm170, %v167
  // Predicated region
  $region30: #{actor_critic_forward.7} parent=0 // pred_check
    _
  $region31: #{actor_critic_forward.7} parent=0 // pred_check_branch
    %173 = sbr.rel (0) target = $region33
  $region32: #{actor_critic_forward.7} parent=0 // pred_region
    _
  $region33: #{actor_critic_forward.7} parent=0 // pred_fallthru
    _
  // Predicated region
  $region34: #{actor_critic_forward.7} parent=0 // pred_check
    _
  $region35: #{actor_critic_forward.7} parent=0 // pred_check_branch
    %175 = sbr.rel (0) target = $region37
  $region36: #{actor_critic_forward.7} parent=0 // pred_region
    _
  $region37: #{actor_critic_forward.7} parent=0 // pred_fallthru
    _

</llo_original>
